<compile_context>
chip_gen: v5e
topology: v5e:2x2
jax: 0.10.0
libtpu: 0.0.40
codegen_flags: <defaults>
</compile_context>

<pallas_src>
import functools

import jax
import jax.numpy as jnp
from jax.experimental import pallas as pl
from jax.experimental.pallas import tpu as pltpu

EPS = 1e-5
LANES = 128
_W_OFF = 8  # sublane-aligned offset of the image inside the halo scratch


def _round_up(x, m):
    return (x + m - 1) // m * m


def _vmem_limit_bytes():
    """Generation-aware scoped-VMEM budget (v7x: 64 MiB phys, v4/v5e/v6e: 128 MiB)."""
    try:
        kind = jax.devices()[0].device_kind.lower()
    except Exception:
        kind = ""
    if "v7" in kind or "7x" in kind:
        return 40 * 1024 * 1024
    if ("v6" in kind) or ("v5" in kind) or ("v4" in kind):
        return 64 * 1024 * 1024
    return 32 * 1024 * 1024


# ------------------------------ Pallas kernels ------------------------------
def _conv_bn_stats_kernel(ho, wo, stride, apply_in_relu,
                          x_ref, scale_ref, shift_ref, w_ref,
                          o_ref, s_ref, pad_ref):
    """(input scale/shift [+ReLU]) -> tap-folded 3x3 conv -> raw conv + stats.

    One batch element (full image) per grid step.

    x_ref:     [1, hi, wi, cphys]    input image (prev layer's raw conv, or x)
    scale_ref: [1, cphys] f32        previous-layer BN scale (identity for L1)
    shift_ref: [1, cphys] f32        previous-layer BN shift (identity for L1)
    w_ref:     [3, 3*cin_pad, cpad]  bf16 tap-folded weights (kh major; kw,cin in K)
    o_ref:     [1, ho, wo, cpad]     raw (pre-BN) conv output
    s_ref:     [1, 2, cpad] f32      per-image (sum, sum of squares) of o values
    pad_ref:   VMEM [hi+2, wi+16, cin_pad] bf16 halo + channel-pad scratch
    """
    hi, wi, cphys = x_ref.shape[1], x_ref.shape[2], x_ref.shape[3]
    cin_pad = pad_ref.shape[-1]
    cpad = w_ref.shape[-1]

    # Previous layer's BN (+ReLU) applied at load time so the normalized
    # activation never touches HBM (identity scale/shift for layer 1).
    y = x_ref[0].astype(jnp.float32) * scale_ref[0] + shift_ref[0]
    if apply_in_relu:
        y = jnp.maximum(y, 0.0)
    y = y.astype(jnp.bfloat16)

    # Build the spatially haloed, channel-padded input in VMEM: full memset
    # (keeps halo + padded channels exactly zero, independent of grid order /
    # megacore sharding) then an aligned interior store at sublane offset 8.
    pad_ref[...] = jnp.zeros_like(pad_ref)
    pad_ref[1:hi + 1, _W_OFF:_W_OFF + wi, 0:cphys] = y

    # Tap-folded conv: 3 MXU matmuls with K = 3*cin_pad instead of 9 with
    # K = cin (better MXU fill on the 256-wide v6e/v7x arrays, 3x fewer f32
    # accumulator round-trips for v5e's single vst slot).
    acc = jnp.zeros((ho * wo, cpad), jnp.float32)
    for kh in range(3):
        rows = pad_ref[kh:kh + (ho - 1) * stride + 1]        # [*, wi+16, cin_pad]
        if stride == 1:
            cols = [rows[:, _W_OFF - 1 + kw:_W_OFF - 1 + kw + wo, :]
                    for kw in range(3)]
        else:
            # TODO(synk): stride>1 tap path is written but not exercised here.
            cols = [jax.lax.slice(
                rows, (0, _W_OFF - 1 + kw, 0),
                (rows.shape[0], _W_OFF - 1 + kw + (wo - 1) * stride + 1, cin_pad),
                (stride, stride, 1)) for kw in range(3)]
        xcat = jnp.concatenate(cols, axis=-1).reshape(ho * wo, 3 * cin_pad)
        acc += jnp.dot(xcat, w_ref[kh], preferred_element_type=jnp.float32)

    # Store the raw conv in the output dtype; BN statistics are taken over
    # exactly the stored values so the downstream scale/shift stays consistent.
    cstore = acc.astype(o_ref.dtype)
    o_ref[0] = cstore.reshape(ho, wo, cpad)
    cf = cstore.astype(jnp.float32)
    s_ref[0] = jnp.concatenate(
        [jnp.sum(cf, axis=0, keepdims=True),
         jnp.sum(cf * cf, axis=0, keepdims=True)], axis=0)


def _bn_kernel(x_ref, scale_ref, shift_ref, o_ref):
    """y = x*scale + shift over large, lane-dense [rows, C] blocks."""
    o_ref[...] = (x_ref[...].astype(jnp.float32) * scale_ref[0]
                  + shift_ref[0]).astype(o_ref.dtype)


# ------------------------------ pallas_call glue -----------------------------
def _conv_layer(x_nhwc, w_oihw, in_scale, in_shift, *, apply_in_relu, stride,
                out_dtype, vmem_limit):
    """One fused (input scale/shift [+ReLU]) -> conv3x3(pad=1, bias=False) layer.

    Returns (raw conv output [N, Ho, Wo, Cpad], BN partials [N, 2, Cpad], Ho, Wo, Cpad).
    """
    n, h, w, cphys = x_nhwc.shape
    cout, cin_l = w_oihw.shape[0], w_oihw.shape[1]
    assert cin_l <= cphys
    ho = (h - 1) // stride + 1
    wo = (w - 1) // stride + 1
    cpad = _round_up(cout, LANES)
    # Lane-dense MXU operand: small Cin is padded to a full 128 lane in VMEM
    # only (no HBM cost); for Cin >= 64 rely on tap folding instead of padding.
    cin_pad = LANES if cphys < 64 else _round_up(cphys, 8)

    # Tap-folded weights [3, 3*cin_pad, cpad]: kh major, (kw, cin) in K.
    wt = jnp.transpose(w_oihw, (2, 3, 1, 0)).astype(jnp.float32)      # HWIO
    wt = jnp.pad(wt, ((0, 0), (0, 0), (0, cin_pad - cin_l), (0, cpad - cout)))
    wt = wt.reshape(3, 3 * cin_pad, cpad).astype(jnp.bfloat16)

    kern = functools.partial(_conv_bn_stats_kernel, ho, wo, stride, apply_in_relu)
    cost = pl.CostEstimate(
        flops=2 * n * ho * wo * 9 * cin_pad * cpad,
        transcendentals=0,
        bytes_accessed=int(x_nhwc.size * x_nhwc.dtype.itemsize + wt.size * 2
                           + n * ho * wo * cpad * jnp.dtype(out_dtype).itemsize
                           + n * 2 * cpad * 4))
    conv_raw, stats = pl.pallas_call(
        kern,
        grid=(n,),                                   # >= 2 shards across v7x's 2 TCs
        in_specs=[
            pl.BlockSpec((1, h, w, cphys), lambda b: (b, 0, 0, 0)),
            pl.BlockSpec((1, cphys), lambda b: (0, 0)),                  # resident
            pl.BlockSpec((1, cphys), lambda b: (0, 0)),                  # resident
            pl.BlockSpec((3, 3 * cin_pad, cpad), lambda b: (0, 0, 0)),   # resident
        ],
        out_specs=[
            pl.BlockSpec((1, ho, wo, cpad), lambda b: (b, 0, 0, 0)),
            pl.BlockSpec((1, 2, cpad), lambda b: (b, 0, 0)),
        ],
        out_shape=[
            jax.ShapeDtypeStruct((n, ho, wo, cpad), out_dtype),
            jax.ShapeDtypeStruct((n, 2, cpad), jnp.float32),
        ],
        scratch_shapes=[pltpu.VMEM((h + 2, w + 16, cin_pad), jnp.bfloat16)],
        compiler_params=pltpu.CompilerParams(
            dimension_semantics=("parallel",),
            vmem_limit_bytes=vmem_limit),
        cost_estimate=cost,
    )(x_nhwc, in_scale, in_shift, wt)
    return conv_raw, stats, ho, wo, cpad


def _bn_call(x2d, scale, shift, out_dtype, vmem_limit, target_rows=4096):
    """Final BN pass over [rows, Cpad] with large lane-dense blocks."""
    rows, cpad = x2d.shape
    rblk = rows
    if rows > target_rows and rows % 8 == 0:
        for cand in range(target_rows, 7, -8):
            if rows % cand == 0:
                rblk = cand
                break
    return pl.pallas_call(
        _bn_kernel,
        grid=(rows // rblk,),
        in_specs=[
            pl.BlockSpec((rblk, cpad), lambda i: (i, 0)),
            pl.BlockSpec((1, cpad), lambda i: (0, 0)),                   # resident
            pl.BlockSpec((1, cpad), lambda i: (0, 0)),                   # resident
        ],
        out_specs=pl.BlockSpec((rblk, cpad), lambda i: (i, 0)),
        out_shape=jax.ShapeDtypeStruct((rows, cpad), out_dtype),
        compiler_params=pltpu.CompilerParams(
            dimension_semantics=("parallel",),
            vmem_limit_bytes=vmem_limit),
    )(x2d, scale, shift)


def _finalize_bn(stats, gamma, beta, cout, m_total):
    """Global training-mode (biased) batch stats -> per-channel scale/shift.

    Padded channels are zeroed defensively so 1/sqrt(EPS) never amplifies noise.
    """
    cpad = stats.shape[-1]
    s = jnp.sum(stats, axis=0)                                 # [2, cpad], tiny
    mean = s[0] / m_total
    var = jnp.maximum(s[1] / m_total - mean * mean, 0.0)
    inv = jax.lax.rsqrt(var + EPS)
    mask = jnp.arange(cpad) < cout
    g = jnp.pad(gamma.astype(jnp.float32), (0, cpad - cout))
    b = jnp.pad(beta.astype(jnp.float32), (0, cpad - cout))
    scale = jnp.where(mask, g * inv, 0.0)
    shift = jnp.where(mask, b - mean * scale, 0.0)
    return scale.reshape(1, cpad), shift.reshape(1, cpad)


# --------------------------------- module forward ----------------------------
def residual_block_forward(x_nchw, params, stride=1):
    """Forward of ResidualBlock (NCHW in/out, PyTorch convention).

    NOTE: the PyTorch module never adds the identity/shortcut despite its name,
    so none is added here. BatchNorm runs in training mode (batch statistics);
    running-mean/var momentum state is not produced.
    """
    vmem = _vmem_limit_bytes()
    x = jnp.transpose(x_nchw, (0, 2, 3, 1))                    # NCHW -> NHWC
    n = x.shape[0]
    planes = params["w1"].shape[0]
    cphys1 = x.shape[-1]

    # Layer 1: conv1 raw (bf16) + BN1 partial stats; no input epilogue.
    id_scale = jnp.ones((1, cphys1), jnp.float32)
    id_shift = jnp.zeros((1, cphys1), jnp.float32)
    c1, st1, ho, wo, cpad = _conv_layer(
        x, params["w1"], id_scale, id_shift,
        apply_in_relu=False, stride=stride, out_dtype=jnp.bfloat16,
        vmem_limit=vmem)
    scale1, shift1 = _finalize_bn(st1, params["g1"], params["b1"], planes,
                                  n * ho * wo)

    # Layer 2: BN1 + ReLU fused as conv2's load epilogue; conv2 raw kept f32
    # (it directly becomes the module output after BN2).
    c2, st2, ho2, wo2, cpad2 = _conv_layer(
        c1, params["w2"], scale1, shift1,
        apply_in_relu=True, stride=1, out_dtype=jnp.float32,
        vmem_limit=vmem)
    scale2, shift2 = _finalize_bn(st2, params["g2"], params["b2"], planes,
                                  n * ho2 * wo2)

    # Final BN2 on large flattened lane-dense blocks.
    y = _bn_call(c2.reshape(n * ho2 * wo2, cpad2), scale2, shift2,
                 jnp.float32, vmem)
    y = y.reshape(n, ho2, wo2, cpad2)[..., :planes]            # drop channel pad
    return jnp.transpose(y, (0, 3, 1, 2))                      # NHWC -> NCHW


# ------------------------------ pure-JAX reference ---------------------------
def _reference_forward(x_nchw, params, stride=1):
    """Reference mirroring the kernel numerics: bf16 MXU operands with f32
    accumulation, bf16-stored layer-1 raw conv, f32 training-mode BatchNorm."""
    def conv(x, w_oihw, s):
        return jax.lax.conv_general_dilated(
            x.astype(jnp.bfloat16), w_oihw.astype(jnp.bfloat16),
            window_strides=(s, s), padding=((1, 1), (1, 1)),
            dimension_numbers=("NCHW", "OIHW", "NCHW"),
            preferred_element_type=jnp.float32)

    def bn(x, g, b):
        mean = jnp.mean(x, axis=(0, 2, 3), keepdims=True)
        var = jnp.mean((x - mean) ** 2, axis=(0, 2, 3), keepdims=True)
        return ((x - mean) * jax.lax.rsqrt(var + EPS)
                * g.reshape(1, -1, 1, 1) + b.reshape(1, -1, 1, 1))

    c1 = conv(x_nchw, params["w1"], stride)
    c1 = c1.astype(jnp.bfloat16).astype(jnp.float32)           # bf16-stored raw conv1
    h1 = jnp.maximum(bn(c1, params["g1"], params["b1"]), 0.0)
    h1 = h1.astype(jnp.bfloat16).astype(jnp.float32)           # bf16 conv2 operand
    c2 = conv(h1, params["w2"], 1)
    return bn(c2, params["g2"], params["b2"])


# ------------------------------------ main -----------------------------------
if __name__ == "__main__":
    inplanes, planes, stride = 4, 8, 1
    N, H, W = 2, 16, 16

    key = jax.random.PRNGKey(0)
    kx, kw1, kw2 = jax.random.split(key, 3)

    x = jax.random.normal(kx, (N, inplanes, H, W), dtype=jnp.float32)

    params = {
        # PyTorch Conv2d weights (OIHW), bias=False
        "w1": 0.1 * jax.random.normal(kw1, (planes, inplanes, 3, 3), jnp.float32),
        "w2": 0.1 * jax.random.normal(kw2, (planes, planes, 3, 3), jnp.float32),
        # BatchNorm2d default affine init: weight=1, bias=0
        "g1": jnp.ones((planes,), jnp.float32),
        "b1": jnp.zeros((planes,), jnp.float32),
        "g2": jnp.ones((planes,), jnp.float32),
        "b2": jnp.zeros((planes,), jnp.float32),
    }

    fwd = jax.jit(functools.partial(residual_block_forward, stride=stride))
    out = jax.block_until_ready(fwd(x, params))
    ref = jax.block_until_ready(_reference_forward(x, params, stride=stride))

    assert out.shape == (N, planes, H // stride, W // stride), out.shape
    # bf16-stored intermediates mean rare double-rounding boundary flips can
    # leave a few elements ~1-2 bf16 ulps off the reference; typical error is
    # ~1e-4, so bound the max loosely and the mean tightly.
    max_err = float(jnp.max(jnp.abs(out - ref)))
    mean_err = float(jnp.mean(jnp.abs(out - ref)))
    assert max_err < 2e-2 and mean_err < 1e-3, (max_err, mean_err)

    print("KERNEL_OK")
</pallas_src>

<mosaic_0001>
module attributes {stable_mosaic.version = 11 : i64} {
  func.func @_conv_bn_stats_kernel(%arg0: i32, %arg1: memref<1x16x16x4xf32, #tpu.memory_space<vmem>>, %arg2: memref<1x4xf32, #tpu.memory_space<vmem>>, %arg3: memref<1x4xf32, #tpu.memory_space<vmem>>, %arg4: memref<3x384x128xbf16, #tpu.memory_space<vmem>>, %arg5: memref<1x16x16x128xbf16, #tpu.memory_space<vmem>>, %arg6: memref<1x2x128xf32, #tpu.memory_space<vmem>>, %arg7: memref<18x32x128xbf16, #tpu.memory_space<vmem>>) attributes {dimension_semantics = [#tpu.dimension_semantics<parallel>], iteration_bounds = array<i64: 2>, scalar_prefetch = 0 : i64, scratch_operands = 1 : i64, tpu.core_type = #tpu.core_type<tc>, window_params = [{transform_indices = @transform_0, window_bounds = array<i64: 1, 16, 16, 4>}, {pipeline_mode = #tpu.pipeline_mode<synchronous>, transform_indices = @transform_1, window_bounds = array<i64: 1, 4>}, {pipeline_mode = #tpu.pipeline_mode<synchronous>, transform_indices = @transform_2, window_bounds = array<i64: 1, 4>}, {pipeline_mode = #tpu.pipeline_mode<synchronous>, transform_indices = @transform_3, window_bounds = array<i64: 3, 384, 128>}, {transform_indices = @transform_4, window_bounds = array<i64: 1, 16, 16, 128>}, {transform_indices = @transform_5, window_bounds = array<i64: 1, 2, 128>}]} {
    %c0 = arith.constant 0 : index
    %c0_0 = arith.constant 0 : index
    %c0_1 = arith.constant 0 : index
    %c0_2 = arith.constant 0 : index
    %0 = vector.load %arg1[%c0, %c0_0, %c0_1, %c0_2] : memref<1x16x16x4xf32, #tpu.memory_space<vmem>>, vector<1x16x16x4xf32>
    %1 = vector.shape_cast %0 : vector<1x16x16x4xf32> to vector<16x16x4xf32>
    %c0_3 = arith.constant 0 : index
    %c0_4 = arith.constant 0 : index
    %2 = vector.load %arg2[%c0_3, %c0_4] : memref<1x4xf32, #tpu.memory_space<vmem>>, vector<1x4xf32>
    %3 = vector.shape_cast %2 : vector<1x4xf32> to vector<4xf32>
    %4 = vector.shape_cast %3 : vector<4xf32> to vector<1x1x4xf32>
    %5 = vector.broadcast %4 : vector<1x1x4xf32> to vector<16x16x4xf32>
    %6 = arith.mulf %1, %5 : vector<16x16x4xf32>
    %c0_5 = arith.constant 0 : index
    %c0_6 = arith.constant 0 : index
    %7 = vector.load %arg3[%c0_5, %c0_6] : memref<1x4xf32, #tpu.memory_space<vmem>>, vector<1x4xf32>
    %8 = vector.shape_cast %7 : vector<1x4xf32> to vector<4xf32>
    %9 = vector.shape_cast %8 : vector<4xf32> to vector<1x1x4xf32>
    %10 = vector.broadcast %9 : vector<1x1x4xf32> to vector<16x16x4xf32>
    %11 = arith.addf %6, %10 : vector<16x16x4xf32>
    %12 = arith.truncf %11 : vector<16x16x4xf32> to vector<16x16x4xbf16>
    %cst = arith.constant 0.000000e+00 : bf16
    %13 = vector.broadcast %cst : bf16 to vector<18x32x128xbf16>
    %c0_7 = arith.constant 0 : index
    %c0_8 = arith.constant 0 : index
    %c0_9 = arith.constant 0 : index
    %14 = vector.load %arg7[%c0_7, %c0_8, %c0_9] : memref<18x32x128xbf16, #tpu.memory_space<vmem>>, vector<18x32x128xbf16>
    tpu.vector_store %arg7[%c0_7, %c0_8, %c0_9], %13 {strides = array<i32>} : memref<18x32x128xbf16, #tpu.memory_space<vmem>>, vector<18x32x128xbf16>,
    %c1 = arith.constant 1 : index
    %c8 = arith.constant 8 : index
    %c0_10 = arith.constant 0 : index
    %15 = vector.load %arg7[%c1, %c8, %c0_10] : memref<18x32x128xbf16, #tpu.memory_space<vmem>>, vector<16x16x4xbf16>
    tpu.vector_store %arg7[%c1, %c8, %c0_10], %12 {strides = array<i32>} : memref<18x32x128xbf16, #tpu.memory_space<vmem>>, vector<16x16x4xbf16>,
    %cst_11 = arith.constant 0.000000e+00 : f32
    %16 = vector.broadcast %cst_11 : f32 to vector<256x128xf32>
    %c0_12 = arith.constant 0 : index
    %c0_13 = arith.constant 0 : index
    %c0_14 = arith.constant 0 : index
    %17 = vector.load %arg7[%c0_12, %c0_13, %c0_14] : memref<18x32x128xbf16, #tpu.memory_space<vmem>>, vector<16x32x128xbf16>
    %18 = vector.extract_strided_slice %17 {offsets = [0, 7, 0], sizes = [16, 16, 128], strides = [1, 1, 1]} : vector<16x32x128xbf16> to vector<16x16x128xbf16>
    %19 = vector.extract_strided_slice %17 {offsets = [0, 8, 0], sizes = [16, 16, 128], strides = [1, 1, 1]} : vector<16x32x128xbf16> to vector<16x16x128xbf16>
    %20 = vector.extract_strided_slice %17 {offsets = [0, 9, 0], sizes = [16, 16, 128], strides = [1, 1, 1]} : vector<16x32x128xbf16> to vector<16x16x128xbf16>
    %21 = tpu.concatenate %18, %19, %20 in 2 : vector<16x16x128xbf16>, vector<16x16x128xbf16>, vector<16x16x128xbf16> -> vector<16x16x384xbf16>
    %22 = vector.shape_cast %21 : vector<16x16x384xbf16> to vector<256x384xbf16>
    %c0_15 = arith.constant 0 : index
    %c0_16 = arith.constant 0 : index
    %c0_17 = arith.constant 0 : index
    %23 = vector.load %arg4[%c0_15, %c0_16, %c0_17] : memref<3x384x128xbf16, #tpu.memory_space<vmem>>, vector<1x384x128xbf16>
    %24 = vector.shape_cast %23 : vector<1x384x128xbf16> to vector<384x128xbf16>
    %cst_18 = arith.constant dense<0.000000e+00> : vector<256x128xf32>
    %25 = tpu.matmul %22, %24, %cst_18 {dimension_numbers = #tpu.dot_dimension_numbers<[1], [0], [0], [1], [0, 0, 1, 1], [], []>} : vector<256x384xbf16>, vector<384x128xbf16>, vector<256x128xf32> -> vector<256x128xf32>
    %26 = arith.addf %16, %25 : vector<256x128xf32>
    %c1_19 = arith.constant 1 : index
    %c0_20 = arith.constant 0 : index
    %c0_21 = arith.constant 0 : index
    %27 = vector.load %arg7[%c1_19, %c0_20, %c0_21] : memref<18x32x128xbf16, #tpu.memory_space<vmem>>, vector<16x32x128xbf16>
    %28 = vector.extract_strided_slice %27 {offsets = [0, 7, 0], sizes = [16, 16, 128], strides = [1, 1, 1]} : vector<16x32x128xbf16> to vector<16x16x128xbf16>
    %29 = vector.extract_strided_slice %27 {offsets = [0, 8, 0], sizes = [16, 16, 128], strides = [1, 1, 1]} : vector<16x32x128xbf16> to vector<16x16x128xbf16>
    %30 = vector.extract_strided_slice %27 {offsets = [0, 9, 0], sizes = [16, 16, 128], strides = [1, 1, 1]} : vector<16x32x128xbf16> to vector<16x16x128xbf16>
    %31 = tpu.concatenate %28, %29, %30 in 2 : vector<16x16x128xbf16>, vector<16x16x128xbf16>, vector<16x16x128xbf16> -> vector<16x16x384xbf16>
    %32 = vector.shape_cast %31 : vector<16x16x384xbf16> to vector<256x384xbf16>
    %c1_22 = arith.constant 1 : index
    %c0_23 = arith.constant 0 : index
    %c0_24 = arith.constant 0 : index
    %33 = vector.load %arg4[%c1_22, %c0_23, %c0_24] : memref<3x384x128xbf16, #tpu.memory_space<vmem>>, vector<1x384x128xbf16>
    %34 = vector.shape_cast %33 : vector<1x384x128xbf16> to vector<384x128xbf16>
    %cst_25 = arith.constant dense<0.000000e+00> : vector<256x128xf32>
    %35 = tpu.matmul %32, %34, %cst_25 {dimension_numbers = #tpu.dot_dimension_numbers<[1], [0], [0], [1], [0, 0, 1, 1], [], []>} : vector<256x384xbf16>, vector<384x128xbf16>, vector<256x128xf32> -> vector<256x128xf32>
    %36 = arith.addf %26, %35 : vector<256x128xf32>
    %c2 = arith.constant 2 : index
    %c0_26 = arith.constant 0 : index
    %c0_27 = arith.constant 0 : index
    %37 = vector.load %arg7[%c2, %c0_26, %c0_27] : memref<18x32x128xbf16, #tpu.memory_space<vmem>>, vector<16x32x128xbf16>
    %38 = vector.extract_strided_slice %37 {offsets = [0, 7, 0], sizes = [16, 16, 128], strides = [1, 1, 1]} : vector<16x32x128xbf16> to vector<16x16x128xbf16>
    %39 = vector.extract_strided_slice %37 {offsets = [0, 8, 0], sizes = [16, 16, 128], strides = [1, 1, 1]} : vector<16x32x128xbf16> to vector<16x16x128xbf16>
    %40 = vector.extract_strided_slice %37 {offsets = [0, 9, 0], sizes = [16, 16, 128], strides = [1, 1, 1]} : vector<16x32x128xbf16> to vector<16x16x128xbf16>
    %41 = tpu.concatenate %38, %39, %40 in 2 : vector<16x16x128xbf16>, vector<16x16x128xbf16>, vector<16x16x128xbf16> -> vector<16x16x384xbf16>
    %42 = vector.shape_cast %41 : vector<16x16x384xbf16> to vector<256x384xbf16>
    %c2_28 = arith.constant 2 : index
    %c0_29 = arith.constant 0 : index
    %c0_30 = arith.constant 0 : index
    %43 = vector.load %arg4[%c2_28, %c0_29, %c0_30] : memref<3x384x128xbf16, #tpu.memory_space<vmem>>, vector<1x384x128xbf16>
    %44 = vector.shape_cast %43 : vector<1x384x128xbf16> to vector<384x128xbf16>
    %cst_31 = arith.constant dense<0.000000e+00> : vector<256x128xf32>
    %45 = tpu.matmul %42, %44, %cst_31 {dimension_numbers = #tpu.dot_dimension_numbers<[1], [0], [0], [1], [0, 0, 1, 1], [], []>} : vector<256x384xbf16>, vector<384x128xbf16>, vector<256x128xf32> -> vector<256x128xf32>
    %46 = arith.addf %36, %45 : vector<256x128xf32>
    %47 = arith.truncf %46 : vector<256x128xf32> to vector<256x128xbf16>
    %48 = vector.shape_cast %47 : vector<256x128xbf16> to vector<16x16x128xbf16>
    %c0_32 = arith.constant 0 : index
    %c0_33 = arith.constant 0 : index
    %c0_34 = arith.constant 0 : index
    %c0_35 = arith.constant 0 : index
    %49 = vector.load %arg5[%c0_32, %c0_33, %c0_34, %c0_35] : memref<1x16x16x128xbf16, #tpu.memory_space<vmem>>, vector<1x16x16x128xbf16>
    %50 = vector.shape_cast %49 : vector<1x16x16x128xbf16> to vector<16x16x128xbf16>
    %51 = vector.shape_cast %48 : vector<16x16x128xbf16> to vector<1x16x16x128xbf16>
    tpu.vector_store %arg5[%c0_32, %c0_33, %c0_34, %c0_35], %51 {strides = array<i32>} : memref<1x16x16x128xbf16, #tpu.memory_space<vmem>>, vector<1x16x16x128xbf16>,
    %52 = arith.extf %47 : vector<256x128xbf16> to vector<256x128xf32>
    %cst_36 = arith.constant dense<0.000000e+00> : vector<128xf32>
    %53 = vector.multi_reduction <add>, %52, %cst_36 [0] : vector<256x128xf32> to vector<128xf32>
    %54 = vector.shape_cast %53 : vector<128xf32> to vector<1x128xf32>
    %55 = arith.mulf %52, %52 : vector<256x128xf32>
    %cst_37 = arith.constant dense<0.000000e+00> : vector<128xf32>
    %56 = vector.multi_reduction <add>, %55, %cst_37 [0] : vector<256x128xf32> to vector<128xf32>
    %57 = vector.shape_cast %56 : vector<128xf32> to vector<1x128xf32>
    %58 = tpu.concatenate %54, %57 in 0 : vector<1x128xf32>, vector<1x128xf32> -> vector<2x128xf32>
    %c0_38 = arith.constant 0 : index
    %c0_39 = arith.constant 0 : index
    %c0_40 = arith.constant 0 : index
    %59 = vector.load %arg6[%c0_38, %c0_39, %c0_40] : memref<1x2x128xf32, #tpu.memory_space<vmem>>, vector<1x2x128xf32>
    %60 = vector.shape_cast %59 : vector<1x2x128xf32> to vector<2x128xf32>
    %61 = vector.shape_cast %58 : vector<2x128xf32> to vector<1x2x128xf32>
    tpu.vector_store %arg6[%c0_38, %c0_39, %c0_40], %61 {strides = array<i32>} : memref<1x2x128xf32, #tpu.memory_space<vmem>>, vector<1x2x128xf32>,
    return
  }
  func.func @transform_0(%arg0: i32) -> (i32, i32, i32, i32) {
    %c0_i32 = arith.constant 0 : i32
    %c0_i32_0 = arith.constant 0 : i32
    %c0_i32_1 = arith.constant 0 : i32
    %c0_i32_2 = arith.constant 0 : i32
    return %arg0, %c0_i32, %c0_i32_0, %c0_i32_1 : i32, i32, i32, i32
  }
  func.func @transform_1(%arg0: i32) -> (i32, i32) {
    %c0_i32 = arith.constant 0 : i32
    %c0_i32_0 = arith.constant 0 : i32
    %c0_i32_1 = arith.constant 0 : i32
    return %c0_i32, %c0_i32_0 : i32, i32
  }
  func.func @transform_2(%arg0: i32) -> (i32, i32) {
    %c0_i32 = arith.constant 0 : i32
    %c0_i32_0 = arith.constant 0 : i32
    %c0_i32_1 = arith.constant 0 : i32
    return %c0_i32, %c0_i32_0 : i32, i32
  }
  func.func @transform_3(%arg0: i32) -> (i32, i32, i32) {
    %c0_i32 = arith.constant 0 : i32
    %c0_i32_0 = arith.constant 0 : i32
    %c0_i32_1 = arith.constant 0 : i32
    %c0_i32_2 = arith.constant 0 : i32
    return %c0_i32, %c0_i32_0, %c0_i32_1 : i32, i32, i32
  }
  func.func @transform_4(%arg0: i32) -> (i32, i32, i32, i32) {
    %c0_i32 = arith.constant 0 : i32
    %c0_i32_0 = arith.constant 0 : i32
    %c0_i32_1 = arith.constant 0 : i32
    %c0_i32_2 = arith.constant 0 : i32
    return %arg0, %c0_i32, %c0_i32_0, %c0_i32_1 : i32, i32, i32, i32
  }
  func.func @transform_5(%arg0: i32) -> (i32, i32, i32) {
    %c0_i32 = arith.constant 0 : i32
    %c0_i32_0 = arith.constant 0 : i32
    %c0_i32_1 = arith.constant 0 : i32
    return %arg0, %c0_i32, %c0_i32_0 : i32, i32, i32
  }
}

module attributes {stable_mosaic.version = 11 : i64} {
  func.func @_conv_bn_stats_kernel(%arg0: i32, %arg1: memref<1x16x16x128xbf16, #tpu.memory_space<vmem>>, %arg2: memref<1x128xf32, #tpu.memory_space<vmem>>, %arg3: memref<1x128xf32, #tpu.memory_space<vmem>>, %arg4: memref<3x384x128xbf16, #tpu.memory_space<vmem>>, %arg5: memref<1x16x16x128xf32, #tpu.memory_space<vmem>>, %arg6: memref<1x2x128xf32, #tpu.memory_space<vmem>>, %arg7: memref<18x32x128xbf16, #tpu.memory_space<vmem>>) attributes {dimension_semantics = [#tpu.dimension_semantics<parallel>], iteration_bounds = array<i64: 2>, scalar_prefetch = 0 : i64, scratch_operands = 1 : i64, tpu.core_type = #tpu.core_type<tc>, window_params = [{transform_indices = @transform_0, window_bounds = array<i64: 1, 16, 16, 128>}, {pipeline_mode = #tpu.pipeline_mode<synchronous>, transform_indices = @transform_1, window_bounds = array<i64: 1, 128>}, {pipeline_mode = #tpu.pipeline_mode<synchronous>, transform_indices = @transform_2, window_bounds = array<i64: 1, 128>}, {pipeline_mode = #tpu.pipeline_mode<synchronous>, transform_indices = @transform_3, window_bounds = array<i64: 3, 384, 128>}, {transform_indices = @transform_4, window_bounds = array<i64: 1, 16, 16, 128>}, {transform_indices = @transform_5, window_bounds = array<i64: 1, 2, 128>}]} {
    %c0 = arith.constant 0 : index
    %c0_0 = arith.constant 0 : index
    %c0_1 = arith.constant 0 : index
    %c0_2 = arith.constant 0 : index
    %0 = vector.load %arg1[%c0, %c0_0, %c0_1, %c0_2] : memref<1x16x16x128xbf16, #tpu.memory_space<vmem>>, vector<1x16x16x128xbf16>
    %1 = vector.shape_cast %0 : vector<1x16x16x128xbf16> to vector<16x16x128xbf16>
    %2 = arith.extf %1 : vector<16x16x128xbf16> to vector<16x16x128xf32>
    %c0_3 = arith.constant 0 : index
    %c0_4 = arith.constant 0 : index
    %3 = vector.load %arg2[%c0_3, %c0_4] : memref<1x128xf32, #tpu.memory_space<vmem>>, vector<1x128xf32>
    %4 = vector.shape_cast %3 : vector<1x128xf32> to vector<128xf32>
    %5 = vector.shape_cast %4 : vector<128xf32> to vector<1x1x128xf32>
    %6 = vector.broadcast %5 : vector<1x1x128xf32> to vector<16x16x128xf32>
    %7 = arith.mulf %2, %6 : vector<16x16x128xf32>
    %c0_5 = arith.constant 0 : index
    %c0_6 = arith.constant 0 : index
    %8 = vector.load %arg3[%c0_5, %c0_6] : memref<1x128xf32, #tpu.memory_space<vmem>>, vector<1x128xf32>
    %9 = vector.shape_cast %8 : vector<1x128xf32> to vector<128xf32>
    %10 = vector.shape_cast %9 : vector<128xf32> to vector<1x1x128xf32>
    %11 = vector.broadcast %10 : vector<1x1x128xf32> to vector<16x16x128xf32>
    %12 = arith.addf %7, %11 : vector<16x16x128xf32>
    %cst = arith.constant 0.000000e+00 : f32
    %13 = vector.broadcast %cst : f32 to vector<16x16x128xf32>
    %14 = arith.maximumf %12, %13 : vector<16x16x128xf32>
    %15 = arith.truncf %14 : vector<16x16x128xf32> to vector<16x16x128xbf16>
    %cst_7 = arith.constant 0.000000e+00 : bf16
    %16 = vector.broadcast %cst_7 : bf16 to vector<18x32x128xbf16>
    %c0_8 = arith.constant 0 : index
    %c0_9 = arith.constant 0 : index
    %c0_10 = arith.constant 0 : index
    %17 = vector.load %arg7[%c0_8, %c0_9, %c0_10] : memref<18x32x128xbf16, #tpu.memory_space<vmem>>, vector<18x32x128xbf16>
    tpu.vector_store %arg7[%c0_8, %c0_9, %c0_10], %16 {strides = array<i32>} : memref<18x32x128xbf16, #tpu.memory_space<vmem>>, vector<18x32x128xbf16>,
    %c1 = arith.constant 1 : index
    %c8 = arith.constant 8 : index
    %c0_11 = arith.constant 0 : index
    %18 = vector.load %arg7[%c1, %c8, %c0_11] : memref<18x32x128xbf16, #tpu.memory_space<vmem>>, vector<16x16x128xbf16>
    tpu.vector_store %arg7[%c1, %c8, %c0_11], %15 {strides = array<i32>} : memref<18x32x128xbf16, #tpu.memory_space<vmem>>, vector<16x16x128xbf16>,
    %cst_12 = arith.constant 0.000000e+00 : f32
    %19 = vector.broadcast %cst_12 : f32 to vector<256x128xf32>
    %c0_13 = arith.constant 0 : index
    %c0_14 = arith.constant 0 : index
    %c0_15 = arith.constant 0 : index
    %20 = vector.load %arg7[%c0_13, %c0_14, %c0_15] : memref<18x32x128xbf16, #tpu.memory_space<vmem>>, vector<16x32x128xbf16>
    %21 = vector.extract_strided_slice %20 {offsets = [0, 7, 0], sizes = [16, 16, 128], strides = [1, 1, 1]} : vector<16x32x128xbf16> to vector<16x16x128xbf16>
    %22 = vector.extract_strided_slice %20 {offsets = [0, 8, 0], sizes = [16, 16, 128], strides = [1, 1, 1]} : vector<16x32x128xbf16> to vector<16x16x128xbf16>
    %23 = vector.extract_strided_slice %20 {offsets = [0, 9, 0], sizes = [16, 16, 128], strides = [1, 1, 1]} : vector<16x32x128xbf16> to vector<16x16x128xbf16>
    %24 = tpu.concatenate %21, %22, %23 in 2 : vector<16x16x128xbf16>, vector<16x16x128xbf16>, vector<16x16x128xbf16> -> vector<16x16x384xbf16>
    %25 = vector.shape_cast %24 : vector<16x16x384xbf16> to vector<256x384xbf16>
    %c0_16 = arith.constant 0 : index
    %c0_17 = arith.constant 0 : index
    %c0_18 = arith.constant 0 : index
    %26 = vector.load %arg4[%c0_16, %c0_17, %c0_18] : memref<3x384x128xbf16, #tpu.memory_space<vmem>>, vector<1x384x128xbf16>
    %27 = vector.shape_cast %26 : vector<1x384x128xbf16> to vector<384x128xbf16>
    %cst_19 = arith.constant dense<0.000000e+00> : vector<256x128xf32>
    %28 = tpu.matmul %25, %27, %cst_19 {dimension_numbers = #tpu.dot_dimension_numbers<[1], [0], [0], [1], [0, 0, 1, 1], [], []>} : vector<256x384xbf16>, vector<384x128xbf16>, vector<256x128xf32> -> vector<256x128xf32>
    %29 = arith.addf %19, %28 : vector<256x128xf32>
    %c1_20 = arith.constant 1 : index
    %c0_21 = arith.constant 0 : index
    %c0_22 = arith.constant 0 : index
    %30 = vector.load %arg7[%c1_20, %c0_21, %c0_22] : memref<18x32x128xbf16, #tpu.memory_space<vmem>>, vector<16x32x128xbf16>
    %31 = vector.extract_strided_slice %30 {offsets = [0, 7, 0], sizes = [16, 16, 128], strides = [1, 1, 1]} : vector<16x32x128xbf16> to vector<16x16x128xbf16>
    %32 = vector.extract_strided_slice %30 {offsets = [0, 8, 0], sizes = [16, 16, 128], strides = [1, 1, 1]} : vector<16x32x128xbf16> to vector<16x16x128xbf16>
    %33 = vector.extract_strided_slice %30 {offsets = [0, 9, 0], sizes = [16, 16, 128], strides = [1, 1, 1]} : vector<16x32x128xbf16> to vector<16x16x128xbf16>
    %34 = tpu.concatenate %31, %32, %33 in 2 : vector<16x16x128xbf16>, vector<16x16x128xbf16>, vector<16x16x128xbf16> -> vector<16x16x384xbf16>
    %35 = vector.shape_cast %34 : vector<16x16x384xbf16> to vector<256x384xbf16>
    %c1_23 = arith.constant 1 : index
    %c0_24 = arith.constant 0 : index
    %c0_25 = arith.constant 0 : index
    %36 = vector.load %arg4[%c1_23, %c0_24, %c0_25] : memref<3x384x128xbf16, #tpu.memory_space<vmem>>, vector<1x384x128xbf16>
    %37 = vector.shape_cast %36 : vector<1x384x128xbf16> to vector<384x128xbf16>
    %cst_26 = arith.constant dense<0.000000e+00> : vector<256x128xf32>
    %38 = tpu.matmul %35, %37, %cst_26 {dimension_numbers = #tpu.dot_dimension_numbers<[1], [0], [0], [1], [0, 0, 1, 1], [], []>} : vector<256x384xbf16>, vector<384x128xbf16>, vector<256x128xf32> -> vector<256x128xf32>
    %39 = arith.addf %29, %38 : vector<256x128xf32>
    %c2 = arith.constant 2 : index
    %c0_27 = arith.constant 0 : index
    %c0_28 = arith.constant 0 : index
    %40 = vector.load %arg7[%c2, %c0_27, %c0_28] : memref<18x32x128xbf16, #tpu.memory_space<vmem>>, vector<16x32x128xbf16>
    %41 = vector.extract_strided_slice %40 {offsets = [0, 7, 0], sizes = [16, 16, 128], strides = [1, 1, 1]} : vector<16x32x128xbf16> to vector<16x16x128xbf16>
    %42 = vector.extract_strided_slice %40 {offsets = [0, 8, 0], sizes = [16, 16, 128], strides = [1, 1, 1]} : vector<16x32x128xbf16> to vector<16x16x128xbf16>
    %43 = vector.extract_strided_slice %40 {offsets = [0, 9, 0], sizes = [16, 16, 128], strides = [1, 1, 1]} : vector<16x32x128xbf16> to vector<16x16x128xbf16>
    %44 = tpu.concatenate %41, %42, %43 in 2 : vector<16x16x128xbf16>, vector<16x16x128xbf16>, vector<16x16x128xbf16> -> vector<16x16x384xbf16>
    %45 = vector.shape_cast %44 : vector<16x16x384xbf16> to vector<256x384xbf16>
    %c2_29 = arith.constant 2 : index
    %c0_30 = arith.constant 0 : index
    %c0_31 = arith.constant 0 : index
    %46 = vector.load %arg4[%c2_29, %c0_30, %c0_31] : memref<3x384x128xbf16, #tpu.memory_space<vmem>>, vector<1x384x128xbf16>
    %47 = vector.shape_cast %46 : vector<1x384x128xbf16> to vector<384x128xbf16>
    %cst_32 = arith.constant dense<0.000000e+00> : vector<256x128xf32>
    %48 = tpu.matmul %45, %47, %cst_32 {dimension_numbers = #tpu.dot_dimension_numbers<[1], [0], [0], [1], [0, 0, 1, 1], [], []>} : vector<256x384xbf16>, vector<384x128xbf16>, vector<256x128xf32> -> vector<256x128xf32>
    %49 = arith.addf %39, %48 : vector<256x128xf32>
    %50 = vector.shape_cast %49 : vector<256x128xf32> to vector<16x16x128xf32>
    %c0_33 = arith.constant 0 : index
    %c0_34 = arith.constant 0 : index
    %c0_35 = arith.constant 0 : index
    %c0_36 = arith.constant 0 : index
    %51 = vector.load %arg5[%c0_33, %c0_34, %c0_35, %c0_36] : memref<1x16x16x128xf32, #tpu.memory_space<vmem>>, vector<1x16x16x128xf32>
    %52 = vector.shape_cast %51 : vector<1x16x16x128xf32> to vector<16x16x128xf32>
    %53 = vector.shape_cast %50 : vector<16x16x128xf32> to vector<1x16x16x128xf32>
    tpu.vector_store %arg5[%c0_33, %c0_34, %c0_35, %c0_36], %53 {strides = array<i32>} : memref<1x16x16x128xf32, #tpu.memory_space<vmem>>, vector<1x16x16x128xf32>,
    %cst_37 = arith.constant dense<0.000000e+00> : vector<128xf32>
    %54 = vector.multi_reduction <add>, %49, %cst_37 [0] : vector<256x128xf32> to vector<128xf32>
    %55 = vector.shape_cast %54 : vector<128xf32> to vector<1x128xf32>
    %56 = arith.mulf %49, %49 : vector<256x128xf32>
    %cst_38 = arith.constant dense<0.000000e+00> : vector<128xf32>
    %57 = vector.multi_reduction <add>, %56, %cst_38 [0] : vector<256x128xf32> to vector<128xf32>
    %58 = vector.shape_cast %57 : vector<128xf32> to vector<1x128xf32>
    %59 = tpu.concatenate %55, %58 in 0 : vector<1x128xf32>, vector<1x128xf32> -> vector<2x128xf32>
    %c0_39 = arith.constant 0 : index
    %c0_40 = arith.constant 0 : index
    %c0_41 = arith.constant 0 : index
    %60 = vector.load %arg6[%c0_39, %c0_40, %c0_41] : memref<1x2x128xf32, #tpu.memory_space<vmem>>, vector<1x2x128xf32>
    %61 = vector.shape_cast %60 : vector<1x2x128xf32> to vector<2x128xf32>
    %62 = vector.shape_cast %59 : vector<2x128xf32> to vector<1x2x128xf32>
    tpu.vector_store %arg6[%c0_39, %c0_40, %c0_41], %62 {strides = array<i32>} : memref<1x2x128xf32, #tpu.memory_space<vmem>>, vector<1x2x128xf32>,
    return
  }
  func.func @transform_0(%arg0: i32) -> (i32, i32, i32, i32) {
    %c0_i32 = arith.constant 0 : i32
    %c0_i32_0 = arith.constant 0 : i32
    %c0_i32_1 = arith.constant 0 : i32
    %c0_i32_2 = arith.constant 0 : i32
    return %arg0, %c0_i32, %c0_i32_0, %c0_i32_1 : i32, i32, i32, i32
  }
  func.func @transform_1(%arg0: i32) -> (i32, i32) {
    %c0_i32 = arith.constant 0 : i32
    %c0_i32_0 = arith.constant 0 : i32
    %c0_i32_1 = arith.constant 0 : i32
    return %c0_i32, %c0_i32_0 : i32, i32
  }
  func.func @transform_2(%arg0: i32) -> (i32, i32) {
    %c0_i32 = arith.constant 0 : i32
    %c0_i32_0 = arith.constant 0 : i32
    %c0_i32_1 = arith.constant 0 : i32
    return %c0_i32, %c0_i32_0 : i32, i32
  }
  func.func @transform_3(%arg0: i32) -> (i32, i32, i32) {
    %c0_i32 = arith.constant 0 : i32
    %c0_i32_0 = arith.constant 0 : i32
    %c0_i32_1 = arith.constant 0 : i32
    %c0_i32_2 = arith.constant 0 : i32
    return %c0_i32, %c0_i32_0, %c0_i32_1 : i32, i32, i32
  }
  func.func @transform_4(%arg0: i32) -> (i32, i32, i32, i32) {
    %c0_i32 = arith.constant 0 : i32
    %c0_i32_0 = arith.constant 0 : i32
    %c0_i32_1 = arith.constant 0 : i32
    %c0_i32_2 = arith.constant 0 : i32
    return %arg0, %c0_i32, %c0_i32_0, %c0_i32_1 : i32, i32, i32, i32
  }
  func.func @transform_5(%arg0: i32) -> (i32, i32, i32) {
    %c0_i32 = arith.constant 0 : i32
    %c0_i32_0 = arith.constant 0 : i32
    %c0_i32_1 = arith.constant 0 : i32
    return %arg0, %c0_i32, %c0_i32_0 : i32, i32, i32
  }
}

module attributes {stable_mosaic.version = 11 : i64} {
  func.func @_bn_kernel(%arg0: i32, %arg1: memref<512x128xf32, #tpu.memory_space<vmem>>, %arg2: memref<1x128xf32, #tpu.memory_space<vmem>>, %arg3: memref<1x128xf32, #tpu.memory_space<vmem>>, %arg4: memref<512x128xf32, #tpu.memory_space<vmem>>) attributes {dimension_semantics = [#tpu.dimension_semantics<parallel>], iteration_bounds = array<i64: 1>, scalar_prefetch = 0 : i64, scratch_operands = 0 : i64, tpu.core_type = #tpu.core_type<tc>, window_params = [{transform_indices = @transform_0, window_bounds = array<i64: 512, 128>}, {pipeline_mode = #tpu.pipeline_mode<synchronous>, transform_indices = @transform_1, window_bounds = array<i64: 1, 128>}, {pipeline_mode = #tpu.pipeline_mode<synchronous>, transform_indices = @transform_2, window_bounds = array<i64: 1, 128>}, {transform_indices = @transform_3, window_bounds = array<i64: 512, 128>}]} {
    %c0 = arith.constant 0 : index
    %c0_0 = arith.constant 0 : index
    %0 = vector.load %arg1[%c0, %c0_0] : memref<512x128xf32, #tpu.memory_space<vmem>>, vector<512x128xf32>
    %c0_1 = arith.constant 0 : index
    %c0_2 = arith.constant 0 : index
    %1 = vector.load %arg2[%c0_1, %c0_2] : memref<1x128xf32, #tpu.memory_space<vmem>>, vector<1x128xf32>
    %2 = vector.shape_cast %1 : vector<1x128xf32> to vector<128xf32>
    %3 = vector.shape_cast %2 : vector<128xf32> to vector<1x128xf32>
    %4 = vector.broadcast %3 : vector<1x128xf32> to vector<512x128xf32>
    %5 = arith.mulf %0, %4 : vector<512x128xf32>
    %c0_3 = arith.constant 0 : index
    %c0_4 = arith.constant 0 : index
    %6 = vector.load %arg3[%c0_3, %c0_4] : memref<1x128xf32, #tpu.memory_space<vmem>>, vector<1x128xf32>
    %7 = vector.shape_cast %6 : vector<1x128xf32> to vector<128xf32>
    %8 = vector.shape_cast %7 : vector<128xf32> to vector<1x128xf32>
    %9 = vector.broadcast %8 : vector<1x128xf32> to vector<512x128xf32>
    %10 = arith.addf %5, %9 : vector<512x128xf32>
    %c0_5 = arith.constant 0 : index
    %c0_6 = arith.constant 0 : index
    %11 = vector.load %arg4[%c0_5, %c0_6] : memref<512x128xf32, #tpu.memory_space<vmem>>, vector<512x128xf32>
    tpu.vector_store %arg4[%c0_5, %c0_6], %10 {strides = array<i32>} : memref<512x128xf32, #tpu.memory_space<vmem>>, vector<512x128xf32>,
    return
  }
  func.func @transform_0(%arg0: i32) -> (i32, i32) {
    %c0_i32 = arith.constant 0 : i32
    %c0_i32_0 = arith.constant 0 : i32
    return %arg0, %c0_i32 : i32, i32
  }
  func.func @transform_1(%arg0: i32) -> (i32, i32) {
    %c0_i32 = arith.constant 0 : i32
    %c0_i32_0 = arith.constant 0 : i32
    %c0_i32_1 = arith.constant 0 : i32
    return %c0_i32, %c0_i32_0 : i32, i32
  }
  func.func @transform_2(%arg0: i32) -> (i32, i32) {
    %c0_i32 = arith.constant 0 : i32
    %c0_i32_0 = arith.constant 0 : i32
    %c0_i32_1 = arith.constant 0 : i32
    return %c0_i32, %c0_i32_0 : i32, i32
  }
  func.func @transform_3(%arg0: i32) -> (i32, i32) {
    %c0_i32 = arith.constant 0 : i32
    %c0_i32_0 = arith.constant 0 : i32
    return %arg0, %c0_i32 : i32, i32
  }
}

</mosaic_0001>

<llo_original>
// kernel: residual_block_forward.5
$region0: #{residual_block_forward.5}
  #allocation0 [shape = 'u32[]', space=smem, size = 0x4, offset = 0x4, fixed_abs, tag = 'smem constant byte address 0x4 - core index']
  #allocation1 [shape = 'u32[72,128]{1,0:T(1,128)}', space=vmem, size = 0x9000, scoped, tag = 'internal scratch']
  %s0 = inlined_call_operand.vmem [shape: f32[512,128], index: 0, kind: input, shape index: {}]
  %s1 = inlined_call_operand.vmem [shape: f32[1,128], index: 1, kind: input, shape index: {}]
  %s2 = inlined_call_operand.vmem [shape: f32[1,128], index: 2, kind: input, shape index: {}]
  %s3 = inlined_call_operand.vmem [shape: f32[512,128], index: 3, kind: output, shape index: {}]
  %s4 = sld [smem:[#allocation0]]
  $region22: #{residual_block_forward.5} parent=0
    _
  %s6 = ssub.s32 1, %s4
  %s7 = scalar_select 0, %s6, %s4
  // Predicated region
  $region2: #{residual_block_forward.5} parent=0 // pred_check
    _
  $region3: #{residual_block_forward.5} parent=0 // pred_check_branch
    %9 = sbr.rel (0) target = $region5
  $region4: #{residual_block_forward.5} parent=0 // pred_region
    _
  $region5: #{residual_block_forward.5} parent=0 // pred_fallthru
    _
  // Predicated region
  $region6: #{residual_block_forward.5} parent=0 // pred_check
    _
  $region7: #{residual_block_forward.5} parent=0 // pred_check_branch
    %11 = sbr.rel (0) target = $region9
  $region8: #{residual_block_forward.5} parent=0 // pred_region
    _
  $region9: #{residual_block_forward.5} parent=0 // pred_fallthru
    _
  // Predicated region
  $region10: #{residual_block_forward.5} parent=0 // pred_check
    _
  $region11: #{residual_block_forward.5} parent=0 // pred_check_branch
    %13 = sbr.rel (0) target = $region13
  $region12: #{residual_block_forward.5} parent=0 // pred_region
    _
  $region13: #{residual_block_forward.5} parent=0 // pred_fallthru
    _
  %v14 = vld [vmem:[%s0] sm:$0xff]
  %v15 = vld [vmem:[%s0 + $0x8] sm:$0xff]
  %v16 = vld [vmem:[%s0 + $0x10] sm:$0xff]
  %v17 = vld [vmem:[%s0 + $0x18] sm:$0xff]
  %v18 = vld [vmem:[%s0 + $0x20] sm:$0xff]
  %v19 = vld [vmem:[%s0 + $0x28] sm:$0xff]
  %v20 = vld [vmem:[%s0 + $0x30] sm:$0xff]
  %v21 = vld [vmem:[%s0 + $0x38] sm:$0xff]
  %v22 = vld [vmem:[%s0 + $0x40] sm:$0xff]
  %v23 = vld [vmem:[%s0 + $0x48] sm:$0xff]
  %v24 = vld [vmem:[%s0 + $0x50] sm:$0xff]
  %v25 = vld [vmem:[%s0 + $0x58] sm:$0xff]
  %v26 = vld [vmem:[%s0 + $0x60] sm:$0xff]
  %v27 = vld [vmem:[%s0 + $0x68] sm:$0xff]
  %v28 = vld [vmem:[%s0 + $0x70] sm:$0xff]
  %v29 = vld [vmem:[%s0 + $0x78] sm:$0xff]
  %v30 = vld [vmem:[%s0 + $0x80] sm:$0xff]
  %v31 = vld [vmem:[%s0 + $0x88] sm:$0xff]
  %v32 = vld [vmem:[%s0 + $0x90] sm:$0xff]
  %v33 = vld [vmem:[%s0 + $0x98] sm:$0xff]
  %v34 = vld [vmem:[%s0 + $0xa0] sm:$0xff]
  %v35 = vld [vmem:[%s0 + $0xa8] sm:$0xff]
  %v36 = vld [vmem:[%s0 + $0xb0] sm:$0xff]
  %v37 = vld [vmem:[%s0 + $0xb8] sm:$0xff]
  %v38 = vld [vmem:[%s0 + $0xc0] sm:$0xff]
  %v39 = vld [vmem:[%s0 + $0xc8] sm:$0xff]
  %v40 = vld [vmem:[%s0 + $0xd0] sm:$0xff]
  %v41 = vld [vmem:[%s0 + $0xd8] sm:$0xff]
  %v42 = vld [vmem:[%s0 + $0xe0] sm:$0xff]
  %v43 = vld [vmem:[%s0 + $0xe8] sm:$0xff]
  %v44 = vld [vmem:[%s0 + $0xf0] sm:$0xff]
  %v45 = vld [vmem:[%s0 + $0xf8] sm:$0xff]
  %v46 = vld [vmem:[%s0 + $0x100] sm:$0xff]
  %v47 = vld [vmem:[%s0 + $0x108] sm:$0xff]
  %v48 = vld [vmem:[%s0 + $0x110] sm:$0xff]
  %v49 = vld [vmem:[%s0 + $0x118] sm:$0xff]
  %v50 = vld [vmem:[%s0 + $0x120] sm:$0xff]
  %v51 = vld [vmem:[%s0 + $0x128] sm:$0xff]
  %v52 = vld [vmem:[%s0 + $0x130] sm:$0xff]
  %v53 = vld [vmem:[%s0 + $0x138] sm:$0xff]
  %v54 = vld [vmem:[%s0 + $0x140] sm:$0xff]
  %v55 = vld [vmem:[%s0 + $0x148] sm:$0xff]
  %v56 = vld [vmem:[%s0 + $0x150] sm:$0xff]
  %v57 = vld [vmem:[%s0 + $0x158] sm:$0xff]
  %v58 = vld [vmem:[%s0 + $0x160] sm:$0xff]
  %v59 = vld [vmem:[%s0 + $0x168] sm:$0xff]
  %v60 = vld [vmem:[%s0 + $0x170] sm:$0xff]
  %v61 = vld [vmem:[%s0 + $0x178] sm:$0xff]
  %v62 = vld [vmem:[%s0 + $0x180] sm:$0xff]
  %v63 = vld [vmem:[%s0 + $0x188] sm:$0xff]
  %v64 = vld [vmem:[%s0 + $0x190] sm:$0xff]
  %v65 = vld [vmem:[%s0 + $0x198] sm:$0xff]
  %v66 = vld [vmem:[%s0 + $0x1a0] sm:$0xff]
  %v67 = vld [vmem:[%s0 + $0x1a8] sm:$0xff]
  %v68 = vld [vmem:[%s0 + $0x1b0] sm:$0xff]
  %v69 = vld [vmem:[%s0 + $0x1b8] sm:$0xff]
  %v70 = vld [vmem:[%s0 + $0x1c0] sm:$0xff]
  %v71 = vld [vmem:[%s0 + $0x1c8] sm:$0xff]
  %v72 = vld [vmem:[%s0 + $0x1d0] sm:$0xff]
  %v73 = vld [vmem:[%s0 + $0x1d8] sm:$0xff]
  %v74 = vld [vmem:[%s0 + $0x1e0] sm:$0xff]
  %v75 = vld [vmem:[%s0 + $0x1e8] sm:$0xff]
  %v76 = vld [vmem:[%s0 + $0x1f0] sm:$0xff]
  %v77 = vld [vmem:[%s0 + $0x1f8] sm:$0xff]
  %v78 = vld [vmem:[%s1] sm:$0x1]
  %v80 = vperm.slane %v78, 0
  %v82 = vmul.f32 %v14, %v80
  %v83 = vmul.f32 %v15, %v80
  %v84 = vmul.f32 %v16, %v80
  %v85 = vmul.f32 %v17, %v80
  %v86 = vmul.f32 %v18, %v80
  %v87 = vmul.f32 %v19, %v80
  %v88 = vmul.f32 %v20, %v80
  %v89 = vmul.f32 %v21, %v80
  %v90 = vmul.f32 %v22, %v80
  %v91 = vmul.f32 %v23, %v80
  %v92 = vmul.f32 %v24, %v80
  %v93 = vmul.f32 %v25, %v80
  %v94 = vmul.f32 %v26, %v80
  %v95 = vmul.f32 %v27, %v80
  %v96 = vmul.f32 %v28, %v80
  %v97 = vmul.f32 %v29, %v80
  %v98 = vmul.f32 %v30, %v80
  %v99 = vmul.f32 %v31, %v80
  %v100 = vmul.f32 %v32, %v80
  %v101 = vmul.f32 %v33, %v80
  %v102 = vmul.f32 %v34, %v80
  %v103 = vmul.f32 %v35, %v80
  %v104 = vmul.f32 %v36, %v80
  %v105 = vmul.f32 %v37, %v80
  %v106 = vmul.f32 %v38, %v80
  %v107 = vmul.f32 %v39, %v80
  %v108 = vmul.f32 %v40, %v80
  %v109 = vmul.f32 %v41, %v80
  %v110 = vmul.f32 %v42, %v80
  %v111 = vmul.f32 %v43, %v80
  %v112 = vmul.f32 %v44, %v80
  %v113 = vmul.f32 %v45, %v80
  %v114 = vmul.f32 %v46, %v80
  %v115 = vmul.f32 %v47, %v80
  %v116 = vmul.f32 %v48, %v80
  %v117 = vmul.f32 %v49, %v80
  %v118 = vmul.f32 %v50, %v80
  %v119 = vmul.f32 %v51, %v80
  %v120 = vmul.f32 %v52, %v80
  %v121 = vmul.f32 %v53, %v80
  %v122 = vmul.f32 %v54, %v80
  %v123 = vmul.f32 %v55, %v80
  %v124 = vmul.f32 %v56, %v80
  %v125 = vmul.f32 %v57, %v80
  %v126 = vmul.f32 %v58, %v80
  %v127 = vmul.f32 %v59, %v80
  %v128 = vmul.f32 %v60, %v80
  %v129 = vmul.f32 %v61, %v80
  %v130 = vmul.f32 %v62, %v80
  %v131 = vmul.f32 %v63, %v80
  %v132 = vmul.f32 %v64, %v80
  %v133 = vmul.f32 %v65, %v80
  %v134 = vmul.f32 %v66, %v80
  %v135 = vmul.f32 %v67, %v80
  %v136 = vmul.f32 %v68, %v80
  %v137 = vmul.f32 %v69, %v80
  %v138 = vmul.f32 %v70, %v80
  %v139 = vmul.f32 %v71, %v80
  %v140 = vmul.f32 %v72, %v80
  %v141 = vmul.f32 %v73, %v80
  %v142 = vmul.f32 %v74, %v80
  %v143 = vmul.f32 %v75, %v80
  %v144 = vmul.f32 %v76, %v80
  %v145 = vmul.f32 %v77, %v80
  %v146 = vld [vmem:[%s2] sm:$0x1]
  %v148 = vperm.slane %v146, 0
  %v150 = vadd.f32 %v82, %v148
  %v151 = vadd.f32 %v83, %v148
  %v152 = vadd.f32 %v84, %v148
  %v153 = vadd.f32 %v85, %v148
  %v154 = vadd.f32 %v86, %v148
  %v155 = vadd.f32 %v87, %v148
  %v156 = vadd.f32 %v88, %v148
  %v157 = vadd.f32 %v89, %v148
  %v158 = vadd.f32 %v90, %v148
  %v159 = vadd.f32 %v91, %v148
  %v160 = vadd.f32 %v92, %v148
  %v161 = vadd.f32 %v93, %v148
  %v162 = vadd.f32 %v94, %v148
  %v163 = vadd.f32 %v95, %v148
  %v164 = vadd.f32 %v96, %v148
  %v165 = vadd.f32 %v97, %v148
  %v166 = vadd.f32 %v98, %v148
  %v167 = vadd.f32 %v99, %v148
  %v168 = vadd.f32 %v100, %v148
  %v169 = vadd.f32 %v101, %v148
  %v170 = vadd.f32 %v102, %v148
  %v171 = vadd.f32 %v103, %v148
  %v172 = vadd.f32 %v104, %v148
  %v173 = vadd.f32 %v105, %v148
  %v174 = vadd.f32 %v106, %v148
  %v175 = vadd.f32 %v107, %v148
  %v176 = vadd.f32 %v108, %v148
  %v177 = vadd.f32 %v109, %v148
  %v178 = vadd.f32 %v110, %v148
  %v179 = vadd.f32 %v111, %v148
  %v180 = vadd.f32 %v112, %v148
  %v181 = vadd.f32 %v113, %v148
  %v182 = vadd.f32 %v114, %v148
  %v183 = vadd.f32 %v115, %v148
  %v184 = vadd.f32 %v116, %v148
  %v185 = vadd.f32 %v117, %v148
  %v186 = vadd.f32 %v118, %v148
  %v187 = vadd.f32 %v119, %v148
  %v188 = vadd.f32 %v120, %v148
  %v189 = vadd.f32 %v121, %v148
  %v190 = vadd.f32 %v122, %v148
  %v191 = vadd.f32 %v123, %v148
  %v192 = vadd.f32 %v124, %v148
  %v193 = vadd.f32 %v125, %v148
  %v194 = vadd.f32 %v126, %v148
  %v195 = vadd.f32 %v127, %v148
  %v196 = vadd.f32 %v128, %v148
  %v197 = vadd.f32 %v129, %v148
  %v198 = vadd.f32 %v130, %v148
  %v199 = vadd.f32 %v131, %v148
  %v200 = vadd.f32 %v132, %v148
  %v201 = vadd.f32 %v133, %v148
  %v202 = vadd.f32 %v134, %v148
  %v203 = vadd.f32 %v135, %v148
  %v204 = vadd.f32 %v136, %v148
  %v205 = vadd.f32 %v137, %v148
  %v206 = vadd.f32 %v138, %v148
  %v207 = vadd.f32 %v139, %v148
  %v208 = vadd.f32 %v140, %v148
  %v209 = vadd.f32 %v141, %v148
  %v210 = vadd.f32 %v142, %v148
  %v211 = vadd.f32 %v143, %v148
  %v212 = vadd.f32 %v144, %v148
  %v213 = vadd.f32 %v145, %v148
  %214 = vst [vmem:[%s3] sm:$0xff] %v150
  %215 = vst [vmem:[%s3 + $0x8] sm:$0xff] %v151
  %216 = vst [vmem:[%s3 + $0x10] sm:$0xff] %v152
  %217 = vst [vmem:[%s3 + $0x18] sm:$0xff] %v153
  %218 = vst [vmem:[%s3 + $0x20] sm:$0xff] %v154
  %219 = vst [vmem:[%s3 + $0x28] sm:$0xff] %v155
  %220 = vst [vmem:[%s3 + $0x30] sm:$0xff] %v156
  %221 = vst [vmem:[%s3 + $0x38] sm:$0xff] %v157
  %222 = vst [vmem:[%s3 + $0x40] sm:$0xff] %v158
  %223 = vst [vmem:[%s3 + $0x48] sm:$0xff] %v159
  %224 = vst [vmem:[%s3 + $0x50] sm:$0xff] %v160
  %225 = vst [vmem:[%s3 + $0x58] sm:$0xff] %v161
  %226 = vst [vmem:[%s3 + $0x60] sm:$0xff] %v162
  %227 = vst [vmem:[%s3 + $0x68] sm:$0xff] %v163
  %228 = vst [vmem:[%s3 + $0x70] sm:$0xff] %v164
  %229 = vst [vmem:[%s3 + $0x78] sm:$0xff] %v165
  %230 = vst [vmem:[%s3 + $0x80] sm:$0xff] %v166
  %231 = vst [vmem:[%s3 + $0x88] sm:$0xff] %v167
  %232 = vst [vmem:[%s3 + $0x90] sm:$0xff] %v168
  %233 = vst [vmem:[%s3 + $0x98] sm:$0xff] %v169
  %234 = vst [vmem:[%s3 + $0xa0] sm:$0xff] %v170
  %235 = vst [vmem:[%s3 + $0xa8] sm:$0xff] %v171
  %236 = vst [vmem:[%s3 + $0xb0] sm:$0xff] %v172
  %237 = vst [vmem:[%s3 + $0xb8] sm:$0xff] %v173
  %238 = vst [vmem:[%s3 + $0xc0] sm:$0xff] %v174
  %239 = vst [vmem:[%s3 + $0xc8] sm:$0xff] %v175
  %240 = vst [vmem:[%s3 + $0xd0] sm:$0xff] %v176
  %241 = vst [vmem:[%s3 + $0xd8] sm:$0xff] %v177
  %242 = vst [vmem:[%s3 + $0xe0] sm:$0xff] %v178
  %243 = vst [vmem:[%s3 + $0xe8] sm:$0xff] %v179
  %244 = vst [vmem:[%s3 + $0xf0] sm:$0xff] %v180
  %245 = vst [vmem:[%s3 + $0xf8] sm:$0xff] %v181
  %246 = vst [vmem:[%s3 + $0x100] sm:$0xff] %v182
  %247 = vst [vmem:[%s3 + $0x108] sm:$0xff] %v183
  %248 = vst [vmem:[%s3 + $0x110] sm:$0xff] %v184
  %249 = vst [vmem:[%s3 + $0x118] sm:$0xff] %v185
  %250 = vst [vmem:[%s3 + $0x120] sm:$0xff] %v186
  %251 = vst [vmem:[%s3 + $0x128] sm:$0xff] %v187
  %252 = vst [vmem:[%s3 + $0x130] sm:$0xff] %v188
  %253 = vst [vmem:[%s3 + $0x138] sm:$0xff] %v189
  %254 = vst [vmem:[%s3 + $0x140] sm:$0xff] %v190
  %255 = vst [vmem:[%s3 + $0x148] sm:$0xff] %v191
  %256 = vst [vmem:[%s3 + $0x150] sm:$0xff] %v192
  %257 = vst [vmem:[%s3 + $0x158] sm:$0xff] %v193
  %258 = vst [vmem:[%s3 + $0x160] sm:$0xff] %v194
  %259 = vst [vmem:[%s3 + $0x168] sm:$0xff] %v195
  %260 = vst [vmem:[%s3 + $0x170] sm:$0xff] %v196
  %261 = vst [vmem:[%s3 + $0x178] sm:$0xff] %v197
  %262 = vst [vmem:[%s3 + $0x180] sm:$0xff] %v198
  %263 = vst [vmem:[%s3 + $0x188] sm:$0xff] %v199
  %264 = vst [vmem:[%s3 + $0x190] sm:$0xff] %v200
  %265 = vst [vmem:[%s3 + $0x198] sm:$0xff] %v201
  %266 = vst [vmem:[%s3 + $0x1a0] sm:$0xff] %v202
  %267 = vst [vmem:[%s3 + $0x1a8] sm:$0xff] %v203
  %268 = vst [vmem:[%s3 + $0x1b0] sm:$0xff] %v204
  %269 = vst [vmem:[%s3 + $0x1b8] sm:$0xff] %v205
  %270 = vst [vmem:[%s3 + $0x1c0] sm:$0xff] %v206
  %271 = vst [vmem:[%s3 + $0x1c8] sm:$0xff] %v207
  %272 = vst [vmem:[%s3 + $0x1d0] sm:$0xff] %v208
  %273 = vst [vmem:[%s3 + $0x1d8] sm:$0xff] %v209
  %274 = vst [vmem:[%s3 + $0x1e0] sm:$0xff] %v210
  %275 = vst [vmem:[%s3 + $0x1e8] sm:$0xff] %v211
  %276 = vst [vmem:[%s3 + $0x1f0] sm:$0xff] %v212
  %277 = vst [vmem:[%s3 + $0x1f8] sm:$0xff] %v213
  // Predicated region
  $region14: #{residual_block_forward.5} parent=0 // pred_check
    _
  $region15: #{residual_block_forward.5} parent=0 // pred_check_branch
    %279 = sbr.rel (0) target = $region17
  $region16: #{residual_block_forward.5} parent=0 // pred_region
    _
  $region17: #{residual_block_forward.5} parent=0 // pred_fallthru
    _
  // Predicated region
  $region18: #{residual_block_forward.5} parent=0 // pred_check
    _
  $region19: #{residual_block_forward.5} parent=0 // pred_check_branch
    %281 = sbr.rel (0) target = $region21
  $region20: #{residual_block_forward.5} parent=0 // pred_region
    _
  $region21: #{residual_block_forward.5} parent=0 // pred_fallthru
    _

// kernel: residual_block_forward.3
$region0: #{residual_block_forward.3}
  #allocation0 [shape = 'u32[]', space=smem, size = 0x4, offset = 0x4, fixed_abs, tag = 'smem constant byte address 0x4 - core index']
  #allocation1 [shape = 'u32[72,128]{1,0:T(1,128)}', space=vmem, size = 0x9000, scoped, tag = 'internal scratch']
  #allocation2 [shape = 'bf16[18,32,128]{2,1,0:T(8,128)(2,1)}', space=vmem, size = 0x24000, scoped, tag = 'scratch operand']
  %s0 = inlined_call_operand.vmem [shape: f32[2,16,16,4], index: 0, kind: input, shape index: {}]
  %s1 = inlined_call_operand.vmem [shape: f32[1,4], index: 1, kind: input, shape index: {}]
  %s2 = inlined_call_operand.vmem [shape: f32[1,4], index: 2, kind: input, shape index: {}]
  %s3 = inlined_call_operand.vmem [shape: bf16[3,384,128], index: 3, kind: input, shape index: {}]
  %s4 = inlined_call_operand.vmem [shape: bf16[2,16,16,128], index: 4, kind: output, shape index: {0}]
  %s5 = inlined_call_operand.vmem [shape: f32[2,2,128], index: 5, kind: output, shape index: {1}]
  %6 = xla_tuple %s4, %s5
  %s7 = sld [smem:[#allocation0]]
  $region57: #{residual_block_forward.3} parent=0
    _
  %s9 = ssub.s32 1, %s7
  %s10 = scalar_select 0, %s9, %s7
  loop: start=0, step=1, limit=4
  $region2: #{residual_block_forward.3} parent=0 // loop_pre_header
    _
  $region3: #{residual_block_forward.3} parent=0 // loop_header
    %s12 = sphi 0, %s16
    %p13 = scmp.ge.s32.totalorder %s12, 4
    %s22 = sphi 0, %s24
    %s25 = sphi 0, %s22
    %s26 = sphi 0, %s25
    %s42 = sphi 0, %s26
    %s46 = sphi 0, %s46
    %s48 = sphi 0, %s46
    %s49 = sphi 0, %s48
    %s63 = sphi 0, %s49
    %s67 = sphi 0, %s67
    %s69 = sphi 0, %s67
    %s70 = sphi 0, %s69
    %s84 = sphi 0, %s70
    %s88 = sphi 0, %s88
    %s90 = sphi 0, %s88
    %s91 = sphi 0, %s90
    %s105 = sphi 0, %s91
    %s111 = sphi 0, %s113
    %s114 = sphi 0, %s111
    %s115 = sphi 0, %s114
    %s131 = sphi 0, %s115
    %s137 = sphi 0, %s139
    %s140 = sphi 0, %s137
    %s141 = sphi 0, %s140
    %s157 = sphi 0, %s141
  $region4: #{residual_block_forward.3} parent=0 // loop_header_branch
    %15 = sbr.rel (%p13) target = $region8
  $region5: #{residual_block_forward.3} parent=0 // loop_body
    %s17 = ssub.s32 %s12, 1
    %s18 = ssub.s32 %s12, 2
    %s19 = sadd.s32 %s12, 1
    %s20 = ssub.s32 %s12, %s19
    %p21 = scmp.eq.s32.totalorder %s20, 0
    %s23 = sadd.s32 %s22, 1
    %s24 = scalar_select %p21, %s22, %s23
    %p27 = pneg %p21
    %p28 = scmp.eq.s32.totalorder %s12, 1
    %p29 = por %p27, %p28
    %p30 = scmp.ne.s32.totalorder %s22, %s25
    %p31 = scmp.eq.s32.totalorder %s12, 0
    %p32 = por %p30, %p31
    %p33 = scmp.ne.s32.totalorder %s22, %s25
    %p34 = scmp.eq.s32.totalorder %s17, 1
    %p35 = por %p33, %p34
    %p36 = scmp.ne.s32.totalorder %s25, %s26
    %p37 = scmp.eq.s32.totalorder %s17, 0
    %p38 = por %p36, %p37
    %p39 = scmp.ne.s32.totalorder %s25, %s26
    %p40 = scmp.eq.s32.totalorder %s18, 1
    %p41 = por %p39, %p40
    %p43 = scmp.ne.s32.totalorder %s26, %s42
    %p44 = scmp.eq.s32.totalorder %s18, 0
    %p45 = por %p43, %p44
    %s47 = sadd.s32 %s46, 1
    %p50 = scmp.eq.s32.totalorder %s12, 1
    %p51 = scmp.ne.s32.totalorder %s46, %s48
    %p52 = scmp.eq.s32.totalorder %s12, 0
    %p53 = por %p51, %p52
    %p54 = scmp.ne.s32.totalorder %s46, %s48
    %p55 = scmp.eq.s32.totalorder %s17, 1
    %p56 = por %p54, %p55
    %p57 = scmp.ne.s32.totalorder %s48, %s49
    %p58 = scmp.eq.s32.totalorder %s17, 0
    %p59 = por %p57, %p58
    %p60 = scmp.ne.s32.totalorder %s48, %s49
    %p61 = scmp.eq.s32.totalorder %s18, 1
    %p62 = por %p60, %p61
    %p64 = scmp.ne.s32.totalorder %s49, %s63
    %p65 = scmp.eq.s32.totalorder %s18, 0
    %p66 = por %p64, %p65
    %s68 = sadd.s32 %s67, 1
    %p71 = scmp.eq.s32.totalorder %s12, 1
    %p72 = scmp.ne.s32.totalorder %s67, %s69
    %p73 = scmp.eq.s32.totalorder %s12, 0
    %p74 = por %p72, %p73
    %p75 = scmp.ne.s32.totalorder %s67, %s69
    %p76 = scmp.eq.s32.totalorder %s17, 1
    %p77 = por %p75, %p76
    %p78 = scmp.ne.s32.totalorder %s69, %s70
    %p79 = scmp.eq.s32.totalorder %s17, 0
    %p80 = por %p78, %p79
    %p81 = scmp.ne.s32.totalorder %s69, %s70
    %p82 = scmp.eq.s32.totalorder %s18, 1
    %p83 = por %p81, %p82
    %p85 = scmp.ne.s32.totalorder %s70, %s84
    %p86 = scmp.eq.s32.totalorder %s18, 0
    %p87 = por %p85, %p86
    %s89 = sadd.s32 %s88, 1
    %p92 = scmp.eq.s32.totalorder %s12, 1
    %p93 = scmp.ne.s32.totalorder %s88, %s90
    %p94 = scmp.eq.s32.totalorder %s12, 0
    %p95 = por %p93, %p94
    %p96 = scmp.ne.s32.totalorder %s88, %s90
    %p97 = scmp.eq.s32.totalorder %s17, 1
    %p98 = por %p96, %p97
    %p99 = scmp.ne.s32.totalorder %s90, %s91
    %p100 = scmp.eq.s32.totalorder %s17, 0
    %p101 = por %p99, %p100
    %p102 = scmp.ne.s32.totalorder %s90, %s91
    %p103 = scmp.eq.s32.totalorder %s18, 1
    %p104 = por %p102, %p103
    %p106 = scmp.ne.s32.totalorder %s91, %s105
    %p107 = scmp.eq.s32.totalorder %s18, 0
    %p108 = por %p106, %p107
    %s109 = ssub.s32 %s12, %s19
    %p110 = scmp.eq.s32.totalorder %s109, 0
    %s112 = sadd.s32 %s111, 1
    %s113 = scalar_select %p110, %s111, %s112
    %p116 = pneg %p110
    %p117 = scmp.eq.s32.totalorder %s12, 1
    %p118 = por %p116, %p117
    %p119 = scmp.ne.s32.totalorder %s111, %s114
    %p120 = scmp.eq.s32.totalorder %s12, 0
    %p121 = por %p119, %p120
    %p122 = scmp.ne.s32.totalorder %s111, %s114
    %p123 = scmp.eq.s32.totalorder %s17, 1
    %p124 = por %p122, %p123
    %p125 = scmp.ne.s32.totalorder %s114, %s115
    %p126 = scmp.eq.s32.totalorder %s17, 0
    %p127 = por %p125, %p126
    %p128 = scmp.ne.s32.totalorder %s114, %s115
    %p129 = scmp.eq.s32.totalorder %s18, 1
    %p130 = por %p128, %p129
    %p132 = scmp.ne.s32.totalorder %s115, %s131
    %p133 = scmp.eq.s32.totalorder %s18, 0
    %p134 = por %p132, %p133
    %s135 = ssub.s32 %s12, %s19
    %p136 = scmp.eq.s32.totalorder %s135, 0
    %s138 = sadd.s32 %s137, 1
    %s139 = scalar_select %p136, %s137, %s138
    %p142 = pneg %p136
    %p143 = scmp.eq.s32.totalorder %s12, 1
    %p144 = por %p142, %p143
    %p145 = scmp.ne.s32.totalorder %s137, %s140
    %p146 = scmp.eq.s32.totalorder %s12, 0
    %p147 = por %p145, %p146
    %p148 = scmp.ne.s32.totalorder %s137, %s140
    %p149 = scmp.eq.s32.totalorder %s17, 1
    %p150 = por %p148, %p149
    %p151 = scmp.ne.s32.totalorder %s140, %s141
    %p152 = scmp.eq.s32.totalorder %s17, 0
    %p153 = por %p151, %p152
    %p154 = scmp.ne.s32.totalorder %s140, %s141
    %p155 = scmp.eq.s32.totalorder %s18, 1
    %p156 = por %p154, %p155
    %p158 = scmp.ne.s32.totalorder %s141, %s157
    %p159 = scmp.eq.s32.totalorder %s18, 0
    %p160 = por %p158, %p159
    %p161 = scmp.le.s32.totalorder 1, %s12
    %p162 = scmp.lt.s32.totalorder %s12, 3
    %p163 = pnand %p161, %p162
    %p164 = pneg %p163
    // Predicated region
    $region9: #{residual_block_forward.3} parent=5 // pred_check
      _
    $region10: #{residual_block_forward.3} parent=5 // pred_check_branch
      %166 = sbr.rel (%p163) target = $region12
    $region11: #{residual_block_forward.3} parent=5 // pred_region
      %s167 = ssub.s32 %s12, 1
      // Predicated region
      $region13: #{residual_block_forward.3} parent=11 // pred_check
        %p168 = pneg %p59
      $region14: #{residual_block_forward.3} parent=11 // pred_check_branch
        %170 = sbr.rel (%p168) target = $region16
      $region15: #{residual_block_forward.3} parent=11 // pred_region
        _
      $region16: #{residual_block_forward.3} parent=11 // pred_fallthru
        _
      // Predicated region
      $region17: #{residual_block_forward.3} parent=11 // pred_check
        %p171 = pneg %p80
      $region18: #{residual_block_forward.3} parent=11 // pred_check_branch
        %173 = sbr.rel (%p171) target = $region20
      $region19: #{residual_block_forward.3} parent=11 // pred_region
        _
      $region20: #{residual_block_forward.3} parent=11 // pred_fallthru
        _
      // Predicated region
      $region21: #{residual_block_forward.3} parent=11 // pred_check
        %p174 = pneg %p101
      $region22: #{residual_block_forward.3} parent=11 // pred_check_branch
        %176 = sbr.rel (%p174) target = $region24
      $region23: #{residual_block_forward.3} parent=11 // pred_region
        _
      $region24: #{residual_block_forward.3} parent=11 // pred_fallthru
        _
    $region12: #{residual_block_forward.3} parent=5 // pred_fallthru
      _
    %p177 = scmp.lt.s32.totalorder %s12, 2
    // Predicated region
    $region25: #{residual_block_forward.3} parent=5 // pred_check
      %p178 = pneg %p177
    $region26: #{residual_block_forward.3} parent=5 // pred_check_branch
      %180 = sbr.rel (%p178) target = $region28
    $region27: #{residual_block_forward.3} parent=5 // pred_region
      // Predicated region
      $region29: #{residual_block_forward.3} parent=27 // pred_check
        %p181 = pneg %p32
      $region30: #{residual_block_forward.3} parent=27 // pred_check_branch
        %183 = sbr.rel (%p181) target = $region32
      $region31: #{residual_block_forward.3} parent=27 // pred_region
        %p184 = scmp.lt.s32.totalorder %s12, 1
        %s185 = scalar_select %p184, %s12, 1
        %s186 = smul.addr %s185, 32
        %s187 = smul.addr %s186, 8
        %s188 = scalar_lea.vmem %s0, %s187
      $region32: #{residual_block_forward.3} parent=27 // pred_fallthru
        _
    $region28: #{residual_block_forward.3} parent=5 // pred_fallthru
      _
    %p189 = scmp.le.s32.totalorder 1, %s12
    %p190 = scmp.lt.s32.totalorder %s12, 3
    %p191 = pnand %p189, %p190
    %p192 = pneg %p191
    // Predicated region
    $region33: #{residual_block_forward.3} parent=5 // pred_check
      _
    $region34: #{residual_block_forward.3} parent=5 // pred_check_branch
      %194 = sbr.rel (%p191) target = $region36
    $region35: #{residual_block_forward.3} parent=5 // pred_region
      %s195 = ssub.s32 %s12, 1
      %p196 = scmp.lt.s32.totalorder %s17, 1
      %s197 = scalar_select %p196, %s17, 1
      %s198 = smul.addr %s197, 32
      %s199 = smul.addr %s198, 8
      %s200 = scalar_lea.vmem %s0, %s199
      %p201 = pneg %p38
      %p202 = pneg %p35
      %p203 = pneg %p59
      %p204 = pneg %p56
      %p205 = pneg %p80
      %p206 = pneg %p77
      %p207 = pneg %p101
      %p208 = pneg %p98
      %p209 = pneg %p127
      %p210 = pneg %p124
      %p211 = scmp.lt.s32.totalorder %s17, 1
      %s212 = scalar_select %p211, %s17, 1
      %s213 = smul.addr %s212, 32
      %s214 = smul.addr %s213, 4
      %s215 = scalar_lea.vmem %s4, %s214
      %p216 = pneg %p153
      %p217 = pneg %p150
      %p218 = scmp.lt.s32.totalorder %s17, 1
      %s219 = scalar_select %p218, %s17, 1
      %s220 = smul.addr %s219, 2
      %s221 = scalar_lea.vmem %s5, %s220
      %p222 = scmp.lt.s32.totalorder %s17, 1
      %s223 = scalar_select %p222, %s17, 1
      %s224 = smul.addr %s223, 32
      %s225 = smul.addr %s224, 8
      %s226 = scalar_lea.vmem %s0, %s225
      %p227 = scmp.lt.s32.totalorder %s17, 1
      %s228 = scalar_select %p227, %s17, 1
      %s229 = smul.addr %s228, 32
      %s230 = smul.addr %s229, 4
      %s231 = scalar_lea.vmem %s4, %s230
      %p232 = scmp.lt.s32.totalorder %s17, 1
      %s233 = scalar_select %p232, %s17, 1
      %s234 = smul.addr %s233, 2
      %s235 = scalar_lea.vmem %s5, %s234
      %v237 = vld [vmem:[%s226] sm:$0xff]
      %v238 = vld [vmem:[%s226 + $0x8] sm:$0xff]
      %v239 = vld [vmem:[%s226 + $0x10] sm:$0xff]
      %v240 = vld [vmem:[%s226 + $0x18] sm:$0xff]
      %v241 = vld [vmem:[%s226 + $0x20] sm:$0xff]
      %v242 = vld [vmem:[%s226 + $0x28] sm:$0xff]
      %v243 = vld [vmem:[%s226 + $0x30] sm:$0xff]
      %v244 = vld [vmem:[%s226 + $0x38] sm:$0xff]
      %v245 = vld [vmem:[%s226 + $0x40] sm:$0xff]
      %v246 = vld [vmem:[%s226 + $0x48] sm:$0xff]
      %v247 = vld [vmem:[%s226 + $0x50] sm:$0xff]
      %v248 = vld [vmem:[%s226 + $0x58] sm:$0xff]
      %v249 = vld [vmem:[%s226 + $0x60] sm:$0xff]
      %v250 = vld [vmem:[%s226 + $0x68] sm:$0xff]
      %v251 = vld [vmem:[%s226 + $0x70] sm:$0xff]
      %v252 = vld [vmem:[%s226 + $0x78] sm:$0xff]
      %v253 = vld [vmem:[%s226 + $0x80] sm:$0xff]
      %v254 = vld [vmem:[%s226 + $0x88] sm:$0xff]
      %v255 = vld [vmem:[%s226 + $0x90] sm:$0xff]
      %v256 = vld [vmem:[%s226 + $0x98] sm:$0xff]
      %v257 = vld [vmem:[%s226 + $0xa0] sm:$0xff]
      %v258 = vld [vmem:[%s226 + $0xa8] sm:$0xff]
      %v259 = vld [vmem:[%s226 + $0xb0] sm:$0xff]
      %v260 = vld [vmem:[%s226 + $0xb8] sm:$0xff]
      %v261 = vld [vmem:[%s226 + $0xc0] sm:$0xff]
      %v262 = vld [vmem:[%s226 + $0xc8] sm:$0xff]
      %v263 = vld [vmem:[%s226 + $0xd0] sm:$0xff]
      %v264 = vld [vmem:[%s226 + $0xd8] sm:$0xff]
      %v265 = vld [vmem:[%s226 + $0xe0] sm:$0xff]
      %v266 = vld [vmem:[%s226 + $0xe8] sm:$0xff]
      %v267 = vld [vmem:[%s226 + $0xf0] sm:$0xff]
      %v268 = vld [vmem:[%s226 + $0xf8] sm:$0xff]
      %v269 = vld [vmem:[%s1] sm:$0x1]
      %v271 = vperm.slane %v269, 0
      %v273 = vmul.f32 %v237, %v271
      %v274 = vmul.f32 %v238, %v271
      %v275 = vmul.f32 %v239, %v271
      %v276 = vmul.f32 %v240, %v271
      %v277 = vmul.f32 %v241, %v271
      %v278 = vmul.f32 %v242, %v271
      %v279 = vmul.f32 %v243, %v271
      %v280 = vmul.f32 %v244, %v271
      %v281 = vmul.f32 %v245, %v271
      %v282 = vmul.f32 %v246, %v271
      %v283 = vmul.f32 %v247, %v271
      %v284 = vmul.f32 %v248, %v271
      %v285 = vmul.f32 %v249, %v271
      %v286 = vmul.f32 %v250, %v271
      %v287 = vmul.f32 %v251, %v271
      %v288 = vmul.f32 %v252, %v271
      %v289 = vmul.f32 %v253, %v271
      %v290 = vmul.f32 %v254, %v271
      %v291 = vmul.f32 %v255, %v271
      %v292 = vmul.f32 %v256, %v271
      %v293 = vmul.f32 %v257, %v271
      %v294 = vmul.f32 %v258, %v271
      %v295 = vmul.f32 %v259, %v271
      %v296 = vmul.f32 %v260, %v271
      %v297 = vmul.f32 %v261, %v271
      %v298 = vmul.f32 %v262, %v271
      %v299 = vmul.f32 %v263, %v271
      %v300 = vmul.f32 %v264, %v271
      %v301 = vmul.f32 %v265, %v271
      %v302 = vmul.f32 %v266, %v271
      %v303 = vmul.f32 %v267, %v271
      %v304 = vmul.f32 %v268, %v271
      %v305 = vld [vmem:[%s2] sm:$0x1]
      %v307 = vperm.slane %v305, 0
      %v309 = vadd.f32 %v273, %v307
      %v310 = vadd.f32 %v274, %v307
      %v311 = vadd.f32 %v275, %v307
      %v312 = vadd.f32 %v276, %v307
      %v313 = vadd.f32 %v277, %v307
      %v314 = vadd.f32 %v278, %v307
      %v315 = vadd.f32 %v279, %v307
      %v316 = vadd.f32 %v280, %v307
      %v317 = vadd.f32 %v281, %v307
      %v318 = vadd.f32 %v282, %v307
      %v319 = vadd.f32 %v283, %v307
      %v320 = vadd.f32 %v284, %v307
      %v321 = vadd.f32 %v285, %v307
      %v322 = vadd.f32 %v286, %v307
      %v323 = vadd.f32 %v287, %v307
      %v324 = vadd.f32 %v288, %v307
      %v325 = vadd.f32 %v289, %v307
      %v326 = vadd.f32 %v290, %v307
      %v327 = vadd.f32 %v291, %v307
      %v328 = vadd.f32 %v292, %v307
      %v329 = vadd.f32 %v293, %v307
      %v330 = vadd.f32 %v294, %v307
      %v331 = vadd.f32 %v295, %v307
      %v332 = vadd.f32 %v296, %v307
      %v333 = vadd.f32 %v297, %v307
      %v334 = vadd.f32 %v298, %v307
      %v335 = vadd.f32 %v299, %v307
      %v336 = vadd.f32 %v300, %v307
      %v337 = vadd.f32 %v301, %v307
      %v338 = vadd.f32 %v302, %v307
      %v339 = vadd.f32 %v303, %v307
      %v340 = vadd.f32 %v304, %v307
      %v341 = vpack.c.bf16 %v309, %v309
      %v342 = vpack.c.bf16 %v310, %v310
      %v343 = vpack.c.bf16 %v311, %v311
      %v344 = vpack.c.bf16 %v312, %v312
      %v345 = vpack.c.bf16 %v313, %v313
      %v346 = vpack.c.bf16 %v314, %v314
      %v347 = vpack.c.bf16 %v315, %v315
      %v348 = vpack.c.bf16 %v316, %v316
      %v349 = vpack.c.bf16 %v317, %v317
      %v350 = vpack.c.bf16 %v318, %v318
      %v351 = vpack.c.bf16 %v319, %v319
      %v352 = vpack.c.bf16 %v320, %v320
      %v353 = vpack.c.bf16 %v321, %v321
      %v354 = vpack.c.bf16 %v322, %v322
      %v355 = vpack.c.bf16 %v323, %v323
      %v356 = vpack.c.bf16 %v324, %v324
      %v357 = vpack.c.bf16 %v325, %v325
      %v358 = vpack.c.bf16 %v326, %v326
      %v359 = vpack.c.bf16 %v327, %v327
      %v360 = vpack.c.bf16 %v328, %v328
      %v361 = vpack.c.bf16 %v329, %v329
      %v362 = vpack.c.bf16 %v330, %v330
      %v363 = vpack.c.bf16 %v331, %v331
      %v364 = vpack.c.bf16 %v332, %v332
      %v365 = vpack.c.bf16 %v333, %v333
      %v366 = vpack.c.bf16 %v334, %v334
      %v367 = vpack.c.bf16 %v335, %v335
      %v368 = vpack.c.bf16 %v336, %v336
      %v369 = vpack.c.bf16 %v337, %v337
      %v370 = vpack.c.bf16 %v338, %v338
      %v371 = vpack.c.bf16 %v339, %v339
      %v372 = vpack.c.bf16 %v340, %v340
      %373 = vst [vmem:[#allocation2] sm:$0xf] 0
      %374 = vst [vmem:[#allocation2 + $0x4] sm:$0xf] 0
      %375 = vst [vmem:[#allocation2 + $0x8] sm:$0xf] 0
      %376 = vst [vmem:[#allocation2 + $0xc] sm:$0xf] 0
      %377 = vst [vmem:[#allocation2 + $0x10] sm:$0xf] 0
      %378 = vst [vmem:[#allocation2 + $0x14] sm:$0xf] 0
      %379 = vst [vmem:[#allocation2 + $0x18] sm:$0xf] 0
      %380 = vst [vmem:[#allocation2 + $0x1c] sm:$0xf] 0
      %381 = vst [vmem:[#allocation2 + $0x20] sm:$0xf] 0
      %382 = vst [vmem:[#allocation2 + $0x24] sm:$0xf] 0
      %383 = vst [vmem:[#allocation2 + $0x28] sm:$0xf] 0
      %384 = vst [vmem:[#allocation2 + $0x2c] sm:$0xf] 0
      %385 = vst [vmem:[#allocation2 + $0x30] sm:$0xf] 0
      %386 = vst [vmem:[#allocation2 + $0x34] sm:$0xf] 0
      %387 = vst [vmem:[#allocation2 + $0x38] sm:$0xf] 0
      %388 = vst [vmem:[#allocation2 + $0x3c] sm:$0xf] 0
      %389 = vst [vmem:[#allocation2 + $0x40] sm:$0xf] 0
      %390 = vst [vmem:[#allocation2 + $0x44] sm:$0xf] 0
      %391 = vst [vmem:[#allocation2 + $0x48] sm:$0xf] 0
      %392 = vst [vmem:[#allocation2 + $0x4c] sm:$0xf] 0
      %393 = vst [vmem:[#allocation2 + $0x50] sm:$0xf] 0
      %394 = vst [vmem:[#allocation2 + $0x54] sm:$0xf] 0
      %395 = vst [vmem:[#allocation2 + $0x58] sm:$0xf] 0
      %396 = vst [vmem:[#allocation2 + $0x5c] sm:$0xf] 0
      %397 = vst [vmem:[#allocation2 + $0x60] sm:$0xf] 0
      %398 = vst [vmem:[#allocation2 + $0x64] sm:$0xf] 0
      %399 = vst [vmem:[#allocation2 + $0x68] sm:$0xf] 0
      %400 = vst [vmem:[#allocation2 + $0x6c] sm:$0xf] 0
      %401 = vst [vmem:[#allocation2 + $0x70] sm:$0xf] 0
      %402 = vst [vmem:[#allocation2 + $0x74] sm:$0xf] 0
      %403 = vst [vmem:[#allocation2 + $0x78] sm:$0xf] 0
      %404 = vst [vmem:[#allocation2 + $0x7c] sm:$0xf] 0
      %405 = vst [vmem:[#allocation2 + $0x80] sm:$0xf] 0
      %406 = vst [vmem:[#allocation2 + $0x84] sm:$0xf] 0
      %407 = vst [vmem:[#allocation2 + $0x88] sm:$0xf] 0
      %408 = vst [vmem:[#allocation2 + $0x8c] sm:$0xf] 0
      %409 = vst [vmem:[#allocation2 + $0x90] sm:$0xf] 0
      %410 = vst [vmem:[#allocation2 + $0x94] sm:$0xf] 0
      %411 = vst [vmem:[#allocation2 + $0x98] sm:$0xf] 0
      %412 = vst [vmem:[#allocation2 + $0x9c] sm:$0xf] 0
      %413 = vst [vmem:[#allocation2 + $0xa0] sm:$0xf] 0
      %414 = vst [vmem:[#allocation2 + $0xa4] sm:$0xf] 0
      %415 = vst [vmem:[#allocation2 + $0xa8] sm:$0xf] 0
      %416 = vst [vmem:[#allocation2 + $0xac] sm:$0xf] 0
      %417 = vst [vmem:[#allocation2 + $0xb0] sm:$0xf] 0
      %418 = vst [vmem:[#allocation2 + $0xb4] sm:$0xf] 0
      %419 = vst [vmem:[#allocation2 + $0xb8] sm:$0xf] 0
      %420 = vst [vmem:[#allocation2 + $0xbc] sm:$0xf] 0
      %421 = vst [vmem:[#allocation2 + $0xc0] sm:$0xf] 0
      %422 = vst [vmem:[#allocation2 + $0xc4] sm:$0xf] 0
      %423 = vst [vmem:[#allocation2 + $0xc8] sm:$0xf] 0
      %424 = vst [vmem:[#allocation2 + $0xcc] sm:$0xf] 0
      %425 = vst [vmem:[#allocation2 + $0xd0] sm:$0xf] 0
      %426 = vst [vmem:[#allocation2 + $0xd4] sm:$0xf] 0
      %427 = vst [vmem:[#allocation2 + $0xd8] sm:$0xf] 0
      %428 = vst [vmem:[#allocation2 + $0xdc] sm:$0xf] 0
      %429 = vst [vmem:[#allocation2 + $0xe0] sm:$0xf] 0
      %430 = vst [vmem:[#allocation2 + $0xe4] sm:$0xf] 0
      %431 = vst [vmem:[#allocation2 + $0xe8] sm:$0xf] 0
      %432 = vst [vmem:[#allocation2 + $0xec] sm:$0xf] 0
      %433 = vst [vmem:[#allocation2 + $0xf0] sm:$0xf] 0
      %434 = vst [vmem:[#allocation2 + $0xf4] sm:$0xf] 0
      %435 = vst [vmem:[#allocation2 + $0xf8] sm:$0xf] 0
      %436 = vst [vmem:[#allocation2 + $0xfc] sm:$0xf] 0
      %437 = vst [vmem:[#allocation2 + $0x100] sm:$0xf] 0
      %438 = vst [vmem:[#allocation2 + $0x104] sm:$0xf] 0
      %439 = vst [vmem:[#allocation2 + $0x108] sm:$0xf] 0
      %440 = vst [vmem:[#allocation2 + $0x10c] sm:$0xf] 0
      %441 = vst [vmem:[#allocation2 + $0x110] sm:$0xf] 0
      %442 = vst [vmem:[#allocation2 + $0x114] sm:$0xf] 0
      %443 = vst [vmem:[#allocation2 + $0x118] sm:$0xf] 0
      %444 = vst [vmem:[#allocation2 + $0x11c] sm:$0xf] 0
      %s445 = scalar_lea.vmem [#allocation2], 16
      %vm446 = vcmask 27648
      %447 = vst.msk [vmem:[%s445 + $0x4] sm:$0xf] %vm446, %v341
      %448 = vst.msk [vmem:[%s445 + $0x8] sm:$0xf] %vm446, %v342
      %449 = vst.msk [vmem:[%s445 + $0x14] sm:$0xf] %vm446, %v343
      %450 = vst.msk [vmem:[%s445 + $0x18] sm:$0xf] %vm446, %v344
      %451 = vst.msk [vmem:[%s445 + $0x24] sm:$0xf] %vm446, %v345
      %452 = vst.msk [vmem:[%s445 + $0x28] sm:$0xf] %vm446, %v346
      %453 = vst.msk [vmem:[%s445 + $0x34] sm:$0xf] %vm446, %v347
      %454 = vst.msk [vmem:[%s445 + $0x38] sm:$0xf] %vm446, %v348
      %455 = vst.msk [vmem:[%s445 + $0x44] sm:$0xf] %vm446, %v349
      %456 = vst.msk [vmem:[%s445 + $0x48] sm:$0xf] %vm446, %v350
      %457 = vst.msk [vmem:[%s445 + $0x54] sm:$0xf] %vm446, %v351
      %458 = vst.msk [vmem:[%s445 + $0x58] sm:$0xf] %vm446, %v352
      %459 = vst.msk [vmem:[%s445 + $0x64] sm:$0xf] %vm446, %v353
      %460 = vst.msk [vmem:[%s445 + $0x68] sm:$0xf] %vm446, %v354
      %461 = vst.msk [vmem:[%s445 + $0x74] sm:$0xf] %vm446, %v355
      %462 = vst.msk [vmem:[%s445 + $0x78] sm:$0xf] %vm446, %v356
      %463 = vst.msk [vmem:[%s445 + $0x84] sm:$0xf] %vm446, %v357
      %464 = vst.msk [vmem:[%s445 + $0x88] sm:$0xf] %vm446, %v358
      %465 = vst.msk [vmem:[%s445 + $0x94] sm:$0xf] %vm446, %v359
      %466 = vst.msk [vmem:[%s445 + $0x98] sm:$0xf] %vm446, %v360
      %467 = vst.msk [vmem:[%s445 + $0xa4] sm:$0xf] %vm446, %v361
      %468 = vst.msk [vmem:[%s445 + $0xa8] sm:$0xf] %vm446, %v362
      %469 = vst.msk [vmem:[%s445 + $0xb4] sm:$0xf] %vm446, %v363
      %470 = vst.msk [vmem:[%s445 + $0xb8] sm:$0xf] %vm446, %v364
      %471 = vst.msk [vmem:[%s445 + $0xc4] sm:$0xf] %vm446, %v365
      %472 = vst.msk [vmem:[%s445 + $0xc8] sm:$0xf] %vm446, %v366
      %473 = vst.msk [vmem:[%s445 + $0xd4] sm:$0xf] %vm446, %v367
      %474 = vst.msk [vmem:[%s445 + $0xd8] sm:$0xf] %vm446, %v368
      %475 = vst.msk [vmem:[%s445 + $0xe4] sm:$0xf] %vm446, %v369
      %476 = vst.msk [vmem:[%s445 + $0xe8] sm:$0xf] %vm446, %v370
      %477 = vst.msk [vmem:[%s445 + $0xf4] sm:$0xf] %vm446, %v371
      %478 = vst.msk [vmem:[%s445 + $0xf8] sm:$0xf] %vm446, %v372
      %v479 = vld [vmem:[#allocation2] sm:$0xf]
      %v480 = vld [vmem:[#allocation2 + $0x4] sm:$0xf]
      %v481 = vld [vmem:[#allocation2 + $0x8] sm:$0xf]
      %v482 = vld [vmem:[#allocation2 + $0xc] sm:$0xf]
      %v483 = vld [vmem:[#allocation2 + $0x10] sm:$0xf]
      %v484 = vld [vmem:[#allocation2 + $0x14] sm:$0xf]
      %v485 = vld [vmem:[#allocation2 + $0x18] sm:$0xf]
      %v486 = vld [vmem:[#allocation2 + $0x1c] sm:$0xf]
      %v487 = vld [vmem:[#allocation2 + $0x20] sm:$0xf]
      %v488 = vld [vmem:[#allocation2 + $0x24] sm:$0xf]
      %v489 = vld [vmem:[#allocation2 + $0x28] sm:$0xf]
      %v490 = vld [vmem:[#allocation2 + $0x2c] sm:$0xf]
      %v491 = vld [vmem:[#allocation2 + $0x30] sm:$0xf]
      %v492 = vld [vmem:[#allocation2 + $0x34] sm:$0xf]
      %v493 = vld [vmem:[#allocation2 + $0x38] sm:$0xf]
      %v494 = vld [vmem:[#allocation2 + $0x3c] sm:$0xf]
      %v495 = vld [vmem:[#allocation2 + $0x40] sm:$0xf]
      %v496 = vld [vmem:[#allocation2 + $0x44] sm:$0xf]
      %v497 = vld [vmem:[#allocation2 + $0x48] sm:$0xf]
      %v498 = vld [vmem:[#allocation2 + $0x4c] sm:$0xf]
      %v499 = vld [vmem:[#allocation2 + $0x50] sm:$0xf]
      %v500 = vld [vmem:[#allocation2 + $0x54] sm:$0xf]
      %v501 = vld [vmem:[#allocation2 + $0x58] sm:$0xf]
      %v502 = vld [vmem:[#allocation2 + $0x5c] sm:$0xf]
      %v503 = vld [vmem:[#allocation2 + $0x60] sm:$0xf]
      %v504 = vld [vmem:[#allocation2 + $0x64] sm:$0xf]
      %v505 = vld [vmem:[#allocation2 + $0x68] sm:$0xf]
      %v506 = vld [vmem:[#allocation2 + $0x6c] sm:$0xf]
      %v507 = vld [vmem:[#allocation2 + $0x70] sm:$0xf]
      %v508 = vld [vmem:[#allocation2 + $0x74] sm:$0xf]
      %v509 = vld [vmem:[#allocation2 + $0x78] sm:$0xf]
      %v510 = vld [vmem:[#allocation2 + $0x7c] sm:$0xf]
      %v511 = vld [vmem:[#allocation2 + $0x80] sm:$0xf]
      %v512 = vld [vmem:[#allocation2 + $0x84] sm:$0xf]
      %v513 = vld [vmem:[#allocation2 + $0x88] sm:$0xf]
      %v514 = vld [vmem:[#allocation2 + $0x8c] sm:$0xf]
      %v515 = vld [vmem:[#allocation2 + $0x90] sm:$0xf]
      %v516 = vld [vmem:[#allocation2 + $0x94] sm:$0xf]
      %v517 = vld [vmem:[#allocation2 + $0x98] sm:$0xf]
      %v518 = vld [vmem:[#allocation2 + $0x9c] sm:$0xf]
      %v519 = vld [vmem:[#allocation2 + $0xa0] sm:$0xf]
      %v520 = vld [vmem:[#allocation2 + $0xa4] sm:$0xf]
      %v521 = vld [vmem:[#allocation2 + $0xa8] sm:$0xf]
      %v522 = vld [vmem:[#allocation2 + $0xac] sm:$0xf]
      %v523 = vld [vmem:[#allocation2 + $0xb0] sm:$0xf]
      %v524 = vld [vmem:[#allocation2 + $0xb4] sm:$0xf]
      %v525 = vld [vmem:[#allocation2 + $0xb8] sm:$0xf]
      %v526 = vld [vmem:[#allocation2 + $0xbc] sm:$0xf]
      %v527 = vld [vmem:[#allocation2 + $0xc0] sm:$0xf]
      %v528 = vld [vmem:[#allocation2 + $0xc4] sm:$0xf]
      %v529 = vld [vmem:[#allocation2 + $0xc8] sm:$0xf]
      %v530 = vld [vmem:[#allocation2 + $0xcc] sm:$0xf]
      %v531 = vld [vmem:[#allocation2 + $0xd0] sm:$0xf]
      %v532 = vld [vmem:[#allocation2 + $0xd4] sm:$0xf]
      %v533 = vld [vmem:[#allocation2 + $0xd8] sm:$0xf]
      %v534 = vld [vmem:[#allocation2 + $0xdc] sm:$0xf]
      %v535 = vld [vmem:[#allocation2 + $0xe0] sm:$0xf]
      %v536 = vld [vmem:[#allocation2 + $0xe4] sm:$0xf]
      %v537 = vld [vmem:[#allocation2 + $0xe8] sm:$0xf]
      %v538 = vld [vmem:[#allocation2 + $0xec] sm:$0xf]
      %v539 = vld [vmem:[#allocation2 + $0xf0] sm:$0xf]
      %v540 = vld [vmem:[#allocation2 + $0xf4] sm:$0xf]
      %v541 = vld [vmem:[#allocation2 + $0xf8] sm:$0xf]
      %v542 = vld [vmem:[#allocation2 + $0xfc] sm:$0xf]
      %v591 = vunpack.c.l.b16 %v479
      %v592 = vunpack.c.l.b16 %v480
      %v593 = vunpack.c.l.b16 %v481
      %v594 = vunpack.c.l.b16 %v483
      %v595 = vunpack.c.l.b16 %v484
      %v596 = vunpack.c.l.b16 %v485
      %v597 = vunpack.c.l.b16 %v487
      %v598 = vunpack.c.l.b16 %v488
      %v599 = vunpack.c.l.b16 %v489
      %v600 = vunpack.c.l.b16 %v491
      %v601 = vunpack.c.l.b16 %v492
      %v602 = vunpack.c.l.b16 %v493
      %v603 = vunpack.c.l.b16 %v495
      %v604 = vunpack.c.l.b16 %v496
      %v605 = vunpack.c.l.b16 %v497
      %v606 = vunpack.c.l.b16 %v499
      %v607 = vunpack.c.l.b16 %v500
      %v608 = vunpack.c.l.b16 %v501
      %v609 = vunpack.c.l.b16 %v503
      %v610 = vunpack.c.l.b16 %v504
      %v611 = vunpack.c.l.b16 %v505
      %v612 = vunpack.c.l.b16 %v507
      %v613 = vunpack.c.l.b16 %v508
      %v614 = vunpack.c.l.b16 %v509
      %v615 = vunpack.c.l.b16 %v511
      %v616 = vunpack.c.l.b16 %v512
      %v617 = vunpack.c.l.b16 %v513
      %v618 = vunpack.c.l.b16 %v515
      %v619 = vunpack.c.l.b16 %v516
      %v620 = vunpack.c.l.b16 %v517
      %v621 = vunpack.c.l.b16 %v519
      %v622 = vunpack.c.l.b16 %v520
      %v623 = vunpack.c.l.b16 %v521
      %v624 = vunpack.c.l.b16 %v523
      %v625 = vunpack.c.l.b16 %v524
      %v626 = vunpack.c.l.b16 %v525
      %v627 = vunpack.c.l.b16 %v527
      %v628 = vunpack.c.l.b16 %v528
      %v629 = vunpack.c.l.b16 %v529
      %v630 = vunpack.c.l.b16 %v531
      %v631 = vunpack.c.l.b16 %v532
      %v632 = vunpack.c.l.b16 %v533
      %v633 = vunpack.c.l.b16 %v535
      %v634 = vunpack.c.l.b16 %v536
      %v635 = vunpack.c.l.b16 %v537
      %v636 = vunpack.c.l.b16 %v539
      %v637 = vunpack.c.l.b16 %v540
      %v638 = vunpack.c.l.b16 %v541
      %v639 = vpack.c.b16 %v592, %v591
      %v640 = vpack.c.b16 %v593, %v593
      %v641 = vpack.c.b16 %v595, %v594
      %v642 = vpack.c.b16 %v596, %v596
      %v643 = vpack.c.b16 %v598, %v597
      %v644 = vpack.c.b16 %v599, %v599
      %v645 = vpack.c.b16 %v601, %v600
      %v646 = vpack.c.b16 %v602, %v602
      %v647 = vpack.c.b16 %v604, %v603
      %v648 = vpack.c.b16 %v605, %v605
      %v649 = vpack.c.b16 %v607, %v606
      %v650 = vpack.c.b16 %v608, %v608
      %v651 = vpack.c.b16 %v610, %v609
      %v652 = vpack.c.b16 %v611, %v611
      %v653 = vpack.c.b16 %v613, %v612
      %v654 = vpack.c.b16 %v614, %v614
      %v655 = vpack.c.b16 %v616, %v615
      %v656 = vpack.c.b16 %v617, %v617
      %v657 = vpack.c.b16 %v619, %v618
      %v658 = vpack.c.b16 %v620, %v620
      %v659 = vpack.c.b16 %v622, %v621
      %v660 = vpack.c.b16 %v623, %v623
      %v661 = vpack.c.b16 %v625, %v624
      %v662 = vpack.c.b16 %v626, %v626
      %v663 = vpack.c.b16 %v628, %v627
      %v664 = vpack.c.b16 %v629, %v629
      %v665 = vpack.c.b16 %v631, %v630
      %v666 = vpack.c.b16 %v632, %v632
      %v667 = vpack.c.b16 %v634, %v633
      %v668 = vpack.c.b16 %v635, %v635
      %v669 = vpack.c.b16 %v637, %v636
      %v670 = vpack.c.b16 %v638, %v638
      %v671 = vpack.c.b16 %v593, %v592
      %v672 = vpack.c.b16 %v596, %v595
      %v673 = vpack.c.b16 %v599, %v598
      %v674 = vpack.c.b16 %v602, %v601
      %v675 = vpack.c.b16 %v605, %v604
      %v676 = vpack.c.b16 %v608, %v607
      %v677 = vpack.c.b16 %v611, %v610
      %v678 = vpack.c.b16 %v614, %v613
      %v679 = vpack.c.b16 %v617, %v616
      %v680 = vpack.c.b16 %v620, %v619
      %v681 = vpack.c.b16 %v623, %v622
      %v682 = vpack.c.b16 %v626, %v625
      %v683 = vpack.c.b16 %v629, %v628
      %v684 = vpack.c.b16 %v632, %v631
      %v685 = vpack.c.b16 %v635, %v634
      %v686 = vpack.c.b16 %v638, %v637
      %v688 = vshrl.u32 %v671, 16
      %v690 = vrot.slane %v688, 4
      %v691 = vshll.u32 %v671, 16
      %v693 = vrot.slane %v691, 5
      %v694 = vor.u32 %v690, %v693
      %v696 = vshrl.u32 %v672, 16
      %v698 = vrot.slane %v696, 4
      %v699 = vshll.u32 %v672, 16
      %v701 = vrot.slane %v699, 5
      %v702 = vor.u32 %v698, %v701
      %v704 = vshrl.u32 %v673, 16
      %v706 = vrot.slane %v704, 4
      %v707 = vshll.u32 %v673, 16
      %v709 = vrot.slane %v707, 5
      %v710 = vor.u32 %v706, %v709
      %v712 = vshrl.u32 %v674, 16
      %v714 = vrot.slane %v712, 4
      %v715 = vshll.u32 %v674, 16
      %v717 = vrot.slane %v715, 5
      %v718 = vor.u32 %v714, %v717
      %v720 = vshrl.u32 %v675, 16
      %v722 = vrot.slane %v720, 4
      %v723 = vshll.u32 %v675, 16
      %v725 = vrot.slane %v723, 5
      %v726 = vor.u32 %v722, %v725
      %v728 = vshrl.u32 %v676, 16
      %v730 = vrot.slane %v728, 4
      %v731 = vshll.u32 %v676, 16
      %v733 = vrot.slane %v731, 5
      %v734 = vor.u32 %v730, %v733
      %v736 = vshrl.u32 %v677, 16
      %v738 = vrot.slane %v736, 4
      %v739 = vshll.u32 %v677, 16
      %v741 = vrot.slane %v739, 5
      %v742 = vor.u32 %v738, %v741
      %v744 = vshrl.u32 %v678, 16
      %v746 = vrot.slane %v744, 4
      %v747 = vshll.u32 %v678, 16
      %v749 = vrot.slane %v747, 5
      %v750 = vor.u32 %v746, %v749
      %v752 = vshrl.u32 %v679, 16
      %v754 = vrot.slane %v752, 4
      %v755 = vshll.u32 %v679, 16
      %v757 = vrot.slane %v755, 5
      %v758 = vor.u32 %v754, %v757
      %v760 = vshrl.u32 %v680, 16
      %v762 = vrot.slane %v760, 4
      %v763 = vshll.u32 %v680, 16
      %v765 = vrot.slane %v763, 5
      %v766 = vor.u32 %v762, %v765
      %v768 = vshrl.u32 %v681, 16
      %v770 = vrot.slane %v768, 4
      %v771 = vshll.u32 %v681, 16
      %v773 = vrot.slane %v771, 5
      %v774 = vor.u32 %v770, %v773
      %v776 = vshrl.u32 %v682, 16
      %v778 = vrot.slane %v776, 4
      %v779 = vshll.u32 %v682, 16
      %v781 = vrot.slane %v779, 5
      %v782 = vor.u32 %v778, %v781
      %v784 = vshrl.u32 %v683, 16
      %v786 = vrot.slane %v784, 4
      %v787 = vshll.u32 %v683, 16
      %v789 = vrot.slane %v787, 5
      %v790 = vor.u32 %v786, %v789
      %v792 = vshrl.u32 %v684, 16
      %v794 = vrot.slane %v792, 4
      %v795 = vshll.u32 %v684, 16
      %v797 = vrot.slane %v795, 5
      %v798 = vor.u32 %v794, %v797
      %v800 = vshrl.u32 %v685, 16
      %v802 = vrot.slane %v800, 4
      %v803 = vshll.u32 %v685, 16
      %v805 = vrot.slane %v803, 5
      %v806 = vor.u32 %v802, %v805
      %v808 = vshrl.u32 %v686, 16
      %v810 = vrot.slane %v808, 4
      %v811 = vshll.u32 %v686, 16
      %v813 = vrot.slane %v811, 5
      %v814 = vor.u32 %v810, %v813
      %v831 = vunpack.c.l.b16 %v482
      %v832 = vunpack.c.l.b16 %v486
      %v833 = vunpack.c.l.b16 %v490
      %v834 = vunpack.c.l.b16 %v494
      %v835 = vunpack.c.l.b16 %v498
      %v836 = vunpack.c.l.b16 %v502
      %v837 = vunpack.c.l.b16 %v506
      %v838 = vunpack.c.l.b16 %v510
      %v839 = vunpack.c.l.b16 %v514
      %v840 = vunpack.c.l.b16 %v518
      %v841 = vunpack.c.l.b16 %v522
      %v842 = vunpack.c.l.b16 %v526
      %v843 = vunpack.c.l.b16 %v530
      %v844 = vunpack.c.l.b16 %v534
      %v845 = vunpack.c.l.b16 %v538
      %v846 = vunpack.c.l.b16 %v542
      %v847 = vpack.c.b16 %v831, %v831
      %v848 = vpack.c.b16 %v832, %v832
      %v849 = vpack.c.b16 %v833, %v833
      %v850 = vpack.c.b16 %v834, %v834
      %v851 = vpack.c.b16 %v835, %v835
      %v852 = vpack.c.b16 %v836, %v836
      %v853 = vpack.c.b16 %v837, %v837
      %v854 = vpack.c.b16 %v838, %v838
      %v855 = vpack.c.b16 %v839, %v839
      %v856 = vpack.c.b16 %v840, %v840
      %v857 = vpack.c.b16 %v841, %v841
      %v858 = vpack.c.b16 %v842, %v842
      %v859 = vpack.c.b16 %v843, %v843
      %v860 = vpack.c.b16 %v844, %v844
      %v861 = vpack.c.b16 %v845, %v845
      %v862 = vpack.c.b16 %v846, %v846
      %vm863 = vcmask 1042432
      %v864 = vrot.slane %v671, 5
      %v865 = vrot.slane %v847, 5
      %v866 = vsel %vm863, %v864, %v865
      %v867 = vrot.slane %v672, 5
      %v868 = vrot.slane %v848, 5
      %v869 = vsel %vm863, %v867, %v868
      %v870 = vrot.slane %v673, 5
      %v871 = vrot.slane %v849, 5
      %v872 = vsel %vm863, %v870, %v871
      %v873 = vrot.slane %v674, 5
      %v874 = vrot.slane %v850, 5
      %v875 = vsel %vm863, %v873, %v874
      %v876 = vrot.slane %v675, 5
      %v877 = vrot.slane %v851, 5
      %v878 = vsel %vm863, %v876, %v877
      %v879 = vrot.slane %v676, 5
      %v880 = vrot.slane %v852, 5
      %v881 = vsel %vm863, %v879, %v880
      %v882 = vrot.slane %v677, 5
      %v883 = vrot.slane %v853, 5
      %v884 = vsel %vm863, %v882, %v883
      %v885 = vrot.slane %v678, 5
      %v886 = vrot.slane %v854, 5
      %v887 = vsel %vm863, %v885, %v886
      %v888 = vrot.slane %v679, 5
      %v889 = vrot.slane %v855, 5
      %v890 = vsel %vm863, %v888, %v889
      %v891 = vrot.slane %v680, 5
      %v892 = vrot.slane %v856, 5
      %v893 = vsel %vm863, %v891, %v892
      %v894 = vrot.slane %v681, 5
      %v895 = vrot.slane %v857, 5
      %v896 = vsel %vm863, %v894, %v895
      %v897 = vrot.slane %v682, 5
      %v898 = vrot.slane %v858, 5
      %v899 = vsel %vm863, %v897, %v898
      %v900 = vrot.slane %v683, 5
      %v901 = vrot.slane %v859, 5
      %v902 = vsel %vm863, %v900, %v901
      %v903 = vrot.slane %v684, 5
      %v904 = vrot.slane %v860, 5
      %v905 = vsel %vm863, %v903, %v904
      %v906 = vrot.slane %v685, 5
      %v907 = vrot.slane %v861, 5
      %v908 = vsel %vm863, %v906, %v907
      %v909 = vrot.slane %v686, 5
      %v910 = vrot.slane %v862, 5
      %v911 = vsel %vm863, %v909, %v910
      %vm912 = vsmask.f32 4352
      %v914 = vshrl.u32 %v639, 16
      %v916 = vrot.slane %v914, 3
      %v917 = vshll.u32 %v639, 16
      %v919 = vrot.slane %v917, 4
      %v920 = vor.u32 %v916, %v919
      %v922 = vshrl.u32 %v640, 16
      %v924 = vrot.slane %v922, 3
      %v925 = vshll.u32 %v640, 16
      %v927 = vrot.slane %v925, 4
      %v928 = vor.u32 %v924, %v927
      %v929 = vsel %vm912, %v920, %v928
      %v931 = vshrl.u32 %v694, 16
      %v933 = vrot.slane %v931, 3
      %v934 = vshll.u32 %v694, 16
      %v936 = vrot.slane %v934, 4
      %v937 = vor.u32 %v933, %v936
      %v938 = vsel %vm912, %v937, %v937
      %v940 = vshrl.u32 %v864, 16
      %v942 = vrot.slane %v940, 3
      %v943 = vshll.u32 %v864, 16
      %v945 = vrot.slane %v943, 4
      %v946 = vor.u32 %v942, %v945
      %v948 = vshrl.u32 %v866, 16
      %v950 = vrot.slane %v948, 3
      %v951 = vshll.u32 %v866, 16
      %v953 = vrot.slane %v951, 4
      %v954 = vor.u32 %v950, %v953
      %v955 = vsel %vm912, %v946, %v954
      %v957 = vshrl.u32 %v641, 16
      %v959 = vrot.slane %v957, 3
      %v960 = vshll.u32 %v641, 16
      %v962 = vrot.slane %v960, 4
      %v963 = vor.u32 %v959, %v962
      %v965 = vshrl.u32 %v642, 16
      %v967 = vrot.slane %v965, 3
      %v968 = vshll.u32 %v642, 16
      %v970 = vrot.slane %v968, 4
      %v971 = vor.u32 %v967, %v970
      %v972 = vsel %vm912, %v963, %v971
      %v974 = vshrl.u32 %v702, 16
      %v976 = vrot.slane %v974, 3
      %v977 = vshll.u32 %v702, 16
      %v979 = vrot.slane %v977, 4
      %v980 = vor.u32 %v976, %v979
      %v981 = vsel %vm912, %v980, %v980
      %v983 = vshrl.u32 %v867, 16
      %v985 = vrot.slane %v983, 3
      %v986 = vshll.u32 %v867, 16
      %v988 = vrot.slane %v986, 4
      %v989 = vor.u32 %v985, %v988
      %v991 = vshrl.u32 %v869, 16
      %v993 = vrot.slane %v991, 3
      %v994 = vshll.u32 %v869, 16
      %v996 = vrot.slane %v994, 4
      %v997 = vor.u32 %v993, %v996
      %v998 = vsel %vm912, %v989, %v997
      %v1000 = vshrl.u32 %v643, 16
      %v1002 = vrot.slane %v1000, 3
      %v1003 = vshll.u32 %v643, 16
      %v1005 = vrot.slane %v1003, 4
      %v1006 = vor.u32 %v1002, %v1005
      %v1008 = vshrl.u32 %v644, 16
      %v1010 = vrot.slane %v1008, 3
      %v1011 = vshll.u32 %v644, 16
      %v1013 = vrot.slane %v1011, 4
      %v1014 = vor.u32 %v1010, %v1013
      %v1015 = vsel %vm912, %v1006, %v1014
      %v1017 = vshrl.u32 %v710, 16
      %v1019 = vrot.slane %v1017, 3
      %v1020 = vshll.u32 %v710, 16
      %v1022 = vrot.slane %v1020, 4
      %v1023 = vor.u32 %v1019, %v1022
      %v1024 = vsel %vm912, %v1023, %v1023
      %v1026 = vshrl.u32 %v870, 16
      %v1028 = vrot.slane %v1026, 3
      %v1029 = vshll.u32 %v870, 16
      %v1031 = vrot.slane %v1029, 4
      %v1032 = vor.u32 %v1028, %v1031
      %v1034 = vshrl.u32 %v872, 16
      %v1036 = vrot.slane %v1034, 3
      %v1037 = vshll.u32 %v872, 16
      %v1039 = vrot.slane %v1037, 4
      %v1040 = vor.u32 %v1036, %v1039
      %v1041 = vsel %vm912, %v1032, %v1040
      %v1043 = vshrl.u32 %v645, 16
      %v1045 = vrot.slane %v1043, 3
      %v1046 = vshll.u32 %v645, 16
      %v1048 = vrot.slane %v1046, 4
      %v1049 = vor.u32 %v1045, %v1048
      %v1051 = vshrl.u32 %v646, 16
      %v1053 = vrot.slane %v1051, 3
      %v1054 = vshll.u32 %v646, 16
      %v1056 = vrot.slane %v1054, 4
      %v1057 = vor.u32 %v1053, %v1056
      %v1058 = vsel %vm912, %v1049, %v1057
      %v1060 = vshrl.u32 %v718, 16
      %v1062 = vrot.slane %v1060, 3
      %v1063 = vshll.u32 %v718, 16
      %v1065 = vrot.slane %v1063, 4
      %v1066 = vor.u32 %v1062, %v1065
      %v1067 = vsel %vm912, %v1066, %v1066
      %v1069 = vshrl.u32 %v873, 16
      %v1071 = vrot.slane %v1069, 3
      %v1072 = vshll.u32 %v873, 16
      %v1074 = vrot.slane %v1072, 4
      %v1075 = vor.u32 %v1071, %v1074
      %v1077 = vshrl.u32 %v875, 16
      %v1079 = vrot.slane %v1077, 3
      %v1080 = vshll.u32 %v875, 16
      %v1082 = vrot.slane %v1080, 4
      %v1083 = vor.u32 %v1079, %v1082
      %v1084 = vsel %vm912, %v1075, %v1083
      %v1086 = vshrl.u32 %v647, 16
      %v1088 = vrot.slane %v1086, 3
      %v1089 = vshll.u32 %v647, 16
      %v1091 = vrot.slane %v1089, 4
      %v1092 = vor.u32 %v1088, %v1091
      %v1094 = vshrl.u32 %v648, 16
      %v1096 = vrot.slane %v1094, 3
      %v1097 = vshll.u32 %v648, 16
      %v1099 = vrot.slane %v1097, 4
      %v1100 = vor.u32 %v1096, %v1099
      %v1101 = vsel %vm912, %v1092, %v1100
      %v1103 = vshrl.u32 %v726, 16
      %v1105 = vrot.slane %v1103, 3
      %v1106 = vshll.u32 %v726, 16
      %v1108 = vrot.slane %v1106, 4
      %v1109 = vor.u32 %v1105, %v1108
      %v1110 = vsel %vm912, %v1109, %v1109
      %v1112 = vshrl.u32 %v876, 16
      %v1114 = vrot.slane %v1112, 3
      %v1115 = vshll.u32 %v876, 16
      %v1117 = vrot.slane %v1115, 4
      %v1118 = vor.u32 %v1114, %v1117
      %v1120 = vshrl.u32 %v878, 16
      %v1122 = vrot.slane %v1120, 3
      %v1123 = vshll.u32 %v878, 16
      %v1125 = vrot.slane %v1123, 4
      %v1126 = vor.u32 %v1122, %v1125
      %v1127 = vsel %vm912, %v1118, %v1126
      %v1129 = vshrl.u32 %v649, 16
      %v1131 = vrot.slane %v1129, 3
      %v1132 = vshll.u32 %v649, 16
      %v1134 = vrot.slane %v1132, 4
      %v1135 = vor.u32 %v1131, %v1134
      %v1137 = vshrl.u32 %v650, 16
      %v1139 = vrot.slane %v1137, 3
      %v1140 = vshll.u32 %v650, 16
      %v1142 = vrot.slane %v1140, 4
      %v1143 = vor.u32 %v1139, %v1142
      %v1144 = vsel %vm912, %v1135, %v1143
      %v1146 = vshrl.u32 %v734, 16
      %v1148 = vrot.slane %v1146, 3
      %v1149 = vshll.u32 %v734, 16
      %v1151 = vrot.slane %v1149, 4
      %v1152 = vor.u32 %v1148, %v1151
      %v1153 = vsel %vm912, %v1152, %v1152
      %v1155 = vshrl.u32 %v879, 16
      %v1157 = vrot.slane %v1155, 3
      %v1158 = vshll.u32 %v879, 16
      %v1160 = vrot.slane %v1158, 4
      %v1161 = vor.u32 %v1157, %v1160
      %v1163 = vshrl.u32 %v881, 16
      %v1165 = vrot.slane %v1163, 3
      %v1166 = vshll.u32 %v881, 16
      %v1168 = vrot.slane %v1166, 4
      %v1169 = vor.u32 %v1165, %v1168
      %v1170 = vsel %vm912, %v1161, %v1169
      %v1172 = vshrl.u32 %v651, 16
      %v1174 = vrot.slane %v1172, 3
      %v1175 = vshll.u32 %v651, 16
      %v1177 = vrot.slane %v1175, 4
      %v1178 = vor.u32 %v1174, %v1177
      %v1180 = vshrl.u32 %v652, 16
      %v1182 = vrot.slane %v1180, 3
      %v1183 = vshll.u32 %v652, 16
      %v1185 = vrot.slane %v1183, 4
      %v1186 = vor.u32 %v1182, %v1185
      %v1187 = vsel %vm912, %v1178, %v1186
      %v1189 = vshrl.u32 %v742, 16
      %v1191 = vrot.slane %v1189, 3
      %v1192 = vshll.u32 %v742, 16
      %v1194 = vrot.slane %v1192, 4
      %v1195 = vor.u32 %v1191, %v1194
      %v1196 = vsel %vm912, %v1195, %v1195
      %v1198 = vshrl.u32 %v882, 16
      %v1200 = vrot.slane %v1198, 3
      %v1201 = vshll.u32 %v882, 16
      %v1203 = vrot.slane %v1201, 4
      %v1204 = vor.u32 %v1200, %v1203
      %v1206 = vshrl.u32 %v884, 16
      %v1208 = vrot.slane %v1206, 3
      %v1209 = vshll.u32 %v884, 16
      %v1211 = vrot.slane %v1209, 4
      %v1212 = vor.u32 %v1208, %v1211
      %v1213 = vsel %vm912, %v1204, %v1212
      %v1215 = vshrl.u32 %v653, 16
      %v1217 = vrot.slane %v1215, 3
      %v1218 = vshll.u32 %v653, 16
      %v1220 = vrot.slane %v1218, 4
      %v1221 = vor.u32 %v1217, %v1220
      %v1223 = vshrl.u32 %v654, 16
      %v1225 = vrot.slane %v1223, 3
      %v1226 = vshll.u32 %v654, 16
      %v1228 = vrot.slane %v1226, 4
      %v1229 = vor.u32 %v1225, %v1228
      %v1230 = vsel %vm912, %v1221, %v1229
      %v1232 = vshrl.u32 %v750, 16
      %v1234 = vrot.slane %v1232, 3
      %v1235 = vshll.u32 %v750, 16
      %v1237 = vrot.slane %v1235, 4
      %v1238 = vor.u32 %v1234, %v1237
      %v1239 = vsel %vm912, %v1238, %v1238
      %v1241 = vshrl.u32 %v885, 16
      %v1243 = vrot.slane %v1241, 3
      %v1244 = vshll.u32 %v885, 16
      %v1246 = vrot.slane %v1244, 4
      %v1247 = vor.u32 %v1243, %v1246
      %v1249 = vshrl.u32 %v887, 16
      %v1251 = vrot.slane %v1249, 3
      %v1252 = vshll.u32 %v887, 16
      %v1254 = vrot.slane %v1252, 4
      %v1255 = vor.u32 %v1251, %v1254
      %v1256 = vsel %vm912, %v1247, %v1255
      %v1258 = vshrl.u32 %v655, 16
      %v1260 = vrot.slane %v1258, 3
      %v1261 = vshll.u32 %v655, 16
      %v1263 = vrot.slane %v1261, 4
      %v1264 = vor.u32 %v1260, %v1263
      %v1266 = vshrl.u32 %v656, 16
      %v1268 = vrot.slane %v1266, 3
      %v1269 = vshll.u32 %v656, 16
      %v1271 = vrot.slane %v1269, 4
      %v1272 = vor.u32 %v1268, %v1271
      %v1273 = vsel %vm912, %v1264, %v1272
      %v1275 = vshrl.u32 %v758, 16
      %v1277 = vrot.slane %v1275, 3
      %v1278 = vshll.u32 %v758, 16
      %v1280 = vrot.slane %v1278, 4
      %v1281 = vor.u32 %v1277, %v1280
      %v1282 = vsel %vm912, %v1281, %v1281
      %v1284 = vshrl.u32 %v888, 16
      %v1286 = vrot.slane %v1284, 3
      %v1287 = vshll.u32 %v888, 16
      %v1289 = vrot.slane %v1287, 4
      %v1290 = vor.u32 %v1286, %v1289
      %v1292 = vshrl.u32 %v890, 16
      %v1294 = vrot.slane %v1292, 3
      %v1295 = vshll.u32 %v890, 16
      %v1297 = vrot.slane %v1295, 4
      %v1298 = vor.u32 %v1294, %v1297
      %v1299 = vsel %vm912, %v1290, %v1298
      %v1301 = vshrl.u32 %v657, 16
      %v1303 = vrot.slane %v1301, 3
      %v1304 = vshll.u32 %v657, 16
      %v1306 = vrot.slane %v1304, 4
      %v1307 = vor.u32 %v1303, %v1306
      %v1309 = vshrl.u32 %v658, 16
      %v1311 = vrot.slane %v1309, 3
      %v1312 = vshll.u32 %v658, 16
      %v1314 = vrot.slane %v1312, 4
      %v1315 = vor.u32 %v1311, %v1314
      %v1316 = vsel %vm912, %v1307, %v1315
      %v1318 = vshrl.u32 %v766, 16
      %v1320 = vrot.slane %v1318, 3
      %v1321 = vshll.u32 %v766, 16
      %v1323 = vrot.slane %v1321, 4
      %v1324 = vor.u32 %v1320, %v1323
      %v1325 = vsel %vm912, %v1324, %v1324
      %v1327 = vshrl.u32 %v891, 16
      %v1329 = vrot.slane %v1327, 3
      %v1330 = vshll.u32 %v891, 16
      %v1332 = vrot.slane %v1330, 4
      %v1333 = vor.u32 %v1329, %v1332
      %v1335 = vshrl.u32 %v893, 16
      %v1337 = vrot.slane %v1335, 3
      %v1338 = vshll.u32 %v893, 16
      %v1340 = vrot.slane %v1338, 4
      %v1341 = vor.u32 %v1337, %v1340
      %v1342 = vsel %vm912, %v1333, %v1341
      %v1344 = vshrl.u32 %v659, 16
      %v1346 = vrot.slane %v1344, 3
      %v1347 = vshll.u32 %v659, 16
      %v1349 = vrot.slane %v1347, 4
      %v1350 = vor.u32 %v1346, %v1349
      %v1352 = vshrl.u32 %v660, 16
      %v1354 = vrot.slane %v1352, 3
      %v1355 = vshll.u32 %v660, 16
      %v1357 = vrot.slane %v1355, 4
      %v1358 = vor.u32 %v1354, %v1357
      %v1359 = vsel %vm912, %v1350, %v1358
      %v1361 = vshrl.u32 %v774, 16
      %v1363 = vrot.slane %v1361, 3
      %v1364 = vshll.u32 %v774, 16
      %v1366 = vrot.slane %v1364, 4
      %v1367 = vor.u32 %v1363, %v1366
      %v1368 = vsel %vm912, %v1367, %v1367
      %v1370 = vshrl.u32 %v894, 16
      %v1372 = vrot.slane %v1370, 3
      %v1373 = vshll.u32 %v894, 16
      %v1375 = vrot.slane %v1373, 4
      %v1376 = vor.u32 %v1372, %v1375
      %v1378 = vshrl.u32 %v896, 16
      %v1380 = vrot.slane %v1378, 3
      %v1381 = vshll.u32 %v896, 16
      %v1383 = vrot.slane %v1381, 4
      %v1384 = vor.u32 %v1380, %v1383
      %v1385 = vsel %vm912, %v1376, %v1384
      %v1387 = vshrl.u32 %v661, 16
      %v1389 = vrot.slane %v1387, 3
      %v1390 = vshll.u32 %v661, 16
      %v1392 = vrot.slane %v1390, 4
      %v1393 = vor.u32 %v1389, %v1392
      %v1395 = vshrl.u32 %v662, 16
      %v1397 = vrot.slane %v1395, 3
      %v1398 = vshll.u32 %v662, 16
      %v1400 = vrot.slane %v1398, 4
      %v1401 = vor.u32 %v1397, %v1400
      %v1402 = vsel %vm912, %v1393, %v1401
      %v1404 = vshrl.u32 %v782, 16
      %v1406 = vrot.slane %v1404, 3
      %v1407 = vshll.u32 %v782, 16
      %v1409 = vrot.slane %v1407, 4
      %v1410 = vor.u32 %v1406, %v1409
      %v1411 = vsel %vm912, %v1410, %v1410
      %v1413 = vshrl.u32 %v897, 16
      %v1415 = vrot.slane %v1413, 3
      %v1416 = vshll.u32 %v897, 16
      %v1418 = vrot.slane %v1416, 4
      %v1419 = vor.u32 %v1415, %v1418
      %v1421 = vshrl.u32 %v899, 16
      %v1423 = vrot.slane %v1421, 3
      %v1424 = vshll.u32 %v899, 16
      %v1426 = vrot.slane %v1424, 4
      %v1427 = vor.u32 %v1423, %v1426
      %v1428 = vsel %vm912, %v1419, %v1427
      %v1430 = vshrl.u32 %v663, 16
      %v1432 = vrot.slane %v1430, 3
      %v1433 = vshll.u32 %v663, 16
      %v1435 = vrot.slane %v1433, 4
      %v1436 = vor.u32 %v1432, %v1435
      %v1438 = vshrl.u32 %v664, 16
      %v1440 = vrot.slane %v1438, 3
      %v1441 = vshll.u32 %v664, 16
      %v1443 = vrot.slane %v1441, 4
      %v1444 = vor.u32 %v1440, %v1443
      %v1445 = vsel %vm912, %v1436, %v1444
      %v1447 = vshrl.u32 %v790, 16
      %v1449 = vrot.slane %v1447, 3
      %v1450 = vshll.u32 %v790, 16
      %v1452 = vrot.slane %v1450, 4
      %v1453 = vor.u32 %v1449, %v1452
      %v1454 = vsel %vm912, %v1453, %v1453
      %v1456 = vshrl.u32 %v900, 16
      %v1458 = vrot.slane %v1456, 3
      %v1459 = vshll.u32 %v900, 16
      %v1461 = vrot.slane %v1459, 4
      %v1462 = vor.u32 %v1458, %v1461
      %v1464 = vshrl.u32 %v902, 16
      %v1466 = vrot.slane %v1464, 3
      %v1467 = vshll.u32 %v902, 16
      %v1469 = vrot.slane %v1467, 4
      %v1470 = vor.u32 %v1466, %v1469
      %v1471 = vsel %vm912, %v1462, %v1470
      %v1473 = vshrl.u32 %v665, 16
      %v1475 = vrot.slane %v1473, 3
      %v1476 = vshll.u32 %v665, 16
      %v1478 = vrot.slane %v1476, 4
      %v1479 = vor.u32 %v1475, %v1478
      %v1481 = vshrl.u32 %v666, 16
      %v1483 = vrot.slane %v1481, 3
      %v1484 = vshll.u32 %v666, 16
      %v1486 = vrot.slane %v1484, 4
      %v1487 = vor.u32 %v1483, %v1486
      %v1488 = vsel %vm912, %v1479, %v1487
      %v1490 = vshrl.u32 %v798, 16
      %v1492 = vrot.slane %v1490, 3
      %v1493 = vshll.u32 %v798, 16
      %v1495 = vrot.slane %v1493, 4
      %v1496 = vor.u32 %v1492, %v1495
      %v1497 = vsel %vm912, %v1496, %v1496
      %v1499 = vshrl.u32 %v903, 16
      %v1501 = vrot.slane %v1499, 3
      %v1502 = vshll.u32 %v903, 16
      %v1504 = vrot.slane %v1502, 4
      %v1505 = vor.u32 %v1501, %v1504
      %v1507 = vshrl.u32 %v905, 16
      %v1509 = vrot.slane %v1507, 3
      %v1510 = vshll.u32 %v905, 16
      %v1512 = vrot.slane %v1510, 4
      %v1513 = vor.u32 %v1509, %v1512
      %v1514 = vsel %vm912, %v1505, %v1513
      %v1516 = vshrl.u32 %v667, 16
      %v1518 = vrot.slane %v1516, 3
      %v1519 = vshll.u32 %v667, 16
      %v1521 = vrot.slane %v1519, 4
      %v1522 = vor.u32 %v1518, %v1521
      %v1524 = vshrl.u32 %v668, 16
      %v1526 = vrot.slane %v1524, 3
      %v1527 = vshll.u32 %v668, 16
      %v1529 = vrot.slane %v1527, 4
      %v1530 = vor.u32 %v1526, %v1529
      %v1531 = vsel %vm912, %v1522, %v1530
      %v1533 = vshrl.u32 %v806, 16
      %v1535 = vrot.slane %v1533, 3
      %v1536 = vshll.u32 %v806, 16
      %v1538 = vrot.slane %v1536, 4
      %v1539 = vor.u32 %v1535, %v1538
      %v1540 = vsel %vm912, %v1539, %v1539
      %v1542 = vshrl.u32 %v906, 16
      %v1544 = vrot.slane %v1542, 3
      %v1545 = vshll.u32 %v906, 16
      %v1547 = vrot.slane %v1545, 4
      %v1548 = vor.u32 %v1544, %v1547
      %v1550 = vshrl.u32 %v908, 16
      %v1552 = vrot.slane %v1550, 3
      %v1553 = vshll.u32 %v908, 16
      %v1555 = vrot.slane %v1553, 4
      %v1556 = vor.u32 %v1552, %v1555
      %v1557 = vsel %vm912, %v1548, %v1556
      %v1559 = vshrl.u32 %v669, 16
      %v1561 = vrot.slane %v1559, 3
      %v1562 = vshll.u32 %v669, 16
      %v1564 = vrot.slane %v1562, 4
      %v1565 = vor.u32 %v1561, %v1564
      %v1567 = vshrl.u32 %v670, 16
      %v1569 = vrot.slane %v1567, 3
      %v1570 = vshll.u32 %v670, 16
      %v1572 = vrot.slane %v1570, 4
      %v1573 = vor.u32 %v1569, %v1572
      %v1574 = vsel %vm912, %v1565, %v1573
      %v1576 = vshrl.u32 %v814, 16
      %v1578 = vrot.slane %v1576, 3
      %v1579 = vshll.u32 %v814, 16
      %v1581 = vrot.slane %v1579, 4
      %v1582 = vor.u32 %v1578, %v1581
      %v1583 = vsel %vm912, %v1582, %v1582
      %v1585 = vshrl.u32 %v909, 16
      %v1587 = vrot.slane %v1585, 3
      %v1588 = vshll.u32 %v909, 16
      %v1590 = vrot.slane %v1588, 4
      %v1591 = vor.u32 %v1587, %v1590
      %v1593 = vshrl.u32 %v911, 16
      %v1595 = vrot.slane %v1593, 3
      %v1596 = vshll.u32 %v911, 16
      %v1598 = vrot.slane %v1596, 4
      %v1599 = vor.u32 %v1595, %v1598
      %v1600 = vsel %vm912, %v1591, %v1599
      %v1649 = vld [vmem:[%s3] sm:$0xf]
      %v1650 = vld [vmem:[%s3 + $0x4] sm:$0xf]
      %v1651 = vld [vmem:[%s3 + $0x8] sm:$0xf]
      %v1652 = vld [vmem:[%s3 + $0xc] sm:$0xf]
      %v1653 = vld [vmem:[%s3 + $0x10] sm:$0xf]
      %v1654 = vld [vmem:[%s3 + $0x14] sm:$0xf]
      %v1655 = vld [vmem:[%s3 + $0x18] sm:$0xf]
      %v1656 = vld [vmem:[%s3 + $0x1c] sm:$0xf]
      %v1657 = vld [vmem:[%s3 + $0x20] sm:$0xf]
      %v1658 = vld [vmem:[%s3 + $0x24] sm:$0xf]
      %v1659 = vld [vmem:[%s3 + $0x28] sm:$0xf]
      %v1660 = vld [vmem:[%s3 + $0x2c] sm:$0xf]
      %v1661 = vld [vmem:[%s3 + $0x30] sm:$0xf]
      %v1662 = vld [vmem:[%s3 + $0x34] sm:$0xf]
      %v1663 = vld [vmem:[%s3 + $0x38] sm:$0xf]
      %v1664 = vld [vmem:[%s3 + $0x3c] sm:$0xf]
      %v1665 = vld [vmem:[%s3 + $0x40] sm:$0xf]
      %v1666 = vld [vmem:[%s3 + $0x44] sm:$0xf]
      %v1667 = vld [vmem:[%s3 + $0x48] sm:$0xf]
      %v1668 = vld [vmem:[%s3 + $0x4c] sm:$0xf]
      %v1669 = vld [vmem:[%s3 + $0x50] sm:$0xf]
      %v1670 = vld [vmem:[%s3 + $0x54] sm:$0xf]
      %v1671 = vld [vmem:[%s3 + $0x58] sm:$0xf]
      %v1672 = vld [vmem:[%s3 + $0x5c] sm:$0xf]
      %v1673 = vld [vmem:[%s3 + $0x60] sm:$0xf]
      %v1674 = vld [vmem:[%s3 + $0x64] sm:$0xf]
      %v1675 = vld [vmem:[%s3 + $0x68] sm:$0xf]
      %v1676 = vld [vmem:[%s3 + $0x6c] sm:$0xf]
      %v1677 = vld [vmem:[%s3 + $0x70] sm:$0xf]
      %v1678 = vld [vmem:[%s3 + $0x74] sm:$0xf]
      %v1679 = vld [vmem:[%s3 + $0x78] sm:$0xf]
      %v1680 = vld [vmem:[%s3 + $0x7c] sm:$0xf]
      %v1681 = vld [vmem:[%s3 + $0x80] sm:$0xf]
      %v1682 = vld [vmem:[%s3 + $0x84] sm:$0xf]
      %v1683 = vld [vmem:[%s3 + $0x88] sm:$0xf]
      %v1684 = vld [vmem:[%s3 + $0x8c] sm:$0xf]
      %v1685 = vld [vmem:[%s3 + $0x90] sm:$0xf]
      %v1686 = vld [vmem:[%s3 + $0x94] sm:$0xf]
      %v1687 = vld [vmem:[%s3 + $0x98] sm:$0xf]
      %v1688 = vld [vmem:[%s3 + $0x9c] sm:$0xf]
      %v1689 = vld [vmem:[%s3 + $0xa0] sm:$0xf]
      %v1690 = vld [vmem:[%s3 + $0xa4] sm:$0xf]
      %v1691 = vld [vmem:[%s3 + $0xa8] sm:$0xf]
      %v1692 = vld [vmem:[%s3 + $0xac] sm:$0xf]
      %v1693 = vld [vmem:[%s3 + $0xb0] sm:$0xf]
      %v1694 = vld [vmem:[%s3 + $0xb4] sm:$0xf]
      %v1695 = vld [vmem:[%s3 + $0xb8] sm:$0xf]
      %v1696 = vld [vmem:[%s3 + $0xbc] sm:$0xf]
      %v1697 = vld [vmem:[%s445] sm:$0xf]
      %v1698 = vld [vmem:[%s445 + $0x4] sm:$0xf]
      %v1699 = vld [vmem:[%s445 + $0x8] sm:$0xf]
      %v1700 = vld [vmem:[%s445 + $0xc] sm:$0xf]
      %v1701 = vld [vmem:[%s445 + $0x10] sm:$0xf]
      %v1702 = vld [vmem:[%s445 + $0x14] sm:$0xf]
      %v1703 = vld [vmem:[%s445 + $0x18] sm:$0xf]
      %v1704 = vld [vmem:[%s445 + $0x1c] sm:$0xf]
      %v1705 = vld [vmem:[%s445 + $0x20] sm:$0xf]
      %v1706 = vld [vmem:[%s445 + $0x24] sm:$0xf]
      %v1707 = vld [vmem:[%s445 + $0x28] sm:$0xf]
      %v1708 = vld [vmem:[%s445 + $0x2c] sm:$0xf]
      %v1709 = vld [vmem:[%s445 + $0x30] sm:$0xf]
      %v1710 = vld [vmem:[%s445 + $0x34] sm:$0xf]
      %v1711 = vld [vmem:[%s445 + $0x38] sm:$0xf]
      %v1712 = vld [vmem:[%s445 + $0x3c] sm:$0xf]
      %v1713 = vld [vmem:[%s445 + $0x40] sm:$0xf]
      %v1714 = vld [vmem:[%s445 + $0x44] sm:$0xf]
      %v1715 = vld [vmem:[%s445 + $0x48] sm:$0xf]
      %v1716 = vld [vmem:[%s445 + $0x4c] sm:$0xf]
      %v1717 = vld [vmem:[%s445 + $0x50] sm:$0xf]
      %v1718 = vld [vmem:[%s445 + $0x54] sm:$0xf]
      %v1719 = vld [vmem:[%s445 + $0x58] sm:$0xf]
      %v1720 = vld [vmem:[%s445 + $0x5c] sm:$0xf]
      %v1721 = vld [vmem:[%s445 + $0x60] sm:$0xf]
      %v1722 = vld [vmem:[%s445 + $0x64] sm:$0xf]
      %v1723 = vld [vmem:[%s445 + $0x68] sm:$0xf]
      %v1724 = vld [vmem:[%s445 + $0x6c] sm:$0xf]
      %v1725 = vld [vmem:[%s445 + $0x70] sm:$0xf]
      %v1726 = vld [vmem:[%s445 + $0x74] sm:$0xf]
      %v1727 = vld [vmem:[%s445 + $0x78] sm:$0xf]
      %v1728 = vld [vmem:[%s445 + $0x7c] sm:$0xf]
      %v1729 = vld [vmem:[%s445 + $0x80] sm:$0xf]
      %v1730 = vld [vmem:[%s445 + $0x84] sm:$0xf]
      %v1731 = vld [vmem:[%s445 + $0x88] sm:$0xf]
      %v1732 = vld [vmem:[%s445 + $0x8c] sm:$0xf]
      %v1733 = vld [vmem:[%s445 + $0x90] sm:$0xf]
      %v1734 = vld [vmem:[%s445 + $0x94] sm:$0xf]
      %v1735 = vld [vmem:[%s445 + $0x98] sm:$0xf]
      %v1736 = vld [vmem:[%s445 + $0x9c] sm:$0xf]
      %v1737 = vld [vmem:[%s445 + $0xa0] sm:$0xf]
      %v1738 = vld [vmem:[%s445 + $0xa4] sm:$0xf]
      %v1739 = vld [vmem:[%s445 + $0xa8] sm:$0xf]
      %v1740 = vld [vmem:[%s445 + $0xac] sm:$0xf]
      %v1741 = vld [vmem:[%s445 + $0xb0] sm:$0xf]
      %v1742 = vld [vmem:[%s445 + $0xb4] sm:$0xf]
      %v1743 = vld [vmem:[%s445 + $0xb8] sm:$0xf]
      %v1744 = vld [vmem:[%s445 + $0xbc] sm:$0xf]
      %v1745 = vld [vmem:[%s445 + $0xc0] sm:$0xf]
      %v1746 = vld [vmem:[%s445 + $0xc4] sm:$0xf]
      %v1747 = vld [vmem:[%s445 + $0xc8] sm:$0xf]
      %v1748 = vld [vmem:[%s445 + $0xcc] sm:$0xf]
      %v1749 = vld [vmem:[%s445 + $0xd0] sm:$0xf]
      %v1750 = vld [vmem:[%s445 + $0xd4] sm:$0xf]
      %v1751 = vld [vmem:[%s445 + $0xd8] sm:$0xf]
      %v1752 = vld [vmem:[%s445 + $0xdc] sm:$0xf]
      %v1753 = vld [vmem:[%s445 + $0xe0] sm:$0xf]
      %v1754 = vld [vmem:[%s445 + $0xe4] sm:$0xf]
      %v1755 = vld [vmem:[%s445 + $0xe8] sm:$0xf]
      %v1756 = vld [vmem:[%s445 + $0xec] sm:$0xf]
      %v1757 = vld [vmem:[%s445 + $0xf0] sm:$0xf]
      %v1758 = vld [vmem:[%s445 + $0xf4] sm:$0xf]
      %v1759 = vld [vmem:[%s445 + $0xf8] sm:$0xf]
      %v1760 = vld [vmem:[%s445 + $0xfc] sm:$0xf]
      %v1809 = vunpack.c.l.b16 %v1697
      %v1810 = vunpack.c.l.b16 %v1698
      %v1811 = vunpack.c.l.b16 %v1699
      %v1812 = vunpack.c.l.b16 %v1701
      %v1813 = vunpack.c.l.b16 %v1702
      %v1814 = vunpack.c.l.b16 %v1703
      %v1815 = vunpack.c.l.b16 %v1705
      %v1816 = vunpack.c.l.b16 %v1706
      %v1817 = vunpack.c.l.b16 %v1707
      %v1818 = vunpack.c.l.b16 %v1709
      %v1819 = vunpack.c.l.b16 %v1710
      %v1820 = vunpack.c.l.b16 %v1711
      %v1821 = vunpack.c.l.b16 %v1713
      %v1822 = vunpack.c.l.b16 %v1714
      %v1823 = vunpack.c.l.b16 %v1715
      %v1824 = vunpack.c.l.b16 %v1717
      %v1825 = vunpack.c.l.b16 %v1718
      %v1826 = vunpack.c.l.b16 %v1719
      %v1827 = vunpack.c.l.b16 %v1721
      %v1828 = vunpack.c.l.b16 %v1722
      %v1829 = vunpack.c.l.b16 %v1723
      %v1830 = vunpack.c.l.b16 %v1725
      %v1831 = vunpack.c.l.b16 %v1726
      %v1832 = vunpack.c.l.b16 %v1727
      %v1833 = vunpack.c.l.b16 %v1729
      %v1834 = vunpack.c.l.b16 %v1730
      %v1835 = vunpack.c.l.b16 %v1731
      %v1836 = vunpack.c.l.b16 %v1733
      %v1837 = vunpack.c.l.b16 %v1734
      %v1838 = vunpack.c.l.b16 %v1735
      %v1839 = vunpack.c.l.b16 %v1737
      %v1840 = vunpack.c.l.b16 %v1738
      %v1841 = vunpack.c.l.b16 %v1739
      %v1842 = vunpack.c.l.b16 %v1741
      %v1843 = vunpack.c.l.b16 %v1742
      %v1844 = vunpack.c.l.b16 %v1743
      %v1845 = vunpack.c.l.b16 %v1745
      %v1846 = vunpack.c.l.b16 %v1746
      %v1847 = vunpack.c.l.b16 %v1747
      %v1848 = vunpack.c.l.b16 %v1749
      %v1849 = vunpack.c.l.b16 %v1750
      %v1850 = vunpack.c.l.b16 %v1751
      %v1851 = vunpack.c.l.b16 %v1753
      %v1852 = vunpack.c.l.b16 %v1754
      %v1853 = vunpack.c.l.b16 %v1755
      %v1854 = vunpack.c.l.b16 %v1757
      %v1855 = vunpack.c.l.b16 %v1758
      %v1856 = vunpack.c.l.b16 %v1759
      %v1857 = vpack.c.b16 %v1810, %v1809
      %v1858 = vpack.c.b16 %v1811, %v1811
      %v1859 = vpack.c.b16 %v1813, %v1812
      %v1860 = vpack.c.b16 %v1814, %v1814
      %v1861 = vpack.c.b16 %v1816, %v1815
      %v1862 = vpack.c.b16 %v1817, %v1817
      %v1863 = vpack.c.b16 %v1819, %v1818
      %v1864 = vpack.c.b16 %v1820, %v1820
      %v1865 = vpack.c.b16 %v1822, %v1821
      %v1866 = vpack.c.b16 %v1823, %v1823
      %v1867 = vpack.c.b16 %v1825, %v1824
      %v1868 = vpack.c.b16 %v1826, %v1826
      %v1869 = vpack.c.b16 %v1828, %v1827
      %v1870 = vpack.c.b16 %v1829, %v1829
      %v1871 = vpack.c.b16 %v1831, %v1830
      %v1872 = vpack.c.b16 %v1832, %v1832
      %v1873 = vpack.c.b16 %v1834, %v1833
      %v1874 = vpack.c.b16 %v1835, %v1835
      %v1875 = vpack.c.b16 %v1837, %v1836
      %v1876 = vpack.c.b16 %v1838, %v1838
      %v1877 = vpack.c.b16 %v1840, %v1839
      %v1878 = vpack.c.b16 %v1841, %v1841
      %v1879 = vpack.c.b16 %v1843, %v1842
      %v1880 = vpack.c.b16 %v1844, %v1844
      %v1881 = vpack.c.b16 %v1846, %v1845
      %v1882 = vpack.c.b16 %v1847, %v1847
      %v1883 = vpack.c.b16 %v1849, %v1848
      %v1884 = vpack.c.b16 %v1850, %v1850
      %v1885 = vpack.c.b16 %v1852, %v1851
      %v1886 = vpack.c.b16 %v1853, %v1853
      %v1887 = vpack.c.b16 %v1855, %v1854
      %v1888 = vpack.c.b16 %v1856, %v1856
      %v1889 = vpack.c.b16 %v1811, %v1810
      %v1890 = vpack.c.b16 %v1814, %v1813
      %v1891 = vpack.c.b16 %v1817, %v1816
      %v1892 = vpack.c.b16 %v1820, %v1819
      %v1893 = vpack.c.b16 %v1823, %v1822
      %v1894 = vpack.c.b16 %v1826, %v1825
      %v1895 = vpack.c.b16 %v1829, %v1828
      %v1896 = vpack.c.b16 %v1832, %v1831
      %v1897 = vpack.c.b16 %v1835, %v1834
      %v1898 = vpack.c.b16 %v1838, %v1837
      %v1899 = vpack.c.b16 %v1841, %v1840
      %v1900 = vpack.c.b16 %v1844, %v1843
      %v1901 = vpack.c.b16 %v1847, %v1846
      %v1902 = vpack.c.b16 %v1850, %v1849
      %v1903 = vpack.c.b16 %v1853, %v1852
      %v1904 = vpack.c.b16 %v1856, %v1855
      %v1906 = vshrl.u32 %v1889, 16
      %v1908 = vrot.slane %v1906, 4
      %v1909 = vshll.u32 %v1889, 16
      %v1911 = vrot.slane %v1909, 5
      %v1912 = vor.u32 %v1908, %v1911
      %v1914 = vshrl.u32 %v1890, 16
      %v1916 = vrot.slane %v1914, 4
      %v1917 = vshll.u32 %v1890, 16
      %v1919 = vrot.slane %v1917, 5
      %v1920 = vor.u32 %v1916, %v1919
      %v1922 = vshrl.u32 %v1891, 16
      %v1924 = vrot.slane %v1922, 4
      %v1925 = vshll.u32 %v1891, 16
      %v1927 = vrot.slane %v1925, 5
      %v1928 = vor.u32 %v1924, %v1927
      %v1930 = vshrl.u32 %v1892, 16
      %v1932 = vrot.slane %v1930, 4
      %v1933 = vshll.u32 %v1892, 16
      %v1935 = vrot.slane %v1933, 5
      %v1936 = vor.u32 %v1932, %v1935
      %v1938 = vshrl.u32 %v1893, 16
      %v1940 = vrot.slane %v1938, 4
      %v1941 = vshll.u32 %v1893, 16
      %v1943 = vrot.slane %v1941, 5
      %v1944 = vor.u32 %v1940, %v1943
      %v1946 = vshrl.u32 %v1894, 16
      %v1948 = vrot.slane %v1946, 4
      %v1949 = vshll.u32 %v1894, 16
      %v1951 = vrot.slane %v1949, 5
      %v1952 = vor.u32 %v1948, %v1951
      %v1954 = vshrl.u32 %v1895, 16
      %v1956 = vrot.slane %v1954, 4
      %v1957 = vshll.u32 %v1895, 16
      %v1959 = vrot.slane %v1957, 5
      %v1960 = vor.u32 %v1956, %v1959
      %v1962 = vshrl.u32 %v1896, 16
      %v1964 = vrot.slane %v1962, 4
      %v1965 = vshll.u32 %v1896, 16
      %v1967 = vrot.slane %v1965, 5
      %v1968 = vor.u32 %v1964, %v1967
      %v1970 = vshrl.u32 %v1897, 16
      %v1972 = vrot.slane %v1970, 4
      %v1973 = vshll.u32 %v1897, 16
      %v1975 = vrot.slane %v1973, 5
      %v1976 = vor.u32 %v1972, %v1975
      %v1978 = vshrl.u32 %v1898, 16
      %v1980 = vrot.slane %v1978, 4
      %v1981 = vshll.u32 %v1898, 16
      %v1983 = vrot.slane %v1981, 5
      %v1984 = vor.u32 %v1980, %v1983
      %v1986 = vshrl.u32 %v1899, 16
      %v1988 = vrot.slane %v1986, 4
      %v1989 = vshll.u32 %v1899, 16
      %v1991 = vrot.slane %v1989, 5
      %v1992 = vor.u32 %v1988, %v1991
      %v1994 = vshrl.u32 %v1900, 16
      %v1996 = vrot.slane %v1994, 4
      %v1997 = vshll.u32 %v1900, 16
      %v1999 = vrot.slane %v1997, 5
      %v2000 = vor.u32 %v1996, %v1999
      %v2002 = vshrl.u32 %v1901, 16
      %v2004 = vrot.slane %v2002, 4
      %v2005 = vshll.u32 %v1901, 16
      %v2007 = vrot.slane %v2005, 5
      %v2008 = vor.u32 %v2004, %v2007
      %v2010 = vshrl.u32 %v1902, 16
      %v2012 = vrot.slane %v2010, 4
      %v2013 = vshll.u32 %v1902, 16
      %v2015 = vrot.slane %v2013, 5
      %v2016 = vor.u32 %v2012, %v2015
      %v2018 = vshrl.u32 %v1903, 16
      %v2020 = vrot.slane %v2018, 4
      %v2021 = vshll.u32 %v1903, 16
      %v2023 = vrot.slane %v2021, 5
      %v2024 = vor.u32 %v2020, %v2023
      %v2026 = vshrl.u32 %v1904, 16
      %v2028 = vrot.slane %v2026, 4
      %v2029 = vshll.u32 %v1904, 16
      %v2031 = vrot.slane %v2029, 5
      %v2032 = vor.u32 %v2028, %v2031
      %v2049 = vunpack.c.l.b16 %v1700
      %v2050 = vunpack.c.l.b16 %v1704
      %v2051 = vunpack.c.l.b16 %v1708
      %v2052 = vunpack.c.l.b16 %v1712
      %v2053 = vunpack.c.l.b16 %v1716
      %v2054 = vunpack.c.l.b16 %v1720
      %v2055 = vunpack.c.l.b16 %v1724
      %v2056 = vunpack.c.l.b16 %v1728
      %v2057 = vunpack.c.l.b16 %v1732
      %v2058 = vunpack.c.l.b16 %v1736
      %v2059 = vunpack.c.l.b16 %v1740
      %v2060 = vunpack.c.l.b16 %v1744
      %v2061 = vunpack.c.l.b16 %v1748
      %v2062 = vunpack.c.l.b16 %v1752
      %v2063 = vunpack.c.l.b16 %v1756
      %v2064 = vunpack.c.l.b16 %v1760
      %v2065 = vpack.c.b16 %v2049, %v2049
      %v2066 = vpack.c.b16 %v2050, %v2050
      %v2067 = vpack.c.b16 %v2051, %v2051
      %v2068 = vpack.c.b16 %v2052, %v2052
      %v2069 = vpack.c.b16 %v2053, %v2053
      %v2070 = vpack.c.b16 %v2054, %v2054
      %v2071 = vpack.c.b16 %v2055, %v2055
      %v2072 = vpack.c.b16 %v2056, %v2056
      %v2073 = vpack.c.b16 %v2057, %v2057
      %v2074 = vpack.c.b16 %v2058, %v2058
      %v2075 = vpack.c.b16 %v2059, %v2059
      %v2076 = vpack.c.b16 %v2060, %v2060
      %v2077 = vpack.c.b16 %v2061, %v2061
      %v2078 = vpack.c.b16 %v2062, %v2062
      %v2079 = vpack.c.b16 %v2063, %v2063
      %v2080 = vpack.c.b16 %v2064, %v2064
      %v2081 = vrot.slane %v1889, 5
      %v2082 = vrot.slane %v2065, 5
      %v2083 = vsel %vm863, %v2081, %v2082
      %v2084 = vrot.slane %v1890, 5
      %v2085 = vrot.slane %v2066, 5
      %v2086 = vsel %vm863, %v2084, %v2085
      %v2087 = vrot.slane %v1891, 5
      %v2088 = vrot.slane %v2067, 5
      %v2089 = vsel %vm863, %v2087, %v2088
      %v2090 = vrot.slane %v1892, 5
      %v2091 = vrot.slane %v2068, 5
      %v2092 = vsel %vm863, %v2090, %v2091
      %v2093 = vrot.slane %v1893, 5
      %v2094 = vrot.slane %v2069, 5
      %v2095 = vsel %vm863, %v2093, %v2094
      %v2096 = vrot.slane %v1894, 5
      %v2097 = vrot.slane %v2070, 5
      %v2098 = vsel %vm863, %v2096, %v2097
      %v2099 = vrot.slane %v1895, 5
      %v2100 = vrot.slane %v2071, 5
      %v2101 = vsel %vm863, %v2099, %v2100
      %v2102 = vrot.slane %v1896, 5
      %v2103 = vrot.slane %v2072, 5
      %v2104 = vsel %vm863, %v2102, %v2103
      %v2105 = vrot.slane %v1897, 5
      %v2106 = vrot.slane %v2073, 5
      %v2107 = vsel %vm863, %v2105, %v2106
      %v2108 = vrot.slane %v1898, 5
      %v2109 = vrot.slane %v2074, 5
      %v2110 = vsel %vm863, %v2108, %v2109
      %v2111 = vrot.slane %v1899, 5
      %v2112 = vrot.slane %v2075, 5
      %v2113 = vsel %vm863, %v2111, %v2112
      %v2114 = vrot.slane %v1900, 5
      %v2115 = vrot.slane %v2076, 5
      %v2116 = vsel %vm863, %v2114, %v2115
      %v2117 = vrot.slane %v1901, 5
      %v2118 = vrot.slane %v2077, 5
      %v2119 = vsel %vm863, %v2117, %v2118
      %v2120 = vrot.slane %v1902, 5
      %v2121 = vrot.slane %v2078, 5
      %v2122 = vsel %vm863, %v2120, %v2121
      %v2123 = vrot.slane %v1903, 5
      %v2124 = vrot.slane %v2079, 5
      %v2125 = vsel %vm863, %v2123, %v2124
      %v2126 = vrot.slane %v1904, 5
      %v2127 = vrot.slane %v2080, 5
      %v2128 = vsel %vm863, %v2126, %v2127
      %v2130 = vshrl.u32 %v1857, 16
      %v2132 = vrot.slane %v2130, 3
      %v2133 = vshll.u32 %v1857, 16
      %v2135 = vrot.slane %v2133, 4
      %v2136 = vor.u32 %v2132, %v2135
      %v2138 = vshrl.u32 %v1858, 16
      %v2140 = vrot.slane %v2138, 3
      %v2141 = vshll.u32 %v1858, 16
      %v2143 = vrot.slane %v2141, 4
      %v2144 = vor.u32 %v2140, %v2143
      %v2145 = vsel %vm912, %v2136, %v2144
      %v2147 = vshrl.u32 %v1912, 16
      %v2149 = vrot.slane %v2147, 3
      %v2150 = vshll.u32 %v1912, 16
      %v2152 = vrot.slane %v2150, 4
      %v2153 = vor.u32 %v2149, %v2152
      %v2154 = vsel %vm912, %v2153, %v2153
      %v2156 = vshrl.u32 %v2081, 16
      %v2158 = vrot.slane %v2156, 3
      %v2159 = vshll.u32 %v2081, 16
      %v2161 = vrot.slane %v2159, 4
      %v2162 = vor.u32 %v2158, %v2161
      %v2164 = vshrl.u32 %v2083, 16
      %v2166 = vrot.slane %v2164, 3
      %v2167 = vshll.u32 %v2083, 16
      %v2169 = vrot.slane %v2167, 4
      %v2170 = vor.u32 %v2166, %v2169
      %v2171 = vsel %vm912, %v2162, %v2170
      %v2173 = vshrl.u32 %v1859, 16
      %v2175 = vrot.slane %v2173, 3
      %v2176 = vshll.u32 %v1859, 16
      %v2178 = vrot.slane %v2176, 4
      %v2179 = vor.u32 %v2175, %v2178
      %v2181 = vshrl.u32 %v1860, 16
      %v2183 = vrot.slane %v2181, 3
      %v2184 = vshll.u32 %v1860, 16
      %v2186 = vrot.slane %v2184, 4
      %v2187 = vor.u32 %v2183, %v2186
      %v2188 = vsel %vm912, %v2179, %v2187
      %v2190 = vshrl.u32 %v1920, 16
      %v2192 = vrot.slane %v2190, 3
      %v2193 = vshll.u32 %v1920, 16
      %v2195 = vrot.slane %v2193, 4
      %v2196 = vor.u32 %v2192, %v2195
      %v2197 = vsel %vm912, %v2196, %v2196
      %v2199 = vshrl.u32 %v2084, 16
      %v2201 = vrot.slane %v2199, 3
      %v2202 = vshll.u32 %v2084, 16
      %v2204 = vrot.slane %v2202, 4
      %v2205 = vor.u32 %v2201, %v2204
      %v2207 = vshrl.u32 %v2086, 16
      %v2209 = vrot.slane %v2207, 3
      %v2210 = vshll.u32 %v2086, 16
      %v2212 = vrot.slane %v2210, 4
      %v2213 = vor.u32 %v2209, %v2212
      %v2214 = vsel %vm912, %v2205, %v2213
      %v2216 = vshrl.u32 %v1861, 16
      %v2218 = vrot.slane %v2216, 3
      %v2219 = vshll.u32 %v1861, 16
      %v2221 = vrot.slane %v2219, 4
      %v2222 = vor.u32 %v2218, %v2221
      %v2224 = vshrl.u32 %v1862, 16
      %v2226 = vrot.slane %v2224, 3
      %v2227 = vshll.u32 %v1862, 16
      %v2229 = vrot.slane %v2227, 4
      %v2230 = vor.u32 %v2226, %v2229
      %v2231 = vsel %vm912, %v2222, %v2230
      %v2233 = vshrl.u32 %v1928, 16
      %v2235 = vrot.slane %v2233, 3
      %v2236 = vshll.u32 %v1928, 16
      %v2238 = vrot.slane %v2236, 4
      %v2239 = vor.u32 %v2235, %v2238
      %v2240 = vsel %vm912, %v2239, %v2239
      %v2242 = vshrl.u32 %v2087, 16
      %v2244 = vrot.slane %v2242, 3
      %v2245 = vshll.u32 %v2087, 16
      %v2247 = vrot.slane %v2245, 4
      %v2248 = vor.u32 %v2244, %v2247
      %v2250 = vshrl.u32 %v2089, 16
      %v2252 = vrot.slane %v2250, 3
      %v2253 = vshll.u32 %v2089, 16
      %v2255 = vrot.slane %v2253, 4
      %v2256 = vor.u32 %v2252, %v2255
      %v2257 = vsel %vm912, %v2248, %v2256
      %v2259 = vshrl.u32 %v1863, 16
      %v2261 = vrot.slane %v2259, 3
      %v2262 = vshll.u32 %v1863, 16
      %v2264 = vrot.slane %v2262, 4
      %v2265 = vor.u32 %v2261, %v2264
      %v2267 = vshrl.u32 %v1864, 16
      %v2269 = vrot.slane %v2267, 3
      %v2270 = vshll.u32 %v1864, 16
      %v2272 = vrot.slane %v2270, 4
      %v2273 = vor.u32 %v2269, %v2272
      %v2274 = vsel %vm912, %v2265, %v2273
      %v2276 = vshrl.u32 %v1936, 16
      %v2278 = vrot.slane %v2276, 3
      %v2279 = vshll.u32 %v1936, 16
      %v2281 = vrot.slane %v2279, 4
      %v2282 = vor.u32 %v2278, %v2281
      %v2283 = vsel %vm912, %v2282, %v2282
      %v2285 = vshrl.u32 %v2090, 16
      %v2287 = vrot.slane %v2285, 3
      %v2288 = vshll.u32 %v2090, 16
      %v2290 = vrot.slane %v2288, 4
      %v2291 = vor.u32 %v2287, %v2290
      %v2293 = vshrl.u32 %v2092, 16
      %v2295 = vrot.slane %v2293, 3
      %v2296 = vshll.u32 %v2092, 16
      %v2298 = vrot.slane %v2296, 4
      %v2299 = vor.u32 %v2295, %v2298
      %v2300 = vsel %vm912, %v2291, %v2299
      %v2302 = vshrl.u32 %v1865, 16
      %v2304 = vrot.slane %v2302, 3
      %v2305 = vshll.u32 %v1865, 16
      %v2307 = vrot.slane %v2305, 4
      %v2308 = vor.u32 %v2304, %v2307
      %v2310 = vshrl.u32 %v1866, 16
      %v2312 = vrot.slane %v2310, 3
      %v2313 = vshll.u32 %v1866, 16
      %v2315 = vrot.slane %v2313, 4
      %v2316 = vor.u32 %v2312, %v2315
      %v2317 = vsel %vm912, %v2308, %v2316
      %v2319 = vshrl.u32 %v1944, 16
      %v2321 = vrot.slane %v2319, 3
      %v2322 = vshll.u32 %v1944, 16
      %v2324 = vrot.slane %v2322, 4
      %v2325 = vor.u32 %v2321, %v2324
      %v2326 = vsel %vm912, %v2325, %v2325
      %v2328 = vshrl.u32 %v2093, 16
      %v2330 = vrot.slane %v2328, 3
      %v2331 = vshll.u32 %v2093, 16
      %v2333 = vrot.slane %v2331, 4
      %v2334 = vor.u32 %v2330, %v2333
      %v2336 = vshrl.u32 %v2095, 16
      %v2338 = vrot.slane %v2336, 3
      %v2339 = vshll.u32 %v2095, 16
      %v2341 = vrot.slane %v2339, 4
      %v2342 = vor.u32 %v2338, %v2341
      %v2343 = vsel %vm912, %v2334, %v2342
      %v2345 = vshrl.u32 %v1867, 16
      %v2347 = vrot.slane %v2345, 3
      %v2348 = vshll.u32 %v1867, 16
      %v2350 = vrot.slane %v2348, 4
      %v2351 = vor.u32 %v2347, %v2350
      %v2353 = vshrl.u32 %v1868, 16
      %v2355 = vrot.slane %v2353, 3
      %v2356 = vshll.u32 %v1868, 16
      %v2358 = vrot.slane %v2356, 4
      %v2359 = vor.u32 %v2355, %v2358
      %v2360 = vsel %vm912, %v2351, %v2359
      %v2362 = vshrl.u32 %v1952, 16
      %v2364 = vrot.slane %v2362, 3
      %v2365 = vshll.u32 %v1952, 16
      %v2367 = vrot.slane %v2365, 4
      %v2368 = vor.u32 %v2364, %v2367
      %v2369 = vsel %vm912, %v2368, %v2368
      %v2371 = vshrl.u32 %v2096, 16
      %v2373 = vrot.slane %v2371, 3
      %v2374 = vshll.u32 %v2096, 16
      %v2376 = vrot.slane %v2374, 4
      %v2377 = vor.u32 %v2373, %v2376
      %v2379 = vshrl.u32 %v2098, 16
      %v2381 = vrot.slane %v2379, 3
      %v2382 = vshll.u32 %v2098, 16
      %v2384 = vrot.slane %v2382, 4
      %v2385 = vor.u32 %v2381, %v2384
      %v2386 = vsel %vm912, %v2377, %v2385
      %v2388 = vshrl.u32 %v1869, 16
      %v2390 = vrot.slane %v2388, 3
      %v2391 = vshll.u32 %v1869, 16
      %v2393 = vrot.slane %v2391, 4
      %v2394 = vor.u32 %v2390, %v2393
      %v2396 = vshrl.u32 %v1870, 16
      %v2398 = vrot.slane %v2396, 3
      %v2399 = vshll.u32 %v1870, 16
      %v2401 = vrot.slane %v2399, 4
      %v2402 = vor.u32 %v2398, %v2401
      %v2403 = vsel %vm912, %v2394, %v2402
      %v2405 = vshrl.u32 %v1960, 16
      %v2407 = vrot.slane %v2405, 3
      %v2408 = vshll.u32 %v1960, 16
      %v2410 = vrot.slane %v2408, 4
      %v2411 = vor.u32 %v2407, %v2410
      %v2412 = vsel %vm912, %v2411, %v2411
      %v2414 = vshrl.u32 %v2099, 16
      %v2416 = vrot.slane %v2414, 3
      %v2417 = vshll.u32 %v2099, 16
      %v2419 = vrot.slane %v2417, 4
      %v2420 = vor.u32 %v2416, %v2419
      %v2422 = vshrl.u32 %v2101, 16
      %v2424 = vrot.slane %v2422, 3
      %v2425 = vshll.u32 %v2101, 16
      %v2427 = vrot.slane %v2425, 4
      %v2428 = vor.u32 %v2424, %v2427
      %v2429 = vsel %vm912, %v2420, %v2428
      %v2431 = vshrl.u32 %v1871, 16
      %v2433 = vrot.slane %v2431, 3
      %v2434 = vshll.u32 %v1871, 16
      %v2436 = vrot.slane %v2434, 4
      %v2437 = vor.u32 %v2433, %v2436
      %v2439 = vshrl.u32 %v1872, 16
      %v2441 = vrot.slane %v2439, 3
      %v2442 = vshll.u32 %v1872, 16
      %v2444 = vrot.slane %v2442, 4
      %v2445 = vor.u32 %v2441, %v2444
      %v2446 = vsel %vm912, %v2437, %v2445
      %v2448 = vshrl.u32 %v1968, 16
      %v2450 = vrot.slane %v2448, 3
      %v2451 = vshll.u32 %v1968, 16
      %v2453 = vrot.slane %v2451, 4
      %v2454 = vor.u32 %v2450, %v2453
      %v2455 = vsel %vm912, %v2454, %v2454
      %v2457 = vshrl.u32 %v2102, 16
      %v2459 = vrot.slane %v2457, 3
      %v2460 = vshll.u32 %v2102, 16
      %v2462 = vrot.slane %v2460, 4
      %v2463 = vor.u32 %v2459, %v2462
      %v2465 = vshrl.u32 %v2104, 16
      %v2467 = vrot.slane %v2465, 3
      %v2468 = vshll.u32 %v2104, 16
      %v2470 = vrot.slane %v2468, 4
      %v2471 = vor.u32 %v2467, %v2470
      %v2472 = vsel %vm912, %v2463, %v2471
      %v2474 = vshrl.u32 %v1873, 16
      %v2476 = vrot.slane %v2474, 3
      %v2477 = vshll.u32 %v1873, 16
      %v2479 = vrot.slane %v2477, 4
      %v2480 = vor.u32 %v2476, %v2479
      %v2482 = vshrl.u32 %v1874, 16
      %v2484 = vrot.slane %v2482, 3
      %v2485 = vshll.u32 %v1874, 16
      %v2487 = vrot.slane %v2485, 4
      %v2488 = vor.u32 %v2484, %v2487
      %v2489 = vsel %vm912, %v2480, %v2488
      %v2491 = vshrl.u32 %v1976, 16
      %v2493 = vrot.slane %v2491, 3
      %v2494 = vshll.u32 %v1976, 16
      %v2496 = vrot.slane %v2494, 4
      %v2497 = vor.u32 %v2493, %v2496
      %v2498 = vsel %vm912, %v2497, %v2497
      %v2500 = vshrl.u32 %v2105, 16
      %v2502 = vrot.slane %v2500, 3
      %v2503 = vshll.u32 %v2105, 16
      %v2505 = vrot.slane %v2503, 4
      %v2506 = vor.u32 %v2502, %v2505
      %v2508 = vshrl.u32 %v2107, 16
      %v2510 = vrot.slane %v2508, 3
      %v2511 = vshll.u32 %v2107, 16
      %v2513 = vrot.slane %v2511, 4
      %v2514 = vor.u32 %v2510, %v2513
      %v2515 = vsel %vm912, %v2506, %v2514
      %v2517 = vshrl.u32 %v1875, 16
      %v2519 = vrot.slane %v2517, 3
      %v2520 = vshll.u32 %v1875, 16
      %v2522 = vrot.slane %v2520, 4
      %v2523 = vor.u32 %v2519, %v2522
      %v2525 = vshrl.u32 %v1876, 16
      %v2527 = vrot.slane %v2525, 3
      %v2528 = vshll.u32 %v1876, 16
      %v2530 = vrot.slane %v2528, 4
      %v2531 = vor.u32 %v2527, %v2530
      %v2532 = vsel %vm912, %v2523, %v2531
      %v2534 = vshrl.u32 %v1984, 16
      %v2536 = vrot.slane %v2534, 3
      %v2537 = vshll.u32 %v1984, 16
      %v2539 = vrot.slane %v2537, 4
      %v2540 = vor.u32 %v2536, %v2539
      %v2541 = vsel %vm912, %v2540, %v2540
      %v2543 = vshrl.u32 %v2108, 16
      %v2545 = vrot.slane %v2543, 3
      %v2546 = vshll.u32 %v2108, 16
      %v2548 = vrot.slane %v2546, 4
      %v2549 = vor.u32 %v2545, %v2548
      %v2551 = vshrl.u32 %v2110, 16
      %v2553 = vrot.slane %v2551, 3
      %v2554 = vshll.u32 %v2110, 16
      %v2556 = vrot.slane %v2554, 4
      %v2557 = vor.u32 %v2553, %v2556
      %v2558 = vsel %vm912, %v2549, %v2557
      %v2560 = vshrl.u32 %v1877, 16
      %v2562 = vrot.slane %v2560, 3
      %v2563 = vshll.u32 %v1877, 16
      %v2565 = vrot.slane %v2563, 4
      %v2566 = vor.u32 %v2562, %v2565
      %v2568 = vshrl.u32 %v1878, 16
      %v2570 = vrot.slane %v2568, 3
      %v2571 = vshll.u32 %v1878, 16
      %v2573 = vrot.slane %v2571, 4
      %v2574 = vor.u32 %v2570, %v2573
      %v2575 = vsel %vm912, %v2566, %v2574
      %v2577 = vshrl.u32 %v1992, 16
      %v2579 = vrot.slane %v2577, 3
      %v2580 = vshll.u32 %v1992, 16
      %v2582 = vrot.slane %v2580, 4
      %v2583 = vor.u32 %v2579, %v2582
      %v2584 = vsel %vm912, %v2583, %v2583
      %v2586 = vshrl.u32 %v2111, 16
      %v2588 = vrot.slane %v2586, 3
      %v2589 = vshll.u32 %v2111, 16
      %v2591 = vrot.slane %v2589, 4
      %v2592 = vor.u32 %v2588, %v2591
      %v2594 = vshrl.u32 %v2113, 16
      %v2596 = vrot.slane %v2594, 3
      %v2597 = vshll.u32 %v2113, 16
      %v2599 = vrot.slane %v2597, 4
      %v2600 = vor.u32 %v2596, %v2599
      %v2601 = vsel %vm912, %v2592, %v2600
      %v2603 = vshrl.u32 %v1879, 16
      %v2605 = vrot.slane %v2603, 3
      %v2606 = vshll.u32 %v1879, 16
      %v2608 = vrot.slane %v2606, 4
      %v2609 = vor.u32 %v2605, %v2608
      %v2611 = vshrl.u32 %v1880, 16
      %v2613 = vrot.slane %v2611, 3
      %v2614 = vshll.u32 %v1880, 16
      %v2616 = vrot.slane %v2614, 4
      %v2617 = vor.u32 %v2613, %v2616
      %v2618 = vsel %vm912, %v2609, %v2617
      %v2620 = vshrl.u32 %v2000, 16
      %v2622 = vrot.slane %v2620, 3
      %v2623 = vshll.u32 %v2000, 16
      %v2625 = vrot.slane %v2623, 4
      %v2626 = vor.u32 %v2622, %v2625
      %v2627 = vsel %vm912, %v2626, %v2626
      %v2629 = vshrl.u32 %v2114, 16
      %v2631 = vrot.slane %v2629, 3
      %v2632 = vshll.u32 %v2114, 16
      %v2634 = vrot.slane %v2632, 4
      %v2635 = vor.u32 %v2631, %v2634
      %v2637 = vshrl.u32 %v2116, 16
      %v2639 = vrot.slane %v2637, 3
      %v2640 = vshll.u32 %v2116, 16
      %v2642 = vrot.slane %v2640, 4
      %v2643 = vor.u32 %v2639, %v2642
      %v2644 = vsel %vm912, %v2635, %v2643
      %v2646 = vshrl.u32 %v1881, 16
      %v2648 = vrot.slane %v2646, 3
      %v2649 = vshll.u32 %v1881, 16
      %v2651 = vrot.slane %v2649, 4
      %v2652 = vor.u32 %v2648, %v2651
      %v2654 = vshrl.u32 %v1882, 16
      %v2656 = vrot.slane %v2654, 3
      %v2657 = vshll.u32 %v1882, 16
      %v2659 = vrot.slane %v2657, 4
      %v2660 = vor.u32 %v2656, %v2659
      %v2661 = vsel %vm912, %v2652, %v2660
      %v2663 = vshrl.u32 %v2008, 16
      %v2665 = vrot.slane %v2663, 3
      %v2666 = vshll.u32 %v2008, 16
      %v2668 = vrot.slane %v2666, 4
      %v2669 = vor.u32 %v2665, %v2668
      %v2670 = vsel %vm912, %v2669, %v2669
      %v2672 = vshrl.u32 %v2117, 16
      %v2674 = vrot.slane %v2672, 3
      %v2675 = vshll.u32 %v2117, 16
      %v2677 = vrot.slane %v2675, 4
      %v2678 = vor.u32 %v2674, %v2677
      %v2680 = vshrl.u32 %v2119, 16
      %v2682 = vrot.slane %v2680, 3
      %v2683 = vshll.u32 %v2119, 16
      %v2685 = vrot.slane %v2683, 4
      %v2686 = vor.u32 %v2682, %v2685
      %v2687 = vsel %vm912, %v2678, %v2686
      %v2689 = vshrl.u32 %v1883, 16
      %v2691 = vrot.slane %v2689, 3
      %v2692 = vshll.u32 %v1883, 16
      %v2694 = vrot.slane %v2692, 4
      %v2695 = vor.u32 %v2691, %v2694
      %v2697 = vshrl.u32 %v1884, 16
      %v2699 = vrot.slane %v2697, 3
      %v2700 = vshll.u32 %v1884, 16
      %v2702 = vrot.slane %v2700, 4
      %v2703 = vor.u32 %v2699, %v2702
      %v2704 = vsel %vm912, %v2695, %v2703
      %v2706 = vshrl.u32 %v2016, 16
      %v2708 = vrot.slane %v2706, 3
      %v2709 = vshll.u32 %v2016, 16
      %v2711 = vrot.slane %v2709, 4
      %v2712 = vor.u32 %v2708, %v2711
      %v2713 = vsel %vm912, %v2712, %v2712
      %v2715 = vshrl.u32 %v2120, 16
      %v2717 = vrot.slane %v2715, 3
      %v2718 = vshll.u32 %v2120, 16
      %v2720 = vrot.slane %v2718, 4
      %v2721 = vor.u32 %v2717, %v2720
      %v2723 = vshrl.u32 %v2122, 16
      %v2725 = vrot.slane %v2723, 3
      %v2726 = vshll.u32 %v2122, 16
      %v2728 = vrot.slane %v2726, 4
      %v2729 = vor.u32 %v2725, %v2728
      %v2730 = vsel %vm912, %v2721, %v2729
      %v2732 = vshrl.u32 %v1885, 16
      %v2734 = vrot.slane %v2732, 3
      %v2735 = vshll.u32 %v1885, 16
      %v2737 = vrot.slane %v2735, 4
      %v2738 = vor.u32 %v2734, %v2737
      %v2740 = vshrl.u32 %v1886, 16
      %v2742 = vrot.slane %v2740, 3
      %v2743 = vshll.u32 %v1886, 16
      %v2745 = vrot.slane %v2743, 4
      %v2746 = vor.u32 %v2742, %v2745
      %v2747 = vsel %vm912, %v2738, %v2746
      %v2749 = vshrl.u32 %v2024, 16
      %v2751 = vrot.slane %v2749, 3
      %v2752 = vshll.u32 %v2024, 16
      %v2754 = vrot.slane %v2752, 4
      %v2755 = vor.u32 %v2751, %v2754
      %v2756 = vsel %vm912, %v2755, %v2755
      %v2758 = vshrl.u32 %v2123, 16
      %v2760 = vrot.slane %v2758, 3
      %v2761 = vshll.u32 %v2123, 16
      %v2763 = vrot.slane %v2761, 4
      %v2764 = vor.u32 %v2760, %v2763
      %v2766 = vshrl.u32 %v2125, 16
      %v2768 = vrot.slane %v2766, 3
      %v2769 = vshll.u32 %v2125, 16
      %v2771 = vrot.slane %v2769, 4
      %v2772 = vor.u32 %v2768, %v2771
      %v2773 = vsel %vm912, %v2764, %v2772
      %v2775 = vshrl.u32 %v1887, 16
      %v2777 = vrot.slane %v2775, 3
      %v2778 = vshll.u32 %v1887, 16
      %v2780 = vrot.slane %v2778, 4
      %v2781 = vor.u32 %v2777, %v2780
      %v2783 = vshrl.u32 %v1888, 16
      %v2785 = vrot.slane %v2783, 3
      %v2786 = vshll.u32 %v1888, 16
      %v2788 = vrot.slane %v2786, 4
      %v2789 = vor.u32 %v2785, %v2788
      %v2790 = vsel %vm912, %v2781, %v2789
      %v2792 = vshrl.u32 %v2032, 16
      %v2794 = vrot.slane %v2792, 3
      %v2795 = vshll.u32 %v2032, 16
      %v2797 = vrot.slane %v2795, 4
      %v2798 = vor.u32 %v2794, %v2797
      %v2799 = vsel %vm912, %v2798, %v2798
      %v2801 = vshrl.u32 %v2126, 16
      %v2803 = vrot.slane %v2801, 3
      %v2804 = vshll.u32 %v2126, 16
      %v2806 = vrot.slane %v2804, 4
      %v2807 = vor.u32 %v2803, %v2806
      %v2809 = vshrl.u32 %v2128, 16
      %v2811 = vrot.slane %v2809, 3
      %v2812 = vshll.u32 %v2128, 16
      %v2814 = vrot.slane %v2812, 4
      %v2815 = vor.u32 %v2811, %v2814
      %v2816 = vsel %vm912, %v2807, %v2815
      %s2865 = scalar_lea.vmem %s3, 192
      %v2866 = vld [vmem:[%s2865] sm:$0xf]
      %v2867 = vld [vmem:[%s2865 + $0x4] sm:$0xf]
      %v2868 = vld [vmem:[%s2865 + $0x8] sm:$0xf]
      %v2869 = vld [vmem:[%s2865 + $0xc] sm:$0xf]
      %v2870 = vld [vmem:[%s2865 + $0x10] sm:$0xf]
      %v2871 = vld [vmem:[%s2865 + $0x14] sm:$0xf]
      %v2872 = vld [vmem:[%s2865 + $0x18] sm:$0xf]
      %v2873 = vld [vmem:[%s2865 + $0x1c] sm:$0xf]
      %v2874 = vld [vmem:[%s2865 + $0x20] sm:$0xf]
      %v2875 = vld [vmem:[%s2865 + $0x24] sm:$0xf]
      %v2876 = vld [vmem:[%s2865 + $0x28] sm:$0xf]
      %v2877 = vld [vmem:[%s2865 + $0x2c] sm:$0xf]
      %v2878 = vld [vmem:[%s2865 + $0x30] sm:$0xf]
      %v2879 = vld [vmem:[%s2865 + $0x34] sm:$0xf]
      %v2880 = vld [vmem:[%s2865 + $0x38] sm:$0xf]
      %v2881 = vld [vmem:[%s2865 + $0x3c] sm:$0xf]
      %v2882 = vld [vmem:[%s2865 + $0x40] sm:$0xf]
      %v2883 = vld [vmem:[%s2865 + $0x44] sm:$0xf]
      %v2884 = vld [vmem:[%s2865 + $0x48] sm:$0xf]
      %v2885 = vld [vmem:[%s2865 + $0x4c] sm:$0xf]
      %v2886 = vld [vmem:[%s2865 + $0x50] sm:$0xf]
      %v2887 = vld [vmem:[%s2865 + $0x54] sm:$0xf]
      %v2888 = vld [vmem:[%s2865 + $0x58] sm:$0xf]
      %v2889 = vld [vmem:[%s2865 + $0x5c] sm:$0xf]
      %v2890 = vld [vmem:[%s2865 + $0x60] sm:$0xf]
      %v2891 = vld [vmem:[%s2865 + $0x64] sm:$0xf]
      %v2892 = vld [vmem:[%s2865 + $0x68] sm:$0xf]
      %v2893 = vld [vmem:[%s2865 + $0x6c] sm:$0xf]
      %v2894 = vld [vmem:[%s2865 + $0x70] sm:$0xf]
      %v2895 = vld [vmem:[%s2865 + $0x74] sm:$0xf]
      %v2896 = vld [vmem:[%s2865 + $0x78] sm:$0xf]
      %v2897 = vld [vmem:[%s2865 + $0x7c] sm:$0xf]
      %v2898 = vld [vmem:[%s2865 + $0x80] sm:$0xf]
      %v2899 = vld [vmem:[%s2865 + $0x84] sm:$0xf]
      %v2900 = vld [vmem:[%s2865 + $0x88] sm:$0xf]
      %v2901 = vld [vmem:[%s2865 + $0x8c] sm:$0xf]
      %v2902 = vld [vmem:[%s2865 + $0x90] sm:$0xf]
      %v2903 = vld [vmem:[%s2865 + $0x94] sm:$0xf]
      %v2904 = vld [vmem:[%s2865 + $0x98] sm:$0xf]
      %v2905 = vld [vmem:[%s2865 + $0x9c] sm:$0xf]
      %v2906 = vld [vmem:[%s2865 + $0xa0] sm:$0xf]
      %v2907 = vld [vmem:[%s2865 + $0xa4] sm:$0xf]
      %v2908 = vld [vmem:[%s2865 + $0xa8] sm:$0xf]
      %v2909 = vld [vmem:[%s2865 + $0xac] sm:$0xf]
      %v2910 = vld [vmem:[%s2865 + $0xb0] sm:$0xf]
      %v2911 = vld [vmem:[%s2865 + $0xb4] sm:$0xf]
      %v2912 = vld [vmem:[%s2865 + $0xb8] sm:$0xf]
      %v2913 = vld [vmem:[%s2865 + $0xbc] sm:$0xf]
      %v2962 = vunpack.c.l.b16 %v2866
      %v2963 = vunpack.c.l.b16 %v2867
      %v2964 = vunpack.c.l.b16 %v2868
      %v2965 = vunpack.c.l.b16 %v2869
      %v2966 = vunpack.c.l.b16 %v2870
      %v2967 = vunpack.c.l.b16 %v2871
      %v2968 = vunpack.c.l.b16 %v2872
      %v2969 = vunpack.c.l.b16 %v2873
      %v2970 = vunpack.c.l.b16 %v2874
      %v2971 = vunpack.c.l.b16 %v2875
      %v2972 = vunpack.c.l.b16 %v2876
      %v2973 = vunpack.c.l.b16 %v2877
      %v2974 = vunpack.c.l.b16 %v2878
      %v2975 = vunpack.c.l.b16 %v2879
      %v2976 = vunpack.c.l.b16 %v2880
      %v2977 = vunpack.c.l.b16 %v2881
      %v2978 = vunpack.c.l.b16 %v2882
      %v2979 = vunpack.c.l.b16 %v2883
      %v2980 = vunpack.c.l.b16 %v2884
      %v2981 = vunpack.c.l.b16 %v2885
      %v2982 = vunpack.c.l.b16 %v2886
      %v2983 = vunpack.c.l.b16 %v2887
      %v2984 = vunpack.c.l.b16 %v2888
      %v2985 = vunpack.c.l.b16 %v2889
      %v2986 = vunpack.c.l.b16 %v2890
      %v2987 = vunpack.c.l.b16 %v2891
      %v2988 = vunpack.c.l.b16 %v2892
      %v2989 = vunpack.c.l.b16 %v2893
      %v2990 = vunpack.c.l.b16 %v2894
      %v2991 = vunpack.c.l.b16 %v2895
      %v2992 = vunpack.c.l.b16 %v2896
      %v2993 = vunpack.c.l.b16 %v2897
      %v2994 = vunpack.c.l.b16 %v2898
      %v2995 = vunpack.c.l.b16 %v2899
      %v2996 = vunpack.c.l.b16 %v2900
      %v2997 = vunpack.c.l.b16 %v2901
      %v2998 = vunpack.c.l.b16 %v2902
      %v2999 = vunpack.c.l.b16 %v2903
      %v3000 = vunpack.c.l.b16 %v2904
      %v3001 = vunpack.c.l.b16 %v2905
      %v3002 = vunpack.c.l.b16 %v2906
      %v3003 = vunpack.c.l.b16 %v2907
      %v3004 = vunpack.c.l.b16 %v2908
      %v3005 = vunpack.c.l.b16 %v2909
      %v3006 = vunpack.c.l.b16 %v2910
      %v3007 = vunpack.c.l.b16 %v2911
      %v3008 = vunpack.c.l.b16 %v2912
      %v3009 = vunpack.c.l.b16 %v2913
      %v3010 = vpack.c.b16 %v2963, %v2962
      %v3011 = vpack.c.b16 %v2965, %v2964
      %v3012 = vpack.c.b16 %v2967, %v2966
      %v3013 = vpack.c.b16 %v2969, %v2968
      %v3014 = vpack.c.b16 %v2971, %v2970
      %v3015 = vpack.c.b16 %v2973, %v2972
      %v3016 = vpack.c.b16 %v2975, %v2974
      %v3017 = vpack.c.b16 %v2977, %v2976
      %v3018 = vpack.c.b16 %v2979, %v2978
      %v3019 = vpack.c.b16 %v2981, %v2980
      %v3020 = vpack.c.b16 %v2983, %v2982
      %v3021 = vpack.c.b16 %v2985, %v2984
      %v3022 = vpack.c.b16 %v2987, %v2986
      %v3023 = vpack.c.b16 %v2989, %v2988
      %v3024 = vpack.c.b16 %v2991, %v2990
      %v3025 = vpack.c.b16 %v2993, %v2992
      %v3026 = vpack.c.b16 %v2995, %v2994
      %v3027 = vpack.c.b16 %v2997, %v2996
      %v3028 = vpack.c.b16 %v2999, %v2998
      %v3029 = vpack.c.b16 %v3001, %v3000
      %v3030 = vpack.c.b16 %v3003, %v3002
      %v3031 = vpack.c.b16 %v3005, %v3004
      %v3032 = vpack.c.b16 %v3007, %v3006
      %v3033 = vpack.c.b16 %v3009, %v3008
      %3058 = vmatpush.bf16.msra.mxu0 %v3017
      %3059 = vmatpush.bf16.msra.mxu0 %v3016
      %3060 = vmatpush.bf16.msra.mxu0 %v3015
      %3061 = vmatpush.bf16.msra.mxu0 %v3014
      %3062 = vmatpush.bf16.msra.mxu0 %v3013
      %3063 = vmatpush.bf16.msra.mxu0 %v3012
      %3064 = vmatpush.bf16.msra.mxu0 %v3011
      %3065 = vmatpush.bf16.msra.mxu0 %v3010
      %3066 = vmatmul.bf16.gmra.mxu0 %v2145
      %v3067 = vpop.f32.mrf.mxu0
      %v3068 = vadd.f32 0.0, %v3067
      %v3069 = vpop.f32.mrf.mxu0
      %v3070 = vadd.f32 0.0, %v3069
      %3071 = vmatmul.bf16.gmra.mxu0 %v2188
      %v3072 = vpop.f32.mrf.mxu0
      %v3073 = vadd.f32 0.0, %v3072
      %v3074 = vpop.f32.mrf.mxu0
      %v3075 = vadd.f32 0.0, %v3074
      %3076 = vmatmul.bf16.gmra.mxu0 %v2231
      %v3077 = vpop.f32.mrf.mxu0
      %v3078 = vadd.f32 0.0, %v3077
      %v3079 = vpop.f32.mrf.mxu0
      %v3080 = vadd.f32 0.0, %v3079
      %3081 = vmatmul.bf16.gmra.mxu0 %v2274
      %v3082 = vpop.f32.mrf.mxu0
      %v3083 = vadd.f32 0.0, %v3082
      %v3084 = vpop.f32.mrf.mxu0
      %v3085 = vadd.f32 0.0, %v3084
      %3086 = vmatmul.bf16.gmra.mxu0 %v2317
      %v3087 = vpop.f32.mrf.mxu0
      %v3088 = vadd.f32 0.0, %v3087
      %v3089 = vpop.f32.mrf.mxu0
      %v3090 = vadd.f32 0.0, %v3089
      %3091 = vmatmul.bf16.gmra.mxu0 %v2360
      %v3092 = vpop.f32.mrf.mxu0
      %v3093 = vadd.f32 0.0, %v3092
      %v3094 = vpop.f32.mrf.mxu0
      %v3095 = vadd.f32 0.0, %v3094
      %3096 = vmatmul.bf16.gmra.mxu0 %v2403
      %v3097 = vpop.f32.mrf.mxu0
      %v3098 = vadd.f32 0.0, %v3097
      %v3099 = vpop.f32.mrf.mxu0
      %v3100 = vadd.f32 0.0, %v3099
      %3101 = vmatmul.bf16.gmra.mxu0 %v2446
      %v3102 = vpop.f32.mrf.mxu0
      %v3103 = vadd.f32 0.0, %v3102
      %v3104 = vpop.f32.mrf.mxu0
      %v3105 = vadd.f32 0.0, %v3104
      %3106 = vmatmul.bf16.gmra.mxu0 %v2489
      %v3107 = vpop.f32.mrf.mxu0
      %v3108 = vadd.f32 0.0, %v3107
      %v3109 = vpop.f32.mrf.mxu0
      %v3110 = vadd.f32 0.0, %v3109
      %3111 = vmatmul.bf16.gmra.mxu0 %v2532
      %v3112 = vpop.f32.mrf.mxu0
      %v3113 = vadd.f32 0.0, %v3112
      %v3114 = vpop.f32.mrf.mxu0
      %v3115 = vadd.f32 0.0, %v3114
      %3116 = vmatmul.bf16.gmra.mxu0 %v2575
      %v3117 = vpop.f32.mrf.mxu0
      %v3118 = vadd.f32 0.0, %v3117
      %v3119 = vpop.f32.mrf.mxu0
      %v3120 = vadd.f32 0.0, %v3119
      %3121 = vmatmul.bf16.gmra.mxu0 %v2618
      %v3122 = vpop.f32.mrf.mxu0
      %v3123 = vadd.f32 0.0, %v3122
      %v3124 = vpop.f32.mrf.mxu0
      %v3125 = vadd.f32 0.0, %v3124
      %3126 = vmatmul.bf16.gmra.mxu0 %v2661
      %v3127 = vpop.f32.mrf.mxu0
      %v3128 = vadd.f32 0.0, %v3127
      %v3129 = vpop.f32.mrf.mxu0
      %v3130 = vadd.f32 0.0, %v3129
      %3131 = vmatmul.bf16.gmra.mxu0 %v2704
      %v3132 = vpop.f32.mrf.mxu0
      %v3133 = vadd.f32 0.0, %v3132
      %v3134 = vpop.f32.mrf.mxu0
      %v3135 = vadd.f32 0.0, %v3134
      %3136 = vmatmul.bf16.gmra.mxu0 %v2747
      %v3137 = vpop.f32.mrf.mxu0
      %v3138 = vadd.f32 0.0, %v3137
      %v3139 = vpop.f32.mrf.mxu0
      %v3140 = vadd.f32 0.0, %v3139
      %3141 = vmatmul.bf16.gmra.mxu0 %v2790
      %v3142 = vpop.f32.mrf.mxu0
      %v3143 = vadd.f32 0.0, %v3142
      %v3144 = vpop.f32.mrf.mxu0
      %v3145 = vadd.f32 0.0, %v3144
      %3146 = vdwg.mxu0
      %3147 = vmatpush.bf16.msra.mxu0 %v3025
      %3148 = vmatpush.bf16.msra.mxu0 %v3024
      %3149 = vmatpush.bf16.msra.mxu0 %v3023
      %3150 = vmatpush.bf16.msra.mxu0 %v3022
      %3151 = vmatpush.bf16.msra.mxu0 %v3021
      %3152 = vmatpush.bf16.msra.mxu0 %v3020
      %3153 = vmatpush.bf16.msra.mxu0 %v3019
      %3154 = vmatpush.bf16.msra.mxu0 %v3018
      %3155 = vmatmul.bf16.gmra.mxu0 %v2154
      %v3156 = vpop.f32.mrf.mxu0
      %v3157 = vadd.f32 %v3068, %v3156
      %v3158 = vpop.f32.mrf.mxu0
      %v3159 = vadd.f32 %v3070, %v3158
      %3160 = vmatmul.bf16.gmra.mxu0 %v2197
      %v3161 = vpop.f32.mrf.mxu0
      %v3162 = vadd.f32 %v3073, %v3161
      %v3163 = vpop.f32.mrf.mxu0
      %v3164 = vadd.f32 %v3075, %v3163
      %3165 = vmatmul.bf16.gmra.mxu0 %v2240
      %v3166 = vpop.f32.mrf.mxu0
      %v3167 = vadd.f32 %v3078, %v3166
      %v3168 = vpop.f32.mrf.mxu0
      %v3169 = vadd.f32 %v3080, %v3168
      %3170 = vmatmul.bf16.gmra.mxu0 %v2283
      %v3171 = vpop.f32.mrf.mxu0
      %v3172 = vadd.f32 %v3083, %v3171
      %v3173 = vpop.f32.mrf.mxu0
      %v3174 = vadd.f32 %v3085, %v3173
      %3175 = vmatmul.bf16.gmra.mxu0 %v2326
      %v3176 = vpop.f32.mrf.mxu0
      %v3177 = vadd.f32 %v3088, %v3176
      %v3178 = vpop.f32.mrf.mxu0
      %v3179 = vadd.f32 %v3090, %v3178
      %3180 = vmatmul.bf16.gmra.mxu0 %v2369
      %v3181 = vpop.f32.mrf.mxu0
      %v3182 = vadd.f32 %v3093, %v3181
      %v3183 = vpop.f32.mrf.mxu0
      %v3184 = vadd.f32 %v3095, %v3183
      %3185 = vmatmul.bf16.gmra.mxu0 %v2412
      %v3186 = vpop.f32.mrf.mxu0
      %v3187 = vadd.f32 %v3098, %v3186
      %v3188 = vpop.f32.mrf.mxu0
      %v3189 = vadd.f32 %v3100, %v3188
      %3190 = vmatmul.bf16.gmra.mxu0 %v2455
      %v3191 = vpop.f32.mrf.mxu0
      %v3192 = vadd.f32 %v3103, %v3191
      %v3193 = vpop.f32.mrf.mxu0
      %v3194 = vadd.f32 %v3105, %v3193
      %3195 = vmatmul.bf16.gmra.mxu0 %v2498
      %v3196 = vpop.f32.mrf.mxu0
      %v3197 = vadd.f32 %v3108, %v3196
      %v3198 = vpop.f32.mrf.mxu0
      %v3199 = vadd.f32 %v3110, %v3198
      %3200 = vmatmul.bf16.gmra.mxu0 %v2541
      %v3201 = vpop.f32.mrf.mxu0
      %v3202 = vadd.f32 %v3113, %v3201
      %v3203 = vpop.f32.mrf.mxu0
      %v3204 = vadd.f32 %v3115, %v3203
      %3205 = vmatmul.bf16.gmra.mxu0 %v2584
      %v3206 = vpop.f32.mrf.mxu0
      %v3207 = vadd.f32 %v3118, %v3206
      %v3208 = vpop.f32.mrf.mxu0
      %v3209 = vadd.f32 %v3120, %v3208
      %3210 = vmatmul.bf16.gmra.mxu0 %v2627
      %v3211 = vpop.f32.mrf.mxu0
      %v3212 = vadd.f32 %v3123, %v3211
      %v3213 = vpop.f32.mrf.mxu0
      %v3214 = vadd.f32 %v3125, %v3213
      %3215 = vmatmul.bf16.gmra.mxu0 %v2670
      %v3216 = vpop.f32.mrf.mxu0
      %v3217 = vadd.f32 %v3128, %v3216
      %v3218 = vpop.f32.mrf.mxu0
      %v3219 = vadd.f32 %v3130, %v3218
      %3220 = vmatmul.bf16.gmra.mxu0 %v2713
      %v3221 = vpop.f32.mrf.mxu0
      %v3222 = vadd.f32 %v3133, %v3221
      %v3223 = vpop.f32.mrf.mxu0
      %v3224 = vadd.f32 %v3135, %v3223
      %3225 = vmatmul.bf16.gmra.mxu0 %v2756
      %v3226 = vpop.f32.mrf.mxu0
      %v3227 = vadd.f32 %v3138, %v3226
      %v3228 = vpop.f32.mrf.mxu0
      %v3229 = vadd.f32 %v3140, %v3228
      %3230 = vmatmul.bf16.gmra.mxu0 %v2799
      %v3231 = vpop.f32.mrf.mxu0
      %v3232 = vadd.f32 %v3143, %v3231
      %v3233 = vpop.f32.mrf.mxu0
      %v3234 = vadd.f32 %v3145, %v3233
      %3235 = vdwg.mxu0
      %3236 = vmatpush.bf16.msra.mxu0 %v3033
      %3237 = vmatpush.bf16.msra.mxu0 %v3032
      %3238 = vmatpush.bf16.msra.mxu0 %v3031
      %3239 = vmatpush.bf16.msra.mxu0 %v3030
      %3240 = vmatpush.bf16.msra.mxu0 %v3029
      %3241 = vmatpush.bf16.msra.mxu0 %v3028
      %3242 = vmatpush.bf16.msra.mxu0 %v3027
      %3243 = vmatpush.bf16.msra.mxu0 %v3026
      %3244 = vmatmul.bf16.gmra.mxu0 %v2171
      %v3245 = vpop.f32.mrf.mxu0
      %v3246 = vadd.f32 %v3157, %v3245
      %v3247 = vpop.f32.mrf.mxu0
      %v3248 = vadd.f32 %v3159, %v3247
      %3249 = vmatmul.bf16.gmra.mxu0 %v2214
      %v3250 = vpop.f32.mrf.mxu0
      %v3251 = vadd.f32 %v3162, %v3250
      %v3252 = vpop.f32.mrf.mxu0
      %v3253 = vadd.f32 %v3164, %v3252
      %3254 = vmatmul.bf16.gmra.mxu0 %v2257
      %v3255 = vpop.f32.mrf.mxu0
      %v3256 = vadd.f32 %v3167, %v3255
      %v3257 = vpop.f32.mrf.mxu0
      %v3258 = vadd.f32 %v3169, %v3257
      %3259 = vmatmul.bf16.gmra.mxu0 %v2300
      %v3260 = vpop.f32.mrf.mxu0
      %v3261 = vadd.f32 %v3172, %v3260
      %v3262 = vpop.f32.mrf.mxu0
      %v3263 = vadd.f32 %v3174, %v3262
      %3264 = vmatmul.bf16.gmra.mxu0 %v2343
      %v3265 = vpop.f32.mrf.mxu0
      %v3266 = vadd.f32 %v3177, %v3265
      %v3267 = vpop.f32.mrf.mxu0
      %v3268 = vadd.f32 %v3179, %v3267
      %3269 = vmatmul.bf16.gmra.mxu0 %v2386
      %v3270 = vpop.f32.mrf.mxu0
      %v3271 = vadd.f32 %v3182, %v3270
      %v3272 = vpop.f32.mrf.mxu0
      %v3273 = vadd.f32 %v3184, %v3272
      %3274 = vmatmul.bf16.gmra.mxu0 %v2429
      %v3275 = vpop.f32.mrf.mxu0
      %v3276 = vadd.f32 %v3187, %v3275
      %v3277 = vpop.f32.mrf.mxu0
      %v3278 = vadd.f32 %v3189, %v3277
      %3279 = vmatmul.bf16.gmra.mxu0 %v2472
      %v3280 = vpop.f32.mrf.mxu0
      %v3281 = vadd.f32 %v3192, %v3280
      %v3282 = vpop.f32.mrf.mxu0
      %v3283 = vadd.f32 %v3194, %v3282
      %3284 = vmatmul.bf16.gmra.mxu0 %v2515
      %v3285 = vpop.f32.mrf.mxu0
      %v3286 = vadd.f32 %v3197, %v3285
      %v3287 = vpop.f32.mrf.mxu0
      %v3288 = vadd.f32 %v3199, %v3287
      %3289 = vmatmul.bf16.gmra.mxu0 %v2558
      %v3290 = vpop.f32.mrf.mxu0
      %v3291 = vadd.f32 %v3202, %v3290
      %v3292 = vpop.f32.mrf.mxu0
      %v3293 = vadd.f32 %v3204, %v3292
      %3294 = vmatmul.bf16.gmra.mxu0 %v2601
      %v3295 = vpop.f32.mrf.mxu0
      %v3296 = vadd.f32 %v3207, %v3295
      %v3297 = vpop.f32.mrf.mxu0
      %v3298 = vadd.f32 %v3209, %v3297
      %3299 = vmatmul.bf16.gmra.mxu0 %v2644
      %v3300 = vpop.f32.mrf.mxu0
      %v3301 = vadd.f32 %v3212, %v3300
      %v3302 = vpop.f32.mrf.mxu0
      %v3303 = vadd.f32 %v3214, %v3302
      %3304 = vmatmul.bf16.gmra.mxu0 %v2687
      %v3305 = vpop.f32.mrf.mxu0
      %v3306 = vadd.f32 %v3217, %v3305
      %v3307 = vpop.f32.mrf.mxu0
      %v3308 = vadd.f32 %v3219, %v3307
      %3309 = vmatmul.bf16.gmra.mxu0 %v2730
      %v3310 = vpop.f32.mrf.mxu0
      %v3311 = vadd.f32 %v3222, %v3310
      %v3312 = vpop.f32.mrf.mxu0
      %v3313 = vadd.f32 %v3224, %v3312
      %3314 = vmatmul.bf16.gmra.mxu0 %v2773
      %v3315 = vpop.f32.mrf.mxu0
      %v3316 = vadd.f32 %v3227, %v3315
      %v3317 = vpop.f32.mrf.mxu0
      %v3318 = vadd.f32 %v3229, %v3317
      %3319 = vmatmul.bf16.gmra.mxu0 %v2816
      %v3320 = vpop.f32.mrf.mxu0
      %v3321 = vadd.f32 %v3232, %v3320
      %v3322 = vpop.f32.mrf.mxu0
      %v3323 = vadd.f32 %v3234, %v3322
      %3324 = vdwg.mxu0
      %v3373 = vunpack.c.l.b16 %v1649
      %v3374 = vunpack.c.l.b16 %v1650
      %v3375 = vunpack.c.l.b16 %v1651
      %v3376 = vunpack.c.l.b16 %v1652
      %v3377 = vunpack.c.l.b16 %v1653
      %v3378 = vunpack.c.l.b16 %v1654
      %v3379 = vunpack.c.l.b16 %v1655
      %v3380 = vunpack.c.l.b16 %v1656
      %v3381 = vunpack.c.l.b16 %v1657
      %v3382 = vunpack.c.l.b16 %v1658
      %v3383 = vunpack.c.l.b16 %v1659
      %v3384 = vunpack.c.l.b16 %v1660
      %v3385 = vunpack.c.l.b16 %v1661
      %v3386 = vunpack.c.l.b16 %v1662
      %v3387 = vunpack.c.l.b16 %v1663
      %v3388 = vunpack.c.l.b16 %v1664
      %v3389 = vunpack.c.l.b16 %v1665
      %v3390 = vunpack.c.l.b16 %v1666
      %v3391 = vunpack.c.l.b16 %v1667
      %v3392 = vunpack.c.l.b16 %v1668
      %v3393 = vunpack.c.l.b16 %v1669
      %v3394 = vunpack.c.l.b16 %v1670
      %v3395 = vunpack.c.l.b16 %v1671
      %v3396 = vunpack.c.l.b16 %v1672
      %v3397 = vunpack.c.l.b16 %v1673
      %v3398 = vunpack.c.l.b16 %v1674
      %v3399 = vunpack.c.l.b16 %v1675
      %v3400 = vunpack.c.l.b16 %v1676
      %v3401 = vunpack.c.l.b16 %v1677
      %v3402 = vunpack.c.l.b16 %v1678
      %v3403 = vunpack.c.l.b16 %v1679
      %v3404 = vunpack.c.l.b16 %v1680
      %v3405 = vunpack.c.l.b16 %v1681
      %v3406 = vunpack.c.l.b16 %v1682
      %v3407 = vunpack.c.l.b16 %v1683
      %v3408 = vunpack.c.l.b16 %v1684
      %v3409 = vunpack.c.l.b16 %v1685
      %v3410 = vunpack.c.l.b16 %v1686
      %v3411 = vunpack.c.l.b16 %v1687
      %v3412 = vunpack.c.l.b16 %v1688
      %v3413 = vunpack.c.l.b16 %v1689
      %v3414 = vunpack.c.l.b16 %v1690
      %v3415 = vunpack.c.l.b16 %v1691
      %v3416 = vunpack.c.l.b16 %v1692
      %v3417 = vunpack.c.l.b16 %v1693
      %v3418 = vunpack.c.l.b16 %v1694
      %v3419 = vunpack.c.l.b16 %v1695
      %v3420 = vunpack.c.l.b16 %v1696
      %v3421 = vpack.c.b16 %v3374, %v3373
      %v3422 = vpack.c.b16 %v3376, %v3375
      %v3423 = vpack.c.b16 %v3378, %v3377
      %v3424 = vpack.c.b16 %v3380, %v3379
      %v3425 = vpack.c.b16 %v3382, %v3381
      %v3426 = vpack.c.b16 %v3384, %v3383
      %v3427 = vpack.c.b16 %v3386, %v3385
      %v3428 = vpack.c.b16 %v3388, %v3387
      %v3429 = vpack.c.b16 %v3390, %v3389
      %v3430 = vpack.c.b16 %v3392, %v3391
      %v3431 = vpack.c.b16 %v3394, %v3393
      %v3432 = vpack.c.b16 %v3396, %v3395
      %v3433 = vpack.c.b16 %v3398, %v3397
      %v3434 = vpack.c.b16 %v3400, %v3399
      %v3435 = vpack.c.b16 %v3402, %v3401
      %v3436 = vpack.c.b16 %v3404, %v3403
      %v3437 = vpack.c.b16 %v3406, %v3405
      %v3438 = vpack.c.b16 %v3408, %v3407
      %v3439 = vpack.c.b16 %v3410, %v3409
      %v3440 = vpack.c.b16 %v3412, %v3411
      %v3441 = vpack.c.b16 %v3414, %v3413
      %v3442 = vpack.c.b16 %v3416, %v3415
      %v3443 = vpack.c.b16 %v3418, %v3417
      %v3444 = vpack.c.b16 %v3420, %v3419
      %3469 = vmatpush.bf16.msra.mxu0 %v3428
      %3470 = vmatpush.bf16.msra.mxu0 %v3427
      %3471 = vmatpush.bf16.msra.mxu0 %v3426
      %3472 = vmatpush.bf16.msra.mxu0 %v3425
      %3473 = vmatpush.bf16.msra.mxu0 %v3424
      %3474 = vmatpush.bf16.msra.mxu0 %v3423
      %3475 = vmatpush.bf16.msra.mxu0 %v3422
      %3476 = vmatpush.bf16.msra.mxu0 %v3421
      %3477 = vmatmul.bf16.gmra.mxu0 %v929
      %v3478 = vpop.f32.mrf.mxu0
      %v3479 = vadd.f32 %v3246, %v3478
      %v3480 = vpop.f32.mrf.mxu0
      %v3481 = vadd.f32 %v3248, %v3480
      %3482 = vmatmul.bf16.gmra.mxu0 %v972
      %v3483 = vpop.f32.mrf.mxu0
      %v3484 = vadd.f32 %v3251, %v3483
      %v3485 = vpop.f32.mrf.mxu0
      %v3486 = vadd.f32 %v3253, %v3485
      %3487 = vmatmul.bf16.gmra.mxu0 %v1015
      %v3488 = vpop.f32.mrf.mxu0
      %v3489 = vadd.f32 %v3256, %v3488
      %v3490 = vpop.f32.mrf.mxu0
      %v3491 = vadd.f32 %v3258, %v3490
      %3492 = vmatmul.bf16.gmra.mxu0 %v1058
      %v3493 = vpop.f32.mrf.mxu0
      %v3494 = vadd.f32 %v3261, %v3493
      %v3495 = vpop.f32.mrf.mxu0
      %v3496 = vadd.f32 %v3263, %v3495
      %3497 = vmatmul.bf16.gmra.mxu0 %v1101
      %v3498 = vpop.f32.mrf.mxu0
      %v3499 = vadd.f32 %v3266, %v3498
      %v3500 = vpop.f32.mrf.mxu0
      %v3501 = vadd.f32 %v3268, %v3500
      %3502 = vmatmul.bf16.gmra.mxu0 %v1144
      %v3503 = vpop.f32.mrf.mxu0
      %v3504 = vadd.f32 %v3271, %v3503
      %v3505 = vpop.f32.mrf.mxu0
      %v3506 = vadd.f32 %v3273, %v3505
      %3507 = vmatmul.bf16.gmra.mxu0 %v1187
      %v3508 = vpop.f32.mrf.mxu0
      %v3509 = vadd.f32 %v3276, %v3508
      %v3510 = vpop.f32.mrf.mxu0
      %v3511 = vadd.f32 %v3278, %v3510
      %3512 = vmatmul.bf16.gmra.mxu0 %v1230
      %v3513 = vpop.f32.mrf.mxu0
      %v3514 = vadd.f32 %v3281, %v3513
      %v3515 = vpop.f32.mrf.mxu0
      %v3516 = vadd.f32 %v3283, %v3515
      %3517 = vmatmul.bf16.gmra.mxu0 %v1273
      %v3518 = vpop.f32.mrf.mxu0
      %v3519 = vadd.f32 %v3286, %v3518
      %v3520 = vpop.f32.mrf.mxu0
      %v3521 = vadd.f32 %v3288, %v3520
      %3522 = vmatmul.bf16.gmra.mxu0 %v1316
      %v3523 = vpop.f32.mrf.mxu0
      %v3524 = vadd.f32 %v3291, %v3523
      %v3525 = vpop.f32.mrf.mxu0
      %v3526 = vadd.f32 %v3293, %v3525
      %3527 = vmatmul.bf16.gmra.mxu0 %v1359
      %v3528 = vpop.f32.mrf.mxu0
      %v3529 = vadd.f32 %v3296, %v3528
      %v3530 = vpop.f32.mrf.mxu0
      %v3531 = vadd.f32 %v3298, %v3530
      %3532 = vmatmul.bf16.gmra.mxu0 %v1402
      %v3533 = vpop.f32.mrf.mxu0
      %v3534 = vadd.f32 %v3301, %v3533
      %v3535 = vpop.f32.mrf.mxu0
      %v3536 = vadd.f32 %v3303, %v3535
      %3537 = vmatmul.bf16.gmra.mxu0 %v1445
      %v3538 = vpop.f32.mrf.mxu0
      %v3539 = vadd.f32 %v3306, %v3538
      %v3540 = vpop.f32.mrf.mxu0
      %v3541 = vadd.f32 %v3308, %v3540
      %3542 = vmatmul.bf16.gmra.mxu0 %v1488
      %v3543 = vpop.f32.mrf.mxu0
      %v3544 = vadd.f32 %v3311, %v3543
      %v3545 = vpop.f32.mrf.mxu0
      %v3546 = vadd.f32 %v3313, %v3545
      %3547 = vmatmul.bf16.gmra.mxu0 %v1531
      %v3548 = vpop.f32.mrf.mxu0
      %v3549 = vadd.f32 %v3316, %v3548
      %v3550 = vpop.f32.mrf.mxu0
      %v3551 = vadd.f32 %v3318, %v3550
      %3552 = vmatmul.bf16.gmra.mxu0 %v1574
      %v3553 = vpop.f32.mrf.mxu0
      %v3554 = vadd.f32 %v3321, %v3553
      %v3555 = vpop.f32.mrf.mxu0
      %v3556 = vadd.f32 %v3323, %v3555
      %3557 = vdwg.mxu0
      %3558 = vmatpush.bf16.msra.mxu0 %v3436
      %3559 = vmatpush.bf16.msra.mxu0 %v3435
      %3560 = vmatpush.bf16.msra.mxu0 %v3434
      %3561 = vmatpush.bf16.msra.mxu0 %v3433
      %3562 = vmatpush.bf16.msra.mxu0 %v3432
      %3563 = vmatpush.bf16.msra.mxu0 %v3431
      %3564 = vmatpush.bf16.msra.mxu0 %v3430
      %3565 = vmatpush.bf16.msra.mxu0 %v3429
      %3566 = vmatmul.bf16.gmra.mxu0 %v938
      %v3567 = vpop.f32.mrf.mxu0
      %v3568 = vadd.f32 %v3479, %v3567
      %v3569 = vpop.f32.mrf.mxu0
      %v3570 = vadd.f32 %v3481, %v3569
      %3571 = vmatmul.bf16.gmra.mxu0 %v981
      %v3572 = vpop.f32.mrf.mxu0
      %v3573 = vadd.f32 %v3484, %v3572
      %v3574 = vpop.f32.mrf.mxu0
      %v3575 = vadd.f32 %v3486, %v3574
      %3576 = vmatmul.bf16.gmra.mxu0 %v1024
      %v3577 = vpop.f32.mrf.mxu0
      %v3578 = vadd.f32 %v3489, %v3577
      %v3579 = vpop.f32.mrf.mxu0
      %v3580 = vadd.f32 %v3491, %v3579
      %3581 = vmatmul.bf16.gmra.mxu0 %v1067
      %v3582 = vpop.f32.mrf.mxu0
      %v3583 = vadd.f32 %v3494, %v3582
      %v3584 = vpop.f32.mrf.mxu0
      %v3585 = vadd.f32 %v3496, %v3584
      %3586 = vmatmul.bf16.gmra.mxu0 %v1110
      %v3587 = vpop.f32.mrf.mxu0
      %v3588 = vadd.f32 %v3499, %v3587
      %v3589 = vpop.f32.mrf.mxu0
      %v3590 = vadd.f32 %v3501, %v3589
      %3591 = vmatmul.bf16.gmra.mxu0 %v1153
      %v3592 = vpop.f32.mrf.mxu0
      %v3593 = vadd.f32 %v3504, %v3592
      %v3594 = vpop.f32.mrf.mxu0
      %v3595 = vadd.f32 %v3506, %v3594
      %3596 = vmatmul.bf16.gmra.mxu0 %v1196
      %v3597 = vpop.f32.mrf.mxu0
      %v3598 = vadd.f32 %v3509, %v3597
      %v3599 = vpop.f32.mrf.mxu0
      %v3600 = vadd.f32 %v3511, %v3599
      %3601 = vmatmul.bf16.gmra.mxu0 %v1239
      %v3602 = vpop.f32.mrf.mxu0
      %v3603 = vadd.f32 %v3514, %v3602
      %v3604 = vpop.f32.mrf.mxu0
      %v3605 = vadd.f32 %v3516, %v3604
      %3606 = vmatmul.bf16.gmra.mxu0 %v1282
      %v3607 = vpop.f32.mrf.mxu0
      %v3608 = vadd.f32 %v3519, %v3607
      %v3609 = vpop.f32.mrf.mxu0
      %v3610 = vadd.f32 %v3521, %v3609
      %3611 = vmatmul.bf16.gmra.mxu0 %v1325
      %v3612 = vpop.f32.mrf.mxu0
      %v3613 = vadd.f32 %v3524, %v3612
      %v3614 = vpop.f32.mrf.mxu0
      %v3615 = vadd.f32 %v3526, %v3614
      %3616 = vmatmul.bf16.gmra.mxu0 %v1368
      %v3617 = vpop.f32.mrf.mxu0
      %v3618 = vadd.f32 %v3529, %v3617
      %v3619 = vpop.f32.mrf.mxu0
      %v3620 = vadd.f32 %v3531, %v3619
      %3621 = vmatmul.bf16.gmra.mxu0 %v1411
      %v3622 = vpop.f32.mrf.mxu0
      %v3623 = vadd.f32 %v3534, %v3622
      %v3624 = vpop.f32.mrf.mxu0
      %v3625 = vadd.f32 %v3536, %v3624
      %3626 = vmatmul.bf16.gmra.mxu0 %v1454
      %v3627 = vpop.f32.mrf.mxu0
      %v3628 = vadd.f32 %v3539, %v3627
      %v3629 = vpop.f32.mrf.mxu0
      %v3630 = vadd.f32 %v3541, %v3629
      %3631 = vmatmul.bf16.gmra.mxu0 %v1497
      %v3632 = vpop.f32.mrf.mxu0
      %v3633 = vadd.f32 %v3544, %v3632
      %v3634 = vpop.f32.mrf.mxu0
      %v3635 = vadd.f32 %v3546, %v3634
      %3636 = vmatmul.bf16.gmra.mxu0 %v1540
      %v3637 = vpop.f32.mrf.mxu0
      %v3638 = vadd.f32 %v3549, %v3637
      %v3639 = vpop.f32.mrf.mxu0
      %v3640 = vadd.f32 %v3551, %v3639
      %3641 = vmatmul.bf16.gmra.mxu0 %v1583
      %v3642 = vpop.f32.mrf.mxu0
      %v3643 = vadd.f32 %v3554, %v3642
      %v3644 = vpop.f32.mrf.mxu0
      %v3645 = vadd.f32 %v3556, %v3644
      %3646 = vdwg.mxu0
      %3647 = vmatpush.bf16.msra.mxu0 %v3444
      %3648 = vmatpush.bf16.msra.mxu0 %v3443
      %3649 = vmatpush.bf16.msra.mxu0 %v3442
      %3650 = vmatpush.bf16.msra.mxu0 %v3441
      %3651 = vmatpush.bf16.msra.mxu0 %v3440
      %3652 = vmatpush.bf16.msra.mxu0 %v3439
      %3653 = vmatpush.bf16.msra.mxu0 %v3438
      %3654 = vmatpush.bf16.msra.mxu0 %v3437
      %3655 = vmatmul.bf16.gmra.mxu0 %v955
      %v3656 = vpop.f32.mrf.mxu0
      %v3657 = vadd.f32 %v3568, %v3656
      %v3658 = vpop.f32.mrf.mxu0
      %v3659 = vadd.f32 %v3570, %v3658
      %3660 = vmatmul.bf16.gmra.mxu0 %v998
      %v3661 = vpop.f32.mrf.mxu0
      %v3662 = vadd.f32 %v3573, %v3661
      %v3663 = vpop.f32.mrf.mxu0
      %v3664 = vadd.f32 %v3575, %v3663
      %3665 = vmatmul.bf16.gmra.mxu0 %v1041
      %v3666 = vpop.f32.mrf.mxu0
      %v3667 = vadd.f32 %v3578, %v3666
      %v3668 = vpop.f32.mrf.mxu0
      %v3669 = vadd.f32 %v3580, %v3668
      %3670 = vmatmul.bf16.gmra.mxu0 %v1084
      %v3671 = vpop.f32.mrf.mxu0
      %v3672 = vadd.f32 %v3583, %v3671
      %v3673 = vpop.f32.mrf.mxu0
      %v3674 = vadd.f32 %v3585, %v3673
      %3675 = vmatmul.bf16.gmra.mxu0 %v1127
      %v3676 = vpop.f32.mrf.mxu0
      %v3677 = vadd.f32 %v3588, %v3676
      %v3678 = vpop.f32.mrf.mxu0
      %v3679 = vadd.f32 %v3590, %v3678
      %3680 = vmatmul.bf16.gmra.mxu0 %v1170
      %v3681 = vpop.f32.mrf.mxu0
      %v3682 = vadd.f32 %v3593, %v3681
      %v3683 = vpop.f32.mrf.mxu0
      %v3684 = vadd.f32 %v3595, %v3683
      %3685 = vmatmul.bf16.gmra.mxu0 %v1213
      %v3686 = vpop.f32.mrf.mxu0
      %v3687 = vadd.f32 %v3598, %v3686
      %v3688 = vpop.f32.mrf.mxu0
      %v3689 = vadd.f32 %v3600, %v3688
      %3690 = vmatmul.bf16.gmra.mxu0 %v1256
      %v3691 = vpop.f32.mrf.mxu0
      %v3692 = vadd.f32 %v3603, %v3691
      %v3693 = vpop.f32.mrf.mxu0
      %v3694 = vadd.f32 %v3605, %v3693
      %3695 = vmatmul.bf16.gmra.mxu0 %v1299
      %v3696 = vpop.f32.mrf.mxu0
      %v3697 = vadd.f32 %v3608, %v3696
      %v3698 = vpop.f32.mrf.mxu0
      %v3699 = vadd.f32 %v3610, %v3698
      %3700 = vmatmul.bf16.gmra.mxu0 %v1342
      %v3701 = vpop.f32.mrf.mxu0
      %v3702 = vadd.f32 %v3613, %v3701
      %v3703 = vpop.f32.mrf.mxu0
      %v3704 = vadd.f32 %v3615, %v3703
      %3705 = vmatmul.bf16.gmra.mxu0 %v1385
      %v3706 = vpop.f32.mrf.mxu0
      %v3707 = vadd.f32 %v3618, %v3706
      %v3708 = vpop.f32.mrf.mxu0
      %v3709 = vadd.f32 %v3620, %v3708
      %3710 = vmatmul.bf16.gmra.mxu0 %v1428
      %v3711 = vpop.f32.mrf.mxu0
      %v3712 = vadd.f32 %v3623, %v3711
      %v3713 = vpop.f32.mrf.mxu0
      %v3714 = vadd.f32 %v3625, %v3713
      %3715 = vmatmul.bf16.gmra.mxu0 %v1471
      %v3716 = vpop.f32.mrf.mxu0
      %v3717 = vadd.f32 %v3628, %v3716
      %v3718 = vpop.f32.mrf.mxu0
      %v3719 = vadd.f32 %v3630, %v3718
      %3720 = vmatmul.bf16.gmra.mxu0 %v1514
      %v3721 = vpop.f32.mrf.mxu0
      %v3722 = vadd.f32 %v3633, %v3721
      %v3723 = vpop.f32.mrf.mxu0
      %v3724 = vadd.f32 %v3635, %v3723
      %3725 = vmatmul.bf16.gmra.mxu0 %v1557
      %v3726 = vpop.f32.mrf.mxu0
      %v3727 = vadd.f32 %v3638, %v3726
      %v3728 = vpop.f32.mrf.mxu0
      %v3729 = vadd.f32 %v3640, %v3728
      %3730 = vmatmul.bf16.gmra.mxu0 %v1600
      %v3731 = vpop.f32.mrf.mxu0
      %v3732 = vadd.f32 %v3643, %v3731
      %v3733 = vpop.f32.mrf.mxu0
      %v3734 = vadd.f32 %v3645, %v3733
      %3735 = vdwg.mxu0
      %s3736 = scalar_lea.vmem [#allocation2], 32
      %v3737 = vld [vmem:[%s3736] sm:$0xf]
      %v3738 = vld [vmem:[%s3736 + $0x4] sm:$0xf]
      %v3739 = vld [vmem:[%s3736 + $0x8] sm:$0xf]
      %v3740 = vld [vmem:[%s3736 + $0xc] sm:$0xf]
      %v3741 = vld [vmem:[%s3736 + $0x10] sm:$0xf]
      %v3742 = vld [vmem:[%s3736 + $0x14] sm:$0xf]
      %v3743 = vld [vmem:[%s3736 + $0x18] sm:$0xf]
      %v3744 = vld [vmem:[%s3736 + $0x1c] sm:$0xf]
      %v3745 = vld [vmem:[%s3736 + $0x20] sm:$0xf]
      %v3746 = vld [vmem:[%s3736 + $0x24] sm:$0xf]
      %v3747 = vld [vmem:[%s3736 + $0x28] sm:$0xf]
      %v3748 = vld [vmem:[%s3736 + $0x2c] sm:$0xf]
      %v3749 = vld [vmem:[%s3736 + $0x30] sm:$0xf]
      %v3750 = vld [vmem:[%s3736 + $0x34] sm:$0xf]
      %v3751 = vld [vmem:[%s3736 + $0x38] sm:$0xf]
      %v3752 = vld [vmem:[%s3736 + $0x3c] sm:$0xf]
      %v3753 = vld [vmem:[%s3736 + $0x40] sm:$0xf]
      %v3754 = vld [vmem:[%s3736 + $0x44] sm:$0xf]
      %v3755 = vld [vmem:[%s3736 + $0x48] sm:$0xf]
      %v3756 = vld [vmem:[%s3736 + $0x4c] sm:$0xf]
      %v3757 = vld [vmem:[%s3736 + $0x50] sm:$0xf]
      %v3758 = vld [vmem:[%s3736 + $0x54] sm:$0xf]
      %v3759 = vld [vmem:[%s3736 + $0x58] sm:$0xf]
      %v3760 = vld [vmem:[%s3736 + $0x5c] sm:$0xf]
      %v3761 = vld [vmem:[%s3736 + $0x60] sm:$0xf]
      %v3762 = vld [vmem:[%s3736 + $0x64] sm:$0xf]
      %v3763 = vld [vmem:[%s3736 + $0x68] sm:$0xf]
      %v3764 = vld [vmem:[%s3736 + $0x6c] sm:$0xf]
      %v3765 = vld [vmem:[%s3736 + $0x70] sm:$0xf]
      %v3766 = vld [vmem:[%s3736 + $0x74] sm:$0xf]
      %v3767 = vld [vmem:[%s3736 + $0x78] sm:$0xf]
      %v3768 = vld [vmem:[%s3736 + $0x7c] sm:$0xf]
      %v3769 = vld [vmem:[%s3736 + $0x80] sm:$0xf]
      %v3770 = vld [vmem:[%s3736 + $0x84] sm:$0xf]
      %v3771 = vld [vmem:[%s3736 + $0x88] sm:$0xf]
      %v3772 = vld [vmem:[%s3736 + $0x8c] sm:$0xf]
      %v3773 = vld [vmem:[%s3736 + $0x90] sm:$0xf]
      %v3774 = vld [vmem:[%s3736 + $0x94] sm:$0xf]
      %v3775 = vld [vmem:[%s3736 + $0x98] sm:$0xf]
      %v3776 = vld [vmem:[%s3736 + $0x9c] sm:$0xf]
      %v3777 = vld [vmem:[%s3736 + $0xa0] sm:$0xf]
      %v3778 = vld [vmem:[%s3736 + $0xa4] sm:$0xf]
      %v3779 = vld [vmem:[%s3736 + $0xa8] sm:$0xf]
      %v3780 = vld [vmem:[%s3736 + $0xac] sm:$0xf]
      %v3781 = vld [vmem:[%s3736 + $0xb0] sm:$0xf]
      %v3782 = vld [vmem:[%s3736 + $0xb4] sm:$0xf]
      %v3783 = vld [vmem:[%s3736 + $0xb8] sm:$0xf]
      %v3784 = vld [vmem:[%s3736 + $0xbc] sm:$0xf]
      %v3785 = vld [vmem:[%s3736 + $0xc0] sm:$0xf]
      %v3786 = vld [vmem:[%s3736 + $0xc4] sm:$0xf]
      %v3787 = vld [vmem:[%s3736 + $0xc8] sm:$0xf]
      %v3788 = vld [vmem:[%s3736 + $0xcc] sm:$0xf]
      %v3789 = vld [vmem:[%s3736 + $0xd0] sm:$0xf]
      %v3790 = vld [vmem:[%s3736 + $0xd4] sm:$0xf]
      %v3791 = vld [vmem:[%s3736 + $0xd8] sm:$0xf]
      %v3792 = vld [vmem:[%s3736 + $0xdc] sm:$0xf]
      %v3793 = vld [vmem:[%s3736 + $0xe0] sm:$0xf]
      %v3794 = vld [vmem:[%s3736 + $0xe4] sm:$0xf]
      %v3795 = vld [vmem:[%s3736 + $0xe8] sm:$0xf]
      %v3796 = vld [vmem:[%s3736 + $0xec] sm:$0xf]
      %v3797 = vld [vmem:[%s3736 + $0xf0] sm:$0xf]
      %v3798 = vld [vmem:[%s3736 + $0xf4] sm:$0xf]
      %v3799 = vld [vmem:[%s3736 + $0xf8] sm:$0xf]
      %v3800 = vld [vmem:[%s3736 + $0xfc] sm:$0xf]
      %v3849 = vunpack.c.l.b16 %v3737
      %v3850 = vunpack.c.l.b16 %v3738
      %v3851 = vunpack.c.l.b16 %v3739
      %v3852 = vunpack.c.l.b16 %v3741
      %v3853 = vunpack.c.l.b16 %v3742
      %v3854 = vunpack.c.l.b16 %v3743
      %v3855 = vunpack.c.l.b16 %v3745
      %v3856 = vunpack.c.l.b16 %v3746
      %v3857 = vunpack.c.l.b16 %v3747
      %v3858 = vunpack.c.l.b16 %v3749
      %v3859 = vunpack.c.l.b16 %v3750
      %v3860 = vunpack.c.l.b16 %v3751
      %v3861 = vunpack.c.l.b16 %v3753
      %v3862 = vunpack.c.l.b16 %v3754
      %v3863 = vunpack.c.l.b16 %v3755
      %v3864 = vunpack.c.l.b16 %v3757
      %v3865 = vunpack.c.l.b16 %v3758
      %v3866 = vunpack.c.l.b16 %v3759
      %v3867 = vunpack.c.l.b16 %v3761
      %v3868 = vunpack.c.l.b16 %v3762
      %v3869 = vunpack.c.l.b16 %v3763
      %v3870 = vunpack.c.l.b16 %v3765
      %v3871 = vunpack.c.l.b16 %v3766
      %v3872 = vunpack.c.l.b16 %v3767
      %v3873 = vunpack.c.l.b16 %v3769
      %v3874 = vunpack.c.l.b16 %v3770
      %v3875 = vunpack.c.l.b16 %v3771
      %v3876 = vunpack.c.l.b16 %v3773
      %v3877 = vunpack.c.l.b16 %v3774
      %v3878 = vunpack.c.l.b16 %v3775
      %v3879 = vunpack.c.l.b16 %v3777
      %v3880 = vunpack.c.l.b16 %v3778
      %v3881 = vunpack.c.l.b16 %v3779
      %v3882 = vunpack.c.l.b16 %v3781
      %v3883 = vunpack.c.l.b16 %v3782
      %v3884 = vunpack.c.l.b16 %v3783
      %v3885 = vunpack.c.l.b16 %v3785
      %v3886 = vunpack.c.l.b16 %v3786
      %v3887 = vunpack.c.l.b16 %v3787
      %v3888 = vunpack.c.l.b16 %v3789
      %v3889 = vunpack.c.l.b16 %v3790
      %v3890 = vunpack.c.l.b16 %v3791
      %v3891 = vunpack.c.l.b16 %v3793
      %v3892 = vunpack.c.l.b16 %v3794
      %v3893 = vunpack.c.l.b16 %v3795
      %v3894 = vunpack.c.l.b16 %v3797
      %v3895 = vunpack.c.l.b16 %v3798
      %v3896 = vunpack.c.l.b16 %v3799
      %v3897 = vpack.c.b16 %v3850, %v3849
      %v3898 = vpack.c.b16 %v3851, %v3851
      %v3899 = vpack.c.b16 %v3853, %v3852
      %v3900 = vpack.c.b16 %v3854, %v3854
      %v3901 = vpack.c.b16 %v3856, %v3855
      %v3902 = vpack.c.b16 %v3857, %v3857
      %v3903 = vpack.c.b16 %v3859, %v3858
      %v3904 = vpack.c.b16 %v3860, %v3860
      %v3905 = vpack.c.b16 %v3862, %v3861
      %v3906 = vpack.c.b16 %v3863, %v3863
      %v3907 = vpack.c.b16 %v3865, %v3864
      %v3908 = vpack.c.b16 %v3866, %v3866
      %v3909 = vpack.c.b16 %v3868, %v3867
      %v3910 = vpack.c.b16 %v3869, %v3869
      %v3911 = vpack.c.b16 %v3871, %v3870
      %v3912 = vpack.c.b16 %v3872, %v3872
      %v3913 = vpack.c.b16 %v3874, %v3873
      %v3914 = vpack.c.b16 %v3875, %v3875
      %v3915 = vpack.c.b16 %v3877, %v3876
      %v3916 = vpack.c.b16 %v3878, %v3878
      %v3917 = vpack.c.b16 %v3880, %v3879
      %v3918 = vpack.c.b16 %v3881, %v3881
      %v3919 = vpack.c.b16 %v3883, %v3882
      %v3920 = vpack.c.b16 %v3884, %v3884
      %v3921 = vpack.c.b16 %v3886, %v3885
      %v3922 = vpack.c.b16 %v3887, %v3887
      %v3923 = vpack.c.b16 %v3889, %v3888
      %v3924 = vpack.c.b16 %v3890, %v3890
      %v3925 = vpack.c.b16 %v3892, %v3891
      %v3926 = vpack.c.b16 %v3893, %v3893
      %v3927 = vpack.c.b16 %v3895, %v3894
      %v3928 = vpack.c.b16 %v3896, %v3896
      %v3929 = vpack.c.b16 %v3851, %v3850
      %v3930 = vpack.c.b16 %v3854, %v3853
      %v3931 = vpack.c.b16 %v3857, %v3856
      %v3932 = vpack.c.b16 %v3860, %v3859
      %v3933 = vpack.c.b16 %v3863, %v3862
      %v3934 = vpack.c.b16 %v3866, %v3865
      %v3935 = vpack.c.b16 %v3869, %v3868
      %v3936 = vpack.c.b16 %v3872, %v3871
      %v3937 = vpack.c.b16 %v3875, %v3874
      %v3938 = vpack.c.b16 %v3878, %v3877
      %v3939 = vpack.c.b16 %v3881, %v3880
      %v3940 = vpack.c.b16 %v3884, %v3883
      %v3941 = vpack.c.b16 %v3887, %v3886
      %v3942 = vpack.c.b16 %v3890, %v3889
      %v3943 = vpack.c.b16 %v3893, %v3892
      %v3944 = vpack.c.b16 %v3896, %v3895
      %v3946 = vshrl.u32 %v3929, 16
      %v3948 = vrot.slane %v3946, 4
      %v3949 = vshll.u32 %v3929, 16
      %v3951 = vrot.slane %v3949, 5
      %v3952 = vor.u32 %v3948, %v3951
      %v3954 = vshrl.u32 %v3930, 16
      %v3956 = vrot.slane %v3954, 4
      %v3957 = vshll.u32 %v3930, 16
      %v3959 = vrot.slane %v3957, 5
      %v3960 = vor.u32 %v3956, %v3959
      %v3962 = vshrl.u32 %v3931, 16
      %v3964 = vrot.slane %v3962, 4
      %v3965 = vshll.u32 %v3931, 16
      %v3967 = vrot.slane %v3965, 5
      %v3968 = vor.u32 %v3964, %v3967
      %v3970 = vshrl.u32 %v3932, 16
      %v3972 = vrot.slane %v3970, 4
      %v3973 = vshll.u32 %v3932, 16
      %v3975 = vrot.slane %v3973, 5
      %v3976 = vor.u32 %v3972, %v3975
      %v3978 = vshrl.u32 %v3933, 16
      %v3980 = vrot.slane %v3978, 4
      %v3981 = vshll.u32 %v3933, 16
      %v3983 = vrot.slane %v3981, 5
      %v3984 = vor.u32 %v3980, %v3983
      %v3986 = vshrl.u32 %v3934, 16
      %v3988 = vrot.slane %v3986, 4
      %v3989 = vshll.u32 %v3934, 16
      %v3991 = vrot.slane %v3989, 5
      %v3992 = vor.u32 %v3988, %v3991
      %v3994 = vshrl.u32 %v3935, 16
      %v3996 = vrot.slane %v3994, 4
      %v3997 = vshll.u32 %v3935, 16
      %v3999 = vrot.slane %v3997, 5
      %v4000 = vor.u32 %v3996, %v3999
      %v4002 = vshrl.u32 %v3936, 16
      %v4004 = vrot.slane %v4002, 4
      %v4005 = vshll.u32 %v3936, 16
      %v4007 = vrot.slane %v4005, 5
      %v4008 = vor.u32 %v4004, %v4007
      %v4010 = vshrl.u32 %v3937, 16
      %v4012 = vrot.slane %v4010, 4
      %v4013 = vshll.u32 %v3937, 16
      %v4015 = vrot.slane %v4013, 5
      %v4016 = vor.u32 %v4012, %v4015
      %v4018 = vshrl.u32 %v3938, 16
      %v4020 = vrot.slane %v4018, 4
      %v4021 = vshll.u32 %v3938, 16
      %v4023 = vrot.slane %v4021, 5
      %v4024 = vor.u32 %v4020, %v4023
      %v4026 = vshrl.u32 %v3939, 16
      %v4028 = vrot.slane %v4026, 4
      %v4029 = vshll.u32 %v3939, 16
      %v4031 = vrot.slane %v4029, 5
      %v4032 = vor.u32 %v4028, %v4031
      %v4034 = vshrl.u32 %v3940, 16
      %v4036 = vrot.slane %v4034, 4
      %v4037 = vshll.u32 %v3940, 16
      %v4039 = vrot.slane %v4037, 5
      %v4040 = vor.u32 %v4036, %v4039
      %v4042 = vshrl.u32 %v3941, 16
      %v4044 = vrot.slane %v4042, 4
      %v4045 = vshll.u32 %v3941, 16
      %v4047 = vrot.slane %v4045, 5
      %v4048 = vor.u32 %v4044, %v4047
      %v4050 = vshrl.u32 %v3942, 16
      %v4052 = vrot.slane %v4050, 4
      %v4053 = vshll.u32 %v3942, 16
      %v4055 = vrot.slane %v4053, 5
      %v4056 = vor.u32 %v4052, %v4055
      %v4058 = vshrl.u32 %v3943, 16
      %v4060 = vrot.slane %v4058, 4
      %v4061 = vshll.u32 %v3943, 16
      %v4063 = vrot.slane %v4061, 5
      %v4064 = vor.u32 %v4060, %v4063
      %v4066 = vshrl.u32 %v3944, 16
      %v4068 = vrot.slane %v4066, 4
      %v4069 = vshll.u32 %v3944, 16
      %v4071 = vrot.slane %v4069, 5
      %v4072 = vor.u32 %v4068, %v4071
      %v4089 = vunpack.c.l.b16 %v3740
      %v4090 = vunpack.c.l.b16 %v3744
      %v4091 = vunpack.c.l.b16 %v3748
      %v4092 = vunpack.c.l.b16 %v3752
      %v4093 = vunpack.c.l.b16 %v3756
      %v4094 = vunpack.c.l.b16 %v3760
      %v4095 = vunpack.c.l.b16 %v3764
      %v4096 = vunpack.c.l.b16 %v3768
      %v4097 = vunpack.c.l.b16 %v3772
      %v4098 = vunpack.c.l.b16 %v3776
      %v4099 = vunpack.c.l.b16 %v3780
      %v4100 = vunpack.c.l.b16 %v3784
      %v4101 = vunpack.c.l.b16 %v3788
      %v4102 = vunpack.c.l.b16 %v3792
      %v4103 = vunpack.c.l.b16 %v3796
      %v4104 = vunpack.c.l.b16 %v3800
      %v4105 = vpack.c.b16 %v4089, %v4089
      %v4106 = vpack.c.b16 %v4090, %v4090
      %v4107 = vpack.c.b16 %v4091, %v4091
      %v4108 = vpack.c.b16 %v4092, %v4092
      %v4109 = vpack.c.b16 %v4093, %v4093
      %v4110 = vpack.c.b16 %v4094, %v4094
      %v4111 = vpack.c.b16 %v4095, %v4095
      %v4112 = vpack.c.b16 %v4096, %v4096
      %v4113 = vpack.c.b16 %v4097, %v4097
      %v4114 = vpack.c.b16 %v4098, %v4098
      %v4115 = vpack.c.b16 %v4099, %v4099
      %v4116 = vpack.c.b16 %v4100, %v4100
      %v4117 = vpack.c.b16 %v4101, %v4101
      %v4118 = vpack.c.b16 %v4102, %v4102
      %v4119 = vpack.c.b16 %v4103, %v4103
      %v4120 = vpack.c.b16 %v4104, %v4104
      %v4121 = vrot.slane %v3929, 5
      %v4122 = vrot.slane %v4105, 5
      %v4123 = vsel %vm863, %v4121, %v4122
      %v4124 = vrot.slane %v3930, 5
      %v4125 = vrot.slane %v4106, 5
      %v4126 = vsel %vm863, %v4124, %v4125
      %v4127 = vrot.slane %v3931, 5
      %v4128 = vrot.slane %v4107, 5
      %v4129 = vsel %vm863, %v4127, %v4128
      %v4130 = vrot.slane %v3932, 5
      %v4131 = vrot.slane %v4108, 5
      %v4132 = vsel %vm863, %v4130, %v4131
      %v4133 = vrot.slane %v3933, 5
      %v4134 = vrot.slane %v4109, 5
      %v4135 = vsel %vm863, %v4133, %v4134
      %v4136 = vrot.slane %v3934, 5
      %v4137 = vrot.slane %v4110, 5
      %v4138 = vsel %vm863, %v4136, %v4137
      %v4139 = vrot.slane %v3935, 5
      %v4140 = vrot.slane %v4111, 5
      %v4141 = vsel %vm863, %v4139, %v4140
      %v4142 = vrot.slane %v3936, 5
      %v4143 = vrot.slane %v4112, 5
      %v4144 = vsel %vm863, %v4142, %v4143
      %v4145 = vrot.slane %v3937, 5
      %v4146 = vrot.slane %v4113, 5
      %v4147 = vsel %vm863, %v4145, %v4146
      %v4148 = vrot.slane %v3938, 5
      %v4149 = vrot.slane %v4114, 5
      %v4150 = vsel %vm863, %v4148, %v4149
      %v4151 = vrot.slane %v3939, 5
      %v4152 = vrot.slane %v4115, 5
      %v4153 = vsel %vm863, %v4151, %v4152
      %v4154 = vrot.slane %v3940, 5
      %v4155 = vrot.slane %v4116, 5
      %v4156 = vsel %vm863, %v4154, %v4155
      %v4157 = vrot.slane %v3941, 5
      %v4158 = vrot.slane %v4117, 5
      %v4159 = vsel %vm863, %v4157, %v4158
      %v4160 = vrot.slane %v3942, 5
      %v4161 = vrot.slane %v4118, 5
      %v4162 = vsel %vm863, %v4160, %v4161
      %v4163 = vrot.slane %v3943, 5
      %v4164 = vrot.slane %v4119, 5
      %v4165 = vsel %vm863, %v4163, %v4164
      %v4166 = vrot.slane %v3944, 5
      %v4167 = vrot.slane %v4120, 5
      %v4168 = vsel %vm863, %v4166, %v4167
      %v4170 = vshrl.u32 %v3897, 16
      %v4172 = vrot.slane %v4170, 3
      %v4173 = vshll.u32 %v3897, 16
      %v4175 = vrot.slane %v4173, 4
      %v4176 = vor.u32 %v4172, %v4175
      %v4178 = vshrl.u32 %v3898, 16
      %v4180 = vrot.slane %v4178, 3
      %v4181 = vshll.u32 %v3898, 16
      %v4183 = vrot.slane %v4181, 4
      %v4184 = vor.u32 %v4180, %v4183
      %v4185 = vsel %vm912, %v4176, %v4184
      %v4187 = vshrl.u32 %v3952, 16
      %v4189 = vrot.slane %v4187, 3
      %v4190 = vshll.u32 %v3952, 16
      %v4192 = vrot.slane %v4190, 4
      %v4193 = vor.u32 %v4189, %v4192
      %v4194 = vsel %vm912, %v4193, %v4193
      %v4196 = vshrl.u32 %v4121, 16
      %v4198 = vrot.slane %v4196, 3
      %v4199 = vshll.u32 %v4121, 16
      %v4201 = vrot.slane %v4199, 4
      %v4202 = vor.u32 %v4198, %v4201
      %v4204 = vshrl.u32 %v4123, 16
      %v4206 = vrot.slane %v4204, 3
      %v4207 = vshll.u32 %v4123, 16
      %v4209 = vrot.slane %v4207, 4
      %v4210 = vor.u32 %v4206, %v4209
      %v4211 = vsel %vm912, %v4202, %v4210
      %v4213 = vshrl.u32 %v3899, 16
      %v4215 = vrot.slane %v4213, 3
      %v4216 = vshll.u32 %v3899, 16
      %v4218 = vrot.slane %v4216, 4
      %v4219 = vor.u32 %v4215, %v4218
      %v4221 = vshrl.u32 %v3900, 16
      %v4223 = vrot.slane %v4221, 3
      %v4224 = vshll.u32 %v3900, 16
      %v4226 = vrot.slane %v4224, 4
      %v4227 = vor.u32 %v4223, %v4226
      %v4228 = vsel %vm912, %v4219, %v4227
      %v4230 = vshrl.u32 %v3960, 16
      %v4232 = vrot.slane %v4230, 3
      %v4233 = vshll.u32 %v3960, 16
      %v4235 = vrot.slane %v4233, 4
      %v4236 = vor.u32 %v4232, %v4235
      %v4237 = vsel %vm912, %v4236, %v4236
      %v4239 = vshrl.u32 %v4124, 16
      %v4241 = vrot.slane %v4239, 3
      %v4242 = vshll.u32 %v4124, 16
      %v4244 = vrot.slane %v4242, 4
      %v4245 = vor.u32 %v4241, %v4244
      %v4247 = vshrl.u32 %v4126, 16
      %v4249 = vrot.slane %v4247, 3
      %v4250 = vshll.u32 %v4126, 16
      %v4252 = vrot.slane %v4250, 4
      %v4253 = vor.u32 %v4249, %v4252
      %v4254 = vsel %vm912, %v4245, %v4253
      %v4256 = vshrl.u32 %v3901, 16
      %v4258 = vrot.slane %v4256, 3
      %v4259 = vshll.u32 %v3901, 16
      %v4261 = vrot.slane %v4259, 4
      %v4262 = vor.u32 %v4258, %v4261
      %v4264 = vshrl.u32 %v3902, 16
      %v4266 = vrot.slane %v4264, 3
      %v4267 = vshll.u32 %v3902, 16
      %v4269 = vrot.slane %v4267, 4
      %v4270 = vor.u32 %v4266, %v4269
      %v4271 = vsel %vm912, %v4262, %v4270
      %v4273 = vshrl.u32 %v3968, 16
      %v4275 = vrot.slane %v4273, 3
      %v4276 = vshll.u32 %v3968, 16
      %v4278 = vrot.slane %v4276, 4
      %v4279 = vor.u32 %v4275, %v4278
      %v4280 = vsel %vm912, %v4279, %v4279
      %v4282 = vshrl.u32 %v4127, 16
      %v4284 = vrot.slane %v4282, 3
      %v4285 = vshll.u32 %v4127, 16
      %v4287 = vrot.slane %v4285, 4
      %v4288 = vor.u32 %v4284, %v4287
      %v4290 = vshrl.u32 %v4129, 16
      %v4292 = vrot.slane %v4290, 3
      %v4293 = vshll.u32 %v4129, 16
      %v4295 = vrot.slane %v4293, 4
      %v4296 = vor.u32 %v4292, %v4295
      %v4297 = vsel %vm912, %v4288, %v4296
      %v4299 = vshrl.u32 %v3903, 16
      %v4301 = vrot.slane %v4299, 3
      %v4302 = vshll.u32 %v3903, 16
      %v4304 = vrot.slane %v4302, 4
      %v4305 = vor.u32 %v4301, %v4304
      %v4307 = vshrl.u32 %v3904, 16
      %v4309 = vrot.slane %v4307, 3
      %v4310 = vshll.u32 %v3904, 16
      %v4312 = vrot.slane %v4310, 4
      %v4313 = vor.u32 %v4309, %v4312
      %v4314 = vsel %vm912, %v4305, %v4313
      %v4316 = vshrl.u32 %v3976, 16
      %v4318 = vrot.slane %v4316, 3
      %v4319 = vshll.u32 %v3976, 16
      %v4321 = vrot.slane %v4319, 4
      %v4322 = vor.u32 %v4318, %v4321
      %v4323 = vsel %vm912, %v4322, %v4322
      %v4325 = vshrl.u32 %v4130, 16
      %v4327 = vrot.slane %v4325, 3
      %v4328 = vshll.u32 %v4130, 16
      %v4330 = vrot.slane %v4328, 4
      %v4331 = vor.u32 %v4327, %v4330
      %v4333 = vshrl.u32 %v4132, 16
      %v4335 = vrot.slane %v4333, 3
      %v4336 = vshll.u32 %v4132, 16
      %v4338 = vrot.slane %v4336, 4
      %v4339 = vor.u32 %v4335, %v4338
      %v4340 = vsel %vm912, %v4331, %v4339
      %v4342 = vshrl.u32 %v3905, 16
      %v4344 = vrot.slane %v4342, 3
      %v4345 = vshll.u32 %v3905, 16
      %v4347 = vrot.slane %v4345, 4
      %v4348 = vor.u32 %v4344, %v4347
      %v4350 = vshrl.u32 %v3906, 16
      %v4352 = vrot.slane %v4350, 3
      %v4353 = vshll.u32 %v3906, 16
      %v4355 = vrot.slane %v4353, 4
      %v4356 = vor.u32 %v4352, %v4355
      %v4357 = vsel %vm912, %v4348, %v4356
      %v4359 = vshrl.u32 %v3984, 16
      %v4361 = vrot.slane %v4359, 3
      %v4362 = vshll.u32 %v3984, 16
      %v4364 = vrot.slane %v4362, 4
      %v4365 = vor.u32 %v4361, %v4364
      %v4366 = vsel %vm912, %v4365, %v4365
      %v4368 = vshrl.u32 %v4133, 16
      %v4370 = vrot.slane %v4368, 3
      %v4371 = vshll.u32 %v4133, 16
      %v4373 = vrot.slane %v4371, 4
      %v4374 = vor.u32 %v4370, %v4373
      %v4376 = vshrl.u32 %v4135, 16
      %v4378 = vrot.slane %v4376, 3
      %v4379 = vshll.u32 %v4135, 16
      %v4381 = vrot.slane %v4379, 4
      %v4382 = vor.u32 %v4378, %v4381
      %v4383 = vsel %vm912, %v4374, %v4382
      %v4385 = vshrl.u32 %v3907, 16
      %v4387 = vrot.slane %v4385, 3
      %v4388 = vshll.u32 %v3907, 16
      %v4390 = vrot.slane %v4388, 4
      %v4391 = vor.u32 %v4387, %v4390
      %v4393 = vshrl.u32 %v3908, 16
      %v4395 = vrot.slane %v4393, 3
      %v4396 = vshll.u32 %v3908, 16
      %v4398 = vrot.slane %v4396, 4
      %v4399 = vor.u32 %v4395, %v4398
      %v4400 = vsel %vm912, %v4391, %v4399
      %v4402 = vshrl.u32 %v3992, 16
      %v4404 = vrot.slane %v4402, 3
      %v4405 = vshll.u32 %v3992, 16
      %v4407 = vrot.slane %v4405, 4
      %v4408 = vor.u32 %v4404, %v4407
      %v4409 = vsel %vm912, %v4408, %v4408
      %v4411 = vshrl.u32 %v4136, 16
      %v4413 = vrot.slane %v4411, 3
      %v4414 = vshll.u32 %v4136, 16
      %v4416 = vrot.slane %v4414, 4
      %v4417 = vor.u32 %v4413, %v4416
      %v4419 = vshrl.u32 %v4138, 16
      %v4421 = vrot.slane %v4419, 3
      %v4422 = vshll.u32 %v4138, 16
      %v4424 = vrot.slane %v4422, 4
      %v4425 = vor.u32 %v4421, %v4424
      %v4426 = vsel %vm912, %v4417, %v4425
      %v4428 = vshrl.u32 %v3909, 16
      %v4430 = vrot.slane %v4428, 3
      %v4431 = vshll.u32 %v3909, 16
      %v4433 = vrot.slane %v4431, 4
      %v4434 = vor.u32 %v4430, %v4433
      %v4436 = vshrl.u32 %v3910, 16
      %v4438 = vrot.slane %v4436, 3
      %v4439 = vshll.u32 %v3910, 16
      %v4441 = vrot.slane %v4439, 4
      %v4442 = vor.u32 %v4438, %v4441
      %v4443 = vsel %vm912, %v4434, %v4442
      %v4445 = vshrl.u32 %v4000, 16
      %v4447 = vrot.slane %v4445, 3
      %v4448 = vshll.u32 %v4000, 16
      %v4450 = vrot.slane %v4448, 4
      %v4451 = vor.u32 %v4447, %v4450
      %v4452 = vsel %vm912, %v4451, %v4451
      %v4454 = vshrl.u32 %v4139, 16
      %v4456 = vrot.slane %v4454, 3
      %v4457 = vshll.u32 %v4139, 16
      %v4459 = vrot.slane %v4457, 4
      %v4460 = vor.u32 %v4456, %v4459
      %v4462 = vshrl.u32 %v4141, 16
      %v4464 = vrot.slane %v4462, 3
      %v4465 = vshll.u32 %v4141, 16
      %v4467 = vrot.slane %v4465, 4
      %v4468 = vor.u32 %v4464, %v4467
      %v4469 = vsel %vm912, %v4460, %v4468
      %v4471 = vshrl.u32 %v3911, 16
      %v4473 = vrot.slane %v4471, 3
      %v4474 = vshll.u32 %v3911, 16
      %v4476 = vrot.slane %v4474, 4
      %v4477 = vor.u32 %v4473, %v4476
      %v4479 = vshrl.u32 %v3912, 16
      %v4481 = vrot.slane %v4479, 3
      %v4482 = vshll.u32 %v3912, 16
      %v4484 = vrot.slane %v4482, 4
      %v4485 = vor.u32 %v4481, %v4484
      %v4486 = vsel %vm912, %v4477, %v4485
      %v4488 = vshrl.u32 %v4008, 16
      %v4490 = vrot.slane %v4488, 3
      %v4491 = vshll.u32 %v4008, 16
      %v4493 = vrot.slane %v4491, 4
      %v4494 = vor.u32 %v4490, %v4493
      %v4495 = vsel %vm912, %v4494, %v4494
      %v4497 = vshrl.u32 %v4142, 16
      %v4499 = vrot.slane %v4497, 3
      %v4500 = vshll.u32 %v4142, 16
      %v4502 = vrot.slane %v4500, 4
      %v4503 = vor.u32 %v4499, %v4502
      %v4505 = vshrl.u32 %v4144, 16
      %v4507 = vrot.slane %v4505, 3
      %v4508 = vshll.u32 %v4144, 16
      %v4510 = vrot.slane %v4508, 4
      %v4511 = vor.u32 %v4507, %v4510
      %v4512 = vsel %vm912, %v4503, %v4511
      %v4514 = vshrl.u32 %v3913, 16
      %v4516 = vrot.slane %v4514, 3
      %v4517 = vshll.u32 %v3913, 16
      %v4519 = vrot.slane %v4517, 4
      %v4520 = vor.u32 %v4516, %v4519
      %v4522 = vshrl.u32 %v3914, 16
      %v4524 = vrot.slane %v4522, 3
      %v4525 = vshll.u32 %v3914, 16
      %v4527 = vrot.slane %v4525, 4
      %v4528 = vor.u32 %v4524, %v4527
      %v4529 = vsel %vm912, %v4520, %v4528
      %v4531 = vshrl.u32 %v4016, 16
      %v4533 = vrot.slane %v4531, 3
      %v4534 = vshll.u32 %v4016, 16
      %v4536 = vrot.slane %v4534, 4
      %v4537 = vor.u32 %v4533, %v4536
      %v4538 = vsel %vm912, %v4537, %v4537
      %v4540 = vshrl.u32 %v4145, 16
      %v4542 = vrot.slane %v4540, 3
      %v4543 = vshll.u32 %v4145, 16
      %v4545 = vrot.slane %v4543, 4
      %v4546 = vor.u32 %v4542, %v4545
      %v4548 = vshrl.u32 %v4147, 16
      %v4550 = vrot.slane %v4548, 3
      %v4551 = vshll.u32 %v4147, 16
      %v4553 = vrot.slane %v4551, 4
      %v4554 = vor.u32 %v4550, %v4553
      %v4555 = vsel %vm912, %v4546, %v4554
      %v4557 = vshrl.u32 %v3915, 16
      %v4559 = vrot.slane %v4557, 3
      %v4560 = vshll.u32 %v3915, 16
      %v4562 = vrot.slane %v4560, 4
      %v4563 = vor.u32 %v4559, %v4562
      %v4565 = vshrl.u32 %v3916, 16
      %v4567 = vrot.slane %v4565, 3
      %v4568 = vshll.u32 %v3916, 16
      %v4570 = vrot.slane %v4568, 4
      %v4571 = vor.u32 %v4567, %v4570
      %v4572 = vsel %vm912, %v4563, %v4571
      %v4574 = vshrl.u32 %v4024, 16
      %v4576 = vrot.slane %v4574, 3
      %v4577 = vshll.u32 %v4024, 16
      %v4579 = vrot.slane %v4577, 4
      %v4580 = vor.u32 %v4576, %v4579
      %v4581 = vsel %vm912, %v4580, %v4580
      %v4583 = vshrl.u32 %v4148, 16
      %v4585 = vrot.slane %v4583, 3
      %v4586 = vshll.u32 %v4148, 16
      %v4588 = vrot.slane %v4586, 4
      %v4589 = vor.u32 %v4585, %v4588
      %v4591 = vshrl.u32 %v4150, 16
      %v4593 = vrot.slane %v4591, 3
      %v4594 = vshll.u32 %v4150, 16
      %v4596 = vrot.slane %v4594, 4
      %v4597 = vor.u32 %v4593, %v4596
      %v4598 = vsel %vm912, %v4589, %v4597
      %v4600 = vshrl.u32 %v3917, 16
      %v4602 = vrot.slane %v4600, 3
      %v4603 = vshll.u32 %v3917, 16
      %v4605 = vrot.slane %v4603, 4
      %v4606 = vor.u32 %v4602, %v4605
      %v4608 = vshrl.u32 %v3918, 16
      %v4610 = vrot.slane %v4608, 3
      %v4611 = vshll.u32 %v3918, 16
      %v4613 = vrot.slane %v4611, 4
      %v4614 = vor.u32 %v4610, %v4613
      %v4615 = vsel %vm912, %v4606, %v4614
      %v4617 = vshrl.u32 %v4032, 16
      %v4619 = vrot.slane %v4617, 3
      %v4620 = vshll.u32 %v4032, 16
      %v4622 = vrot.slane %v4620, 4
      %v4623 = vor.u32 %v4619, %v4622
      %v4624 = vsel %vm912, %v4623, %v4623
      %v4626 = vshrl.u32 %v4151, 16
      %v4628 = vrot.slane %v4626, 3
      %v4629 = vshll.u32 %v4151, 16
      %v4631 = vrot.slane %v4629, 4
      %v4632 = vor.u32 %v4628, %v4631
      %v4634 = vshrl.u32 %v4153, 16
      %v4636 = vrot.slane %v4634, 3
      %v4637 = vshll.u32 %v4153, 16
      %v4639 = vrot.slane %v4637, 4
      %v4640 = vor.u32 %v4636, %v4639
      %v4641 = vsel %vm912, %v4632, %v4640
      %v4643 = vshrl.u32 %v3919, 16
      %v4645 = vrot.slane %v4643, 3
      %v4646 = vshll.u32 %v3919, 16
      %v4648 = vrot.slane %v4646, 4
      %v4649 = vor.u32 %v4645, %v4648
      %v4651 = vshrl.u32 %v3920, 16
      %v4653 = vrot.slane %v4651, 3
      %v4654 = vshll.u32 %v3920, 16
      %v4656 = vrot.slane %v4654, 4
      %v4657 = vor.u32 %v4653, %v4656
      %v4658 = vsel %vm912, %v4649, %v4657
      %v4660 = vshrl.u32 %v4040, 16
      %v4662 = vrot.slane %v4660, 3
      %v4663 = vshll.u32 %v4040, 16
      %v4665 = vrot.slane %v4663, 4
      %v4666 = vor.u32 %v4662, %v4665
      %v4667 = vsel %vm912, %v4666, %v4666
      %v4669 = vshrl.u32 %v4154, 16
      %v4671 = vrot.slane %v4669, 3
      %v4672 = vshll.u32 %v4154, 16
      %v4674 = vrot.slane %v4672, 4
      %v4675 = vor.u32 %v4671, %v4674
      %v4677 = vshrl.u32 %v4156, 16
      %v4679 = vrot.slane %v4677, 3
      %v4680 = vshll.u32 %v4156, 16
      %v4682 = vrot.slane %v4680, 4
      %v4683 = vor.u32 %v4679, %v4682
      %v4684 = vsel %vm912, %v4675, %v4683
      %v4686 = vshrl.u32 %v3921, 16
      %v4688 = vrot.slane %v4686, 3
      %v4689 = vshll.u32 %v3921, 16
      %v4691 = vrot.slane %v4689, 4
      %v4692 = vor.u32 %v4688, %v4691
      %v4694 = vshrl.u32 %v3922, 16
      %v4696 = vrot.slane %v4694, 3
      %v4697 = vshll.u32 %v3922, 16
      %v4699 = vrot.slane %v4697, 4
      %v4700 = vor.u32 %v4696, %v4699
      %v4701 = vsel %vm912, %v4692, %v4700
      %v4703 = vshrl.u32 %v4048, 16
      %v4705 = vrot.slane %v4703, 3
      %v4706 = vshll.u32 %v4048, 16
      %v4708 = vrot.slane %v4706, 4
      %v4709 = vor.u32 %v4705, %v4708
      %v4710 = vsel %vm912, %v4709, %v4709
      %v4712 = vshrl.u32 %v4157, 16
      %v4714 = vrot.slane %v4712, 3
      %v4715 = vshll.u32 %v4157, 16
      %v4717 = vrot.slane %v4715, 4
      %v4718 = vor.u32 %v4714, %v4717
      %v4720 = vshrl.u32 %v4159, 16
      %v4722 = vrot.slane %v4720, 3
      %v4723 = vshll.u32 %v4159, 16
      %v4725 = vrot.slane %v4723, 4
      %v4726 = vor.u32 %v4722, %v4725
      %v4727 = vsel %vm912, %v4718, %v4726
      %v4729 = vshrl.u32 %v3923, 16
      %v4731 = vrot.slane %v4729, 3
      %v4732 = vshll.u32 %v3923, 16
      %v4734 = vrot.slane %v4732, 4
      %v4735 = vor.u32 %v4731, %v4734
      %v4737 = vshrl.u32 %v3924, 16
      %v4739 = vrot.slane %v4737, 3
      %v4740 = vshll.u32 %v3924, 16
      %v4742 = vrot.slane %v4740, 4
      %v4743 = vor.u32 %v4739, %v4742
      %v4744 = vsel %vm912, %v4735, %v4743
      %v4746 = vshrl.u32 %v4056, 16
      %v4748 = vrot.slane %v4746, 3
      %v4749 = vshll.u32 %v4056, 16
      %v4751 = vrot.slane %v4749, 4
      %v4752 = vor.u32 %v4748, %v4751
      %v4753 = vsel %vm912, %v4752, %v4752
      %v4755 = vshrl.u32 %v4160, 16
      %v4757 = vrot.slane %v4755, 3
      %v4758 = vshll.u32 %v4160, 16
      %v4760 = vrot.slane %v4758, 4
      %v4761 = vor.u32 %v4757, %v4760
      %v4763 = vshrl.u32 %v4162, 16
      %v4765 = vrot.slane %v4763, 3
      %v4766 = vshll.u32 %v4162, 16
      %v4768 = vrot.slane %v4766, 4
      %v4769 = vor.u32 %v4765, %v4768
      %v4770 = vsel %vm912, %v4761, %v4769
      %v4772 = vshrl.u32 %v3925, 16
      %v4774 = vrot.slane %v4772, 3
      %v4775 = vshll.u32 %v3925, 16
      %v4777 = vrot.slane %v4775, 4
      %v4778 = vor.u32 %v4774, %v4777
      %v4780 = vshrl.u32 %v3926, 16
      %v4782 = vrot.slane %v4780, 3
      %v4783 = vshll.u32 %v3926, 16
      %v4785 = vrot.slane %v4783, 4
      %v4786 = vor.u32 %v4782, %v4785
      %v4787 = vsel %vm912, %v4778, %v4786
      %v4789 = vshrl.u32 %v4064, 16
      %v4791 = vrot.slane %v4789, 3
      %v4792 = vshll.u32 %v4064, 16
      %v4794 = vrot.slane %v4792, 4
      %v4795 = vor.u32 %v4791, %v4794
      %v4796 = vsel %vm912, %v4795, %v4795
      %v4798 = vshrl.u32 %v4163, 16
      %v4800 = vrot.slane %v4798, 3
      %v4801 = vshll.u32 %v4163, 16
      %v4803 = vrot.slane %v4801, 4
      %v4804 = vor.u32 %v4800, %v4803
      %v4806 = vshrl.u32 %v4165, 16
      %v4808 = vrot.slane %v4806, 3
      %v4809 = vshll.u32 %v4165, 16
      %v4811 = vrot.slane %v4809, 4
      %v4812 = vor.u32 %v4808, %v4811
      %v4813 = vsel %vm912, %v4804, %v4812
      %v4815 = vshrl.u32 %v3927, 16
      %v4817 = vrot.slane %v4815, 3
      %v4818 = vshll.u32 %v3927, 16
      %v4820 = vrot.slane %v4818, 4
      %v4821 = vor.u32 %v4817, %v4820
      %v4823 = vshrl.u32 %v3928, 16
      %v4825 = vrot.slane %v4823, 3
      %v4826 = vshll.u32 %v3928, 16
      %v4828 = vrot.slane %v4826, 4
      %v4829 = vor.u32 %v4825, %v4828
      %v4830 = vsel %vm912, %v4821, %v4829
      %v4832 = vshrl.u32 %v4072, 16
      %v4834 = vrot.slane %v4832, 3
      %v4835 = vshll.u32 %v4072, 16
      %v4837 = vrot.slane %v4835, 4
      %v4838 = vor.u32 %v4834, %v4837
      %v4839 = vsel %vm912, %v4838, %v4838
      %v4841 = vshrl.u32 %v4166, 16
      %v4843 = vrot.slane %v4841, 3
      %v4844 = vshll.u32 %v4166, 16
      %v4846 = vrot.slane %v4844, 4
      %v4847 = vor.u32 %v4843, %v4846
      %v4849 = vshrl.u32 %v4168, 16
      %v4851 = vrot.slane %v4849, 3
      %v4852 = vshll.u32 %v4168, 16
      %v4854 = vrot.slane %v4852, 4
      %v4855 = vor.u32 %v4851, %v4854
      %v4856 = vsel %vm912, %v4847, %v4855
      %s4905 = scalar_lea.vmem %s3, 384
      %v4906 = vld [vmem:[%s4905] sm:$0xf]
      %v4907 = vld [vmem:[%s4905 + $0x4] sm:$0xf]
      %v4908 = vld [vmem:[%s4905 + $0x8] sm:$0xf]
      %v4909 = vld [vmem:[%s4905 + $0xc] sm:$0xf]
      %v4910 = vld [vmem:[%s4905 + $0x10] sm:$0xf]
      %v4911 = vld [vmem:[%s4905 + $0x14] sm:$0xf]
      %v4912 = vld [vmem:[%s4905 + $0x18] sm:$0xf]
      %v4913 = vld [vmem:[%s4905 + $0x1c] sm:$0xf]
      %v4914 = vld [vmem:[%s4905 + $0x20] sm:$0xf]
      %v4915 = vld [vmem:[%s4905 + $0x24] sm:$0xf]
      %v4916 = vld [vmem:[%s4905 + $0x28] sm:$0xf]
      %v4917 = vld [vmem:[%s4905 + $0x2c] sm:$0xf]
      %v4918 = vld [vmem:[%s4905 + $0x30] sm:$0xf]
      %v4919 = vld [vmem:[%s4905 + $0x34] sm:$0xf]
      %v4920 = vld [vmem:[%s4905 + $0x38] sm:$0xf]
      %v4921 = vld [vmem:[%s4905 + $0x3c] sm:$0xf]
      %v4922 = vld [vmem:[%s4905 + $0x40] sm:$0xf]
      %v4923 = vld [vmem:[%s4905 + $0x44] sm:$0xf]
      %v4924 = vld [vmem:[%s4905 + $0x48] sm:$0xf]
      %v4925 = vld [vmem:[%s4905 + $0x4c] sm:$0xf]
      %v4926 = vld [vmem:[%s4905 + $0x50] sm:$0xf]
      %v4927 = vld [vmem:[%s4905 + $0x54] sm:$0xf]
      %v4928 = vld [vmem:[%s4905 + $0x58] sm:$0xf]
      %v4929 = vld [vmem:[%s4905 + $0x5c] sm:$0xf]
      %v4930 = vld [vmem:[%s4905 + $0x60] sm:$0xf]
      %v4931 = vld [vmem:[%s4905 + $0x64] sm:$0xf]
      %v4932 = vld [vmem:[%s4905 + $0x68] sm:$0xf]
      %v4933 = vld [vmem:[%s4905 + $0x6c] sm:$0xf]
      %v4934 = vld [vmem:[%s4905 + $0x70] sm:$0xf]
      %v4935 = vld [vmem:[%s4905 + $0x74] sm:$0xf]
      %v4936 = vld [vmem:[%s4905 + $0x78] sm:$0xf]
      %v4937 = vld [vmem:[%s4905 + $0x7c] sm:$0xf]
      %v4938 = vld [vmem:[%s4905 + $0x80] sm:$0xf]
      %v4939 = vld [vmem:[%s4905 + $0x84] sm:$0xf]
      %v4940 = vld [vmem:[%s4905 + $0x88] sm:$0xf]
      %v4941 = vld [vmem:[%s4905 + $0x8c] sm:$0xf]
      %v4942 = vld [vmem:[%s4905 + $0x90] sm:$0xf]
      %v4943 = vld [vmem:[%s4905 + $0x94] sm:$0xf]
      %v4944 = vld [vmem:[%s4905 + $0x98] sm:$0xf]
      %v4945 = vld [vmem:[%s4905 + $0x9c] sm:$0xf]
      %v4946 = vld [vmem:[%s4905 + $0xa0] sm:$0xf]
      %v4947 = vld [vmem:[%s4905 + $0xa4] sm:$0xf]
      %v4948 = vld [vmem:[%s4905 + $0xa8] sm:$0xf]
      %v4949 = vld [vmem:[%s4905 + $0xac] sm:$0xf]
      %v4950 = vld [vmem:[%s4905 + $0xb0] sm:$0xf]
      %v4951 = vld [vmem:[%s4905 + $0xb4] sm:$0xf]
      %v4952 = vld [vmem:[%s4905 + $0xb8] sm:$0xf]
      %v4953 = vld [vmem:[%s4905 + $0xbc] sm:$0xf]
      %v5002 = vunpack.c.l.b16 %v4906
      %v5003 = vunpack.c.l.b16 %v4907
      %v5004 = vunpack.c.l.b16 %v4908
      %v5005 = vunpack.c.l.b16 %v4909
      %v5006 = vunpack.c.l.b16 %v4910
      %v5007 = vunpack.c.l.b16 %v4911
      %v5008 = vunpack.c.l.b16 %v4912
      %v5009 = vunpack.c.l.b16 %v4913
      %v5010 = vunpack.c.l.b16 %v4914
      %v5011 = vunpack.c.l.b16 %v4915
      %v5012 = vunpack.c.l.b16 %v4916
      %v5013 = vunpack.c.l.b16 %v4917
      %v5014 = vunpack.c.l.b16 %v4918
      %v5015 = vunpack.c.l.b16 %v4919
      %v5016 = vunpack.c.l.b16 %v4920
      %v5017 = vunpack.c.l.b16 %v4921
      %v5018 = vunpack.c.l.b16 %v4922
      %v5019 = vunpack.c.l.b16 %v4923
      %v5020 = vunpack.c.l.b16 %v4924
      %v5021 = vunpack.c.l.b16 %v4925
      %v5022 = vunpack.c.l.b16 %v4926
      %v5023 = vunpack.c.l.b16 %v4927
      %v5024 = vunpack.c.l.b16 %v4928
      %v5025 = vunpack.c.l.b16 %v4929
      %v5026 = vunpack.c.l.b16 %v4930
      %v5027 = vunpack.c.l.b16 %v4931
      %v5028 = vunpack.c.l.b16 %v4932
      %v5029 = vunpack.c.l.b16 %v4933
      %v5030 = vunpack.c.l.b16 %v4934
      %v5031 = vunpack.c.l.b16 %v4935
      %v5032 = vunpack.c.l.b16 %v4936
      %v5033 = vunpack.c.l.b16 %v4937
      %v5034 = vunpack.c.l.b16 %v4938
      %v5035 = vunpack.c.l.b16 %v4939
      %v5036 = vunpack.c.l.b16 %v4940
      %v5037 = vunpack.c.l.b16 %v4941
      %v5038 = vunpack.c.l.b16 %v4942
      %v5039 = vunpack.c.l.b16 %v4943
      %v5040 = vunpack.c.l.b16 %v4944
      %v5041 = vunpack.c.l.b16 %v4945
      %v5042 = vunpack.c.l.b16 %v4946
      %v5043 = vunpack.c.l.b16 %v4947
      %v5044 = vunpack.c.l.b16 %v4948
      %v5045 = vunpack.c.l.b16 %v4949
      %v5046 = vunpack.c.l.b16 %v4950
      %v5047 = vunpack.c.l.b16 %v4951
      %v5048 = vunpack.c.l.b16 %v4952
      %v5049 = vunpack.c.l.b16 %v4953
      %v5050 = vpack.c.b16 %v5003, %v5002
      %v5051 = vpack.c.b16 %v5005, %v5004
      %v5052 = vpack.c.b16 %v5007, %v5006
      %v5053 = vpack.c.b16 %v5009, %v5008
      %v5054 = vpack.c.b16 %v5011, %v5010
      %v5055 = vpack.c.b16 %v5013, %v5012
      %v5056 = vpack.c.b16 %v5015, %v5014
      %v5057 = vpack.c.b16 %v5017, %v5016
      %v5058 = vpack.c.b16 %v5019, %v5018
      %v5059 = vpack.c.b16 %v5021, %v5020
      %v5060 = vpack.c.b16 %v5023, %v5022
      %v5061 = vpack.c.b16 %v5025, %v5024
      %v5062 = vpack.c.b16 %v5027, %v5026
      %v5063 = vpack.c.b16 %v5029, %v5028
      %v5064 = vpack.c.b16 %v5031, %v5030
      %v5065 = vpack.c.b16 %v5033, %v5032
      %v5066 = vpack.c.b16 %v5035, %v5034
      %v5067 = vpack.c.b16 %v5037, %v5036
      %v5068 = vpack.c.b16 %v5039, %v5038
      %v5069 = vpack.c.b16 %v5041, %v5040
      %v5070 = vpack.c.b16 %v5043, %v5042
      %v5071 = vpack.c.b16 %v5045, %v5044
      %v5072 = vpack.c.b16 %v5047, %v5046
      %v5073 = vpack.c.b16 %v5049, %v5048
      %5098 = vmatpush.bf16.msra.mxu0 %v5057
      %5099 = vmatpush.bf16.msra.mxu0 %v5056
      %5100 = vmatpush.bf16.msra.mxu0 %v5055
      %5101 = vmatpush.bf16.msra.mxu0 %v5054
      %5102 = vmatpush.bf16.msra.mxu0 %v5053
      %5103 = vmatpush.bf16.msra.mxu0 %v5052
      %5104 = vmatpush.bf16.msra.mxu0 %v5051
      %5105 = vmatpush.bf16.msra.mxu0 %v5050
      %5106 = vmatmul.bf16.gmra.mxu0 %v4185
      %v5107 = vpop.f32.mrf.mxu0
      %v5108 = vadd.f32 0.0, %v5107
      %v5109 = vpop.f32.mrf.mxu0
      %v5110 = vadd.f32 0.0, %v5109
      %5111 = vmatmul.bf16.gmra.mxu0 %v4228
      %v5112 = vpop.f32.mrf.mxu0
      %v5113 = vadd.f32 0.0, %v5112
      %v5114 = vpop.f32.mrf.mxu0
      %v5115 = vadd.f32 0.0, %v5114
      %5116 = vmatmul.bf16.gmra.mxu0 %v4271
      %v5117 = vpop.f32.mrf.mxu0
      %v5118 = vadd.f32 0.0, %v5117
      %v5119 = vpop.f32.mrf.mxu0
      %v5120 = vadd.f32 0.0, %v5119
      %5121 = vmatmul.bf16.gmra.mxu0 %v4314
      %v5122 = vpop.f32.mrf.mxu0
      %v5123 = vadd.f32 0.0, %v5122
      %v5124 = vpop.f32.mrf.mxu0
      %v5125 = vadd.f32 0.0, %v5124
      %5126 = vmatmul.bf16.gmra.mxu0 %v4357
      %v5127 = vpop.f32.mrf.mxu0
      %v5128 = vadd.f32 0.0, %v5127
      %v5129 = vpop.f32.mrf.mxu0
      %v5130 = vadd.f32 0.0, %v5129
      %5131 = vmatmul.bf16.gmra.mxu0 %v4400
      %v5132 = vpop.f32.mrf.mxu0
      %v5133 = vadd.f32 0.0, %v5132
      %v5134 = vpop.f32.mrf.mxu0
      %v5135 = vadd.f32 0.0, %v5134
      %5136 = vmatmul.bf16.gmra.mxu0 %v4443
      %v5137 = vpop.f32.mrf.mxu0
      %v5138 = vadd.f32 0.0, %v5137
      %v5139 = vpop.f32.mrf.mxu0
      %v5140 = vadd.f32 0.0, %v5139
      %5141 = vmatmul.bf16.gmra.mxu0 %v4486
      %v5142 = vpop.f32.mrf.mxu0
      %v5143 = vadd.f32 0.0, %v5142
      %v5144 = vpop.f32.mrf.mxu0
      %v5145 = vadd.f32 0.0, %v5144
      %5146 = vmatmul.bf16.gmra.mxu0 %v4529
      %v5147 = vpop.f32.mrf.mxu0
      %v5148 = vadd.f32 0.0, %v5147
      %v5149 = vpop.f32.mrf.mxu0
      %v5150 = vadd.f32 0.0, %v5149
      %5151 = vmatmul.bf16.gmra.mxu0 %v4572
      %v5152 = vpop.f32.mrf.mxu0
      %v5153 = vadd.f32 0.0, %v5152
      %v5154 = vpop.f32.mrf.mxu0
      %v5155 = vadd.f32 0.0, %v5154
      %5156 = vmatmul.bf16.gmra.mxu0 %v4615
      %v5157 = vpop.f32.mrf.mxu0
      %v5158 = vadd.f32 0.0, %v5157
      %v5159 = vpop.f32.mrf.mxu0
      %v5160 = vadd.f32 0.0, %v5159
      %5161 = vmatmul.bf16.gmra.mxu0 %v4658
      %v5162 = vpop.f32.mrf.mxu0
      %v5163 = vadd.f32 0.0, %v5162
      %v5164 = vpop.f32.mrf.mxu0
      %v5165 = vadd.f32 0.0, %v5164
      %5166 = vmatmul.bf16.gmra.mxu0 %v4701
      %v5167 = vpop.f32.mrf.mxu0
      %v5168 = vadd.f32 0.0, %v5167
      %v5169 = vpop.f32.mrf.mxu0
      %v5170 = vadd.f32 0.0, %v5169
      %5171 = vmatmul.bf16.gmra.mxu0 %v4744
      %v5172 = vpop.f32.mrf.mxu0
      %v5173 = vadd.f32 0.0, %v5172
      %v5174 = vpop.f32.mrf.mxu0
      %v5175 = vadd.f32 0.0, %v5174
      %5176 = vmatmul.bf16.gmra.mxu0 %v4787
      %v5177 = vpop.f32.mrf.mxu0
      %v5178 = vadd.f32 0.0, %v5177
      %v5179 = vpop.f32.mrf.mxu0
      %v5180 = vadd.f32 0.0, %v5179
      %5181 = vmatmul.bf16.gmra.mxu0 %v4830
      %v5182 = vpop.f32.mrf.mxu0
      %v5183 = vadd.f32 0.0, %v5182
      %v5184 = vpop.f32.mrf.mxu0
      %v5185 = vadd.f32 0.0, %v5184
      %5186 = vdwg.mxu0
      %5187 = vmatpush.bf16.msra.mxu0 %v5065
      %5188 = vmatpush.bf16.msra.mxu0 %v5064
      %5189 = vmatpush.bf16.msra.mxu0 %v5063
      %5190 = vmatpush.bf16.msra.mxu0 %v5062
      %5191 = vmatpush.bf16.msra.mxu0 %v5061
      %5192 = vmatpush.bf16.msra.mxu0 %v5060
      %5193 = vmatpush.bf16.msra.mxu0 %v5059
      %5194 = vmatpush.bf16.msra.mxu0 %v5058
      %5195 = vmatmul.bf16.gmra.mxu0 %v4194
      %v5196 = vpop.f32.mrf.mxu0
      %v5197 = vadd.f32 %v5108, %v5196
      %v5198 = vpop.f32.mrf.mxu0
      %v5199 = vadd.f32 %v5110, %v5198
      %5200 = vmatmul.bf16.gmra.mxu0 %v4237
      %v5201 = vpop.f32.mrf.mxu0
      %v5202 = vadd.f32 %v5113, %v5201
      %v5203 = vpop.f32.mrf.mxu0
      %v5204 = vadd.f32 %v5115, %v5203
      %5205 = vmatmul.bf16.gmra.mxu0 %v4280
      %v5206 = vpop.f32.mrf.mxu0
      %v5207 = vadd.f32 %v5118, %v5206
      %v5208 = vpop.f32.mrf.mxu0
      %v5209 = vadd.f32 %v5120, %v5208
      %5210 = vmatmul.bf16.gmra.mxu0 %v4323
      %v5211 = vpop.f32.mrf.mxu0
      %v5212 = vadd.f32 %v5123, %v5211
      %v5213 = vpop.f32.mrf.mxu0
      %v5214 = vadd.f32 %v5125, %v5213
      %5215 = vmatmul.bf16.gmra.mxu0 %v4366
      %v5216 = vpop.f32.mrf.mxu0
      %v5217 = vadd.f32 %v5128, %v5216
      %v5218 = vpop.f32.mrf.mxu0
      %v5219 = vadd.f32 %v5130, %v5218
      %5220 = vmatmul.bf16.gmra.mxu0 %v4409
      %v5221 = vpop.f32.mrf.mxu0
      %v5222 = vadd.f32 %v5133, %v5221
      %v5223 = vpop.f32.mrf.mxu0
      %v5224 = vadd.f32 %v5135, %v5223
      %5225 = vmatmul.bf16.gmra.mxu0 %v4452
      %v5226 = vpop.f32.mrf.mxu0
      %v5227 = vadd.f32 %v5138, %v5226
      %v5228 = vpop.f32.mrf.mxu0
      %v5229 = vadd.f32 %v5140, %v5228
      %5230 = vmatmul.bf16.gmra.mxu0 %v4495
      %v5231 = vpop.f32.mrf.mxu0
      %v5232 = vadd.f32 %v5143, %v5231
      %v5233 = vpop.f32.mrf.mxu0
      %v5234 = vadd.f32 %v5145, %v5233
      %5235 = vmatmul.bf16.gmra.mxu0 %v4538
      %v5236 = vpop.f32.mrf.mxu0
      %v5237 = vadd.f32 %v5148, %v5236
      %v5238 = vpop.f32.mrf.mxu0
      %v5239 = vadd.f32 %v5150, %v5238
      %5240 = vmatmul.bf16.gmra.mxu0 %v4581
      %v5241 = vpop.f32.mrf.mxu0
      %v5242 = vadd.f32 %v5153, %v5241
      %v5243 = vpop.f32.mrf.mxu0
      %v5244 = vadd.f32 %v5155, %v5243
      %5245 = vmatmul.bf16.gmra.mxu0 %v4624
      %v5246 = vpop.f32.mrf.mxu0
      %v5247 = vadd.f32 %v5158, %v5246
      %v5248 = vpop.f32.mrf.mxu0
      %v5249 = vadd.f32 %v5160, %v5248
      %5250 = vmatmul.bf16.gmra.mxu0 %v4667
      %v5251 = vpop.f32.mrf.mxu0
      %v5252 = vadd.f32 %v5163, %v5251
      %v5253 = vpop.f32.mrf.mxu0
      %v5254 = vadd.f32 %v5165, %v5253
      %5255 = vmatmul.bf16.gmra.mxu0 %v4710
      %v5256 = vpop.f32.mrf.mxu0
      %v5257 = vadd.f32 %v5168, %v5256
      %v5258 = vpop.f32.mrf.mxu0
      %v5259 = vadd.f32 %v5170, %v5258
      %5260 = vmatmul.bf16.gmra.mxu0 %v4753
      %v5261 = vpop.f32.mrf.mxu0
      %v5262 = vadd.f32 %v5173, %v5261
      %v5263 = vpop.f32.mrf.mxu0
      %v5264 = vadd.f32 %v5175, %v5263
      %5265 = vmatmul.bf16.gmra.mxu0 %v4796
      %v5266 = vpop.f32.mrf.mxu0
      %v5267 = vadd.f32 %v5178, %v5266
      %v5268 = vpop.f32.mrf.mxu0
      %v5269 = vadd.f32 %v5180, %v5268
      %5270 = vmatmul.bf16.gmra.mxu0 %v4839
      %v5271 = vpop.f32.mrf.mxu0
      %v5272 = vadd.f32 %v5183, %v5271
      %v5273 = vpop.f32.mrf.mxu0
      %v5274 = vadd.f32 %v5185, %v5273
      %5275 = vdwg.mxu0
      %5276 = vmatpush.bf16.msra.mxu0 %v5073
      %5277 = vmatpush.bf16.msra.mxu0 %v5072
      %5278 = vmatpush.bf16.msra.mxu0 %v5071
      %5279 = vmatpush.bf16.msra.mxu0 %v5070
      %5280 = vmatpush.bf16.msra.mxu0 %v5069
      %5281 = vmatpush.bf16.msra.mxu0 %v5068
      %5282 = vmatpush.bf16.msra.mxu0 %v5067
      %5283 = vmatpush.bf16.msra.mxu0 %v5066
      %5284 = vmatmul.bf16.gmra.mxu0 %v4211
      %v5285 = vpop.f32.mrf.mxu0
      %v5286 = vadd.f32 %v5197, %v5285
      %v5287 = vpop.f32.mrf.mxu0
      %v5288 = vadd.f32 %v5199, %v5287
      %5289 = vmatmul.bf16.gmra.mxu0 %v4254
      %v5290 = vpop.f32.mrf.mxu0
      %v5291 = vadd.f32 %v5202, %v5290
      %v5292 = vpop.f32.mrf.mxu0
      %v5293 = vadd.f32 %v5204, %v5292
      %5294 = vmatmul.bf16.gmra.mxu0 %v4297
      %v5295 = vpop.f32.mrf.mxu0
      %v5296 = vadd.f32 %v5207, %v5295
      %v5297 = vpop.f32.mrf.mxu0
      %v5298 = vadd.f32 %v5209, %v5297
      %5299 = vmatmul.bf16.gmra.mxu0 %v4340
      %v5300 = vpop.f32.mrf.mxu0
      %v5301 = vadd.f32 %v5212, %v5300
      %v5302 = vpop.f32.mrf.mxu0
      %v5303 = vadd.f32 %v5214, %v5302
      %5304 = vmatmul.bf16.gmra.mxu0 %v4383
      %v5305 = vpop.f32.mrf.mxu0
      %v5306 = vadd.f32 %v5217, %v5305
      %v5307 = vpop.f32.mrf.mxu0
      %v5308 = vadd.f32 %v5219, %v5307
      %5309 = vmatmul.bf16.gmra.mxu0 %v4426
      %v5310 = vpop.f32.mrf.mxu0
      %v5311 = vadd.f32 %v5222, %v5310
      %v5312 = vpop.f32.mrf.mxu0
      %v5313 = vadd.f32 %v5224, %v5312
      %5314 = vmatmul.bf16.gmra.mxu0 %v4469
      %v5315 = vpop.f32.mrf.mxu0
      %v5316 = vadd.f32 %v5227, %v5315
      %v5317 = vpop.f32.mrf.mxu0
      %v5318 = vadd.f32 %v5229, %v5317
      %5319 = vmatmul.bf16.gmra.mxu0 %v4512
      %v5320 = vpop.f32.mrf.mxu0
      %v5321 = vadd.f32 %v5232, %v5320
      %v5322 = vpop.f32.mrf.mxu0
      %v5323 = vadd.f32 %v5234, %v5322
      %5324 = vmatmul.bf16.gmra.mxu0 %v4555
      %v5325 = vpop.f32.mrf.mxu0
      %v5326 = vadd.f32 %v5237, %v5325
      %v5327 = vpop.f32.mrf.mxu0
      %v5328 = vadd.f32 %v5239, %v5327
      %5329 = vmatmul.bf16.gmra.mxu0 %v4598
      %v5330 = vpop.f32.mrf.mxu0
      %v5331 = vadd.f32 %v5242, %v5330
      %v5332 = vpop.f32.mrf.mxu0
      %v5333 = vadd.f32 %v5244, %v5332
      %5334 = vmatmul.bf16.gmra.mxu0 %v4641
      %v5335 = vpop.f32.mrf.mxu0
      %v5336 = vadd.f32 %v5247, %v5335
      %v5337 = vpop.f32.mrf.mxu0
      %v5338 = vadd.f32 %v5249, %v5337
      %5339 = vmatmul.bf16.gmra.mxu0 %v4684
      %v5340 = vpop.f32.mrf.mxu0
      %v5341 = vadd.f32 %v5252, %v5340
      %v5342 = vpop.f32.mrf.mxu0
      %v5343 = vadd.f32 %v5254, %v5342
      %5344 = vmatmul.bf16.gmra.mxu0 %v4727
      %v5345 = vpop.f32.mrf.mxu0
      %v5346 = vadd.f32 %v5257, %v5345
      %v5347 = vpop.f32.mrf.mxu0
      %v5348 = vadd.f32 %v5259, %v5347
      %5349 = vmatmul.bf16.gmra.mxu0 %v4770
      %v5350 = vpop.f32.mrf.mxu0
      %v5351 = vadd.f32 %v5262, %v5350
      %v5352 = vpop.f32.mrf.mxu0
      %v5353 = vadd.f32 %v5264, %v5352
      %5354 = vmatmul.bf16.gmra.mxu0 %v4813
      %v5355 = vpop.f32.mrf.mxu0
      %v5356 = vadd.f32 %v5267, %v5355
      %v5357 = vpop.f32.mrf.mxu0
      %v5358 = vadd.f32 %v5269, %v5357
      %5359 = vmatmul.bf16.gmra.mxu0 %v4856
      %v5360 = vpop.f32.mrf.mxu0
      %v5361 = vadd.f32 %v5272, %v5360
      %v5362 = vpop.f32.mrf.mxu0
      %v5363 = vadd.f32 %v5274, %v5362
      %5364 = vdwg.mxu0
      %v5365 = vadd.f32 %v3657, %v5286
      %v5366 = vadd.f32 %v3659, %v5288
      %v5367 = vadd.f32 %v3662, %v5291
      %v5368 = vadd.f32 %v3664, %v5293
      %v5369 = vadd.f32 %v3667, %v5296
      %v5370 = vadd.f32 %v3669, %v5298
      %v5371 = vadd.f32 %v3672, %v5301
      %v5372 = vadd.f32 %v3674, %v5303
      %v5373 = vadd.f32 %v3677, %v5306
      %v5374 = vadd.f32 %v3679, %v5308
      %v5375 = vadd.f32 %v3682, %v5311
      %v5376 = vadd.f32 %v3684, %v5313
      %v5377 = vadd.f32 %v3687, %v5316
      %v5378 = vadd.f32 %v3689, %v5318
      %v5379 = vadd.f32 %v3692, %v5321
      %v5380 = vadd.f32 %v3694, %v5323
      %v5381 = vadd.f32 %v3697, %v5326
      %v5382 = vadd.f32 %v3699, %v5328
      %v5383 = vadd.f32 %v3702, %v5331
      %v5384 = vadd.f32 %v3704, %v5333
      %v5385 = vadd.f32 %v3707, %v5336
      %v5386 = vadd.f32 %v3709, %v5338
      %v5387 = vadd.f32 %v3712, %v5341
      %v5388 = vadd.f32 %v3714, %v5343
      %v5389 = vadd.f32 %v3717, %v5346
      %v5390 = vadd.f32 %v3719, %v5348
      %v5391 = vadd.f32 %v3722, %v5351
      %v5392 = vadd.f32 %v3724, %v5353
      %v5393 = vadd.f32 %v3727, %v5356
      %v5394 = vadd.f32 %v3729, %v5358
      %v5395 = vadd.f32 %v3732, %v5361
      %v5396 = vadd.f32 %v3734, %v5363
      %v5397 = vpack.c.bf16 %v5365, %v5365
      %v5398 = vpack.c.bf16 %v5366, %v5366
      %v5399 = vpack.c.bf16 %v5367, %v5367
      %v5400 = vpack.c.bf16 %v5368, %v5368
      %v5401 = vpack.c.bf16 %v5369, %v5369
      %v5402 = vpack.c.bf16 %v5370, %v5370
      %v5403 = vpack.c.bf16 %v5371, %v5371
      %v5404 = vpack.c.bf16 %v5372, %v5372
      %v5405 = vpack.c.bf16 %v5373, %v5373
      %v5406 = vpack.c.bf16 %v5374, %v5374
      %v5407 = vpack.c.bf16 %v5375, %v5375
      %v5408 = vpack.c.bf16 %v5376, %v5376
      %v5409 = vpack.c.bf16 %v5377, %v5377
      %v5410 = vpack.c.bf16 %v5378, %v5378
      %v5411 = vpack.c.bf16 %v5379, %v5379
      %v5412 = vpack.c.bf16 %v5380, %v5380
      %v5413 = vpack.c.bf16 %v5381, %v5381
      %v5414 = vpack.c.bf16 %v5382, %v5382
      %v5415 = vpack.c.bf16 %v5383, %v5383
      %v5416 = vpack.c.bf16 %v5384, %v5384
      %v5417 = vpack.c.bf16 %v5385, %v5385
      %v5418 = vpack.c.bf16 %v5386, %v5386
      %v5419 = vpack.c.bf16 %v5387, %v5387
      %v5420 = vpack.c.bf16 %v5388, %v5388
      %v5421 = vpack.c.bf16 %v5389, %v5389
      %v5422 = vpack.c.bf16 %v5390, %v5390
      %v5423 = vpack.c.bf16 %v5391, %v5391
      %v5424 = vpack.c.bf16 %v5392, %v5392
      %v5425 = vpack.c.bf16 %v5393, %v5393
      %v5426 = vpack.c.bf16 %v5394, %v5394
      %v5427 = vpack.c.bf16 %v5395, %v5395
      %v5428 = vpack.c.bf16 %v5396, %v5396
      %5429 = vst [vmem:[%s231] sm:$0xf] %v5397
      %5430 = vst [vmem:[%s231 + $0x4] sm:$0xf] %v5398
      %5431 = vst [vmem:[%s231 + $0x8] sm:$0xf] %v5399
      %5432 = vst [vmem:[%s231 + $0xc] sm:$0xf] %v5400
      %5433 = vst [vmem:[%s231 + $0x10] sm:$0xf] %v5401
      %5434 = vst [vmem:[%s231 + $0x14] sm:$0xf] %v5402
      %5435 = vst [vmem:[%s231 + $0x18] sm:$0xf] %v5403
      %5436 = vst [vmem:[%s231 + $0x1c] sm:$0xf] %v5404
      %5437 = vst [vmem:[%s231 + $0x20] sm:$0xf] %v5405
      %5438 = vst [vmem:[%s231 + $0x24] sm:$0xf] %v5406
      %5439 = vst [vmem:[%s231 + $0x28] sm:$0xf] %v5407
      %5440 = vst [vmem:[%s231 + $0x2c] sm:$0xf] %v5408
      %5441 = vst [vmem:[%s231 + $0x30] sm:$0xf] %v5409
      %5442 = vst [vmem:[%s231 + $0x34] sm:$0xf] %v5410
      %5443 = vst [vmem:[%s231 + $0x38] sm:$0xf] %v5411
      %5444 = vst [vmem:[%s231 + $0x3c] sm:$0xf] %v5412
      %5445 = vst [vmem:[%s231 + $0x40] sm:$0xf] %v5413
      %5446 = vst [vmem:[%s231 + $0x44] sm:$0xf] %v5414
      %5447 = vst [vmem:[%s231 + $0x48] sm:$0xf] %v5415
      %5448 = vst [vmem:[%s231 + $0x4c] sm:$0xf] %v5416
      %5449 = vst [vmem:[%s231 + $0x50] sm:$0xf] %v5417
      %5450 = vst [vmem:[%s231 + $0x54] sm:$0xf] %v5418
      %5451 = vst [vmem:[%s231 + $0x58] sm:$0xf] %v5419
      %5452 = vst [vmem:[%s231 + $0x5c] sm:$0xf] %v5420
      %5453 = vst [vmem:[%s231 + $0x60] sm:$0xf] %v5421
      %5454 = vst [vmem:[%s231 + $0x64] sm:$0xf] %v5422
      %5455 = vst [vmem:[%s231 + $0x68] sm:$0xf] %v5423
      %5456 = vst [vmem:[%s231 + $0x6c] sm:$0xf] %v5424
      %5457 = vst [vmem:[%s231 + $0x70] sm:$0xf] %v5425
      %5458 = vst [vmem:[%s231 + $0x74] sm:$0xf] %v5426
      %5459 = vst [vmem:[%s231 + $0x78] sm:$0xf] %v5427
      %5460 = vst [vmem:[%s231 + $0x7c] sm:$0xf] %v5428
      %v5461 = vunpack.c.l.bf16 %v5397
      %v5462 = vunpack.c.l.bf16 %v5398
      %v5463 = vunpack.c.l.bf16 %v5399
      %v5464 = vunpack.c.l.bf16 %v5400
      %v5465 = vunpack.c.l.bf16 %v5401
      %v5466 = vunpack.c.l.bf16 %v5402
      %v5467 = vunpack.c.l.bf16 %v5403
      %v5468 = vunpack.c.l.bf16 %v5404
      %v5469 = vunpack.c.l.bf16 %v5405
      %v5470 = vunpack.c.l.bf16 %v5406
      %v5471 = vunpack.c.l.bf16 %v5407
      %v5472 = vunpack.c.l.bf16 %v5408
      %v5473 = vunpack.c.l.bf16 %v5409
      %v5474 = vunpack.c.l.bf16 %v5410
      %v5475 = vunpack.c.l.bf16 %v5411
      %v5476 = vunpack.c.l.bf16 %v5412
      %v5477 = vunpack.c.l.bf16 %v5413
      %v5478 = vunpack.c.l.bf16 %v5414
      %v5479 = vunpack.c.l.bf16 %v5415
      %v5480 = vunpack.c.l.bf16 %v5416
      %v5481 = vunpack.c.l.bf16 %v5417
      %v5482 = vunpack.c.l.bf16 %v5418
      %v5483 = vunpack.c.l.bf16 %v5419
      %v5484 = vunpack.c.l.bf16 %v5420
      %v5485 = vunpack.c.l.bf16 %v5421
      %v5486 = vunpack.c.l.bf16 %v5422
      %v5487 = vunpack.c.l.bf16 %v5423
      %v5488 = vunpack.c.l.bf16 %v5424
      %v5489 = vunpack.c.l.bf16 %v5425
      %v5490 = vunpack.c.l.bf16 %v5426
      %v5491 = vunpack.c.l.bf16 %v5427
      %v5492 = vunpack.c.l.bf16 %v5428
      %v5493 = vadd.f32 %v5461, %v5462
      %v5494 = vadd.f32 %v5493, %v5463
      %v5495 = vadd.f32 %v5494, %v5464
      %v5496 = vadd.f32 %v5495, %v5465
      %v5497 = vadd.f32 %v5496, %v5466
      %v5498 = vadd.f32 %v5497, %v5467
      %v5499 = vadd.f32 %v5498, %v5468
      %v5500 = vadd.f32 %v5499, %v5469
      %v5501 = vadd.f32 %v5500, %v5470
      %v5502 = vadd.f32 %v5501, %v5471
      %v5503 = vadd.f32 %v5502, %v5472
      %v5504 = vadd.f32 %v5503, %v5473
      %v5505 = vadd.f32 %v5504, %v5474
      %v5506 = vadd.f32 %v5505, %v5475
      %v5507 = vadd.f32 %v5506, %v5476
      %v5508 = vadd.f32 %v5507, %v5477
      %v5509 = vadd.f32 %v5508, %v5478
      %v5510 = vadd.f32 %v5509, %v5479
      %v5511 = vadd.f32 %v5510, %v5480
      %v5512 = vadd.f32 %v5511, %v5481
      %v5513 = vadd.f32 %v5512, %v5482
      %v5514 = vadd.f32 %v5513, %v5483
      %v5515 = vadd.f32 %v5514, %v5484
      %v5516 = vadd.f32 %v5515, %v5485
      %v5517 = vadd.f32 %v5516, %v5486
      %v5518 = vadd.f32 %v5517, %v5487
      %v5519 = vadd.f32 %v5518, %v5488
      %v5520 = vadd.f32 %v5519, %v5489
      %v5521 = vadd.f32 %v5520, %v5490
      %v5522 = vadd.f32 %v5521, %v5491
      %v5523 = vadd.f32 %v5522, %v5492
      %v5524 = vrot.slane %v5523, 4
      %v5525 = vadd.f32 %v5523, %v5524
      %v5526 = vrot.slane %v5525, 2
      %v5527 = vadd.f32 %v5525, %v5526
      %v5528 = vrot.slane %v5527, 1
      %v5529 = vadd.f32 %v5527, %v5528
      %v5530 = vmul.f32 %v5461, %v5461
      %v5531 = vmul.f32 %v5462, %v5462
      %v5532 = vmul.f32 %v5463, %v5463
      %v5533 = vmul.f32 %v5464, %v5464
      %v5534 = vmul.f32 %v5465, %v5465
      %v5535 = vmul.f32 %v5466, %v5466
      %v5536 = vmul.f32 %v5467, %v5467
      %v5537 = vmul.f32 %v5468, %v5468
      %v5538 = vmul.f32 %v5469, %v5469
      %v5539 = vmul.f32 %v5470, %v5470
      %v5540 = vmul.f32 %v5471, %v5471
      %v5541 = vmul.f32 %v5472, %v5472
      %v5542 = vmul.f32 %v5473, %v5473
      %v5543 = vmul.f32 %v5474, %v5474
      %v5544 = vmul.f32 %v5475, %v5475
      %v5545 = vmul.f32 %v5476, %v5476
      %v5546 = vmul.f32 %v5477, %v5477
      %v5547 = vmul.f32 %v5478, %v5478
      %v5548 = vmul.f32 %v5479, %v5479
      %v5549 = vmul.f32 %v5480, %v5480
      %v5550 = vmul.f32 %v5481, %v5481
      %v5551 = vmul.f32 %v5482, %v5482
      %v5552 = vmul.f32 %v5483, %v5483
      %v5553 = vmul.f32 %v5484, %v5484
      %v5554 = vmul.f32 %v5485, %v5485
      %v5555 = vmul.f32 %v5486, %v5486
      %v5556 = vmul.f32 %v5487, %v5487
      %v5557 = vmul.f32 %v5488, %v5488
      %v5558 = vmul.f32 %v5489, %v5489
      %v5559 = vmul.f32 %v5490, %v5490
      %v5560 = vmul.f32 %v5491, %v5491
      %v5561 = vmul.f32 %v5492, %v5492
      %v5562 = vadd.f32 %v5530, %v5531
      %v5563 = vadd.f32 %v5562, %v5532
      %v5564 = vadd.f32 %v5563, %v5533
      %v5565 = vadd.f32 %v5564, %v5534
      %v5566 = vadd.f32 %v5565, %v5535
      %v5567 = vadd.f32 %v5566, %v5536
      %v5568 = vadd.f32 %v5567, %v5537
      %v5569 = vadd.f32 %v5568, %v5538
      %v5570 = vadd.f32 %v5569, %v5539
      %v5571 = vadd.f32 %v5570, %v5540
      %v5572 = vadd.f32 %v5571, %v5541
      %v5573 = vadd.f32 %v5572, %v5542
      %v5574 = vadd.f32 %v5573, %v5543
      %v5575 = vadd.f32 %v5574, %v5544
      %v5576 = vadd.f32 %v5575, %v5545
      %v5577 = vadd.f32 %v5576, %v5546
      %v5578 = vadd.f32 %v5577, %v5547
      %v5579 = vadd.f32 %v5578, %v5548
      %v5580 = vadd.f32 %v5579, %v5549
      %v5581 = vadd.f32 %v5580, %v5550
      %v5582 = vadd.f32 %v5581, %v5551
      %v5583 = vadd.f32 %v5582, %v5552
      %v5584 = vadd.f32 %v5583, %v5553
      %v5585 = vadd.f32 %v5584, %v5554
      %v5586 = vadd.f32 %v5585, %v5555
      %v5587 = vadd.f32 %v5586, %v5556
      %v5588 = vadd.f32 %v5587, %v5557
      %v5589 = vadd.f32 %v5588, %v5558
      %v5590 = vadd.f32 %v5589, %v5559
      %v5591 = vadd.f32 %v5590, %v5560
      %v5592 = vadd.f32 %v5591, %v5561
      %v5593 = vrot.slane %v5592, 4
      %v5594 = vadd.f32 %v5592, %v5593
      %v5595 = vrot.slane %v5594, 2
      %v5596 = vadd.f32 %v5594, %v5595
      %v5597 = vrot.slane %v5596, 1
      %v5598 = vadd.f32 %v5596, %v5597
      %vm5599 = vcmask 1040384
      %v5600 = vsel %vm5599, %v5529, %v5598
      %5601 = vst [vmem:[%s235] sm:$0x3] %v5600
      %p5602 = scmp.lt.s32.totalorder %s17, 1
      %s5603 = scalar_select %p5602, %s17, 1
      %s5604 = smul.addr %s5603, 32
      %s5605 = smul.addr %s5604, 4
      %s5606 = scalar_lea.vmem %s4, %s5605
      %p5607 = scmp.lt.s32.totalorder %s17, 1
      %s5608 = scalar_select %p5607, %s17, 1
      %s5609 = smul.addr %s5608, 2
      %s5610 = scalar_lea.vmem %s5, %s5609
      // Predicated region
      $region37: #{residual_block_forward.3} parent=35 // pred_check
        %p5611 = pneg %p124
      $region38: #{residual_block_forward.3} parent=35 // pred_check_branch
        %5613 = sbr.rel (%p5611) target = $region40
      $region39: #{residual_block_forward.3} parent=35 // pred_region
        _
      $region40: #{residual_block_forward.3} parent=35 // pred_fallthru
        _
      // Predicated region
      $region41: #{residual_block_forward.3} parent=35 // pred_check
        %p5614 = pneg %p150
      $region42: #{residual_block_forward.3} parent=35 // pred_check_branch
        %5616 = sbr.rel (%p5614) target = $region44
      $region43: #{residual_block_forward.3} parent=35 // pred_region
        _
      $region44: #{residual_block_forward.3} parent=35 // pred_fallthru
        _
    $region36: #{residual_block_forward.3} parent=5 // pred_fallthru
      _
    %p5617 = scmp.le.s32.totalorder 2, %s12
    // Predicated region
    $region45: #{residual_block_forward.3} parent=5 // pred_check
      %p5618 = pneg %p5617
    $region46: #{residual_block_forward.3} parent=5 // pred_check_branch
      %5620 = sbr.rel (%p5618) target = $region48
    $region47: #{residual_block_forward.3} parent=5 // pred_region
      %s5621 = ssub.s32 %s12, 2
      // Predicated region
      $region49: #{residual_block_forward.3} parent=47 // pred_check
        %p5622 = pneg %p130
      $region50: #{residual_block_forward.3} parent=47 // pred_check_branch
        %5624 = sbr.rel (%p5622) target = $region52
      $region51: #{residual_block_forward.3} parent=47 // pred_region
        %p5625 = scmp.lt.s32.totalorder %s18, 1
        %s5626 = scalar_select %p5625, %s18, 1
        %s5627 = smul.addr %s5626, 32
        %s5628 = smul.addr %s5627, 4
        %s5629 = scalar_lea.vmem %s4, %s5628
      $region52: #{residual_block_forward.3} parent=47 // pred_fallthru
        _
      // Predicated region
      $region53: #{residual_block_forward.3} parent=47 // pred_check
        %p5630 = pneg %p156
      $region54: #{residual_block_forward.3} parent=47 // pred_check_branch
        %5632 = sbr.rel (%p5630) target = $region56
      $region55: #{residual_block_forward.3} parent=47 // pred_region
        %p5633 = scmp.lt.s32.totalorder %s18, 1
        %s5634 = scalar_select %p5633, %s18, 1
        %s5635 = smul.addr %s5634, 2
        %s5636 = scalar_lea.vmem %s5, %s5635
      $region56: #{residual_block_forward.3} parent=47 // pred_fallthru
        _
    $region48: #{residual_block_forward.3} parent=5 // pred_fallthru
      _
  $region6: #{residual_block_forward.3} parent=0 // loop_footer
    %s16 = sadd.s32 1, %s12
  $region7: #{residual_block_forward.3} parent=0 // loop_footer_branch
    %11 = sbr.rel target = $region3
  $region8: #{residual_block_forward.3} parent=0 // loop_exit
    _

// kernel: residual_block_forward.4
$region0: #{residual_block_forward.4}
  #allocation0 [shape = 'u32[]', space=smem, size = 0x4, offset = 0x4, fixed_abs, tag = 'smem constant byte address 0x4 - core index']
  #allocation1 [shape = 'u32[72,128]{1,0:T(1,128)}', space=vmem, size = 0x9000, scoped, tag = 'internal scratch']
  #allocation2 [shape = 'bf16[18,32,128]{2,1,0:T(8,128)(2,1)}', space=vmem, size = 0x24000, scoped, tag = 'scratch operand']
  %s0 = inlined_call_operand.vmem [shape: bf16[2,16,16,128], index: 0, kind: input, shape index: {}]
  %s1 = inlined_call_operand.vmem [shape: f32[1,128], index: 1, kind: input, shape index: {}]
  %s2 = inlined_call_operand.vmem [shape: f32[1,128], index: 2, kind: input, shape index: {}]
  %s3 = inlined_call_operand.vmem [shape: bf16[3,384,128], index: 3, kind: input, shape index: {}]
  %s4 = inlined_call_operand.vmem [shape: f32[2,16,16,128], index: 4, kind: output, shape index: {0}]
  %s5 = inlined_call_operand.vmem [shape: f32[2,2,128], index: 5, kind: output, shape index: {1}]
  %6 = xla_tuple %s4, %s5
  %s7 = sld [smem:[#allocation0]]
  $region57: #{residual_block_forward.4} parent=0
    _
  %s9 = ssub.s32 1, %s7
  %s10 = scalar_select 0, %s9, %s7
  loop: start=0, step=1, limit=4
  $region2: #{residual_block_forward.4} parent=0 // loop_pre_header
    _
  $region3: #{residual_block_forward.4} parent=0 // loop_header
    %s12 = sphi 0, %s16
    %p13 = scmp.ge.s32.totalorder %s12, 4
    %s22 = sphi 0, %s24
    %s25 = sphi 0, %s22
    %s26 = sphi 0, %s25
    %s42 = sphi 0, %s26
    %s46 = sphi 0, %s46
    %s48 = sphi 0, %s46
    %s49 = sphi 0, %s48
    %s63 = sphi 0, %s49
    %s67 = sphi 0, %s67
    %s69 = sphi 0, %s67
    %s70 = sphi 0, %s69
    %s84 = sphi 0, %s70
    %s88 = sphi 0, %s88
    %s90 = sphi 0, %s88
    %s91 = sphi 0, %s90
    %s105 = sphi 0, %s91
    %s111 = sphi 0, %s113
    %s114 = sphi 0, %s111
    %s115 = sphi 0, %s114
    %s131 = sphi 0, %s115
    %s137 = sphi 0, %s139
    %s140 = sphi 0, %s137
    %s141 = sphi 0, %s140
    %s157 = sphi 0, %s141
  $region4: #{residual_block_forward.4} parent=0 // loop_header_branch
    %15 = sbr.rel (%p13) target = $region8
  $region5: #{residual_block_forward.4} parent=0 // loop_body
    %s17 = ssub.s32 %s12, 1
    %s18 = ssub.s32 %s12, 2
    %s19 = sadd.s32 %s12, 1
    %s20 = ssub.s32 %s12, %s19
    %p21 = scmp.eq.s32.totalorder %s20, 0
    %s23 = sadd.s32 %s22, 1
    %s24 = scalar_select %p21, %s22, %s23
    %p27 = pneg %p21
    %p28 = scmp.eq.s32.totalorder %s12, 1
    %p29 = por %p27, %p28
    %p30 = scmp.ne.s32.totalorder %s22, %s25
    %p31 = scmp.eq.s32.totalorder %s12, 0
    %p32 = por %p30, %p31
    %p33 = scmp.ne.s32.totalorder %s22, %s25
    %p34 = scmp.eq.s32.totalorder %s17, 1
    %p35 = por %p33, %p34
    %p36 = scmp.ne.s32.totalorder %s25, %s26
    %p37 = scmp.eq.s32.totalorder %s17, 0
    %p38 = por %p36, %p37
    %p39 = scmp.ne.s32.totalorder %s25, %s26
    %p40 = scmp.eq.s32.totalorder %s18, 1
    %p41 = por %p39, %p40
    %p43 = scmp.ne.s32.totalorder %s26, %s42
    %p44 = scmp.eq.s32.totalorder %s18, 0
    %p45 = por %p43, %p44
    %s47 = sadd.s32 %s46, 1
    %p50 = scmp.eq.s32.totalorder %s12, 1
    %p51 = scmp.ne.s32.totalorder %s46, %s48
    %p52 = scmp.eq.s32.totalorder %s12, 0
    %p53 = por %p51, %p52
    %p54 = scmp.ne.s32.totalorder %s46, %s48
    %p55 = scmp.eq.s32.totalorder %s17, 1
    %p56 = por %p54, %p55
    %p57 = scmp.ne.s32.totalorder %s48, %s49
    %p58 = scmp.eq.s32.totalorder %s17, 0
    %p59 = por %p57, %p58
    %p60 = scmp.ne.s32.totalorder %s48, %s49
    %p61 = scmp.eq.s32.totalorder %s18, 1
    %p62 = por %p60, %p61
    %p64 = scmp.ne.s32.totalorder %s49, %s63
    %p65 = scmp.eq.s32.totalorder %s18, 0
    %p66 = por %p64, %p65
    %s68 = sadd.s32 %s67, 1
    %p71 = scmp.eq.s32.totalorder %s12, 1
    %p72 = scmp.ne.s32.totalorder %s67, %s69
    %p73 = scmp.eq.s32.totalorder %s12, 0
    %p74 = por %p72, %p73
    %p75 = scmp.ne.s32.totalorder %s67, %s69
    %p76 = scmp.eq.s32.totalorder %s17, 1
    %p77 = por %p75, %p76
    %p78 = scmp.ne.s32.totalorder %s69, %s70
    %p79 = scmp.eq.s32.totalorder %s17, 0
    %p80 = por %p78, %p79
    %p81 = scmp.ne.s32.totalorder %s69, %s70
    %p82 = scmp.eq.s32.totalorder %s18, 1
    %p83 = por %p81, %p82
    %p85 = scmp.ne.s32.totalorder %s70, %s84
    %p86 = scmp.eq.s32.totalorder %s18, 0
    %p87 = por %p85, %p86
    %s89 = sadd.s32 %s88, 1
    %p92 = scmp.eq.s32.totalorder %s12, 1
    %p93 = scmp.ne.s32.totalorder %s88, %s90
    %p94 = scmp.eq.s32.totalorder %s12, 0
    %p95 = por %p93, %p94
    %p96 = scmp.ne.s32.totalorder %s88, %s90
    %p97 = scmp.eq.s32.totalorder %s17, 1
    %p98 = por %p96, %p97
    %p99 = scmp.ne.s32.totalorder %s90, %s91
    %p100 = scmp.eq.s32.totalorder %s17, 0
    %p101 = por %p99, %p100
    %p102 = scmp.ne.s32.totalorder %s90, %s91
    %p103 = scmp.eq.s32.totalorder %s18, 1
    %p104 = por %p102, %p103
    %p106 = scmp.ne.s32.totalorder %s91, %s105
    %p107 = scmp.eq.s32.totalorder %s18, 0
    %p108 = por %p106, %p107
    %s109 = ssub.s32 %s12, %s19
    %p110 = scmp.eq.s32.totalorder %s109, 0
    %s112 = sadd.s32 %s111, 1
    %s113 = scalar_select %p110, %s111, %s112
    %p116 = pneg %p110
    %p117 = scmp.eq.s32.totalorder %s12, 1
    %p118 = por %p116, %p117
    %p119 = scmp.ne.s32.totalorder %s111, %s114
    %p120 = scmp.eq.s32.totalorder %s12, 0
    %p121 = por %p119, %p120
    %p122 = scmp.ne.s32.totalorder %s111, %s114
    %p123 = scmp.eq.s32.totalorder %s17, 1
    %p124 = por %p122, %p123
    %p125 = scmp.ne.s32.totalorder %s114, %s115
    %p126 = scmp.eq.s32.totalorder %s17, 0
    %p127 = por %p125, %p126
    %p128 = scmp.ne.s32.totalorder %s114, %s115
    %p129 = scmp.eq.s32.totalorder %s18, 1
    %p130 = por %p128, %p129
    %p132 = scmp.ne.s32.totalorder %s115, %s131
    %p133 = scmp.eq.s32.totalorder %s18, 0
    %p134 = por %p132, %p133
    %s135 = ssub.s32 %s12, %s19
    %p136 = scmp.eq.s32.totalorder %s135, 0
    %s138 = sadd.s32 %s137, 1
    %s139 = scalar_select %p136, %s137, %s138
    %p142 = pneg %p136
    %p143 = scmp.eq.s32.totalorder %s12, 1
    %p144 = por %p142, %p143
    %p145 = scmp.ne.s32.totalorder %s137, %s140
    %p146 = scmp.eq.s32.totalorder %s12, 0
    %p147 = por %p145, %p146
    %p148 = scmp.ne.s32.totalorder %s137, %s140
    %p149 = scmp.eq.s32.totalorder %s17, 1
    %p150 = por %p148, %p149
    %p151 = scmp.ne.s32.totalorder %s140, %s141
    %p152 = scmp.eq.s32.totalorder %s17, 0
    %p153 = por %p151, %p152
    %p154 = scmp.ne.s32.totalorder %s140, %s141
    %p155 = scmp.eq.s32.totalorder %s18, 1
    %p156 = por %p154, %p155
    %p158 = scmp.ne.s32.totalorder %s141, %s157
    %p159 = scmp.eq.s32.totalorder %s18, 0
    %p160 = por %p158, %p159
    %p161 = scmp.le.s32.totalorder 1, %s12
    %p162 = scmp.lt.s32.totalorder %s12, 3
    %p163 = pnand %p161, %p162
    %p164 = pneg %p163
    // Predicated region
    $region9: #{residual_block_forward.4} parent=5 // pred_check
      _
    $region10: #{residual_block_forward.4} parent=5 // pred_check_branch
      %166 = sbr.rel (%p163) target = $region12
    $region11: #{residual_block_forward.4} parent=5 // pred_region
      %s167 = ssub.s32 %s12, 1
      // Predicated region
      $region13: #{residual_block_forward.4} parent=11 // pred_check
        %p168 = pneg %p59
      $region14: #{residual_block_forward.4} parent=11 // pred_check_branch
        %170 = sbr.rel (%p168) target = $region16
      $region15: #{residual_block_forward.4} parent=11 // pred_region
        _
      $region16: #{residual_block_forward.4} parent=11 // pred_fallthru
        _
      // Predicated region
      $region17: #{residual_block_forward.4} parent=11 // pred_check
        %p171 = pneg %p80
      $region18: #{residual_block_forward.4} parent=11 // pred_check_branch
        %173 = sbr.rel (%p171) target = $region20
      $region19: #{residual_block_forward.4} parent=11 // pred_region
        _
      $region20: #{residual_block_forward.4} parent=11 // pred_fallthru
        _
      // Predicated region
      $region21: #{residual_block_forward.4} parent=11 // pred_check
        %p174 = pneg %p101
      $region22: #{residual_block_forward.4} parent=11 // pred_check_branch
        %176 = sbr.rel (%p174) target = $region24
      $region23: #{residual_block_forward.4} parent=11 // pred_region
        _
      $region24: #{residual_block_forward.4} parent=11 // pred_fallthru
        _
    $region12: #{residual_block_forward.4} parent=5 // pred_fallthru
      _
    %p177 = scmp.lt.s32.totalorder %s12, 2
    // Predicated region
    $region25: #{residual_block_forward.4} parent=5 // pred_check
      %p178 = pneg %p177
    $region26: #{residual_block_forward.4} parent=5 // pred_check_branch
      %180 = sbr.rel (%p178) target = $region28
    $region27: #{residual_block_forward.4} parent=5 // pred_region
      // Predicated region
      $region29: #{residual_block_forward.4} parent=27 // pred_check
        %p181 = pneg %p32
      $region30: #{residual_block_forward.4} parent=27 // pred_check_branch
        %183 = sbr.rel (%p181) target = $region32
      $region31: #{residual_block_forward.4} parent=27 // pred_region
        %p184 = scmp.lt.s32.totalorder %s12, 1
        %s185 = scalar_select %p184, %s12, 1
        %s186 = smul.addr %s185, 32
        %s187 = smul.addr %s186, 4
        %s188 = scalar_lea.vmem %s0, %s187
      $region32: #{residual_block_forward.4} parent=27 // pred_fallthru
        _
    $region28: #{residual_block_forward.4} parent=5 // pred_fallthru
      _
    %p189 = scmp.le.s32.totalorder 1, %s12
    %p190 = scmp.lt.s32.totalorder %s12, 3
    %p191 = pnand %p189, %p190
    %p192 = pneg %p191
    // Predicated region
    $region33: #{residual_block_forward.4} parent=5 // pred_check
      _
    $region34: #{residual_block_forward.4} parent=5 // pred_check_branch
      %194 = sbr.rel (%p191) target = $region36
    $region35: #{residual_block_forward.4} parent=5 // pred_region
      %s195 = ssub.s32 %s12, 1
      %p196 = scmp.lt.s32.totalorder %s17, 1
      %s197 = scalar_select %p196, %s17, 1
      %s198 = smul.addr %s197, 32
      %s199 = smul.addr %s198, 4
      %s200 = scalar_lea.vmem %s0, %s199
      %p201 = pneg %p38
      %p202 = pneg %p35
      %p203 = pneg %p59
      %p204 = pneg %p56
      %p205 = pneg %p80
      %p206 = pneg %p77
      %p207 = pneg %p101
      %p208 = pneg %p98
      %p209 = pneg %p127
      %p210 = pneg %p124
      %p211 = scmp.lt.s32.totalorder %s17, 1
      %s212 = scalar_select %p211, %s17, 1
      %s213 = smul.addr %s212, 32
      %s214 = smul.addr %s213, 8
      %s215 = scalar_lea.vmem %s4, %s214
      %p216 = pneg %p153
      %p217 = pneg %p150
      %p218 = scmp.lt.s32.totalorder %s17, 1
      %s219 = scalar_select %p218, %s17, 1
      %s220 = smul.addr %s219, 2
      %s221 = scalar_lea.vmem %s5, %s220
      %p222 = scmp.lt.s32.totalorder %s17, 1
      %s223 = scalar_select %p222, %s17, 1
      %s224 = smul.addr %s223, 32
      %s225 = smul.addr %s224, 4
      %s226 = scalar_lea.vmem %s0, %s225
      %p227 = scmp.lt.s32.totalorder %s17, 1
      %s228 = scalar_select %p227, %s17, 1
      %s229 = smul.addr %s228, 32
      %s230 = smul.addr %s229, 8
      %s231 = scalar_lea.vmem %s4, %s230
      %p232 = scmp.lt.s32.totalorder %s17, 1
      %s233 = scalar_select %p232, %s17, 1
      %s234 = smul.addr %s233, 2
      %s235 = scalar_lea.vmem %s5, %s234
      %v237 = vld [vmem:[%s226] sm:$0xf]
      %v238 = vld [vmem:[%s226 + $0x4] sm:$0xf]
      %v239 = vld [vmem:[%s226 + $0x8] sm:$0xf]
      %v240 = vld [vmem:[%s226 + $0xc] sm:$0xf]
      %v241 = vld [vmem:[%s226 + $0x10] sm:$0xf]
      %v242 = vld [vmem:[%s226 + $0x14] sm:$0xf]
      %v243 = vld [vmem:[%s226 + $0x18] sm:$0xf]
      %v244 = vld [vmem:[%s226 + $0x1c] sm:$0xf]
      %v245 = vld [vmem:[%s226 + $0x20] sm:$0xf]
      %v246 = vld [vmem:[%s226 + $0x24] sm:$0xf]
      %v247 = vld [vmem:[%s226 + $0x28] sm:$0xf]
      %v248 = vld [vmem:[%s226 + $0x2c] sm:$0xf]
      %v249 = vld [vmem:[%s226 + $0x30] sm:$0xf]
      %v250 = vld [vmem:[%s226 + $0x34] sm:$0xf]
      %v251 = vld [vmem:[%s226 + $0x38] sm:$0xf]
      %v252 = vld [vmem:[%s226 + $0x3c] sm:$0xf]
      %v253 = vld [vmem:[%s226 + $0x40] sm:$0xf]
      %v254 = vld [vmem:[%s226 + $0x44] sm:$0xf]
      %v255 = vld [vmem:[%s226 + $0x48] sm:$0xf]
      %v256 = vld [vmem:[%s226 + $0x4c] sm:$0xf]
      %v257 = vld [vmem:[%s226 + $0x50] sm:$0xf]
      %v258 = vld [vmem:[%s226 + $0x54] sm:$0xf]
      %v259 = vld [vmem:[%s226 + $0x58] sm:$0xf]
      %v260 = vld [vmem:[%s226 + $0x5c] sm:$0xf]
      %v261 = vld [vmem:[%s226 + $0x60] sm:$0xf]
      %v262 = vld [vmem:[%s226 + $0x64] sm:$0xf]
      %v263 = vld [vmem:[%s226 + $0x68] sm:$0xf]
      %v264 = vld [vmem:[%s226 + $0x6c] sm:$0xf]
      %v265 = vld [vmem:[%s226 + $0x70] sm:$0xf]
      %v266 = vld [vmem:[%s226 + $0x74] sm:$0xf]
      %v267 = vld [vmem:[%s226 + $0x78] sm:$0xf]
      %v268 = vld [vmem:[%s226 + $0x7c] sm:$0xf]
      %v269 = vunpack.c.l.bf16 %v237
      %v270 = vunpack.c.l.bf16 %v238
      %v271 = vunpack.c.l.bf16 %v239
      %v272 = vunpack.c.l.bf16 %v240
      %v273 = vunpack.c.l.bf16 %v241
      %v274 = vunpack.c.l.bf16 %v242
      %v275 = vunpack.c.l.bf16 %v243
      %v276 = vunpack.c.l.bf16 %v244
      %v277 = vunpack.c.l.bf16 %v245
      %v278 = vunpack.c.l.bf16 %v246
      %v279 = vunpack.c.l.bf16 %v247
      %v280 = vunpack.c.l.bf16 %v248
      %v281 = vunpack.c.l.bf16 %v249
      %v282 = vunpack.c.l.bf16 %v250
      %v283 = vunpack.c.l.bf16 %v251
      %v284 = vunpack.c.l.bf16 %v252
      %v285 = vunpack.c.l.bf16 %v253
      %v286 = vunpack.c.l.bf16 %v254
      %v287 = vunpack.c.l.bf16 %v255
      %v288 = vunpack.c.l.bf16 %v256
      %v289 = vunpack.c.l.bf16 %v257
      %v290 = vunpack.c.l.bf16 %v258
      %v291 = vunpack.c.l.bf16 %v259
      %v292 = vunpack.c.l.bf16 %v260
      %v293 = vunpack.c.l.bf16 %v261
      %v294 = vunpack.c.l.bf16 %v262
      %v295 = vunpack.c.l.bf16 %v263
      %v296 = vunpack.c.l.bf16 %v264
      %v297 = vunpack.c.l.bf16 %v265
      %v298 = vunpack.c.l.bf16 %v266
      %v299 = vunpack.c.l.bf16 %v267
      %v300 = vunpack.c.l.bf16 %v268
      %v301 = vld [vmem:[%s1] sm:$0x1]
      %v303 = vperm.slane %v301, 0
      %v305 = vmul.f32 %v269, %v303
      %v306 = vmul.f32 %v270, %v303
      %v307 = vmul.f32 %v271, %v303
      %v308 = vmul.f32 %v272, %v303
      %v309 = vmul.f32 %v273, %v303
      %v310 = vmul.f32 %v274, %v303
      %v311 = vmul.f32 %v275, %v303
      %v312 = vmul.f32 %v276, %v303
      %v313 = vmul.f32 %v277, %v303
      %v314 = vmul.f32 %v278, %v303
      %v315 = vmul.f32 %v279, %v303
      %v316 = vmul.f32 %v280, %v303
      %v317 = vmul.f32 %v281, %v303
      %v318 = vmul.f32 %v282, %v303
      %v319 = vmul.f32 %v283, %v303
      %v320 = vmul.f32 %v284, %v303
      %v321 = vmul.f32 %v285, %v303
      %v322 = vmul.f32 %v286, %v303
      %v323 = vmul.f32 %v287, %v303
      %v324 = vmul.f32 %v288, %v303
      %v325 = vmul.f32 %v289, %v303
      %v326 = vmul.f32 %v290, %v303
      %v327 = vmul.f32 %v291, %v303
      %v328 = vmul.f32 %v292, %v303
      %v329 = vmul.f32 %v293, %v303
      %v330 = vmul.f32 %v294, %v303
      %v331 = vmul.f32 %v295, %v303
      %v332 = vmul.f32 %v296, %v303
      %v333 = vmul.f32 %v297, %v303
      %v334 = vmul.f32 %v298, %v303
      %v335 = vmul.f32 %v299, %v303
      %v336 = vmul.f32 %v300, %v303
      %v337 = vld [vmem:[%s2] sm:$0x1]
      %v339 = vperm.slane %v337, 0
      %v341 = vadd.f32 %v305, %v339
      %v342 = vadd.f32 %v306, %v339
      %v343 = vadd.f32 %v307, %v339
      %v344 = vadd.f32 %v308, %v339
      %v345 = vadd.f32 %v309, %v339
      %v346 = vadd.f32 %v310, %v339
      %v347 = vadd.f32 %v311, %v339
      %v348 = vadd.f32 %v312, %v339
      %v349 = vadd.f32 %v313, %v339
      %v350 = vadd.f32 %v314, %v339
      %v351 = vadd.f32 %v315, %v339
      %v352 = vadd.f32 %v316, %v339
      %v353 = vadd.f32 %v317, %v339
      %v354 = vadd.f32 %v318, %v339
      %v355 = vadd.f32 %v319, %v339
      %v356 = vadd.f32 %v320, %v339
      %v357 = vadd.f32 %v321, %v339
      %v358 = vadd.f32 %v322, %v339
      %v359 = vadd.f32 %v323, %v339
      %v360 = vadd.f32 %v324, %v339
      %v361 = vadd.f32 %v325, %v339
      %v362 = vadd.f32 %v326, %v339
      %v363 = vadd.f32 %v327, %v339
      %v364 = vadd.f32 %v328, %v339
      %v365 = vadd.f32 %v329, %v339
      %v366 = vadd.f32 %v330, %v339
      %v367 = vadd.f32 %v331, %v339
      %v368 = vadd.f32 %v332, %v339
      %v369 = vadd.f32 %v333, %v339
      %v370 = vadd.f32 %v334, %v339
      %v371 = vadd.f32 %v335, %v339
      %v372 = vadd.f32 %v336, %v339
      %v373 = vmax.f32 %v341, 0.0
      %v374 = vmax.f32 %v342, 0.0
      %v375 = vmax.f32 %v343, 0.0
      %v376 = vmax.f32 %v344, 0.0
      %v377 = vmax.f32 %v345, 0.0
      %v378 = vmax.f32 %v346, 0.0
      %v379 = vmax.f32 %v347, 0.0
      %v380 = vmax.f32 %v348, 0.0
      %v381 = vmax.f32 %v349, 0.0
      %v382 = vmax.f32 %v350, 0.0
      %v383 = vmax.f32 %v351, 0.0
      %v384 = vmax.f32 %v352, 0.0
      %v385 = vmax.f32 %v353, 0.0
      %v386 = vmax.f32 %v354, 0.0
      %v387 = vmax.f32 %v355, 0.0
      %v388 = vmax.f32 %v356, 0.0
      %v389 = vmax.f32 %v357, 0.0
      %v390 = vmax.f32 %v358, 0.0
      %v391 = vmax.f32 %v359, 0.0
      %v392 = vmax.f32 %v360, 0.0
      %v393 = vmax.f32 %v361, 0.0
      %v394 = vmax.f32 %v362, 0.0
      %v395 = vmax.f32 %v363, 0.0
      %v396 = vmax.f32 %v364, 0.0
      %v397 = vmax.f32 %v365, 0.0
      %v398 = vmax.f32 %v366, 0.0
      %v399 = vmax.f32 %v367, 0.0
      %v400 = vmax.f32 %v368, 0.0
      %v401 = vmax.f32 %v369, 0.0
      %v402 = vmax.f32 %v370, 0.0
      %v403 = vmax.f32 %v371, 0.0
      %v404 = vmax.f32 %v372, 0.0
      %v405 = vpack.c.bf16 %v373, %v373
      %v406 = vpack.c.bf16 %v374, %v374
      %v407 = vpack.c.bf16 %v375, %v375
      %v408 = vpack.c.bf16 %v376, %v376
      %v409 = vpack.c.bf16 %v377, %v377
      %v410 = vpack.c.bf16 %v378, %v378
      %v411 = vpack.c.bf16 %v379, %v379
      %v412 = vpack.c.bf16 %v380, %v380
      %v413 = vpack.c.bf16 %v381, %v381
      %v414 = vpack.c.bf16 %v382, %v382
      %v415 = vpack.c.bf16 %v383, %v383
      %v416 = vpack.c.bf16 %v384, %v384
      %v417 = vpack.c.bf16 %v385, %v385
      %v418 = vpack.c.bf16 %v386, %v386
      %v419 = vpack.c.bf16 %v387, %v387
      %v420 = vpack.c.bf16 %v388, %v388
      %v421 = vpack.c.bf16 %v389, %v389
      %v422 = vpack.c.bf16 %v390, %v390
      %v423 = vpack.c.bf16 %v391, %v391
      %v424 = vpack.c.bf16 %v392, %v392
      %v425 = vpack.c.bf16 %v393, %v393
      %v426 = vpack.c.bf16 %v394, %v394
      %v427 = vpack.c.bf16 %v395, %v395
      %v428 = vpack.c.bf16 %v396, %v396
      %v429 = vpack.c.bf16 %v397, %v397
      %v430 = vpack.c.bf16 %v398, %v398
      %v431 = vpack.c.bf16 %v399, %v399
      %v432 = vpack.c.bf16 %v400, %v400
      %v433 = vpack.c.bf16 %v401, %v401
      %v434 = vpack.c.bf16 %v402, %v402
      %v435 = vpack.c.bf16 %v403, %v403
      %v436 = vpack.c.bf16 %v404, %v404
      %437 = vst [vmem:[#allocation2] sm:$0xf] 0
      %438 = vst [vmem:[#allocation2 + $0x4] sm:$0xf] 0
      %439 = vst [vmem:[#allocation2 + $0x8] sm:$0xf] 0
      %440 = vst [vmem:[#allocation2 + $0xc] sm:$0xf] 0
      %441 = vst [vmem:[#allocation2 + $0x10] sm:$0xf] 0
      %442 = vst [vmem:[#allocation2 + $0x14] sm:$0xf] 0
      %443 = vst [vmem:[#allocation2 + $0x18] sm:$0xf] 0
      %444 = vst [vmem:[#allocation2 + $0x1c] sm:$0xf] 0
      %445 = vst [vmem:[#allocation2 + $0x20] sm:$0xf] 0
      %446 = vst [vmem:[#allocation2 + $0x24] sm:$0xf] 0
      %447 = vst [vmem:[#allocation2 + $0x28] sm:$0xf] 0
      %448 = vst [vmem:[#allocation2 + $0x2c] sm:$0xf] 0
      %449 = vst [vmem:[#allocation2 + $0x30] sm:$0xf] 0
      %450 = vst [vmem:[#allocation2 + $0x34] sm:$0xf] 0
      %451 = vst [vmem:[#allocation2 + $0x38] sm:$0xf] 0
      %452 = vst [vmem:[#allocation2 + $0x3c] sm:$0xf] 0
      %453 = vst [vmem:[#allocation2 + $0x40] sm:$0xf] 0
      %454 = vst [vmem:[#allocation2 + $0x44] sm:$0xf] 0
      %455 = vst [vmem:[#allocation2 + $0x48] sm:$0xf] 0
      %456 = vst [vmem:[#allocation2 + $0x4c] sm:$0xf] 0
      %457 = vst [vmem:[#allocation2 + $0x50] sm:$0xf] 0
      %458 = vst [vmem:[#allocation2 + $0x54] sm:$0xf] 0
      %459 = vst [vmem:[#allocation2 + $0x58] sm:$0xf] 0
      %460 = vst [vmem:[#allocation2 + $0x5c] sm:$0xf] 0
      %461 = vst [vmem:[#allocation2 + $0x60] sm:$0xf] 0
      %462 = vst [vmem:[#allocation2 + $0x64] sm:$0xf] 0
      %463 = vst [vmem:[#allocation2 + $0x68] sm:$0xf] 0
      %464 = vst [vmem:[#allocation2 + $0x6c] sm:$0xf] 0
      %465 = vst [vmem:[#allocation2 + $0x70] sm:$0xf] 0
      %466 = vst [vmem:[#allocation2 + $0x74] sm:$0xf] 0
      %467 = vst [vmem:[#allocation2 + $0x78] sm:$0xf] 0
      %468 = vst [vmem:[#allocation2 + $0x7c] sm:$0xf] 0
      %469 = vst [vmem:[#allocation2 + $0x80] sm:$0xf] 0
      %470 = vst [vmem:[#allocation2 + $0x84] sm:$0xf] 0
      %471 = vst [vmem:[#allocation2 + $0x88] sm:$0xf] 0
      %472 = vst [vmem:[#allocation2 + $0x8c] sm:$0xf] 0
      %473 = vst [vmem:[#allocation2 + $0x90] sm:$0xf] 0
      %474 = vst [vmem:[#allocation2 + $0x94] sm:$0xf] 0
      %475 = vst [vmem:[#allocation2 + $0x98] sm:$0xf] 0
      %476 = vst [vmem:[#allocation2 + $0x9c] sm:$0xf] 0
      %477 = vst [vmem:[#allocation2 + $0xa0] sm:$0xf] 0
      %478 = vst [vmem:[#allocation2 + $0xa4] sm:$0xf] 0
      %479 = vst [vmem:[#allocation2 + $0xa8] sm:$0xf] 0
      %480 = vst [vmem:[#allocation2 + $0xac] sm:$0xf] 0
      %481 = vst [vmem:[#allocation2 + $0xb0] sm:$0xf] 0
      %482 = vst [vmem:[#allocation2 + $0xb4] sm:$0xf] 0
      %483 = vst [vmem:[#allocation2 + $0xb8] sm:$0xf] 0
      %484 = vst [vmem:[#allocation2 + $0xbc] sm:$0xf] 0
      %485 = vst [vmem:[#allocation2 + $0xc0] sm:$0xf] 0
      %486 = vst [vmem:[#allocation2 + $0xc4] sm:$0xf] 0
      %487 = vst [vmem:[#allocation2 + $0xc8] sm:$0xf] 0
      %488 = vst [vmem:[#allocation2 + $0xcc] sm:$0xf] 0
      %489 = vst [vmem:[#allocation2 + $0xd0] sm:$0xf] 0
      %490 = vst [vmem:[#allocation2 + $0xd4] sm:$0xf] 0
      %491 = vst [vmem:[#allocation2 + $0xd8] sm:$0xf] 0
      %492 = vst [vmem:[#allocation2 + $0xdc] sm:$0xf] 0
      %493 = vst [vmem:[#allocation2 + $0xe0] sm:$0xf] 0
      %494 = vst [vmem:[#allocation2 + $0xe4] sm:$0xf] 0
      %495 = vst [vmem:[#allocation2 + $0xe8] sm:$0xf] 0
      %496 = vst [vmem:[#allocation2 + $0xec] sm:$0xf] 0
      %497 = vst [vmem:[#allocation2 + $0xf0] sm:$0xf] 0
      %498 = vst [vmem:[#allocation2 + $0xf4] sm:$0xf] 0
      %499 = vst [vmem:[#allocation2 + $0xf8] sm:$0xf] 0
      %500 = vst [vmem:[#allocation2 + $0xfc] sm:$0xf] 0
      %501 = vst [vmem:[#allocation2 + $0x100] sm:$0xf] 0
      %502 = vst [vmem:[#allocation2 + $0x104] sm:$0xf] 0
      %503 = vst [vmem:[#allocation2 + $0x108] sm:$0xf] 0
      %504 = vst [vmem:[#allocation2 + $0x10c] sm:$0xf] 0
      %505 = vst [vmem:[#allocation2 + $0x110] sm:$0xf] 0
      %506 = vst [vmem:[#allocation2 + $0x114] sm:$0xf] 0
      %507 = vst [vmem:[#allocation2 + $0x118] sm:$0xf] 0
      %508 = vst [vmem:[#allocation2 + $0x11c] sm:$0xf] 0
      %s509 = scalar_lea.vmem [#allocation2], 16
      %510 = vst [vmem:[%s509 + $0x4] sm:$0xf] %v405
      %511 = vst [vmem:[%s509 + $0x8] sm:$0xf] %v406
      %512 = vst [vmem:[%s509 + $0x14] sm:$0xf] %v407
      %513 = vst [vmem:[%s509 + $0x18] sm:$0xf] %v408
      %514 = vst [vmem:[%s509 + $0x24] sm:$0xf] %v409
      %515 = vst [vmem:[%s509 + $0x28] sm:$0xf] %v410
      %516 = vst [vmem:[%s509 + $0x34] sm:$0xf] %v411
      %517 = vst [vmem:[%s509 + $0x38] sm:$0xf] %v412
      %518 = vst [vmem:[%s509 + $0x44] sm:$0xf] %v413
      %519 = vst [vmem:[%s509 + $0x48] sm:$0xf] %v414
      %520 = vst [vmem:[%s509 + $0x54] sm:$0xf] %v415
      %521 = vst [vmem:[%s509 + $0x58] sm:$0xf] %v416
      %522 = vst [vmem:[%s509 + $0x64] sm:$0xf] %v417
      %523 = vst [vmem:[%s509 + $0x68] sm:$0xf] %v418
      %524 = vst [vmem:[%s509 + $0x74] sm:$0xf] %v419
      %525 = vst [vmem:[%s509 + $0x78] sm:$0xf] %v420
      %526 = vst [vmem:[%s509 + $0x84] sm:$0xf] %v421
      %527 = vst [vmem:[%s509 + $0x88] sm:$0xf] %v422
      %528 = vst [vmem:[%s509 + $0x94] sm:$0xf] %v423
      %529 = vst [vmem:[%s509 + $0x98] sm:$0xf] %v424
      %530 = vst [vmem:[%s509 + $0xa4] sm:$0xf] %v425
      %531 = vst [vmem:[%s509 + $0xa8] sm:$0xf] %v426
      %532 = vst [vmem:[%s509 + $0xb4] sm:$0xf] %v427
      %533 = vst [vmem:[%s509 + $0xb8] sm:$0xf] %v428
      %534 = vst [vmem:[%s509 + $0xc4] sm:$0xf] %v429
      %535 = vst [vmem:[%s509 + $0xc8] sm:$0xf] %v430
      %536 = vst [vmem:[%s509 + $0xd4] sm:$0xf] %v431
      %537 = vst [vmem:[%s509 + $0xd8] sm:$0xf] %v432
      %538 = vst [vmem:[%s509 + $0xe4] sm:$0xf] %v433
      %539 = vst [vmem:[%s509 + $0xe8] sm:$0xf] %v434
      %540 = vst [vmem:[%s509 + $0xf4] sm:$0xf] %v435
      %541 = vst [vmem:[%s509 + $0xf8] sm:$0xf] %v436
      %v542 = vld [vmem:[#allocation2] sm:$0xf]
      %v543 = vld [vmem:[#allocation2 + $0x4] sm:$0xf]
      %v544 = vld [vmem:[#allocation2 + $0x8] sm:$0xf]
      %v545 = vld [vmem:[#allocation2 + $0xc] sm:$0xf]
      %v546 = vld [vmem:[#allocation2 + $0x10] sm:$0xf]
      %v547 = vld [vmem:[#allocation2 + $0x14] sm:$0xf]
      %v548 = vld [vmem:[#allocation2 + $0x18] sm:$0xf]
      %v549 = vld [vmem:[#allocation2 + $0x1c] sm:$0xf]
      %v550 = vld [vmem:[#allocation2 + $0x20] sm:$0xf]
      %v551 = vld [vmem:[#allocation2 + $0x24] sm:$0xf]
      %v552 = vld [vmem:[#allocation2 + $0x28] sm:$0xf]
      %v553 = vld [vmem:[#allocation2 + $0x2c] sm:$0xf]
      %v554 = vld [vmem:[#allocation2 + $0x30] sm:$0xf]
      %v555 = vld [vmem:[#allocation2 + $0x34] sm:$0xf]
      %v556 = vld [vmem:[#allocation2 + $0x38] sm:$0xf]
      %v557 = vld [vmem:[#allocation2 + $0x3c] sm:$0xf]
      %v558 = vld [vmem:[#allocation2 + $0x40] sm:$0xf]
      %v559 = vld [vmem:[#allocation2 + $0x44] sm:$0xf]
      %v560 = vld [vmem:[#allocation2 + $0x48] sm:$0xf]
      %v561 = vld [vmem:[#allocation2 + $0x4c] sm:$0xf]
      %v562 = vld [vmem:[#allocation2 + $0x50] sm:$0xf]
      %v563 = vld [vmem:[#allocation2 + $0x54] sm:$0xf]
      %v564 = vld [vmem:[#allocation2 + $0x58] sm:$0xf]
      %v565 = vld [vmem:[#allocation2 + $0x5c] sm:$0xf]
      %v566 = vld [vmem:[#allocation2 + $0x60] sm:$0xf]
      %v567 = vld [vmem:[#allocation2 + $0x64] sm:$0xf]
      %v568 = vld [vmem:[#allocation2 + $0x68] sm:$0xf]
      %v569 = vld [vmem:[#allocation2 + $0x6c] sm:$0xf]
      %v570 = vld [vmem:[#allocation2 + $0x70] sm:$0xf]
      %v571 = vld [vmem:[#allocation2 + $0x74] sm:$0xf]
      %v572 = vld [vmem:[#allocation2 + $0x78] sm:$0xf]
      %v573 = vld [vmem:[#allocation2 + $0x7c] sm:$0xf]
      %v574 = vld [vmem:[#allocation2 + $0x80] sm:$0xf]
      %v575 = vld [vmem:[#allocation2 + $0x84] sm:$0xf]
      %v576 = vld [vmem:[#allocation2 + $0x88] sm:$0xf]
      %v577 = vld [vmem:[#allocation2 + $0x8c] sm:$0xf]
      %v578 = vld [vmem:[#allocation2 + $0x90] sm:$0xf]
      %v579 = vld [vmem:[#allocation2 + $0x94] sm:$0xf]
      %v580 = vld [vmem:[#allocation2 + $0x98] sm:$0xf]
      %v581 = vld [vmem:[#allocation2 + $0x9c] sm:$0xf]
      %v582 = vld [vmem:[#allocation2 + $0xa0] sm:$0xf]
      %v583 = vld [vmem:[#allocation2 + $0xa4] sm:$0xf]
      %v584 = vld [vmem:[#allocation2 + $0xa8] sm:$0xf]
      %v585 = vld [vmem:[#allocation2 + $0xac] sm:$0xf]
      %v586 = vld [vmem:[#allocation2 + $0xb0] sm:$0xf]
      %v587 = vld [vmem:[#allocation2 + $0xb4] sm:$0xf]
      %v588 = vld [vmem:[#allocation2 + $0xb8] sm:$0xf]
      %v589 = vld [vmem:[#allocation2 + $0xbc] sm:$0xf]
      %v590 = vld [vmem:[#allocation2 + $0xc0] sm:$0xf]
      %v591 = vld [vmem:[#allocation2 + $0xc4] sm:$0xf]
      %v592 = vld [vmem:[#allocation2 + $0xc8] sm:$0xf]
      %v593 = vld [vmem:[#allocation2 + $0xcc] sm:$0xf]
      %v594 = vld [vmem:[#allocation2 + $0xd0] sm:$0xf]
      %v595 = vld [vmem:[#allocation2 + $0xd4] sm:$0xf]
      %v596 = vld [vmem:[#allocation2 + $0xd8] sm:$0xf]
      %v597 = vld [vmem:[#allocation2 + $0xdc] sm:$0xf]
      %v598 = vld [vmem:[#allocation2 + $0xe0] sm:$0xf]
      %v599 = vld [vmem:[#allocation2 + $0xe4] sm:$0xf]
      %v600 = vld [vmem:[#allocation2 + $0xe8] sm:$0xf]
      %v601 = vld [vmem:[#allocation2 + $0xec] sm:$0xf]
      %v602 = vld [vmem:[#allocation2 + $0xf0] sm:$0xf]
      %v603 = vld [vmem:[#allocation2 + $0xf4] sm:$0xf]
      %v604 = vld [vmem:[#allocation2 + $0xf8] sm:$0xf]
      %v605 = vld [vmem:[#allocation2 + $0xfc] sm:$0xf]
      %v654 = vunpack.c.l.b16 %v542
      %v655 = vunpack.c.l.b16 %v543
      %v656 = vunpack.c.l.b16 %v544
      %v657 = vunpack.c.l.b16 %v546
      %v658 = vunpack.c.l.b16 %v547
      %v659 = vunpack.c.l.b16 %v548
      %v660 = vunpack.c.l.b16 %v550
      %v661 = vunpack.c.l.b16 %v551
      %v662 = vunpack.c.l.b16 %v552
      %v663 = vunpack.c.l.b16 %v554
      %v664 = vunpack.c.l.b16 %v555
      %v665 = vunpack.c.l.b16 %v556
      %v666 = vunpack.c.l.b16 %v558
      %v667 = vunpack.c.l.b16 %v559
      %v668 = vunpack.c.l.b16 %v560
      %v669 = vunpack.c.l.b16 %v562
      %v670 = vunpack.c.l.b16 %v563
      %v671 = vunpack.c.l.b16 %v564
      %v672 = vunpack.c.l.b16 %v566
      %v673 = vunpack.c.l.b16 %v567
      %v674 = vunpack.c.l.b16 %v568
      %v675 = vunpack.c.l.b16 %v570
      %v676 = vunpack.c.l.b16 %v571
      %v677 = vunpack.c.l.b16 %v572
      %v678 = vunpack.c.l.b16 %v574
      %v679 = vunpack.c.l.b16 %v575
      %v680 = vunpack.c.l.b16 %v576
      %v681 = vunpack.c.l.b16 %v578
      %v682 = vunpack.c.l.b16 %v579
      %v683 = vunpack.c.l.b16 %v580
      %v684 = vunpack.c.l.b16 %v582
      %v685 = vunpack.c.l.b16 %v583
      %v686 = vunpack.c.l.b16 %v584
      %v687 = vunpack.c.l.b16 %v586
      %v688 = vunpack.c.l.b16 %v587
      %v689 = vunpack.c.l.b16 %v588
      %v690 = vunpack.c.l.b16 %v590
      %v691 = vunpack.c.l.b16 %v591
      %v692 = vunpack.c.l.b16 %v592
      %v693 = vunpack.c.l.b16 %v594
      %v694 = vunpack.c.l.b16 %v595
      %v695 = vunpack.c.l.b16 %v596
      %v696 = vunpack.c.l.b16 %v598
      %v697 = vunpack.c.l.b16 %v599
      %v698 = vunpack.c.l.b16 %v600
      %v699 = vunpack.c.l.b16 %v602
      %v700 = vunpack.c.l.b16 %v603
      %v701 = vunpack.c.l.b16 %v604
      %v702 = vpack.c.b16 %v655, %v654
      %v703 = vpack.c.b16 %v656, %v656
      %v704 = vpack.c.b16 %v658, %v657
      %v705 = vpack.c.b16 %v659, %v659
      %v706 = vpack.c.b16 %v661, %v660
      %v707 = vpack.c.b16 %v662, %v662
      %v708 = vpack.c.b16 %v664, %v663
      %v709 = vpack.c.b16 %v665, %v665
      %v710 = vpack.c.b16 %v667, %v666
      %v711 = vpack.c.b16 %v668, %v668
      %v712 = vpack.c.b16 %v670, %v669
      %v713 = vpack.c.b16 %v671, %v671
      %v714 = vpack.c.b16 %v673, %v672
      %v715 = vpack.c.b16 %v674, %v674
      %v716 = vpack.c.b16 %v676, %v675
      %v717 = vpack.c.b16 %v677, %v677
      %v718 = vpack.c.b16 %v679, %v678
      %v719 = vpack.c.b16 %v680, %v680
      %v720 = vpack.c.b16 %v682, %v681
      %v721 = vpack.c.b16 %v683, %v683
      %v722 = vpack.c.b16 %v685, %v684
      %v723 = vpack.c.b16 %v686, %v686
      %v724 = vpack.c.b16 %v688, %v687
      %v725 = vpack.c.b16 %v689, %v689
      %v726 = vpack.c.b16 %v691, %v690
      %v727 = vpack.c.b16 %v692, %v692
      %v728 = vpack.c.b16 %v694, %v693
      %v729 = vpack.c.b16 %v695, %v695
      %v730 = vpack.c.b16 %v697, %v696
      %v731 = vpack.c.b16 %v698, %v698
      %v732 = vpack.c.b16 %v700, %v699
      %v733 = vpack.c.b16 %v701, %v701
      %v734 = vpack.c.b16 %v656, %v655
      %v735 = vpack.c.b16 %v659, %v658
      %v736 = vpack.c.b16 %v662, %v661
      %v737 = vpack.c.b16 %v665, %v664
      %v738 = vpack.c.b16 %v668, %v667
      %v739 = vpack.c.b16 %v671, %v670
      %v740 = vpack.c.b16 %v674, %v673
      %v741 = vpack.c.b16 %v677, %v676
      %v742 = vpack.c.b16 %v680, %v679
      %v743 = vpack.c.b16 %v683, %v682
      %v744 = vpack.c.b16 %v686, %v685
      %v745 = vpack.c.b16 %v689, %v688
      %v746 = vpack.c.b16 %v692, %v691
      %v747 = vpack.c.b16 %v695, %v694
      %v748 = vpack.c.b16 %v698, %v697
      %v749 = vpack.c.b16 %v701, %v700
      %v751 = vshrl.u32 %v734, 16
      %v753 = vrot.slane %v751, 4
      %v754 = vshll.u32 %v734, 16
      %v756 = vrot.slane %v754, 5
      %v757 = vor.u32 %v753, %v756
      %v759 = vshrl.u32 %v735, 16
      %v761 = vrot.slane %v759, 4
      %v762 = vshll.u32 %v735, 16
      %v764 = vrot.slane %v762, 5
      %v765 = vor.u32 %v761, %v764
      %v767 = vshrl.u32 %v736, 16
      %v769 = vrot.slane %v767, 4
      %v770 = vshll.u32 %v736, 16
      %v772 = vrot.slane %v770, 5
      %v773 = vor.u32 %v769, %v772
      %v775 = vshrl.u32 %v737, 16
      %v777 = vrot.slane %v775, 4
      %v778 = vshll.u32 %v737, 16
      %v780 = vrot.slane %v778, 5
      %v781 = vor.u32 %v777, %v780
      %v783 = vshrl.u32 %v738, 16
      %v785 = vrot.slane %v783, 4
      %v786 = vshll.u32 %v738, 16
      %v788 = vrot.slane %v786, 5
      %v789 = vor.u32 %v785, %v788
      %v791 = vshrl.u32 %v739, 16
      %v793 = vrot.slane %v791, 4
      %v794 = vshll.u32 %v739, 16
      %v796 = vrot.slane %v794, 5
      %v797 = vor.u32 %v793, %v796
      %v799 = vshrl.u32 %v740, 16
      %v801 = vrot.slane %v799, 4
      %v802 = vshll.u32 %v740, 16
      %v804 = vrot.slane %v802, 5
      %v805 = vor.u32 %v801, %v804
      %v807 = vshrl.u32 %v741, 16
      %v809 = vrot.slane %v807, 4
      %v810 = vshll.u32 %v741, 16
      %v812 = vrot.slane %v810, 5
      %v813 = vor.u32 %v809, %v812
      %v815 = vshrl.u32 %v742, 16
      %v817 = vrot.slane %v815, 4
      %v818 = vshll.u32 %v742, 16
      %v820 = vrot.slane %v818, 5
      %v821 = vor.u32 %v817, %v820
      %v823 = vshrl.u32 %v743, 16
      %v825 = vrot.slane %v823, 4
      %v826 = vshll.u32 %v743, 16
      %v828 = vrot.slane %v826, 5
      %v829 = vor.u32 %v825, %v828
      %v831 = vshrl.u32 %v744, 16
      %v833 = vrot.slane %v831, 4
      %v834 = vshll.u32 %v744, 16
      %v836 = vrot.slane %v834, 5
      %v837 = vor.u32 %v833, %v836
      %v839 = vshrl.u32 %v745, 16
      %v841 = vrot.slane %v839, 4
      %v842 = vshll.u32 %v745, 16
      %v844 = vrot.slane %v842, 5
      %v845 = vor.u32 %v841, %v844
      %v847 = vshrl.u32 %v746, 16
      %v849 = vrot.slane %v847, 4
      %v850 = vshll.u32 %v746, 16
      %v852 = vrot.slane %v850, 5
      %v853 = vor.u32 %v849, %v852
      %v855 = vshrl.u32 %v747, 16
      %v857 = vrot.slane %v855, 4
      %v858 = vshll.u32 %v747, 16
      %v860 = vrot.slane %v858, 5
      %v861 = vor.u32 %v857, %v860
      %v863 = vshrl.u32 %v748, 16
      %v865 = vrot.slane %v863, 4
      %v866 = vshll.u32 %v748, 16
      %v868 = vrot.slane %v866, 5
      %v869 = vor.u32 %v865, %v868
      %v871 = vshrl.u32 %v749, 16
      %v873 = vrot.slane %v871, 4
      %v874 = vshll.u32 %v749, 16
      %v876 = vrot.slane %v874, 5
      %v877 = vor.u32 %v873, %v876
      %v894 = vunpack.c.l.b16 %v545
      %v895 = vunpack.c.l.b16 %v549
      %v896 = vunpack.c.l.b16 %v553
      %v897 = vunpack.c.l.b16 %v557
      %v898 = vunpack.c.l.b16 %v561
      %v899 = vunpack.c.l.b16 %v565
      %v900 = vunpack.c.l.b16 %v569
      %v901 = vunpack.c.l.b16 %v573
      %v902 = vunpack.c.l.b16 %v577
      %v903 = vunpack.c.l.b16 %v581
      %v904 = vunpack.c.l.b16 %v585
      %v905 = vunpack.c.l.b16 %v589
      %v906 = vunpack.c.l.b16 %v593
      %v907 = vunpack.c.l.b16 %v597
      %v908 = vunpack.c.l.b16 %v601
      %v909 = vunpack.c.l.b16 %v605
      %v910 = vpack.c.b16 %v894, %v894
      %v911 = vpack.c.b16 %v895, %v895
      %v912 = vpack.c.b16 %v896, %v896
      %v913 = vpack.c.b16 %v897, %v897
      %v914 = vpack.c.b16 %v898, %v898
      %v915 = vpack.c.b16 %v899, %v899
      %v916 = vpack.c.b16 %v900, %v900
      %v917 = vpack.c.b16 %v901, %v901
      %v918 = vpack.c.b16 %v902, %v902
      %v919 = vpack.c.b16 %v903, %v903
      %v920 = vpack.c.b16 %v904, %v904
      %v921 = vpack.c.b16 %v905, %v905
      %v922 = vpack.c.b16 %v906, %v906
      %v923 = vpack.c.b16 %v907, %v907
      %v924 = vpack.c.b16 %v908, %v908
      %v925 = vpack.c.b16 %v909, %v909
      %vm926 = vcmask 1042432
      %v927 = vrot.slane %v734, 5
      %v928 = vrot.slane %v910, 5
      %v929 = vsel %vm926, %v927, %v928
      %v930 = vrot.slane %v735, 5
      %v931 = vrot.slane %v911, 5
      %v932 = vsel %vm926, %v930, %v931
      %v933 = vrot.slane %v736, 5
      %v934 = vrot.slane %v912, 5
      %v935 = vsel %vm926, %v933, %v934
      %v936 = vrot.slane %v737, 5
      %v937 = vrot.slane %v913, 5
      %v938 = vsel %vm926, %v936, %v937
      %v939 = vrot.slane %v738, 5
      %v940 = vrot.slane %v914, 5
      %v941 = vsel %vm926, %v939, %v940
      %v942 = vrot.slane %v739, 5
      %v943 = vrot.slane %v915, 5
      %v944 = vsel %vm926, %v942, %v943
      %v945 = vrot.slane %v740, 5
      %v946 = vrot.slane %v916, 5
      %v947 = vsel %vm926, %v945, %v946
      %v948 = vrot.slane %v741, 5
      %v949 = vrot.slane %v917, 5
      %v950 = vsel %vm926, %v948, %v949
      %v951 = vrot.slane %v742, 5
      %v952 = vrot.slane %v918, 5
      %v953 = vsel %vm926, %v951, %v952
      %v954 = vrot.slane %v743, 5
      %v955 = vrot.slane %v919, 5
      %v956 = vsel %vm926, %v954, %v955
      %v957 = vrot.slane %v744, 5
      %v958 = vrot.slane %v920, 5
      %v959 = vsel %vm926, %v957, %v958
      %v960 = vrot.slane %v745, 5
      %v961 = vrot.slane %v921, 5
      %v962 = vsel %vm926, %v960, %v961
      %v963 = vrot.slane %v746, 5
      %v964 = vrot.slane %v922, 5
      %v965 = vsel %vm926, %v963, %v964
      %v966 = vrot.slane %v747, 5
      %v967 = vrot.slane %v923, 5
      %v968 = vsel %vm926, %v966, %v967
      %v969 = vrot.slane %v748, 5
      %v970 = vrot.slane %v924, 5
      %v971 = vsel %vm926, %v969, %v970
      %v972 = vrot.slane %v749, 5
      %v973 = vrot.slane %v925, 5
      %v974 = vsel %vm926, %v972, %v973
      %vm975 = vsmask.f32 4352
      %v977 = vshrl.u32 %v702, 16
      %v979 = vrot.slane %v977, 3
      %v980 = vshll.u32 %v702, 16
      %v982 = vrot.slane %v980, 4
      %v983 = vor.u32 %v979, %v982
      %v985 = vshrl.u32 %v703, 16
      %v987 = vrot.slane %v985, 3
      %v988 = vshll.u32 %v703, 16
      %v990 = vrot.slane %v988, 4
      %v991 = vor.u32 %v987, %v990
      %v992 = vsel %vm975, %v983, %v991
      %v994 = vshrl.u32 %v757, 16
      %v996 = vrot.slane %v994, 3
      %v997 = vshll.u32 %v757, 16
      %v999 = vrot.slane %v997, 4
      %v1000 = vor.u32 %v996, %v999
      %v1001 = vsel %vm975, %v1000, %v1000
      %v1003 = vshrl.u32 %v927, 16
      %v1005 = vrot.slane %v1003, 3
      %v1006 = vshll.u32 %v927, 16
      %v1008 = vrot.slane %v1006, 4
      %v1009 = vor.u32 %v1005, %v1008
      %v1011 = vshrl.u32 %v929, 16
      %v1013 = vrot.slane %v1011, 3
      %v1014 = vshll.u32 %v929, 16
      %v1016 = vrot.slane %v1014, 4
      %v1017 = vor.u32 %v1013, %v1016
      %v1018 = vsel %vm975, %v1009, %v1017
      %v1020 = vshrl.u32 %v704, 16
      %v1022 = vrot.slane %v1020, 3
      %v1023 = vshll.u32 %v704, 16
      %v1025 = vrot.slane %v1023, 4
      %v1026 = vor.u32 %v1022, %v1025
      %v1028 = vshrl.u32 %v705, 16
      %v1030 = vrot.slane %v1028, 3
      %v1031 = vshll.u32 %v705, 16
      %v1033 = vrot.slane %v1031, 4
      %v1034 = vor.u32 %v1030, %v1033
      %v1035 = vsel %vm975, %v1026, %v1034
      %v1037 = vshrl.u32 %v765, 16
      %v1039 = vrot.slane %v1037, 3
      %v1040 = vshll.u32 %v765, 16
      %v1042 = vrot.slane %v1040, 4
      %v1043 = vor.u32 %v1039, %v1042
      %v1044 = vsel %vm975, %v1043, %v1043
      %v1046 = vshrl.u32 %v930, 16
      %v1048 = vrot.slane %v1046, 3
      %v1049 = vshll.u32 %v930, 16
      %v1051 = vrot.slane %v1049, 4
      %v1052 = vor.u32 %v1048, %v1051
      %v1054 = vshrl.u32 %v932, 16
      %v1056 = vrot.slane %v1054, 3
      %v1057 = vshll.u32 %v932, 16
      %v1059 = vrot.slane %v1057, 4
      %v1060 = vor.u32 %v1056, %v1059
      %v1061 = vsel %vm975, %v1052, %v1060
      %v1063 = vshrl.u32 %v706, 16
      %v1065 = vrot.slane %v1063, 3
      %v1066 = vshll.u32 %v706, 16
      %v1068 = vrot.slane %v1066, 4
      %v1069 = vor.u32 %v1065, %v1068
      %v1071 = vshrl.u32 %v707, 16
      %v1073 = vrot.slane %v1071, 3
      %v1074 = vshll.u32 %v707, 16
      %v1076 = vrot.slane %v1074, 4
      %v1077 = vor.u32 %v1073, %v1076
      %v1078 = vsel %vm975, %v1069, %v1077
      %v1080 = vshrl.u32 %v773, 16
      %v1082 = vrot.slane %v1080, 3
      %v1083 = vshll.u32 %v773, 16
      %v1085 = vrot.slane %v1083, 4
      %v1086 = vor.u32 %v1082, %v1085
      %v1087 = vsel %vm975, %v1086, %v1086
      %v1089 = vshrl.u32 %v933, 16
      %v1091 = vrot.slane %v1089, 3
      %v1092 = vshll.u32 %v933, 16
      %v1094 = vrot.slane %v1092, 4
      %v1095 = vor.u32 %v1091, %v1094
      %v1097 = vshrl.u32 %v935, 16
      %v1099 = vrot.slane %v1097, 3
      %v1100 = vshll.u32 %v935, 16
      %v1102 = vrot.slane %v1100, 4
      %v1103 = vor.u32 %v1099, %v1102
      %v1104 = vsel %vm975, %v1095, %v1103
      %v1106 = vshrl.u32 %v708, 16
      %v1108 = vrot.slane %v1106, 3
      %v1109 = vshll.u32 %v708, 16
      %v1111 = vrot.slane %v1109, 4
      %v1112 = vor.u32 %v1108, %v1111
      %v1114 = vshrl.u32 %v709, 16
      %v1116 = vrot.slane %v1114, 3
      %v1117 = vshll.u32 %v709, 16
      %v1119 = vrot.slane %v1117, 4
      %v1120 = vor.u32 %v1116, %v1119
      %v1121 = vsel %vm975, %v1112, %v1120
      %v1123 = vshrl.u32 %v781, 16
      %v1125 = vrot.slane %v1123, 3
      %v1126 = vshll.u32 %v781, 16
      %v1128 = vrot.slane %v1126, 4
      %v1129 = vor.u32 %v1125, %v1128
      %v1130 = vsel %vm975, %v1129, %v1129
      %v1132 = vshrl.u32 %v936, 16
      %v1134 = vrot.slane %v1132, 3
      %v1135 = vshll.u32 %v936, 16
      %v1137 = vrot.slane %v1135, 4
      %v1138 = vor.u32 %v1134, %v1137
      %v1140 = vshrl.u32 %v938, 16
      %v1142 = vrot.slane %v1140, 3
      %v1143 = vshll.u32 %v938, 16
      %v1145 = vrot.slane %v1143, 4
      %v1146 = vor.u32 %v1142, %v1145
      %v1147 = vsel %vm975, %v1138, %v1146
      %v1149 = vshrl.u32 %v710, 16
      %v1151 = vrot.slane %v1149, 3
      %v1152 = vshll.u32 %v710, 16
      %v1154 = vrot.slane %v1152, 4
      %v1155 = vor.u32 %v1151, %v1154
      %v1157 = vshrl.u32 %v711, 16
      %v1159 = vrot.slane %v1157, 3
      %v1160 = vshll.u32 %v711, 16
      %v1162 = vrot.slane %v1160, 4
      %v1163 = vor.u32 %v1159, %v1162
      %v1164 = vsel %vm975, %v1155, %v1163
      %v1166 = vshrl.u32 %v789, 16
      %v1168 = vrot.slane %v1166, 3
      %v1169 = vshll.u32 %v789, 16
      %v1171 = vrot.slane %v1169, 4
      %v1172 = vor.u32 %v1168, %v1171
      %v1173 = vsel %vm975, %v1172, %v1172
      %v1175 = vshrl.u32 %v939, 16
      %v1177 = vrot.slane %v1175, 3
      %v1178 = vshll.u32 %v939, 16
      %v1180 = vrot.slane %v1178, 4
      %v1181 = vor.u32 %v1177, %v1180
      %v1183 = vshrl.u32 %v941, 16
      %v1185 = vrot.slane %v1183, 3
      %v1186 = vshll.u32 %v941, 16
      %v1188 = vrot.slane %v1186, 4
      %v1189 = vor.u32 %v1185, %v1188
      %v1190 = vsel %vm975, %v1181, %v1189
      %v1192 = vshrl.u32 %v712, 16
      %v1194 = vrot.slane %v1192, 3
      %v1195 = vshll.u32 %v712, 16
      %v1197 = vrot.slane %v1195, 4
      %v1198 = vor.u32 %v1194, %v1197
      %v1200 = vshrl.u32 %v713, 16
      %v1202 = vrot.slane %v1200, 3
      %v1203 = vshll.u32 %v713, 16
      %v1205 = vrot.slane %v1203, 4
      %v1206 = vor.u32 %v1202, %v1205
      %v1207 = vsel %vm975, %v1198, %v1206
      %v1209 = vshrl.u32 %v797, 16
      %v1211 = vrot.slane %v1209, 3
      %v1212 = vshll.u32 %v797, 16
      %v1214 = vrot.slane %v1212, 4
      %v1215 = vor.u32 %v1211, %v1214
      %v1216 = vsel %vm975, %v1215, %v1215
      %v1218 = vshrl.u32 %v942, 16
      %v1220 = vrot.slane %v1218, 3
      %v1221 = vshll.u32 %v942, 16
      %v1223 = vrot.slane %v1221, 4
      %v1224 = vor.u32 %v1220, %v1223
      %v1226 = vshrl.u32 %v944, 16
      %v1228 = vrot.slane %v1226, 3
      %v1229 = vshll.u32 %v944, 16
      %v1231 = vrot.slane %v1229, 4
      %v1232 = vor.u32 %v1228, %v1231
      %v1233 = vsel %vm975, %v1224, %v1232
      %v1235 = vshrl.u32 %v714, 16
      %v1237 = vrot.slane %v1235, 3
      %v1238 = vshll.u32 %v714, 16
      %v1240 = vrot.slane %v1238, 4
      %v1241 = vor.u32 %v1237, %v1240
      %v1243 = vshrl.u32 %v715, 16
      %v1245 = vrot.slane %v1243, 3
      %v1246 = vshll.u32 %v715, 16
      %v1248 = vrot.slane %v1246, 4
      %v1249 = vor.u32 %v1245, %v1248
      %v1250 = vsel %vm975, %v1241, %v1249
      %v1252 = vshrl.u32 %v805, 16
      %v1254 = vrot.slane %v1252, 3
      %v1255 = vshll.u32 %v805, 16
      %v1257 = vrot.slane %v1255, 4
      %v1258 = vor.u32 %v1254, %v1257
      %v1259 = vsel %vm975, %v1258, %v1258
      %v1261 = vshrl.u32 %v945, 16
      %v1263 = vrot.slane %v1261, 3
      %v1264 = vshll.u32 %v945, 16
      %v1266 = vrot.slane %v1264, 4
      %v1267 = vor.u32 %v1263, %v1266
      %v1269 = vshrl.u32 %v947, 16
      %v1271 = vrot.slane %v1269, 3
      %v1272 = vshll.u32 %v947, 16
      %v1274 = vrot.slane %v1272, 4
      %v1275 = vor.u32 %v1271, %v1274
      %v1276 = vsel %vm975, %v1267, %v1275
      %v1278 = vshrl.u32 %v716, 16
      %v1280 = vrot.slane %v1278, 3
      %v1281 = vshll.u32 %v716, 16
      %v1283 = vrot.slane %v1281, 4
      %v1284 = vor.u32 %v1280, %v1283
      %v1286 = vshrl.u32 %v717, 16
      %v1288 = vrot.slane %v1286, 3
      %v1289 = vshll.u32 %v717, 16
      %v1291 = vrot.slane %v1289, 4
      %v1292 = vor.u32 %v1288, %v1291
      %v1293 = vsel %vm975, %v1284, %v1292
      %v1295 = vshrl.u32 %v813, 16
      %v1297 = vrot.slane %v1295, 3
      %v1298 = vshll.u32 %v813, 16
      %v1300 = vrot.slane %v1298, 4
      %v1301 = vor.u32 %v1297, %v1300
      %v1302 = vsel %vm975, %v1301, %v1301
      %v1304 = vshrl.u32 %v948, 16
      %v1306 = vrot.slane %v1304, 3
      %v1307 = vshll.u32 %v948, 16
      %v1309 = vrot.slane %v1307, 4
      %v1310 = vor.u32 %v1306, %v1309
      %v1312 = vshrl.u32 %v950, 16
      %v1314 = vrot.slane %v1312, 3
      %v1315 = vshll.u32 %v950, 16
      %v1317 = vrot.slane %v1315, 4
      %v1318 = vor.u32 %v1314, %v1317
      %v1319 = vsel %vm975, %v1310, %v1318
      %v1321 = vshrl.u32 %v718, 16
      %v1323 = vrot.slane %v1321, 3
      %v1324 = vshll.u32 %v718, 16
      %v1326 = vrot.slane %v1324, 4
      %v1327 = vor.u32 %v1323, %v1326
      %v1329 = vshrl.u32 %v719, 16
      %v1331 = vrot.slane %v1329, 3
      %v1332 = vshll.u32 %v719, 16
      %v1334 = vrot.slane %v1332, 4
      %v1335 = vor.u32 %v1331, %v1334
      %v1336 = vsel %vm975, %v1327, %v1335
      %v1338 = vshrl.u32 %v821, 16
      %v1340 = vrot.slane %v1338, 3
      %v1341 = vshll.u32 %v821, 16
      %v1343 = vrot.slane %v1341, 4
      %v1344 = vor.u32 %v1340, %v1343
      %v1345 = vsel %vm975, %v1344, %v1344
      %v1347 = vshrl.u32 %v951, 16
      %v1349 = vrot.slane %v1347, 3
      %v1350 = vshll.u32 %v951, 16
      %v1352 = vrot.slane %v1350, 4
      %v1353 = vor.u32 %v1349, %v1352
      %v1355 = vshrl.u32 %v953, 16
      %v1357 = vrot.slane %v1355, 3
      %v1358 = vshll.u32 %v953, 16
      %v1360 = vrot.slane %v1358, 4
      %v1361 = vor.u32 %v1357, %v1360
      %v1362 = vsel %vm975, %v1353, %v1361
      %v1364 = vshrl.u32 %v720, 16
      %v1366 = vrot.slane %v1364, 3
      %v1367 = vshll.u32 %v720, 16
      %v1369 = vrot.slane %v1367, 4
      %v1370 = vor.u32 %v1366, %v1369
      %v1372 = vshrl.u32 %v721, 16
      %v1374 = vrot.slane %v1372, 3
      %v1375 = vshll.u32 %v721, 16
      %v1377 = vrot.slane %v1375, 4
      %v1378 = vor.u32 %v1374, %v1377
      %v1379 = vsel %vm975, %v1370, %v1378
      %v1381 = vshrl.u32 %v829, 16
      %v1383 = vrot.slane %v1381, 3
      %v1384 = vshll.u32 %v829, 16
      %v1386 = vrot.slane %v1384, 4
      %v1387 = vor.u32 %v1383, %v1386
      %v1388 = vsel %vm975, %v1387, %v1387
      %v1390 = vshrl.u32 %v954, 16
      %v1392 = vrot.slane %v1390, 3
      %v1393 = vshll.u32 %v954, 16
      %v1395 = vrot.slane %v1393, 4
      %v1396 = vor.u32 %v1392, %v1395
      %v1398 = vshrl.u32 %v956, 16
      %v1400 = vrot.slane %v1398, 3
      %v1401 = vshll.u32 %v956, 16
      %v1403 = vrot.slane %v1401, 4
      %v1404 = vor.u32 %v1400, %v1403
      %v1405 = vsel %vm975, %v1396, %v1404
      %v1407 = vshrl.u32 %v722, 16
      %v1409 = vrot.slane %v1407, 3
      %v1410 = vshll.u32 %v722, 16
      %v1412 = vrot.slane %v1410, 4
      %v1413 = vor.u32 %v1409, %v1412
      %v1415 = vshrl.u32 %v723, 16
      %v1417 = vrot.slane %v1415, 3
      %v1418 = vshll.u32 %v723, 16
      %v1420 = vrot.slane %v1418, 4
      %v1421 = vor.u32 %v1417, %v1420
      %v1422 = vsel %vm975, %v1413, %v1421
      %v1424 = vshrl.u32 %v837, 16
      %v1426 = vrot.slane %v1424, 3
      %v1427 = vshll.u32 %v837, 16
      %v1429 = vrot.slane %v1427, 4
      %v1430 = vor.u32 %v1426, %v1429
      %v1431 = vsel %vm975, %v1430, %v1430
      %v1433 = vshrl.u32 %v957, 16
      %v1435 = vrot.slane %v1433, 3
      %v1436 = vshll.u32 %v957, 16
      %v1438 = vrot.slane %v1436, 4
      %v1439 = vor.u32 %v1435, %v1438
      %v1441 = vshrl.u32 %v959, 16
      %v1443 = vrot.slane %v1441, 3
      %v1444 = vshll.u32 %v959, 16
      %v1446 = vrot.slane %v1444, 4
      %v1447 = vor.u32 %v1443, %v1446
      %v1448 = vsel %vm975, %v1439, %v1447
      %v1450 = vshrl.u32 %v724, 16
      %v1452 = vrot.slane %v1450, 3
      %v1453 = vshll.u32 %v724, 16
      %v1455 = vrot.slane %v1453, 4
      %v1456 = vor.u32 %v1452, %v1455
      %v1458 = vshrl.u32 %v725, 16
      %v1460 = vrot.slane %v1458, 3
      %v1461 = vshll.u32 %v725, 16
      %v1463 = vrot.slane %v1461, 4
      %v1464 = vor.u32 %v1460, %v1463
      %v1465 = vsel %vm975, %v1456, %v1464
      %v1467 = vshrl.u32 %v845, 16
      %v1469 = vrot.slane %v1467, 3
      %v1470 = vshll.u32 %v845, 16
      %v1472 = vrot.slane %v1470, 4
      %v1473 = vor.u32 %v1469, %v1472
      %v1474 = vsel %vm975, %v1473, %v1473
      %v1476 = vshrl.u32 %v960, 16
      %v1478 = vrot.slane %v1476, 3
      %v1479 = vshll.u32 %v960, 16
      %v1481 = vrot.slane %v1479, 4
      %v1482 = vor.u32 %v1478, %v1481
      %v1484 = vshrl.u32 %v962, 16
      %v1486 = vrot.slane %v1484, 3
      %v1487 = vshll.u32 %v962, 16
      %v1489 = vrot.slane %v1487, 4
      %v1490 = vor.u32 %v1486, %v1489
      %v1491 = vsel %vm975, %v1482, %v1490
      %v1493 = vshrl.u32 %v726, 16
      %v1495 = vrot.slane %v1493, 3
      %v1496 = vshll.u32 %v726, 16
      %v1498 = vrot.slane %v1496, 4
      %v1499 = vor.u32 %v1495, %v1498
      %v1501 = vshrl.u32 %v727, 16
      %v1503 = vrot.slane %v1501, 3
      %v1504 = vshll.u32 %v727, 16
      %v1506 = vrot.slane %v1504, 4
      %v1507 = vor.u32 %v1503, %v1506
      %v1508 = vsel %vm975, %v1499, %v1507
      %v1510 = vshrl.u32 %v853, 16
      %v1512 = vrot.slane %v1510, 3
      %v1513 = vshll.u32 %v853, 16
      %v1515 = vrot.slane %v1513, 4
      %v1516 = vor.u32 %v1512, %v1515
      %v1517 = vsel %vm975, %v1516, %v1516
      %v1519 = vshrl.u32 %v963, 16
      %v1521 = vrot.slane %v1519, 3
      %v1522 = vshll.u32 %v963, 16
      %v1524 = vrot.slane %v1522, 4
      %v1525 = vor.u32 %v1521, %v1524
      %v1527 = vshrl.u32 %v965, 16
      %v1529 = vrot.slane %v1527, 3
      %v1530 = vshll.u32 %v965, 16
      %v1532 = vrot.slane %v1530, 4
      %v1533 = vor.u32 %v1529, %v1532
      %v1534 = vsel %vm975, %v1525, %v1533
      %v1536 = vshrl.u32 %v728, 16
      %v1538 = vrot.slane %v1536, 3
      %v1539 = vshll.u32 %v728, 16
      %v1541 = vrot.slane %v1539, 4
      %v1542 = vor.u32 %v1538, %v1541
      %v1544 = vshrl.u32 %v729, 16
      %v1546 = vrot.slane %v1544, 3
      %v1547 = vshll.u32 %v729, 16
      %v1549 = vrot.slane %v1547, 4
      %v1550 = vor.u32 %v1546, %v1549
      %v1551 = vsel %vm975, %v1542, %v1550
      %v1553 = vshrl.u32 %v861, 16
      %v1555 = vrot.slane %v1553, 3
      %v1556 = vshll.u32 %v861, 16
      %v1558 = vrot.slane %v1556, 4
      %v1559 = vor.u32 %v1555, %v1558
      %v1560 = vsel %vm975, %v1559, %v1559
      %v1562 = vshrl.u32 %v966, 16
      %v1564 = vrot.slane %v1562, 3
      %v1565 = vshll.u32 %v966, 16
      %v1567 = vrot.slane %v1565, 4
      %v1568 = vor.u32 %v1564, %v1567
      %v1570 = vshrl.u32 %v968, 16
      %v1572 = vrot.slane %v1570, 3
      %v1573 = vshll.u32 %v968, 16
      %v1575 = vrot.slane %v1573, 4
      %v1576 = vor.u32 %v1572, %v1575
      %v1577 = vsel %vm975, %v1568, %v1576
      %v1579 = vshrl.u32 %v730, 16
      %v1581 = vrot.slane %v1579, 3
      %v1582 = vshll.u32 %v730, 16
      %v1584 = vrot.slane %v1582, 4
      %v1585 = vor.u32 %v1581, %v1584
      %v1587 = vshrl.u32 %v731, 16
      %v1589 = vrot.slane %v1587, 3
      %v1590 = vshll.u32 %v731, 16
      %v1592 = vrot.slane %v1590, 4
      %v1593 = vor.u32 %v1589, %v1592
      %v1594 = vsel %vm975, %v1585, %v1593
      %v1596 = vshrl.u32 %v869, 16
      %v1598 = vrot.slane %v1596, 3
      %v1599 = vshll.u32 %v869, 16
      %v1601 = vrot.slane %v1599, 4
      %v1602 = vor.u32 %v1598, %v1601
      %v1603 = vsel %vm975, %v1602, %v1602
      %v1605 = vshrl.u32 %v969, 16
      %v1607 = vrot.slane %v1605, 3
      %v1608 = vshll.u32 %v969, 16
      %v1610 = vrot.slane %v1608, 4
      %v1611 = vor.u32 %v1607, %v1610
      %v1613 = vshrl.u32 %v971, 16
      %v1615 = vrot.slane %v1613, 3
      %v1616 = vshll.u32 %v971, 16
      %v1618 = vrot.slane %v1616, 4
      %v1619 = vor.u32 %v1615, %v1618
      %v1620 = vsel %vm975, %v1611, %v1619
      %v1622 = vshrl.u32 %v732, 16
      %v1624 = vrot.slane %v1622, 3
      %v1625 = vshll.u32 %v732, 16
      %v1627 = vrot.slane %v1625, 4
      %v1628 = vor.u32 %v1624, %v1627
      %v1630 = vshrl.u32 %v733, 16
      %v1632 = vrot.slane %v1630, 3
      %v1633 = vshll.u32 %v733, 16
      %v1635 = vrot.slane %v1633, 4
      %v1636 = vor.u32 %v1632, %v1635
      %v1637 = vsel %vm975, %v1628, %v1636
      %v1639 = vshrl.u32 %v877, 16
      %v1641 = vrot.slane %v1639, 3
      %v1642 = vshll.u32 %v877, 16
      %v1644 = vrot.slane %v1642, 4
      %v1645 = vor.u32 %v1641, %v1644
      %v1646 = vsel %vm975, %v1645, %v1645
      %v1648 = vshrl.u32 %v972, 16
      %v1650 = vrot.slane %v1648, 3
      %v1651 = vshll.u32 %v972, 16
      %v1653 = vrot.slane %v1651, 4
      %v1654 = vor.u32 %v1650, %v1653
      %v1656 = vshrl.u32 %v974, 16
      %v1658 = vrot.slane %v1656, 3
      %v1659 = vshll.u32 %v974, 16
      %v1661 = vrot.slane %v1659, 4
      %v1662 = vor.u32 %v1658, %v1661
      %v1663 = vsel %vm975, %v1654, %v1662
      %v1712 = vld [vmem:[%s3] sm:$0xf]
      %v1713 = vld [vmem:[%s3 + $0x4] sm:$0xf]
      %v1714 = vld [vmem:[%s3 + $0x8] sm:$0xf]
      %v1715 = vld [vmem:[%s3 + $0xc] sm:$0xf]
      %v1716 = vld [vmem:[%s3 + $0x10] sm:$0xf]
      %v1717 = vld [vmem:[%s3 + $0x14] sm:$0xf]
      %v1718 = vld [vmem:[%s3 + $0x18] sm:$0xf]
      %v1719 = vld [vmem:[%s3 + $0x1c] sm:$0xf]
      %v1720 = vld [vmem:[%s3 + $0x20] sm:$0xf]
      %v1721 = vld [vmem:[%s3 + $0x24] sm:$0xf]
      %v1722 = vld [vmem:[%s3 + $0x28] sm:$0xf]
      %v1723 = vld [vmem:[%s3 + $0x2c] sm:$0xf]
      %v1724 = vld [vmem:[%s3 + $0x30] sm:$0xf]
      %v1725 = vld [vmem:[%s3 + $0x34] sm:$0xf]
      %v1726 = vld [vmem:[%s3 + $0x38] sm:$0xf]
      %v1727 = vld [vmem:[%s3 + $0x3c] sm:$0xf]
      %v1728 = vld [vmem:[%s3 + $0x40] sm:$0xf]
      %v1729 = vld [vmem:[%s3 + $0x44] sm:$0xf]
      %v1730 = vld [vmem:[%s3 + $0x48] sm:$0xf]
      %v1731 = vld [vmem:[%s3 + $0x4c] sm:$0xf]
      %v1732 = vld [vmem:[%s3 + $0x50] sm:$0xf]
      %v1733 = vld [vmem:[%s3 + $0x54] sm:$0xf]
      %v1734 = vld [vmem:[%s3 + $0x58] sm:$0xf]
      %v1735 = vld [vmem:[%s3 + $0x5c] sm:$0xf]
      %v1736 = vld [vmem:[%s3 + $0x60] sm:$0xf]
      %v1737 = vld [vmem:[%s3 + $0x64] sm:$0xf]
      %v1738 = vld [vmem:[%s3 + $0x68] sm:$0xf]
      %v1739 = vld [vmem:[%s3 + $0x6c] sm:$0xf]
      %v1740 = vld [vmem:[%s3 + $0x70] sm:$0xf]
      %v1741 = vld [vmem:[%s3 + $0x74] sm:$0xf]
      %v1742 = vld [vmem:[%s3 + $0x78] sm:$0xf]
      %v1743 = vld [vmem:[%s3 + $0x7c] sm:$0xf]
      %v1744 = vld [vmem:[%s3 + $0x80] sm:$0xf]
      %v1745 = vld [vmem:[%s3 + $0x84] sm:$0xf]
      %v1746 = vld [vmem:[%s3 + $0x88] sm:$0xf]
      %v1747 = vld [vmem:[%s3 + $0x8c] sm:$0xf]
      %v1748 = vld [vmem:[%s3 + $0x90] sm:$0xf]
      %v1749 = vld [vmem:[%s3 + $0x94] sm:$0xf]
      %v1750 = vld [vmem:[%s3 + $0x98] sm:$0xf]
      %v1751 = vld [vmem:[%s3 + $0x9c] sm:$0xf]
      %v1752 = vld [vmem:[%s3 + $0xa0] sm:$0xf]
      %v1753 = vld [vmem:[%s3 + $0xa4] sm:$0xf]
      %v1754 = vld [vmem:[%s3 + $0xa8] sm:$0xf]
      %v1755 = vld [vmem:[%s3 + $0xac] sm:$0xf]
      %v1756 = vld [vmem:[%s3 + $0xb0] sm:$0xf]
      %v1757 = vld [vmem:[%s3 + $0xb4] sm:$0xf]
      %v1758 = vld [vmem:[%s3 + $0xb8] sm:$0xf]
      %v1759 = vld [vmem:[%s3 + $0xbc] sm:$0xf]
      %v1760 = vld [vmem:[%s509] sm:$0xf]
      %v1761 = vld [vmem:[%s509 + $0x4] sm:$0xf]
      %v1762 = vld [vmem:[%s509 + $0x8] sm:$0xf]
      %v1763 = vld [vmem:[%s509 + $0xc] sm:$0xf]
      %v1764 = vld [vmem:[%s509 + $0x10] sm:$0xf]
      %v1765 = vld [vmem:[%s509 + $0x14] sm:$0xf]
      %v1766 = vld [vmem:[%s509 + $0x18] sm:$0xf]
      %v1767 = vld [vmem:[%s509 + $0x1c] sm:$0xf]
      %v1768 = vld [vmem:[%s509 + $0x20] sm:$0xf]
      %v1769 = vld [vmem:[%s509 + $0x24] sm:$0xf]
      %v1770 = vld [vmem:[%s509 + $0x28] sm:$0xf]
      %v1771 = vld [vmem:[%s509 + $0x2c] sm:$0xf]
      %v1772 = vld [vmem:[%s509 + $0x30] sm:$0xf]
      %v1773 = vld [vmem:[%s509 + $0x34] sm:$0xf]
      %v1774 = vld [vmem:[%s509 + $0x38] sm:$0xf]
      %v1775 = vld [vmem:[%s509 + $0x3c] sm:$0xf]
      %v1776 = vld [vmem:[%s509 + $0x40] sm:$0xf]
      %v1777 = vld [vmem:[%s509 + $0x44] sm:$0xf]
      %v1778 = vld [vmem:[%s509 + $0x48] sm:$0xf]
      %v1779 = vld [vmem:[%s509 + $0x4c] sm:$0xf]
      %v1780 = vld [vmem:[%s509 + $0x50] sm:$0xf]
      %v1781 = vld [vmem:[%s509 + $0x54] sm:$0xf]
      %v1782 = vld [vmem:[%s509 + $0x58] sm:$0xf]
      %v1783 = vld [vmem:[%s509 + $0x5c] sm:$0xf]
      %v1784 = vld [vmem:[%s509 + $0x60] sm:$0xf]
      %v1785 = vld [vmem:[%s509 + $0x64] sm:$0xf]
      %v1786 = vld [vmem:[%s509 + $0x68] sm:$0xf]
      %v1787 = vld [vmem:[%s509 + $0x6c] sm:$0xf]
      %v1788 = vld [vmem:[%s509 + $0x70] sm:$0xf]
      %v1789 = vld [vmem:[%s509 + $0x74] sm:$0xf]
      %v1790 = vld [vmem:[%s509 + $0x78] sm:$0xf]
      %v1791 = vld [vmem:[%s509 + $0x7c] sm:$0xf]
      %v1792 = vld [vmem:[%s509 + $0x80] sm:$0xf]
      %v1793 = vld [vmem:[%s509 + $0x84] sm:$0xf]
      %v1794 = vld [vmem:[%s509 + $0x88] sm:$0xf]
      %v1795 = vld [vmem:[%s509 + $0x8c] sm:$0xf]
      %v1796 = vld [vmem:[%s509 + $0x90] sm:$0xf]
      %v1797 = vld [vmem:[%s509 + $0x94] sm:$0xf]
      %v1798 = vld [vmem:[%s509 + $0x98] sm:$0xf]
      %v1799 = vld [vmem:[%s509 + $0x9c] sm:$0xf]
      %v1800 = vld [vmem:[%s509 + $0xa0] sm:$0xf]
      %v1801 = vld [vmem:[%s509 + $0xa4] sm:$0xf]
      %v1802 = vld [vmem:[%s509 + $0xa8] sm:$0xf]
      %v1803 = vld [vmem:[%s509 + $0xac] sm:$0xf]
      %v1804 = vld [vmem:[%s509 + $0xb0] sm:$0xf]
      %v1805 = vld [vmem:[%s509 + $0xb4] sm:$0xf]
      %v1806 = vld [vmem:[%s509 + $0xb8] sm:$0xf]
      %v1807 = vld [vmem:[%s509 + $0xbc] sm:$0xf]
      %v1808 = vld [vmem:[%s509 + $0xc0] sm:$0xf]
      %v1809 = vld [vmem:[%s509 + $0xc4] sm:$0xf]
      %v1810 = vld [vmem:[%s509 + $0xc8] sm:$0xf]
      %v1811 = vld [vmem:[%s509 + $0xcc] sm:$0xf]
      %v1812 = vld [vmem:[%s509 + $0xd0] sm:$0xf]
      %v1813 = vld [vmem:[%s509 + $0xd4] sm:$0xf]
      %v1814 = vld [vmem:[%s509 + $0xd8] sm:$0xf]
      %v1815 = vld [vmem:[%s509 + $0xdc] sm:$0xf]
      %v1816 = vld [vmem:[%s509 + $0xe0] sm:$0xf]
      %v1817 = vld [vmem:[%s509 + $0xe4] sm:$0xf]
      %v1818 = vld [vmem:[%s509 + $0xe8] sm:$0xf]
      %v1819 = vld [vmem:[%s509 + $0xec] sm:$0xf]
      %v1820 = vld [vmem:[%s509 + $0xf0] sm:$0xf]
      %v1821 = vld [vmem:[%s509 + $0xf4] sm:$0xf]
      %v1822 = vld [vmem:[%s509 + $0xf8] sm:$0xf]
      %v1823 = vld [vmem:[%s509 + $0xfc] sm:$0xf]
      %v1872 = vunpack.c.l.b16 %v1760
      %v1873 = vunpack.c.l.b16 %v1761
      %v1874 = vunpack.c.l.b16 %v1762
      %v1875 = vunpack.c.l.b16 %v1764
      %v1876 = vunpack.c.l.b16 %v1765
      %v1877 = vunpack.c.l.b16 %v1766
      %v1878 = vunpack.c.l.b16 %v1768
      %v1879 = vunpack.c.l.b16 %v1769
      %v1880 = vunpack.c.l.b16 %v1770
      %v1881 = vunpack.c.l.b16 %v1772
      %v1882 = vunpack.c.l.b16 %v1773
      %v1883 = vunpack.c.l.b16 %v1774
      %v1884 = vunpack.c.l.b16 %v1776
      %v1885 = vunpack.c.l.b16 %v1777
      %v1886 = vunpack.c.l.b16 %v1778
      %v1887 = vunpack.c.l.b16 %v1780
      %v1888 = vunpack.c.l.b16 %v1781
      %v1889 = vunpack.c.l.b16 %v1782
      %v1890 = vunpack.c.l.b16 %v1784
      %v1891 = vunpack.c.l.b16 %v1785
      %v1892 = vunpack.c.l.b16 %v1786
      %v1893 = vunpack.c.l.b16 %v1788
      %v1894 = vunpack.c.l.b16 %v1789
      %v1895 = vunpack.c.l.b16 %v1790
      %v1896 = vunpack.c.l.b16 %v1792
      %v1897 = vunpack.c.l.b16 %v1793
      %v1898 = vunpack.c.l.b16 %v1794
      %v1899 = vunpack.c.l.b16 %v1796
      %v1900 = vunpack.c.l.b16 %v1797
      %v1901 = vunpack.c.l.b16 %v1798
      %v1902 = vunpack.c.l.b16 %v1800
      %v1903 = vunpack.c.l.b16 %v1801
      %v1904 = vunpack.c.l.b16 %v1802
      %v1905 = vunpack.c.l.b16 %v1804
      %v1906 = vunpack.c.l.b16 %v1805
      %v1907 = vunpack.c.l.b16 %v1806
      %v1908 = vunpack.c.l.b16 %v1808
      %v1909 = vunpack.c.l.b16 %v1809
      %v1910 = vunpack.c.l.b16 %v1810
      %v1911 = vunpack.c.l.b16 %v1812
      %v1912 = vunpack.c.l.b16 %v1813
      %v1913 = vunpack.c.l.b16 %v1814
      %v1914 = vunpack.c.l.b16 %v1816
      %v1915 = vunpack.c.l.b16 %v1817
      %v1916 = vunpack.c.l.b16 %v1818
      %v1917 = vunpack.c.l.b16 %v1820
      %v1918 = vunpack.c.l.b16 %v1821
      %v1919 = vunpack.c.l.b16 %v1822
      %v1920 = vpack.c.b16 %v1873, %v1872
      %v1921 = vpack.c.b16 %v1874, %v1874
      %v1922 = vpack.c.b16 %v1876, %v1875
      %v1923 = vpack.c.b16 %v1877, %v1877
      %v1924 = vpack.c.b16 %v1879, %v1878
      %v1925 = vpack.c.b16 %v1880, %v1880
      %v1926 = vpack.c.b16 %v1882, %v1881
      %v1927 = vpack.c.b16 %v1883, %v1883
      %v1928 = vpack.c.b16 %v1885, %v1884
      %v1929 = vpack.c.b16 %v1886, %v1886
      %v1930 = vpack.c.b16 %v1888, %v1887
      %v1931 = vpack.c.b16 %v1889, %v1889
      %v1932 = vpack.c.b16 %v1891, %v1890
      %v1933 = vpack.c.b16 %v1892, %v1892
      %v1934 = vpack.c.b16 %v1894, %v1893
      %v1935 = vpack.c.b16 %v1895, %v1895
      %v1936 = vpack.c.b16 %v1897, %v1896
      %v1937 = vpack.c.b16 %v1898, %v1898
      %v1938 = vpack.c.b16 %v1900, %v1899
      %v1939 = vpack.c.b16 %v1901, %v1901
      %v1940 = vpack.c.b16 %v1903, %v1902
      %v1941 = vpack.c.b16 %v1904, %v1904
      %v1942 = vpack.c.b16 %v1906, %v1905
      %v1943 = vpack.c.b16 %v1907, %v1907
      %v1944 = vpack.c.b16 %v1909, %v1908
      %v1945 = vpack.c.b16 %v1910, %v1910
      %v1946 = vpack.c.b16 %v1912, %v1911
      %v1947 = vpack.c.b16 %v1913, %v1913
      %v1948 = vpack.c.b16 %v1915, %v1914
      %v1949 = vpack.c.b16 %v1916, %v1916
      %v1950 = vpack.c.b16 %v1918, %v1917
      %v1951 = vpack.c.b16 %v1919, %v1919
      %v1952 = vpack.c.b16 %v1874, %v1873
      %v1953 = vpack.c.b16 %v1877, %v1876
      %v1954 = vpack.c.b16 %v1880, %v1879
      %v1955 = vpack.c.b16 %v1883, %v1882
      %v1956 = vpack.c.b16 %v1886, %v1885
      %v1957 = vpack.c.b16 %v1889, %v1888
      %v1958 = vpack.c.b16 %v1892, %v1891
      %v1959 = vpack.c.b16 %v1895, %v1894
      %v1960 = vpack.c.b16 %v1898, %v1897
      %v1961 = vpack.c.b16 %v1901, %v1900
      %v1962 = vpack.c.b16 %v1904, %v1903
      %v1963 = vpack.c.b16 %v1907, %v1906
      %v1964 = vpack.c.b16 %v1910, %v1909
      %v1965 = vpack.c.b16 %v1913, %v1912
      %v1966 = vpack.c.b16 %v1916, %v1915
      %v1967 = vpack.c.b16 %v1919, %v1918
      %v1969 = vshrl.u32 %v1952, 16
      %v1971 = vrot.slane %v1969, 4
      %v1972 = vshll.u32 %v1952, 16
      %v1974 = vrot.slane %v1972, 5
      %v1975 = vor.u32 %v1971, %v1974
      %v1977 = vshrl.u32 %v1953, 16
      %v1979 = vrot.slane %v1977, 4
      %v1980 = vshll.u32 %v1953, 16
      %v1982 = vrot.slane %v1980, 5
      %v1983 = vor.u32 %v1979, %v1982
      %v1985 = vshrl.u32 %v1954, 16
      %v1987 = vrot.slane %v1985, 4
      %v1988 = vshll.u32 %v1954, 16
      %v1990 = vrot.slane %v1988, 5
      %v1991 = vor.u32 %v1987, %v1990
      %v1993 = vshrl.u32 %v1955, 16
      %v1995 = vrot.slane %v1993, 4
      %v1996 = vshll.u32 %v1955, 16
      %v1998 = vrot.slane %v1996, 5
      %v1999 = vor.u32 %v1995, %v1998
      %v2001 = vshrl.u32 %v1956, 16
      %v2003 = vrot.slane %v2001, 4
      %v2004 = vshll.u32 %v1956, 16
      %v2006 = vrot.slane %v2004, 5
      %v2007 = vor.u32 %v2003, %v2006
      %v2009 = vshrl.u32 %v1957, 16
      %v2011 = vrot.slane %v2009, 4
      %v2012 = vshll.u32 %v1957, 16
      %v2014 = vrot.slane %v2012, 5
      %v2015 = vor.u32 %v2011, %v2014
      %v2017 = vshrl.u32 %v1958, 16
      %v2019 = vrot.slane %v2017, 4
      %v2020 = vshll.u32 %v1958, 16
      %v2022 = vrot.slane %v2020, 5
      %v2023 = vor.u32 %v2019, %v2022
      %v2025 = vshrl.u32 %v1959, 16
      %v2027 = vrot.slane %v2025, 4
      %v2028 = vshll.u32 %v1959, 16
      %v2030 = vrot.slane %v2028, 5
      %v2031 = vor.u32 %v2027, %v2030
      %v2033 = vshrl.u32 %v1960, 16
      %v2035 = vrot.slane %v2033, 4
      %v2036 = vshll.u32 %v1960, 16
      %v2038 = vrot.slane %v2036, 5
      %v2039 = vor.u32 %v2035, %v2038
      %v2041 = vshrl.u32 %v1961, 16
      %v2043 = vrot.slane %v2041, 4
      %v2044 = vshll.u32 %v1961, 16
      %v2046 = vrot.slane %v2044, 5
      %v2047 = vor.u32 %v2043, %v2046
      %v2049 = vshrl.u32 %v1962, 16
      %v2051 = vrot.slane %v2049, 4
      %v2052 = vshll.u32 %v1962, 16
      %v2054 = vrot.slane %v2052, 5
      %v2055 = vor.u32 %v2051, %v2054
      %v2057 = vshrl.u32 %v1963, 16
      %v2059 = vrot.slane %v2057, 4
      %v2060 = vshll.u32 %v1963, 16
      %v2062 = vrot.slane %v2060, 5
      %v2063 = vor.u32 %v2059, %v2062
      %v2065 = vshrl.u32 %v1964, 16
      %v2067 = vrot.slane %v2065, 4
      %v2068 = vshll.u32 %v1964, 16
      %v2070 = vrot.slane %v2068, 5
      %v2071 = vor.u32 %v2067, %v2070
      %v2073 = vshrl.u32 %v1965, 16
      %v2075 = vrot.slane %v2073, 4
      %v2076 = vshll.u32 %v1965, 16
      %v2078 = vrot.slane %v2076, 5
      %v2079 = vor.u32 %v2075, %v2078
      %v2081 = vshrl.u32 %v1966, 16
      %v2083 = vrot.slane %v2081, 4
      %v2084 = vshll.u32 %v1966, 16
      %v2086 = vrot.slane %v2084, 5
      %v2087 = vor.u32 %v2083, %v2086
      %v2089 = vshrl.u32 %v1967, 16
      %v2091 = vrot.slane %v2089, 4
      %v2092 = vshll.u32 %v1967, 16
      %v2094 = vrot.slane %v2092, 5
      %v2095 = vor.u32 %v2091, %v2094
      %v2112 = vunpack.c.l.b16 %v1763
      %v2113 = vunpack.c.l.b16 %v1767
      %v2114 = vunpack.c.l.b16 %v1771
      %v2115 = vunpack.c.l.b16 %v1775
      %v2116 = vunpack.c.l.b16 %v1779
      %v2117 = vunpack.c.l.b16 %v1783
      %v2118 = vunpack.c.l.b16 %v1787
      %v2119 = vunpack.c.l.b16 %v1791
      %v2120 = vunpack.c.l.b16 %v1795
      %v2121 = vunpack.c.l.b16 %v1799
      %v2122 = vunpack.c.l.b16 %v1803
      %v2123 = vunpack.c.l.b16 %v1807
      %v2124 = vunpack.c.l.b16 %v1811
      %v2125 = vunpack.c.l.b16 %v1815
      %v2126 = vunpack.c.l.b16 %v1819
      %v2127 = vunpack.c.l.b16 %v1823
      %v2128 = vpack.c.b16 %v2112, %v2112
      %v2129 = vpack.c.b16 %v2113, %v2113
      %v2130 = vpack.c.b16 %v2114, %v2114
      %v2131 = vpack.c.b16 %v2115, %v2115
      %v2132 = vpack.c.b16 %v2116, %v2116
      %v2133 = vpack.c.b16 %v2117, %v2117
      %v2134 = vpack.c.b16 %v2118, %v2118
      %v2135 = vpack.c.b16 %v2119, %v2119
      %v2136 = vpack.c.b16 %v2120, %v2120
      %v2137 = vpack.c.b16 %v2121, %v2121
      %v2138 = vpack.c.b16 %v2122, %v2122
      %v2139 = vpack.c.b16 %v2123, %v2123
      %v2140 = vpack.c.b16 %v2124, %v2124
      %v2141 = vpack.c.b16 %v2125, %v2125
      %v2142 = vpack.c.b16 %v2126, %v2126
      %v2143 = vpack.c.b16 %v2127, %v2127
      %v2144 = vrot.slane %v1952, 5
      %v2145 = vrot.slane %v2128, 5
      %v2146 = vsel %vm926, %v2144, %v2145
      %v2147 = vrot.slane %v1953, 5
      %v2148 = vrot.slane %v2129, 5
      %v2149 = vsel %vm926, %v2147, %v2148
      %v2150 = vrot.slane %v1954, 5
      %v2151 = vrot.slane %v2130, 5
      %v2152 = vsel %vm926, %v2150, %v2151
      %v2153 = vrot.slane %v1955, 5
      %v2154 = vrot.slane %v2131, 5
      %v2155 = vsel %vm926, %v2153, %v2154
      %v2156 = vrot.slane %v1956, 5
      %v2157 = vrot.slane %v2132, 5
      %v2158 = vsel %vm926, %v2156, %v2157
      %v2159 = vrot.slane %v1957, 5
      %v2160 = vrot.slane %v2133, 5
      %v2161 = vsel %vm926, %v2159, %v2160
      %v2162 = vrot.slane %v1958, 5
      %v2163 = vrot.slane %v2134, 5
      %v2164 = vsel %vm926, %v2162, %v2163
      %v2165 = vrot.slane %v1959, 5
      %v2166 = vrot.slane %v2135, 5
      %v2167 = vsel %vm926, %v2165, %v2166
      %v2168 = vrot.slane %v1960, 5
      %v2169 = vrot.slane %v2136, 5
      %v2170 = vsel %vm926, %v2168, %v2169
      %v2171 = vrot.slane %v1961, 5
      %v2172 = vrot.slane %v2137, 5
      %v2173 = vsel %vm926, %v2171, %v2172
      %v2174 = vrot.slane %v1962, 5
      %v2175 = vrot.slane %v2138, 5
      %v2176 = vsel %vm926, %v2174, %v2175
      %v2177 = vrot.slane %v1963, 5
      %v2178 = vrot.slane %v2139, 5
      %v2179 = vsel %vm926, %v2177, %v2178
      %v2180 = vrot.slane %v1964, 5
      %v2181 = vrot.slane %v2140, 5
      %v2182 = vsel %vm926, %v2180, %v2181
      %v2183 = vrot.slane %v1965, 5
      %v2184 = vrot.slane %v2141, 5
      %v2185 = vsel %vm926, %v2183, %v2184
      %v2186 = vrot.slane %v1966, 5
      %v2187 = vrot.slane %v2142, 5
      %v2188 = vsel %vm926, %v2186, %v2187
      %v2189 = vrot.slane %v1967, 5
      %v2190 = vrot.slane %v2143, 5
      %v2191 = vsel %vm926, %v2189, %v2190
      %v2193 = vshrl.u32 %v1920, 16
      %v2195 = vrot.slane %v2193, 3
      %v2196 = vshll.u32 %v1920, 16
      %v2198 = vrot.slane %v2196, 4
      %v2199 = vor.u32 %v2195, %v2198
      %v2201 = vshrl.u32 %v1921, 16
      %v2203 = vrot.slane %v2201, 3
      %v2204 = vshll.u32 %v1921, 16
      %v2206 = vrot.slane %v2204, 4
      %v2207 = vor.u32 %v2203, %v2206
      %v2208 = vsel %vm975, %v2199, %v2207
      %v2210 = vshrl.u32 %v1975, 16
      %v2212 = vrot.slane %v2210, 3
      %v2213 = vshll.u32 %v1975, 16
      %v2215 = vrot.slane %v2213, 4
      %v2216 = vor.u32 %v2212, %v2215
      %v2217 = vsel %vm975, %v2216, %v2216
      %v2219 = vshrl.u32 %v2144, 16
      %v2221 = vrot.slane %v2219, 3
      %v2222 = vshll.u32 %v2144, 16
      %v2224 = vrot.slane %v2222, 4
      %v2225 = vor.u32 %v2221, %v2224
      %v2227 = vshrl.u32 %v2146, 16
      %v2229 = vrot.slane %v2227, 3
      %v2230 = vshll.u32 %v2146, 16
      %v2232 = vrot.slane %v2230, 4
      %v2233 = vor.u32 %v2229, %v2232
      %v2234 = vsel %vm975, %v2225, %v2233
      %v2236 = vshrl.u32 %v1922, 16
      %v2238 = vrot.slane %v2236, 3
      %v2239 = vshll.u32 %v1922, 16
      %v2241 = vrot.slane %v2239, 4
      %v2242 = vor.u32 %v2238, %v2241
      %v2244 = vshrl.u32 %v1923, 16
      %v2246 = vrot.slane %v2244, 3
      %v2247 = vshll.u32 %v1923, 16
      %v2249 = vrot.slane %v2247, 4
      %v2250 = vor.u32 %v2246, %v2249
      %v2251 = vsel %vm975, %v2242, %v2250
      %v2253 = vshrl.u32 %v1983, 16
      %v2255 = vrot.slane %v2253, 3
      %v2256 = vshll.u32 %v1983, 16
      %v2258 = vrot.slane %v2256, 4
      %v2259 = vor.u32 %v2255, %v2258
      %v2260 = vsel %vm975, %v2259, %v2259
      %v2262 = vshrl.u32 %v2147, 16
      %v2264 = vrot.slane %v2262, 3
      %v2265 = vshll.u32 %v2147, 16
      %v2267 = vrot.slane %v2265, 4
      %v2268 = vor.u32 %v2264, %v2267
      %v2270 = vshrl.u32 %v2149, 16
      %v2272 = vrot.slane %v2270, 3
      %v2273 = vshll.u32 %v2149, 16
      %v2275 = vrot.slane %v2273, 4
      %v2276 = vor.u32 %v2272, %v2275
      %v2277 = vsel %vm975, %v2268, %v2276
      %v2279 = vshrl.u32 %v1924, 16
      %v2281 = vrot.slane %v2279, 3
      %v2282 = vshll.u32 %v1924, 16
      %v2284 = vrot.slane %v2282, 4
      %v2285 = vor.u32 %v2281, %v2284
      %v2287 = vshrl.u32 %v1925, 16
      %v2289 = vrot.slane %v2287, 3
      %v2290 = vshll.u32 %v1925, 16
      %v2292 = vrot.slane %v2290, 4
      %v2293 = vor.u32 %v2289, %v2292
      %v2294 = vsel %vm975, %v2285, %v2293
      %v2296 = vshrl.u32 %v1991, 16
      %v2298 = vrot.slane %v2296, 3
      %v2299 = vshll.u32 %v1991, 16
      %v2301 = vrot.slane %v2299, 4
      %v2302 = vor.u32 %v2298, %v2301
      %v2303 = vsel %vm975, %v2302, %v2302
      %v2305 = vshrl.u32 %v2150, 16
      %v2307 = vrot.slane %v2305, 3
      %v2308 = vshll.u32 %v2150, 16
      %v2310 = vrot.slane %v2308, 4
      %v2311 = vor.u32 %v2307, %v2310
      %v2313 = vshrl.u32 %v2152, 16
      %v2315 = vrot.slane %v2313, 3
      %v2316 = vshll.u32 %v2152, 16
      %v2318 = vrot.slane %v2316, 4
      %v2319 = vor.u32 %v2315, %v2318
      %v2320 = vsel %vm975, %v2311, %v2319
      %v2322 = vshrl.u32 %v1926, 16
      %v2324 = vrot.slane %v2322, 3
      %v2325 = vshll.u32 %v1926, 16
      %v2327 = vrot.slane %v2325, 4
      %v2328 = vor.u32 %v2324, %v2327
      %v2330 = vshrl.u32 %v1927, 16
      %v2332 = vrot.slane %v2330, 3
      %v2333 = vshll.u32 %v1927, 16
      %v2335 = vrot.slane %v2333, 4
      %v2336 = vor.u32 %v2332, %v2335
      %v2337 = vsel %vm975, %v2328, %v2336
      %v2339 = vshrl.u32 %v1999, 16
      %v2341 = vrot.slane %v2339, 3
      %v2342 = vshll.u32 %v1999, 16
      %v2344 = vrot.slane %v2342, 4
      %v2345 = vor.u32 %v2341, %v2344
      %v2346 = vsel %vm975, %v2345, %v2345
      %v2348 = vshrl.u32 %v2153, 16
      %v2350 = vrot.slane %v2348, 3
      %v2351 = vshll.u32 %v2153, 16
      %v2353 = vrot.slane %v2351, 4
      %v2354 = vor.u32 %v2350, %v2353
      %v2356 = vshrl.u32 %v2155, 16
      %v2358 = vrot.slane %v2356, 3
      %v2359 = vshll.u32 %v2155, 16
      %v2361 = vrot.slane %v2359, 4
      %v2362 = vor.u32 %v2358, %v2361
      %v2363 = vsel %vm975, %v2354, %v2362
      %v2365 = vshrl.u32 %v1928, 16
      %v2367 = vrot.slane %v2365, 3
      %v2368 = vshll.u32 %v1928, 16
      %v2370 = vrot.slane %v2368, 4
      %v2371 = vor.u32 %v2367, %v2370
      %v2373 = vshrl.u32 %v1929, 16
      %v2375 = vrot.slane %v2373, 3
      %v2376 = vshll.u32 %v1929, 16
      %v2378 = vrot.slane %v2376, 4
      %v2379 = vor.u32 %v2375, %v2378
      %v2380 = vsel %vm975, %v2371, %v2379
      %v2382 = vshrl.u32 %v2007, 16
      %v2384 = vrot.slane %v2382, 3
      %v2385 = vshll.u32 %v2007, 16
      %v2387 = vrot.slane %v2385, 4
      %v2388 = vor.u32 %v2384, %v2387
      %v2389 = vsel %vm975, %v2388, %v2388
      %v2391 = vshrl.u32 %v2156, 16
      %v2393 = vrot.slane %v2391, 3
      %v2394 = vshll.u32 %v2156, 16
      %v2396 = vrot.slane %v2394, 4
      %v2397 = vor.u32 %v2393, %v2396
      %v2399 = vshrl.u32 %v2158, 16
      %v2401 = vrot.slane %v2399, 3
      %v2402 = vshll.u32 %v2158, 16
      %v2404 = vrot.slane %v2402, 4
      %v2405 = vor.u32 %v2401, %v2404
      %v2406 = vsel %vm975, %v2397, %v2405
      %v2408 = vshrl.u32 %v1930, 16
      %v2410 = vrot.slane %v2408, 3
      %v2411 = vshll.u32 %v1930, 16
      %v2413 = vrot.slane %v2411, 4
      %v2414 = vor.u32 %v2410, %v2413
      %v2416 = vshrl.u32 %v1931, 16
      %v2418 = vrot.slane %v2416, 3
      %v2419 = vshll.u32 %v1931, 16
      %v2421 = vrot.slane %v2419, 4
      %v2422 = vor.u32 %v2418, %v2421
      %v2423 = vsel %vm975, %v2414, %v2422
      %v2425 = vshrl.u32 %v2015, 16
      %v2427 = vrot.slane %v2425, 3
      %v2428 = vshll.u32 %v2015, 16
      %v2430 = vrot.slane %v2428, 4
      %v2431 = vor.u32 %v2427, %v2430
      %v2432 = vsel %vm975, %v2431, %v2431
      %v2434 = vshrl.u32 %v2159, 16
      %v2436 = vrot.slane %v2434, 3
      %v2437 = vshll.u32 %v2159, 16
      %v2439 = vrot.slane %v2437, 4
      %v2440 = vor.u32 %v2436, %v2439
      %v2442 = vshrl.u32 %v2161, 16
      %v2444 = vrot.slane %v2442, 3
      %v2445 = vshll.u32 %v2161, 16
      %v2447 = vrot.slane %v2445, 4
      %v2448 = vor.u32 %v2444, %v2447
      %v2449 = vsel %vm975, %v2440, %v2448
      %v2451 = vshrl.u32 %v1932, 16
      %v2453 = vrot.slane %v2451, 3
      %v2454 = vshll.u32 %v1932, 16
      %v2456 = vrot.slane %v2454, 4
      %v2457 = vor.u32 %v2453, %v2456
      %v2459 = vshrl.u32 %v1933, 16
      %v2461 = vrot.slane %v2459, 3
      %v2462 = vshll.u32 %v1933, 16
      %v2464 = vrot.slane %v2462, 4
      %v2465 = vor.u32 %v2461, %v2464
      %v2466 = vsel %vm975, %v2457, %v2465
      %v2468 = vshrl.u32 %v2023, 16
      %v2470 = vrot.slane %v2468, 3
      %v2471 = vshll.u32 %v2023, 16
      %v2473 = vrot.slane %v2471, 4
      %v2474 = vor.u32 %v2470, %v2473
      %v2475 = vsel %vm975, %v2474, %v2474
      %v2477 = vshrl.u32 %v2162, 16
      %v2479 = vrot.slane %v2477, 3
      %v2480 = vshll.u32 %v2162, 16
      %v2482 = vrot.slane %v2480, 4
      %v2483 = vor.u32 %v2479, %v2482
      %v2485 = vshrl.u32 %v2164, 16
      %v2487 = vrot.slane %v2485, 3
      %v2488 = vshll.u32 %v2164, 16
      %v2490 = vrot.slane %v2488, 4
      %v2491 = vor.u32 %v2487, %v2490
      %v2492 = vsel %vm975, %v2483, %v2491
      %v2494 = vshrl.u32 %v1934, 16
      %v2496 = vrot.slane %v2494, 3
      %v2497 = vshll.u32 %v1934, 16
      %v2499 = vrot.slane %v2497, 4
      %v2500 = vor.u32 %v2496, %v2499
      %v2502 = vshrl.u32 %v1935, 16
      %v2504 = vrot.slane %v2502, 3
      %v2505 = vshll.u32 %v1935, 16
      %v2507 = vrot.slane %v2505, 4
      %v2508 = vor.u32 %v2504, %v2507
      %v2509 = vsel %vm975, %v2500, %v2508
      %v2511 = vshrl.u32 %v2031, 16
      %v2513 = vrot.slane %v2511, 3
      %v2514 = vshll.u32 %v2031, 16
      %v2516 = vrot.slane %v2514, 4
      %v2517 = vor.u32 %v2513, %v2516
      %v2518 = vsel %vm975, %v2517, %v2517
      %v2520 = vshrl.u32 %v2165, 16
      %v2522 = vrot.slane %v2520, 3
      %v2523 = vshll.u32 %v2165, 16
      %v2525 = vrot.slane %v2523, 4
      %v2526 = vor.u32 %v2522, %v2525
      %v2528 = vshrl.u32 %v2167, 16
      %v2530 = vrot.slane %v2528, 3
      %v2531 = vshll.u32 %v2167, 16
      %v2533 = vrot.slane %v2531, 4
      %v2534 = vor.u32 %v2530, %v2533
      %v2535 = vsel %vm975, %v2526, %v2534
      %v2537 = vshrl.u32 %v1936, 16
      %v2539 = vrot.slane %v2537, 3
      %v2540 = vshll.u32 %v1936, 16
      %v2542 = vrot.slane %v2540, 4
      %v2543 = vor.u32 %v2539, %v2542
      %v2545 = vshrl.u32 %v1937, 16
      %v2547 = vrot.slane %v2545, 3
      %v2548 = vshll.u32 %v1937, 16
      %v2550 = vrot.slane %v2548, 4
      %v2551 = vor.u32 %v2547, %v2550
      %v2552 = vsel %vm975, %v2543, %v2551
      %v2554 = vshrl.u32 %v2039, 16
      %v2556 = vrot.slane %v2554, 3
      %v2557 = vshll.u32 %v2039, 16
      %v2559 = vrot.slane %v2557, 4
      %v2560 = vor.u32 %v2556, %v2559
      %v2561 = vsel %vm975, %v2560, %v2560
      %v2563 = vshrl.u32 %v2168, 16
      %v2565 = vrot.slane %v2563, 3
      %v2566 = vshll.u32 %v2168, 16
      %v2568 = vrot.slane %v2566, 4
      %v2569 = vor.u32 %v2565, %v2568
      %v2571 = vshrl.u32 %v2170, 16
      %v2573 = vrot.slane %v2571, 3
      %v2574 = vshll.u32 %v2170, 16
      %v2576 = vrot.slane %v2574, 4
      %v2577 = vor.u32 %v2573, %v2576
      %v2578 = vsel %vm975, %v2569, %v2577
      %v2580 = vshrl.u32 %v1938, 16
      %v2582 = vrot.slane %v2580, 3
      %v2583 = vshll.u32 %v1938, 16
      %v2585 = vrot.slane %v2583, 4
      %v2586 = vor.u32 %v2582, %v2585
      %v2588 = vshrl.u32 %v1939, 16
      %v2590 = vrot.slane %v2588, 3
      %v2591 = vshll.u32 %v1939, 16
      %v2593 = vrot.slane %v2591, 4
      %v2594 = vor.u32 %v2590, %v2593
      %v2595 = vsel %vm975, %v2586, %v2594
      %v2597 = vshrl.u32 %v2047, 16
      %v2599 = vrot.slane %v2597, 3
      %v2600 = vshll.u32 %v2047, 16
      %v2602 = vrot.slane %v2600, 4
      %v2603 = vor.u32 %v2599, %v2602
      %v2604 = vsel %vm975, %v2603, %v2603
      %v2606 = vshrl.u32 %v2171, 16
      %v2608 = vrot.slane %v2606, 3
      %v2609 = vshll.u32 %v2171, 16
      %v2611 = vrot.slane %v2609, 4
      %v2612 = vor.u32 %v2608, %v2611
      %v2614 = vshrl.u32 %v2173, 16
      %v2616 = vrot.slane %v2614, 3
      %v2617 = vshll.u32 %v2173, 16
      %v2619 = vrot.slane %v2617, 4
      %v2620 = vor.u32 %v2616, %v2619
      %v2621 = vsel %vm975, %v2612, %v2620
      %v2623 = vshrl.u32 %v1940, 16
      %v2625 = vrot.slane %v2623, 3
      %v2626 = vshll.u32 %v1940, 16
      %v2628 = vrot.slane %v2626, 4
      %v2629 = vor.u32 %v2625, %v2628
      %v2631 = vshrl.u32 %v1941, 16
      %v2633 = vrot.slane %v2631, 3
      %v2634 = vshll.u32 %v1941, 16
      %v2636 = vrot.slane %v2634, 4
      %v2637 = vor.u32 %v2633, %v2636
      %v2638 = vsel %vm975, %v2629, %v2637
      %v2640 = vshrl.u32 %v2055, 16
      %v2642 = vrot.slane %v2640, 3
      %v2643 = vshll.u32 %v2055, 16
      %v2645 = vrot.slane %v2643, 4
      %v2646 = vor.u32 %v2642, %v2645
      %v2647 = vsel %vm975, %v2646, %v2646
      %v2649 = vshrl.u32 %v2174, 16
      %v2651 = vrot.slane %v2649, 3
      %v2652 = vshll.u32 %v2174, 16
      %v2654 = vrot.slane %v2652, 4
      %v2655 = vor.u32 %v2651, %v2654
      %v2657 = vshrl.u32 %v2176, 16
      %v2659 = vrot.slane %v2657, 3
      %v2660 = vshll.u32 %v2176, 16
      %v2662 = vrot.slane %v2660, 4
      %v2663 = vor.u32 %v2659, %v2662
      %v2664 = vsel %vm975, %v2655, %v2663
      %v2666 = vshrl.u32 %v1942, 16
      %v2668 = vrot.slane %v2666, 3
      %v2669 = vshll.u32 %v1942, 16
      %v2671 = vrot.slane %v2669, 4
      %v2672 = vor.u32 %v2668, %v2671
      %v2674 = vshrl.u32 %v1943, 16
      %v2676 = vrot.slane %v2674, 3
      %v2677 = vshll.u32 %v1943, 16
      %v2679 = vrot.slane %v2677, 4
      %v2680 = vor.u32 %v2676, %v2679
      %v2681 = vsel %vm975, %v2672, %v2680
      %v2683 = vshrl.u32 %v2063, 16
      %v2685 = vrot.slane %v2683, 3
      %v2686 = vshll.u32 %v2063, 16
      %v2688 = vrot.slane %v2686, 4
      %v2689 = vor.u32 %v2685, %v2688
      %v2690 = vsel %vm975, %v2689, %v2689
      %v2692 = vshrl.u32 %v2177, 16
      %v2694 = vrot.slane %v2692, 3
      %v2695 = vshll.u32 %v2177, 16
      %v2697 = vrot.slane %v2695, 4
      %v2698 = vor.u32 %v2694, %v2697
      %v2700 = vshrl.u32 %v2179, 16
      %v2702 = vrot.slane %v2700, 3
      %v2703 = vshll.u32 %v2179, 16
      %v2705 = vrot.slane %v2703, 4
      %v2706 = vor.u32 %v2702, %v2705
      %v2707 = vsel %vm975, %v2698, %v2706
      %v2709 = vshrl.u32 %v1944, 16
      %v2711 = vrot.slane %v2709, 3
      %v2712 = vshll.u32 %v1944, 16
      %v2714 = vrot.slane %v2712, 4
      %v2715 = vor.u32 %v2711, %v2714
      %v2717 = vshrl.u32 %v1945, 16
      %v2719 = vrot.slane %v2717, 3
      %v2720 = vshll.u32 %v1945, 16
      %v2722 = vrot.slane %v2720, 4
      %v2723 = vor.u32 %v2719, %v2722
      %v2724 = vsel %vm975, %v2715, %v2723
      %v2726 = vshrl.u32 %v2071, 16
      %v2728 = vrot.slane %v2726, 3
      %v2729 = vshll.u32 %v2071, 16
      %v2731 = vrot.slane %v2729, 4
      %v2732 = vor.u32 %v2728, %v2731
      %v2733 = vsel %vm975, %v2732, %v2732
      %v2735 = vshrl.u32 %v2180, 16
      %v2737 = vrot.slane %v2735, 3
      %v2738 = vshll.u32 %v2180, 16
      %v2740 = vrot.slane %v2738, 4
      %v2741 = vor.u32 %v2737, %v2740
      %v2743 = vshrl.u32 %v2182, 16
      %v2745 = vrot.slane %v2743, 3
      %v2746 = vshll.u32 %v2182, 16
      %v2748 = vrot.slane %v2746, 4
      %v2749 = vor.u32 %v2745, %v2748
      %v2750 = vsel %vm975, %v2741, %v2749
      %v2752 = vshrl.u32 %v1946, 16
      %v2754 = vrot.slane %v2752, 3
      %v2755 = vshll.u32 %v1946, 16
      %v2757 = vrot.slane %v2755, 4
      %v2758 = vor.u32 %v2754, %v2757
      %v2760 = vshrl.u32 %v1947, 16
      %v2762 = vrot.slane %v2760, 3
      %v2763 = vshll.u32 %v1947, 16
      %v2765 = vrot.slane %v2763, 4
      %v2766 = vor.u32 %v2762, %v2765
      %v2767 = vsel %vm975, %v2758, %v2766
      %v2769 = vshrl.u32 %v2079, 16
      %v2771 = vrot.slane %v2769, 3
      %v2772 = vshll.u32 %v2079, 16
      %v2774 = vrot.slane %v2772, 4
      %v2775 = vor.u32 %v2771, %v2774
      %v2776 = vsel %vm975, %v2775, %v2775
      %v2778 = vshrl.u32 %v2183, 16
      %v2780 = vrot.slane %v2778, 3
      %v2781 = vshll.u32 %v2183, 16
      %v2783 = vrot.slane %v2781, 4
      %v2784 = vor.u32 %v2780, %v2783
      %v2786 = vshrl.u32 %v2185, 16
      %v2788 = vrot.slane %v2786, 3
      %v2789 = vshll.u32 %v2185, 16
      %v2791 = vrot.slane %v2789, 4
      %v2792 = vor.u32 %v2788, %v2791
      %v2793 = vsel %vm975, %v2784, %v2792
      %v2795 = vshrl.u32 %v1948, 16
      %v2797 = vrot.slane %v2795, 3
      %v2798 = vshll.u32 %v1948, 16
      %v2800 = vrot.slane %v2798, 4
      %v2801 = vor.u32 %v2797, %v2800
      %v2803 = vshrl.u32 %v1949, 16
      %v2805 = vrot.slane %v2803, 3
      %v2806 = vshll.u32 %v1949, 16
      %v2808 = vrot.slane %v2806, 4
      %v2809 = vor.u32 %v2805, %v2808
      %v2810 = vsel %vm975, %v2801, %v2809
      %v2812 = vshrl.u32 %v2087, 16
      %v2814 = vrot.slane %v2812, 3
      %v2815 = vshll.u32 %v2087, 16
      %v2817 = vrot.slane %v2815, 4
      %v2818 = vor.u32 %v2814, %v2817
      %v2819 = vsel %vm975, %v2818, %v2818
      %v2821 = vshrl.u32 %v2186, 16
      %v2823 = vrot.slane %v2821, 3
      %v2824 = vshll.u32 %v2186, 16
      %v2826 = vrot.slane %v2824, 4
      %v2827 = vor.u32 %v2823, %v2826
      %v2829 = vshrl.u32 %v2188, 16
      %v2831 = vrot.slane %v2829, 3
      %v2832 = vshll.u32 %v2188, 16
      %v2834 = vrot.slane %v2832, 4
      %v2835 = vor.u32 %v2831, %v2834
      %v2836 = vsel %vm975, %v2827, %v2835
      %v2838 = vshrl.u32 %v1950, 16
      %v2840 = vrot.slane %v2838, 3
      %v2841 = vshll.u32 %v1950, 16
      %v2843 = vrot.slane %v2841, 4
      %v2844 = vor.u32 %v2840, %v2843
      %v2846 = vshrl.u32 %v1951, 16
      %v2848 = vrot.slane %v2846, 3
      %v2849 = vshll.u32 %v1951, 16
      %v2851 = vrot.slane %v2849, 4
      %v2852 = vor.u32 %v2848, %v2851
      %v2853 = vsel %vm975, %v2844, %v2852
      %v2855 = vshrl.u32 %v2095, 16
      %v2857 = vrot.slane %v2855, 3
      %v2858 = vshll.u32 %v2095, 16
      %v2860 = vrot.slane %v2858, 4
      %v2861 = vor.u32 %v2857, %v2860
      %v2862 = vsel %vm975, %v2861, %v2861
      %v2864 = vshrl.u32 %v2189, 16
      %v2866 = vrot.slane %v2864, 3
      %v2867 = vshll.u32 %v2189, 16
      %v2869 = vrot.slane %v2867, 4
      %v2870 = vor.u32 %v2866, %v2869
      %v2872 = vshrl.u32 %v2191, 16
      %v2874 = vrot.slane %v2872, 3
      %v2875 = vshll.u32 %v2191, 16
      %v2877 = vrot.slane %v2875, 4
      %v2878 = vor.u32 %v2874, %v2877
      %v2879 = vsel %vm975, %v2870, %v2878
      %s2928 = scalar_lea.vmem %s3, 192
      %v2929 = vld [vmem:[%s2928] sm:$0xf]
      %v2930 = vld [vmem:[%s2928 + $0x4] sm:$0xf]
      %v2931 = vld [vmem:[%s2928 + $0x8] sm:$0xf]
      %v2932 = vld [vmem:[%s2928 + $0xc] sm:$0xf]
      %v2933 = vld [vmem:[%s2928 + $0x10] sm:$0xf]
      %v2934 = vld [vmem:[%s2928 + $0x14] sm:$0xf]
      %v2935 = vld [vmem:[%s2928 + $0x18] sm:$0xf]
      %v2936 = vld [vmem:[%s2928 + $0x1c] sm:$0xf]
      %v2937 = vld [vmem:[%s2928 + $0x20] sm:$0xf]
      %v2938 = vld [vmem:[%s2928 + $0x24] sm:$0xf]
      %v2939 = vld [vmem:[%s2928 + $0x28] sm:$0xf]
      %v2940 = vld [vmem:[%s2928 + $0x2c] sm:$0xf]
      %v2941 = vld [vmem:[%s2928 + $0x30] sm:$0xf]
      %v2942 = vld [vmem:[%s2928 + $0x34] sm:$0xf]
      %v2943 = vld [vmem:[%s2928 + $0x38] sm:$0xf]
      %v2944 = vld [vmem:[%s2928 + $0x3c] sm:$0xf]
      %v2945 = vld [vmem:[%s2928 + $0x40] sm:$0xf]
      %v2946 = vld [vmem:[%s2928 + $0x44] sm:$0xf]
      %v2947 = vld [vmem:[%s2928 + $0x48] sm:$0xf]
      %v2948 = vld [vmem:[%s2928 + $0x4c] sm:$0xf]
      %v2949 = vld [vmem:[%s2928 + $0x50] sm:$0xf]
      %v2950 = vld [vmem:[%s2928 + $0x54] sm:$0xf]
      %v2951 = vld [vmem:[%s2928 + $0x58] sm:$0xf]
      %v2952 = vld [vmem:[%s2928 + $0x5c] sm:$0xf]
      %v2953 = vld [vmem:[%s2928 + $0x60] sm:$0xf]
      %v2954 = vld [vmem:[%s2928 + $0x64] sm:$0xf]
      %v2955 = vld [vmem:[%s2928 + $0x68] sm:$0xf]
      %v2956 = vld [vmem:[%s2928 + $0x6c] sm:$0xf]
      %v2957 = vld [vmem:[%s2928 + $0x70] sm:$0xf]
      %v2958 = vld [vmem:[%s2928 + $0x74] sm:$0xf]
      %v2959 = vld [vmem:[%s2928 + $0x78] sm:$0xf]
      %v2960 = vld [vmem:[%s2928 + $0x7c] sm:$0xf]
      %v2961 = vld [vmem:[%s2928 + $0x80] sm:$0xf]
      %v2962 = vld [vmem:[%s2928 + $0x84] sm:$0xf]
      %v2963 = vld [vmem:[%s2928 + $0x88] sm:$0xf]
      %v2964 = vld [vmem:[%s2928 + $0x8c] sm:$0xf]
      %v2965 = vld [vmem:[%s2928 + $0x90] sm:$0xf]
      %v2966 = vld [vmem:[%s2928 + $0x94] sm:$0xf]
      %v2967 = vld [vmem:[%s2928 + $0x98] sm:$0xf]
      %v2968 = vld [vmem:[%s2928 + $0x9c] sm:$0xf]
      %v2969 = vld [vmem:[%s2928 + $0xa0] sm:$0xf]
      %v2970 = vld [vmem:[%s2928 + $0xa4] sm:$0xf]
      %v2971 = vld [vmem:[%s2928 + $0xa8] sm:$0xf]
      %v2972 = vld [vmem:[%s2928 + $0xac] sm:$0xf]
      %v2973 = vld [vmem:[%s2928 + $0xb0] sm:$0xf]
      %v2974 = vld [vmem:[%s2928 + $0xb4] sm:$0xf]
      %v2975 = vld [vmem:[%s2928 + $0xb8] sm:$0xf]
      %v2976 = vld [vmem:[%s2928 + $0xbc] sm:$0xf]
      %v3025 = vunpack.c.l.b16 %v2929
      %v3026 = vunpack.c.l.b16 %v2930
      %v3027 = vunpack.c.l.b16 %v2931
      %v3028 = vunpack.c.l.b16 %v2932
      %v3029 = vunpack.c.l.b16 %v2933
      %v3030 = vunpack.c.l.b16 %v2934
      %v3031 = vunpack.c.l.b16 %v2935
      %v3032 = vunpack.c.l.b16 %v2936
      %v3033 = vunpack.c.l.b16 %v2937
      %v3034 = vunpack.c.l.b16 %v2938
      %v3035 = vunpack.c.l.b16 %v2939
      %v3036 = vunpack.c.l.b16 %v2940
      %v3037 = vunpack.c.l.b16 %v2941
      %v3038 = vunpack.c.l.b16 %v2942
      %v3039 = vunpack.c.l.b16 %v2943
      %v3040 = vunpack.c.l.b16 %v2944
      %v3041 = vunpack.c.l.b16 %v2945
      %v3042 = vunpack.c.l.b16 %v2946
      %v3043 = vunpack.c.l.b16 %v2947
      %v3044 = vunpack.c.l.b16 %v2948
      %v3045 = vunpack.c.l.b16 %v2949
      %v3046 = vunpack.c.l.b16 %v2950
      %v3047 = vunpack.c.l.b16 %v2951
      %v3048 = vunpack.c.l.b16 %v2952
      %v3049 = vunpack.c.l.b16 %v2953
      %v3050 = vunpack.c.l.b16 %v2954
      %v3051 = vunpack.c.l.b16 %v2955
      %v3052 = vunpack.c.l.b16 %v2956
      %v3053 = vunpack.c.l.b16 %v2957
      %v3054 = vunpack.c.l.b16 %v2958
      %v3055 = vunpack.c.l.b16 %v2959
      %v3056 = vunpack.c.l.b16 %v2960
      %v3057 = vunpack.c.l.b16 %v2961
      %v3058 = vunpack.c.l.b16 %v2962
      %v3059 = vunpack.c.l.b16 %v2963
      %v3060 = vunpack.c.l.b16 %v2964
      %v3061 = vunpack.c.l.b16 %v2965
      %v3062 = vunpack.c.l.b16 %v2966
      %v3063 = vunpack.c.l.b16 %v2967
      %v3064 = vunpack.c.l.b16 %v2968
      %v3065 = vunpack.c.l.b16 %v2969
      %v3066 = vunpack.c.l.b16 %v2970
      %v3067 = vunpack.c.l.b16 %v2971
      %v3068 = vunpack.c.l.b16 %v2972
      %v3069 = vunpack.c.l.b16 %v2973
      %v3070 = vunpack.c.l.b16 %v2974
      %v3071 = vunpack.c.l.b16 %v2975
      %v3072 = vunpack.c.l.b16 %v2976
      %v3073 = vpack.c.b16 %v3026, %v3025
      %v3074 = vpack.c.b16 %v3028, %v3027
      %v3075 = vpack.c.b16 %v3030, %v3029
      %v3076 = vpack.c.b16 %v3032, %v3031
      %v3077 = vpack.c.b16 %v3034, %v3033
      %v3078 = vpack.c.b16 %v3036, %v3035
      %v3079 = vpack.c.b16 %v3038, %v3037
      %v3080 = vpack.c.b16 %v3040, %v3039
      %v3081 = vpack.c.b16 %v3042, %v3041
      %v3082 = vpack.c.b16 %v3044, %v3043
      %v3083 = vpack.c.b16 %v3046, %v3045
      %v3084 = vpack.c.b16 %v3048, %v3047
      %v3085 = vpack.c.b16 %v3050, %v3049
      %v3086 = vpack.c.b16 %v3052, %v3051
      %v3087 = vpack.c.b16 %v3054, %v3053
      %v3088 = vpack.c.b16 %v3056, %v3055
      %v3089 = vpack.c.b16 %v3058, %v3057
      %v3090 = vpack.c.b16 %v3060, %v3059
      %v3091 = vpack.c.b16 %v3062, %v3061
      %v3092 = vpack.c.b16 %v3064, %v3063
      %v3093 = vpack.c.b16 %v3066, %v3065
      %v3094 = vpack.c.b16 %v3068, %v3067
      %v3095 = vpack.c.b16 %v3070, %v3069
      %v3096 = vpack.c.b16 %v3072, %v3071
      %3121 = vmatpush.bf16.msra.mxu0 %v3080
      %3122 = vmatpush.bf16.msra.mxu0 %v3079
      %3123 = vmatpush.bf16.msra.mxu0 %v3078
      %3124 = vmatpush.bf16.msra.mxu0 %v3077
      %3125 = vmatpush.bf16.msra.mxu0 %v3076
      %3126 = vmatpush.bf16.msra.mxu0 %v3075
      %3127 = vmatpush.bf16.msra.mxu0 %v3074
      %3128 = vmatpush.bf16.msra.mxu0 %v3073
      %3129 = vmatmul.bf16.gmra.mxu0 %v2208
      %v3130 = vpop.f32.mrf.mxu0
      %v3131 = vadd.f32 0.0, %v3130
      %v3132 = vpop.f32.mrf.mxu0
      %v3133 = vadd.f32 0.0, %v3132
      %3134 = vmatmul.bf16.gmra.mxu0 %v2251
      %v3135 = vpop.f32.mrf.mxu0
      %v3136 = vadd.f32 0.0, %v3135
      %v3137 = vpop.f32.mrf.mxu0
      %v3138 = vadd.f32 0.0, %v3137
      %3139 = vmatmul.bf16.gmra.mxu0 %v2294
      %v3140 = vpop.f32.mrf.mxu0
      %v3141 = vadd.f32 0.0, %v3140
      %v3142 = vpop.f32.mrf.mxu0
      %v3143 = vadd.f32 0.0, %v3142
      %3144 = vmatmul.bf16.gmra.mxu0 %v2337
      %v3145 = vpop.f32.mrf.mxu0
      %v3146 = vadd.f32 0.0, %v3145
      %v3147 = vpop.f32.mrf.mxu0
      %v3148 = vadd.f32 0.0, %v3147
      %3149 = vmatmul.bf16.gmra.mxu0 %v2380
      %v3150 = vpop.f32.mrf.mxu0
      %v3151 = vadd.f32 0.0, %v3150
      %v3152 = vpop.f32.mrf.mxu0
      %v3153 = vadd.f32 0.0, %v3152
      %3154 = vmatmul.bf16.gmra.mxu0 %v2423
      %v3155 = vpop.f32.mrf.mxu0
      %v3156 = vadd.f32 0.0, %v3155
      %v3157 = vpop.f32.mrf.mxu0
      %v3158 = vadd.f32 0.0, %v3157
      %3159 = vmatmul.bf16.gmra.mxu0 %v2466
      %v3160 = vpop.f32.mrf.mxu0
      %v3161 = vadd.f32 0.0, %v3160
      %v3162 = vpop.f32.mrf.mxu0
      %v3163 = vadd.f32 0.0, %v3162
      %3164 = vmatmul.bf16.gmra.mxu0 %v2509
      %v3165 = vpop.f32.mrf.mxu0
      %v3166 = vadd.f32 0.0, %v3165
      %v3167 = vpop.f32.mrf.mxu0
      %v3168 = vadd.f32 0.0, %v3167
      %3169 = vmatmul.bf16.gmra.mxu0 %v2552
      %v3170 = vpop.f32.mrf.mxu0
      %v3171 = vadd.f32 0.0, %v3170
      %v3172 = vpop.f32.mrf.mxu0
      %v3173 = vadd.f32 0.0, %v3172
      %3174 = vmatmul.bf16.gmra.mxu0 %v2595
      %v3175 = vpop.f32.mrf.mxu0
      %v3176 = vadd.f32 0.0, %v3175
      %v3177 = vpop.f32.mrf.mxu0
      %v3178 = vadd.f32 0.0, %v3177
      %3179 = vmatmul.bf16.gmra.mxu0 %v2638
      %v3180 = vpop.f32.mrf.mxu0
      %v3181 = vadd.f32 0.0, %v3180
      %v3182 = vpop.f32.mrf.mxu0
      %v3183 = vadd.f32 0.0, %v3182
      %3184 = vmatmul.bf16.gmra.mxu0 %v2681
      %v3185 = vpop.f32.mrf.mxu0
      %v3186 = vadd.f32 0.0, %v3185
      %v3187 = vpop.f32.mrf.mxu0
      %v3188 = vadd.f32 0.0, %v3187
      %3189 = vmatmul.bf16.gmra.mxu0 %v2724
      %v3190 = vpop.f32.mrf.mxu0
      %v3191 = vadd.f32 0.0, %v3190
      %v3192 = vpop.f32.mrf.mxu0
      %v3193 = vadd.f32 0.0, %v3192
      %3194 = vmatmul.bf16.gmra.mxu0 %v2767
      %v3195 = vpop.f32.mrf.mxu0
      %v3196 = vadd.f32 0.0, %v3195
      %v3197 = vpop.f32.mrf.mxu0
      %v3198 = vadd.f32 0.0, %v3197
      %3199 = vmatmul.bf16.gmra.mxu0 %v2810
      %v3200 = vpop.f32.mrf.mxu0
      %v3201 = vadd.f32 0.0, %v3200
      %v3202 = vpop.f32.mrf.mxu0
      %v3203 = vadd.f32 0.0, %v3202
      %3204 = vmatmul.bf16.gmra.mxu0 %v2853
      %v3205 = vpop.f32.mrf.mxu0
      %v3206 = vadd.f32 0.0, %v3205
      %v3207 = vpop.f32.mrf.mxu0
      %v3208 = vadd.f32 0.0, %v3207
      %3209 = vdwg.mxu0
      %3210 = vmatpush.bf16.msra.mxu0 %v3088
      %3211 = vmatpush.bf16.msra.mxu0 %v3087
      %3212 = vmatpush.bf16.msra.mxu0 %v3086
      %3213 = vmatpush.bf16.msra.mxu0 %v3085
      %3214 = vmatpush.bf16.msra.mxu0 %v3084
      %3215 = vmatpush.bf16.msra.mxu0 %v3083
      %3216 = vmatpush.bf16.msra.mxu0 %v3082
      %3217 = vmatpush.bf16.msra.mxu0 %v3081
      %3218 = vmatmul.bf16.gmra.mxu0 %v2217
      %v3219 = vpop.f32.mrf.mxu0
      %v3220 = vadd.f32 %v3131, %v3219
      %v3221 = vpop.f32.mrf.mxu0
      %v3222 = vadd.f32 %v3133, %v3221
      %3223 = vmatmul.bf16.gmra.mxu0 %v2260
      %v3224 = vpop.f32.mrf.mxu0
      %v3225 = vadd.f32 %v3136, %v3224
      %v3226 = vpop.f32.mrf.mxu0
      %v3227 = vadd.f32 %v3138, %v3226
      %3228 = vmatmul.bf16.gmra.mxu0 %v2303
      %v3229 = vpop.f32.mrf.mxu0
      %v3230 = vadd.f32 %v3141, %v3229
      %v3231 = vpop.f32.mrf.mxu0
      %v3232 = vadd.f32 %v3143, %v3231
      %3233 = vmatmul.bf16.gmra.mxu0 %v2346
      %v3234 = vpop.f32.mrf.mxu0
      %v3235 = vadd.f32 %v3146, %v3234
      %v3236 = vpop.f32.mrf.mxu0
      %v3237 = vadd.f32 %v3148, %v3236
      %3238 = vmatmul.bf16.gmra.mxu0 %v2389
      %v3239 = vpop.f32.mrf.mxu0
      %v3240 = vadd.f32 %v3151, %v3239
      %v3241 = vpop.f32.mrf.mxu0
      %v3242 = vadd.f32 %v3153, %v3241
      %3243 = vmatmul.bf16.gmra.mxu0 %v2432
      %v3244 = vpop.f32.mrf.mxu0
      %v3245 = vadd.f32 %v3156, %v3244
      %v3246 = vpop.f32.mrf.mxu0
      %v3247 = vadd.f32 %v3158, %v3246
      %3248 = vmatmul.bf16.gmra.mxu0 %v2475
      %v3249 = vpop.f32.mrf.mxu0
      %v3250 = vadd.f32 %v3161, %v3249
      %v3251 = vpop.f32.mrf.mxu0
      %v3252 = vadd.f32 %v3163, %v3251
      %3253 = vmatmul.bf16.gmra.mxu0 %v2518
      %v3254 = vpop.f32.mrf.mxu0
      %v3255 = vadd.f32 %v3166, %v3254
      %v3256 = vpop.f32.mrf.mxu0
      %v3257 = vadd.f32 %v3168, %v3256
      %3258 = vmatmul.bf16.gmra.mxu0 %v2561
      %v3259 = vpop.f32.mrf.mxu0
      %v3260 = vadd.f32 %v3171, %v3259
      %v3261 = vpop.f32.mrf.mxu0
      %v3262 = vadd.f32 %v3173, %v3261
      %3263 = vmatmul.bf16.gmra.mxu0 %v2604
      %v3264 = vpop.f32.mrf.mxu0
      %v3265 = vadd.f32 %v3176, %v3264
      %v3266 = vpop.f32.mrf.mxu0
      %v3267 = vadd.f32 %v3178, %v3266
      %3268 = vmatmul.bf16.gmra.mxu0 %v2647
      %v3269 = vpop.f32.mrf.mxu0
      %v3270 = vadd.f32 %v3181, %v3269
      %v3271 = vpop.f32.mrf.mxu0
      %v3272 = vadd.f32 %v3183, %v3271
      %3273 = vmatmul.bf16.gmra.mxu0 %v2690
      %v3274 = vpop.f32.mrf.mxu0
      %v3275 = vadd.f32 %v3186, %v3274
      %v3276 = vpop.f32.mrf.mxu0
      %v3277 = vadd.f32 %v3188, %v3276
      %3278 = vmatmul.bf16.gmra.mxu0 %v2733
      %v3279 = vpop.f32.mrf.mxu0
      %v3280 = vadd.f32 %v3191, %v3279
      %v3281 = vpop.f32.mrf.mxu0
      %v3282 = vadd.f32 %v3193, %v3281
      %3283 = vmatmul.bf16.gmra.mxu0 %v2776
      %v3284 = vpop.f32.mrf.mxu0
      %v3285 = vadd.f32 %v3196, %v3284
      %v3286 = vpop.f32.mrf.mxu0
      %v3287 = vadd.f32 %v3198, %v3286
      %3288 = vmatmul.bf16.gmra.mxu0 %v2819
      %v3289 = vpop.f32.mrf.mxu0
      %v3290 = vadd.f32 %v3201, %v3289
      %v3291 = vpop.f32.mrf.mxu0
      %v3292 = vadd.f32 %v3203, %v3291
      %3293 = vmatmul.bf16.gmra.mxu0 %v2862
      %v3294 = vpop.f32.mrf.mxu0
      %v3295 = vadd.f32 %v3206, %v3294
      %v3296 = vpop.f32.mrf.mxu0
      %v3297 = vadd.f32 %v3208, %v3296
      %3298 = vdwg.mxu0
      %3299 = vmatpush.bf16.msra.mxu0 %v3096
      %3300 = vmatpush.bf16.msra.mxu0 %v3095
      %3301 = vmatpush.bf16.msra.mxu0 %v3094
      %3302 = vmatpush.bf16.msra.mxu0 %v3093
      %3303 = vmatpush.bf16.msra.mxu0 %v3092
      %3304 = vmatpush.bf16.msra.mxu0 %v3091
      %3305 = vmatpush.bf16.msra.mxu0 %v3090
      %3306 = vmatpush.bf16.msra.mxu0 %v3089
      %3307 = vmatmul.bf16.gmra.mxu0 %v2234
      %v3308 = vpop.f32.mrf.mxu0
      %v3309 = vadd.f32 %v3220, %v3308
      %v3310 = vpop.f32.mrf.mxu0
      %v3311 = vadd.f32 %v3222, %v3310
      %3312 = vmatmul.bf16.gmra.mxu0 %v2277
      %v3313 = vpop.f32.mrf.mxu0
      %v3314 = vadd.f32 %v3225, %v3313
      %v3315 = vpop.f32.mrf.mxu0
      %v3316 = vadd.f32 %v3227, %v3315
      %3317 = vmatmul.bf16.gmra.mxu0 %v2320
      %v3318 = vpop.f32.mrf.mxu0
      %v3319 = vadd.f32 %v3230, %v3318
      %v3320 = vpop.f32.mrf.mxu0
      %v3321 = vadd.f32 %v3232, %v3320
      %3322 = vmatmul.bf16.gmra.mxu0 %v2363
      %v3323 = vpop.f32.mrf.mxu0
      %v3324 = vadd.f32 %v3235, %v3323
      %v3325 = vpop.f32.mrf.mxu0
      %v3326 = vadd.f32 %v3237, %v3325
      %3327 = vmatmul.bf16.gmra.mxu0 %v2406
      %v3328 = vpop.f32.mrf.mxu0
      %v3329 = vadd.f32 %v3240, %v3328
      %v3330 = vpop.f32.mrf.mxu0
      %v3331 = vadd.f32 %v3242, %v3330
      %3332 = vmatmul.bf16.gmra.mxu0 %v2449
      %v3333 = vpop.f32.mrf.mxu0
      %v3334 = vadd.f32 %v3245, %v3333
      %v3335 = vpop.f32.mrf.mxu0
      %v3336 = vadd.f32 %v3247, %v3335
      %3337 = vmatmul.bf16.gmra.mxu0 %v2492
      %v3338 = vpop.f32.mrf.mxu0
      %v3339 = vadd.f32 %v3250, %v3338
      %v3340 = vpop.f32.mrf.mxu0
      %v3341 = vadd.f32 %v3252, %v3340
      %3342 = vmatmul.bf16.gmra.mxu0 %v2535
      %v3343 = vpop.f32.mrf.mxu0
      %v3344 = vadd.f32 %v3255, %v3343
      %v3345 = vpop.f32.mrf.mxu0
      %v3346 = vadd.f32 %v3257, %v3345
      %3347 = vmatmul.bf16.gmra.mxu0 %v2578
      %v3348 = vpop.f32.mrf.mxu0
      %v3349 = vadd.f32 %v3260, %v3348
      %v3350 = vpop.f32.mrf.mxu0
      %v3351 = vadd.f32 %v3262, %v3350
      %3352 = vmatmul.bf16.gmra.mxu0 %v2621
      %v3353 = vpop.f32.mrf.mxu0
      %v3354 = vadd.f32 %v3265, %v3353
      %v3355 = vpop.f32.mrf.mxu0
      %v3356 = vadd.f32 %v3267, %v3355
      %3357 = vmatmul.bf16.gmra.mxu0 %v2664
      %v3358 = vpop.f32.mrf.mxu0
      %v3359 = vadd.f32 %v3270, %v3358
      %v3360 = vpop.f32.mrf.mxu0
      %v3361 = vadd.f32 %v3272, %v3360
      %3362 = vmatmul.bf16.gmra.mxu0 %v2707
      %v3363 = vpop.f32.mrf.mxu0
      %v3364 = vadd.f32 %v3275, %v3363
      %v3365 = vpop.f32.mrf.mxu0
      %v3366 = vadd.f32 %v3277, %v3365
      %3367 = vmatmul.bf16.gmra.mxu0 %v2750
      %v3368 = vpop.f32.mrf.mxu0
      %v3369 = vadd.f32 %v3280, %v3368
      %v3370 = vpop.f32.mrf.mxu0
      %v3371 = vadd.f32 %v3282, %v3370
      %3372 = vmatmul.bf16.gmra.mxu0 %v2793
      %v3373 = vpop.f32.mrf.mxu0
      %v3374 = vadd.f32 %v3285, %v3373
      %v3375 = vpop.f32.mrf.mxu0
      %v3376 = vadd.f32 %v3287, %v3375
      %3377 = vmatmul.bf16.gmra.mxu0 %v2836
      %v3378 = vpop.f32.mrf.mxu0
      %v3379 = vadd.f32 %v3290, %v3378
      %v3380 = vpop.f32.mrf.mxu0
      %v3381 = vadd.f32 %v3292, %v3380
      %3382 = vmatmul.bf16.gmra.mxu0 %v2879
      %v3383 = vpop.f32.mrf.mxu0
      %v3384 = vadd.f32 %v3295, %v3383
      %v3385 = vpop.f32.mrf.mxu0
      %v3386 = vadd.f32 %v3297, %v3385
      %3387 = vdwg.mxu0
      %v3436 = vunpack.c.l.b16 %v1712
      %v3437 = vunpack.c.l.b16 %v1713
      %v3438 = vunpack.c.l.b16 %v1714
      %v3439 = vunpack.c.l.b16 %v1715
      %v3440 = vunpack.c.l.b16 %v1716
      %v3441 = vunpack.c.l.b16 %v1717
      %v3442 = vunpack.c.l.b16 %v1718
      %v3443 = vunpack.c.l.b16 %v1719
      %v3444 = vunpack.c.l.b16 %v1720
      %v3445 = vunpack.c.l.b16 %v1721
      %v3446 = vunpack.c.l.b16 %v1722
      %v3447 = vunpack.c.l.b16 %v1723
      %v3448 = vunpack.c.l.b16 %v1724
      %v3449 = vunpack.c.l.b16 %v1725
      %v3450 = vunpack.c.l.b16 %v1726
      %v3451 = vunpack.c.l.b16 %v1727
      %v3452 = vunpack.c.l.b16 %v1728
      %v3453 = vunpack.c.l.b16 %v1729
      %v3454 = vunpack.c.l.b16 %v1730
      %v3455 = vunpack.c.l.b16 %v1731
      %v3456 = vunpack.c.l.b16 %v1732
      %v3457 = vunpack.c.l.b16 %v1733
      %v3458 = vunpack.c.l.b16 %v1734
      %v3459 = vunpack.c.l.b16 %v1735
      %v3460 = vunpack.c.l.b16 %v1736
      %v3461 = vunpack.c.l.b16 %v1737
      %v3462 = vunpack.c.l.b16 %v1738
      %v3463 = vunpack.c.l.b16 %v1739
      %v3464 = vunpack.c.l.b16 %v1740
      %v3465 = vunpack.c.l.b16 %v1741
      %v3466 = vunpack.c.l.b16 %v1742
      %v3467 = vunpack.c.l.b16 %v1743
      %v3468 = vunpack.c.l.b16 %v1744
      %v3469 = vunpack.c.l.b16 %v1745
      %v3470 = vunpack.c.l.b16 %v1746
      %v3471 = vunpack.c.l.b16 %v1747
      %v3472 = vunpack.c.l.b16 %v1748
      %v3473 = vunpack.c.l.b16 %v1749
      %v3474 = vunpack.c.l.b16 %v1750
      %v3475 = vunpack.c.l.b16 %v1751
      %v3476 = vunpack.c.l.b16 %v1752
      %v3477 = vunpack.c.l.b16 %v1753
      %v3478 = vunpack.c.l.b16 %v1754
      %v3479 = vunpack.c.l.b16 %v1755
      %v3480 = vunpack.c.l.b16 %v1756
      %v3481 = vunpack.c.l.b16 %v1757
      %v3482 = vunpack.c.l.b16 %v1758
      %v3483 = vunpack.c.l.b16 %v1759
      %v3484 = vpack.c.b16 %v3437, %v3436
      %v3485 = vpack.c.b16 %v3439, %v3438
      %v3486 = vpack.c.b16 %v3441, %v3440
      %v3487 = vpack.c.b16 %v3443, %v3442
      %v3488 = vpack.c.b16 %v3445, %v3444
      %v3489 = vpack.c.b16 %v3447, %v3446
      %v3490 = vpack.c.b16 %v3449, %v3448
      %v3491 = vpack.c.b16 %v3451, %v3450
      %v3492 = vpack.c.b16 %v3453, %v3452
      %v3493 = vpack.c.b16 %v3455, %v3454
      %v3494 = vpack.c.b16 %v3457, %v3456
      %v3495 = vpack.c.b16 %v3459, %v3458
      %v3496 = vpack.c.b16 %v3461, %v3460
      %v3497 = vpack.c.b16 %v3463, %v3462
      %v3498 = vpack.c.b16 %v3465, %v3464
      %v3499 = vpack.c.b16 %v3467, %v3466
      %v3500 = vpack.c.b16 %v3469, %v3468
      %v3501 = vpack.c.b16 %v3471, %v3470
      %v3502 = vpack.c.b16 %v3473, %v3472
      %v3503 = vpack.c.b16 %v3475, %v3474
      %v3504 = vpack.c.b16 %v3477, %v3476
      %v3505 = vpack.c.b16 %v3479, %v3478
      %v3506 = vpack.c.b16 %v3481, %v3480
      %v3507 = vpack.c.b16 %v3483, %v3482
      %3532 = vmatpush.bf16.msra.mxu0 %v3491
      %3533 = vmatpush.bf16.msra.mxu0 %v3490
      %3534 = vmatpush.bf16.msra.mxu0 %v3489
      %3535 = vmatpush.bf16.msra.mxu0 %v3488
      %3536 = vmatpush.bf16.msra.mxu0 %v3487
      %3537 = vmatpush.bf16.msra.mxu0 %v3486
      %3538 = vmatpush.bf16.msra.mxu0 %v3485
      %3539 = vmatpush.bf16.msra.mxu0 %v3484
      %3540 = vmatmul.bf16.gmra.mxu0 %v992
      %v3541 = vpop.f32.mrf.mxu0
      %v3542 = vadd.f32 %v3309, %v3541
      %v3543 = vpop.f32.mrf.mxu0
      %v3544 = vadd.f32 %v3311, %v3543
      %3545 = vmatmul.bf16.gmra.mxu0 %v1035
      %v3546 = vpop.f32.mrf.mxu0
      %v3547 = vadd.f32 %v3314, %v3546
      %v3548 = vpop.f32.mrf.mxu0
      %v3549 = vadd.f32 %v3316, %v3548
      %3550 = vmatmul.bf16.gmra.mxu0 %v1078
      %v3551 = vpop.f32.mrf.mxu0
      %v3552 = vadd.f32 %v3319, %v3551
      %v3553 = vpop.f32.mrf.mxu0
      %v3554 = vadd.f32 %v3321, %v3553
      %3555 = vmatmul.bf16.gmra.mxu0 %v1121
      %v3556 = vpop.f32.mrf.mxu0
      %v3557 = vadd.f32 %v3324, %v3556
      %v3558 = vpop.f32.mrf.mxu0
      %v3559 = vadd.f32 %v3326, %v3558
      %3560 = vmatmul.bf16.gmra.mxu0 %v1164
      %v3561 = vpop.f32.mrf.mxu0
      %v3562 = vadd.f32 %v3329, %v3561
      %v3563 = vpop.f32.mrf.mxu0
      %v3564 = vadd.f32 %v3331, %v3563
      %3565 = vmatmul.bf16.gmra.mxu0 %v1207
      %v3566 = vpop.f32.mrf.mxu0
      %v3567 = vadd.f32 %v3334, %v3566
      %v3568 = vpop.f32.mrf.mxu0
      %v3569 = vadd.f32 %v3336, %v3568
      %3570 = vmatmul.bf16.gmra.mxu0 %v1250
      %v3571 = vpop.f32.mrf.mxu0
      %v3572 = vadd.f32 %v3339, %v3571
      %v3573 = vpop.f32.mrf.mxu0
      %v3574 = vadd.f32 %v3341, %v3573
      %3575 = vmatmul.bf16.gmra.mxu0 %v1293
      %v3576 = vpop.f32.mrf.mxu0
      %v3577 = vadd.f32 %v3344, %v3576
      %v3578 = vpop.f32.mrf.mxu0
      %v3579 = vadd.f32 %v3346, %v3578
      %3580 = vmatmul.bf16.gmra.mxu0 %v1336
      %v3581 = vpop.f32.mrf.mxu0
      %v3582 = vadd.f32 %v3349, %v3581
      %v3583 = vpop.f32.mrf.mxu0
      %v3584 = vadd.f32 %v3351, %v3583
      %3585 = vmatmul.bf16.gmra.mxu0 %v1379
      %v3586 = vpop.f32.mrf.mxu0
      %v3587 = vadd.f32 %v3354, %v3586
      %v3588 = vpop.f32.mrf.mxu0
      %v3589 = vadd.f32 %v3356, %v3588
      %3590 = vmatmul.bf16.gmra.mxu0 %v1422
      %v3591 = vpop.f32.mrf.mxu0
      %v3592 = vadd.f32 %v3359, %v3591
      %v3593 = vpop.f32.mrf.mxu0
      %v3594 = vadd.f32 %v3361, %v3593
      %3595 = vmatmul.bf16.gmra.mxu0 %v1465
      %v3596 = vpop.f32.mrf.mxu0
      %v3597 = vadd.f32 %v3364, %v3596
      %v3598 = vpop.f32.mrf.mxu0
      %v3599 = vadd.f32 %v3366, %v3598
      %3600 = vmatmul.bf16.gmra.mxu0 %v1508
      %v3601 = vpop.f32.mrf.mxu0
      %v3602 = vadd.f32 %v3369, %v3601
      %v3603 = vpop.f32.mrf.mxu0
      %v3604 = vadd.f32 %v3371, %v3603
      %3605 = vmatmul.bf16.gmra.mxu0 %v1551
      %v3606 = vpop.f32.mrf.mxu0
      %v3607 = vadd.f32 %v3374, %v3606
      %v3608 = vpop.f32.mrf.mxu0
      %v3609 = vadd.f32 %v3376, %v3608
      %3610 = vmatmul.bf16.gmra.mxu0 %v1594
      %v3611 = vpop.f32.mrf.mxu0
      %v3612 = vadd.f32 %v3379, %v3611
      %v3613 = vpop.f32.mrf.mxu0
      %v3614 = vadd.f32 %v3381, %v3613
      %3615 = vmatmul.bf16.gmra.mxu0 %v1637
      %v3616 = vpop.f32.mrf.mxu0
      %v3617 = vadd.f32 %v3384, %v3616
      %v3618 = vpop.f32.mrf.mxu0
      %v3619 = vadd.f32 %v3386, %v3618
      %3620 = vdwg.mxu0
      %3621 = vmatpush.bf16.msra.mxu0 %v3499
      %3622 = vmatpush.bf16.msra.mxu0 %v3498
      %3623 = vmatpush.bf16.msra.mxu0 %v3497
      %3624 = vmatpush.bf16.msra.mxu0 %v3496
      %3625 = vmatpush.bf16.msra.mxu0 %v3495
      %3626 = vmatpush.bf16.msra.mxu0 %v3494
      %3627 = vmatpush.bf16.msra.mxu0 %v3493
      %3628 = vmatpush.bf16.msra.mxu0 %v3492
      %3629 = vmatmul.bf16.gmra.mxu0 %v1001
      %v3630 = vpop.f32.mrf.mxu0
      %v3631 = vadd.f32 %v3542, %v3630
      %v3632 = vpop.f32.mrf.mxu0
      %v3633 = vadd.f32 %v3544, %v3632
      %3634 = vmatmul.bf16.gmra.mxu0 %v1044
      %v3635 = vpop.f32.mrf.mxu0
      %v3636 = vadd.f32 %v3547, %v3635
      %v3637 = vpop.f32.mrf.mxu0
      %v3638 = vadd.f32 %v3549, %v3637
      %3639 = vmatmul.bf16.gmra.mxu0 %v1087
      %v3640 = vpop.f32.mrf.mxu0
      %v3641 = vadd.f32 %v3552, %v3640
      %v3642 = vpop.f32.mrf.mxu0
      %v3643 = vadd.f32 %v3554, %v3642
      %3644 = vmatmul.bf16.gmra.mxu0 %v1130
      %v3645 = vpop.f32.mrf.mxu0
      %v3646 = vadd.f32 %v3557, %v3645
      %v3647 = vpop.f32.mrf.mxu0
      %v3648 = vadd.f32 %v3559, %v3647
      %3649 = vmatmul.bf16.gmra.mxu0 %v1173
      %v3650 = vpop.f32.mrf.mxu0
      %v3651 = vadd.f32 %v3562, %v3650
      %v3652 = vpop.f32.mrf.mxu0
      %v3653 = vadd.f32 %v3564, %v3652
      %3654 = vmatmul.bf16.gmra.mxu0 %v1216
      %v3655 = vpop.f32.mrf.mxu0
      %v3656 = vadd.f32 %v3567, %v3655
      %v3657 = vpop.f32.mrf.mxu0
      %v3658 = vadd.f32 %v3569, %v3657
      %3659 = vmatmul.bf16.gmra.mxu0 %v1259
      %v3660 = vpop.f32.mrf.mxu0
      %v3661 = vadd.f32 %v3572, %v3660
      %v3662 = vpop.f32.mrf.mxu0
      %v3663 = vadd.f32 %v3574, %v3662
      %3664 = vmatmul.bf16.gmra.mxu0 %v1302
      %v3665 = vpop.f32.mrf.mxu0
      %v3666 = vadd.f32 %v3577, %v3665
      %v3667 = vpop.f32.mrf.mxu0
      %v3668 = vadd.f32 %v3579, %v3667
      %3669 = vmatmul.bf16.gmra.mxu0 %v1345
      %v3670 = vpop.f32.mrf.mxu0
      %v3671 = vadd.f32 %v3582, %v3670
      %v3672 = vpop.f32.mrf.mxu0
      %v3673 = vadd.f32 %v3584, %v3672
      %3674 = vmatmul.bf16.gmra.mxu0 %v1388
      %v3675 = vpop.f32.mrf.mxu0
      %v3676 = vadd.f32 %v3587, %v3675
      %v3677 = vpop.f32.mrf.mxu0
      %v3678 = vadd.f32 %v3589, %v3677
      %3679 = vmatmul.bf16.gmra.mxu0 %v1431
      %v3680 = vpop.f32.mrf.mxu0
      %v3681 = vadd.f32 %v3592, %v3680
      %v3682 = vpop.f32.mrf.mxu0
      %v3683 = vadd.f32 %v3594, %v3682
      %3684 = vmatmul.bf16.gmra.mxu0 %v1474
      %v3685 = vpop.f32.mrf.mxu0
      %v3686 = vadd.f32 %v3597, %v3685
      %v3687 = vpop.f32.mrf.mxu0
      %v3688 = vadd.f32 %v3599, %v3687
      %3689 = vmatmul.bf16.gmra.mxu0 %v1517
      %v3690 = vpop.f32.mrf.mxu0
      %v3691 = vadd.f32 %v3602, %v3690
      %v3692 = vpop.f32.mrf.mxu0
      %v3693 = vadd.f32 %v3604, %v3692
      %3694 = vmatmul.bf16.gmra.mxu0 %v1560
      %v3695 = vpop.f32.mrf.mxu0
      %v3696 = vadd.f32 %v3607, %v3695
      %v3697 = vpop.f32.mrf.mxu0
      %v3698 = vadd.f32 %v3609, %v3697
      %3699 = vmatmul.bf16.gmra.mxu0 %v1603
      %v3700 = vpop.f32.mrf.mxu0
      %v3701 = vadd.f32 %v3612, %v3700
      %v3702 = vpop.f32.mrf.mxu0
      %v3703 = vadd.f32 %v3614, %v3702
      %3704 = vmatmul.bf16.gmra.mxu0 %v1646
      %v3705 = vpop.f32.mrf.mxu0
      %v3706 = vadd.f32 %v3617, %v3705
      %v3707 = vpop.f32.mrf.mxu0
      %v3708 = vadd.f32 %v3619, %v3707
      %3709 = vdwg.mxu0
      %3710 = vmatpush.bf16.msra.mxu0 %v3507
      %3711 = vmatpush.bf16.msra.mxu0 %v3506
      %3712 = vmatpush.bf16.msra.mxu0 %v3505
      %3713 = vmatpush.bf16.msra.mxu0 %v3504
      %3714 = vmatpush.bf16.msra.mxu0 %v3503
      %3715 = vmatpush.bf16.msra.mxu0 %v3502
      %3716 = vmatpush.bf16.msra.mxu0 %v3501
      %3717 = vmatpush.bf16.msra.mxu0 %v3500
      %3718 = vmatmul.bf16.gmra.mxu0 %v1018
      %v3719 = vpop.f32.mrf.mxu0
      %v3720 = vadd.f32 %v3631, %v3719
      %v3721 = vpop.f32.mrf.mxu0
      %v3722 = vadd.f32 %v3633, %v3721
      %3723 = vmatmul.bf16.gmra.mxu0 %v1061
      %v3724 = vpop.f32.mrf.mxu0
      %v3725 = vadd.f32 %v3636, %v3724
      %v3726 = vpop.f32.mrf.mxu0
      %v3727 = vadd.f32 %v3638, %v3726
      %3728 = vmatmul.bf16.gmra.mxu0 %v1104
      %v3729 = vpop.f32.mrf.mxu0
      %v3730 = vadd.f32 %v3641, %v3729
      %v3731 = vpop.f32.mrf.mxu0
      %v3732 = vadd.f32 %v3643, %v3731
      %3733 = vmatmul.bf16.gmra.mxu0 %v1147
      %v3734 = vpop.f32.mrf.mxu0
      %v3735 = vadd.f32 %v3646, %v3734
      %v3736 = vpop.f32.mrf.mxu0
      %v3737 = vadd.f32 %v3648, %v3736
      %3738 = vmatmul.bf16.gmra.mxu0 %v1190
      %v3739 = vpop.f32.mrf.mxu0
      %v3740 = vadd.f32 %v3651, %v3739
      %v3741 = vpop.f32.mrf.mxu0
      %v3742 = vadd.f32 %v3653, %v3741
      %3743 = vmatmul.bf16.gmra.mxu0 %v1233
      %v3744 = vpop.f32.mrf.mxu0
      %v3745 = vadd.f32 %v3656, %v3744
      %v3746 = vpop.f32.mrf.mxu0
      %v3747 = vadd.f32 %v3658, %v3746
      %3748 = vmatmul.bf16.gmra.mxu0 %v1276
      %v3749 = vpop.f32.mrf.mxu0
      %v3750 = vadd.f32 %v3661, %v3749
      %v3751 = vpop.f32.mrf.mxu0
      %v3752 = vadd.f32 %v3663, %v3751
      %3753 = vmatmul.bf16.gmra.mxu0 %v1319
      %v3754 = vpop.f32.mrf.mxu0
      %v3755 = vadd.f32 %v3666, %v3754
      %v3756 = vpop.f32.mrf.mxu0
      %v3757 = vadd.f32 %v3668, %v3756
      %3758 = vmatmul.bf16.gmra.mxu0 %v1362
      %v3759 = vpop.f32.mrf.mxu0
      %v3760 = vadd.f32 %v3671, %v3759
      %v3761 = vpop.f32.mrf.mxu0
      %v3762 = vadd.f32 %v3673, %v3761
      %3763 = vmatmul.bf16.gmra.mxu0 %v1405
      %v3764 = vpop.f32.mrf.mxu0
      %v3765 = vadd.f32 %v3676, %v3764
      %v3766 = vpop.f32.mrf.mxu0
      %v3767 = vadd.f32 %v3678, %v3766
      %3768 = vmatmul.bf16.gmra.mxu0 %v1448
      %v3769 = vpop.f32.mrf.mxu0
      %v3770 = vadd.f32 %v3681, %v3769
      %v3771 = vpop.f32.mrf.mxu0
      %v3772 = vadd.f32 %v3683, %v3771
      %3773 = vmatmul.bf16.gmra.mxu0 %v1491
      %v3774 = vpop.f32.mrf.mxu0
      %v3775 = vadd.f32 %v3686, %v3774
      %v3776 = vpop.f32.mrf.mxu0
      %v3777 = vadd.f32 %v3688, %v3776
      %3778 = vmatmul.bf16.gmra.mxu0 %v1534
      %v3779 = vpop.f32.mrf.mxu0
      %v3780 = vadd.f32 %v3691, %v3779
      %v3781 = vpop.f32.mrf.mxu0
      %v3782 = vadd.f32 %v3693, %v3781
      %3783 = vmatmul.bf16.gmra.mxu0 %v1577
      %v3784 = vpop.f32.mrf.mxu0
      %v3785 = vadd.f32 %v3696, %v3784
      %v3786 = vpop.f32.mrf.mxu0
      %v3787 = vadd.f32 %v3698, %v3786
      %3788 = vmatmul.bf16.gmra.mxu0 %v1620
      %v3789 = vpop.f32.mrf.mxu0
      %v3790 = vadd.f32 %v3701, %v3789
      %v3791 = vpop.f32.mrf.mxu0
      %v3792 = vadd.f32 %v3703, %v3791
      %3793 = vmatmul.bf16.gmra.mxu0 %v1663
      %v3794 = vpop.f32.mrf.mxu0
      %v3795 = vadd.f32 %v3706, %v3794
      %v3796 = vpop.f32.mrf.mxu0
      %v3797 = vadd.f32 %v3708, %v3796
      %3798 = vdwg.mxu0
      %s3799 = scalar_lea.vmem [#allocation2], 32
      %v3800 = vld [vmem:[%s3799] sm:$0xf]
      %v3801 = vld [vmem:[%s3799 + $0x4] sm:$0xf]
      %v3802 = vld [vmem:[%s3799 + $0x8] sm:$0xf]
      %v3803 = vld [vmem:[%s3799 + $0xc] sm:$0xf]
      %v3804 = vld [vmem:[%s3799 + $0x10] sm:$0xf]
      %v3805 = vld [vmem:[%s3799 + $0x14] sm:$0xf]
      %v3806 = vld [vmem:[%s3799 + $0x18] sm:$0xf]
      %v3807 = vld [vmem:[%s3799 + $0x1c] sm:$0xf]
      %v3808 = vld [vmem:[%s3799 + $0x20] sm:$0xf]
      %v3809 = vld [vmem:[%s3799 + $0x24] sm:$0xf]
      %v3810 = vld [vmem:[%s3799 + $0x28] sm:$0xf]
      %v3811 = vld [vmem:[%s3799 + $0x2c] sm:$0xf]
      %v3812 = vld [vmem:[%s3799 + $0x30] sm:$0xf]
      %v3813 = vld [vmem:[%s3799 + $0x34] sm:$0xf]
      %v3814 = vld [vmem:[%s3799 + $0x38] sm:$0xf]
      %v3815 = vld [vmem:[%s3799 + $0x3c] sm:$0xf]
      %v3816 = vld [vmem:[%s3799 + $0x40] sm:$0xf]
      %v3817 = vld [vmem:[%s3799 + $0x44] sm:$0xf]
      %v3818 = vld [vmem:[%s3799 + $0x48] sm:$0xf]
      %v3819 = vld [vmem:[%s3799 + $0x4c] sm:$0xf]
      %v3820 = vld [vmem:[%s3799 + $0x50] sm:$0xf]
      %v3821 = vld [vmem:[%s3799 + $0x54] sm:$0xf]
      %v3822 = vld [vmem:[%s3799 + $0x58] sm:$0xf]
      %v3823 = vld [vmem:[%s3799 + $0x5c] sm:$0xf]
      %v3824 = vld [vmem:[%s3799 + $0x60] sm:$0xf]
      %v3825 = vld [vmem:[%s3799 + $0x64] sm:$0xf]
      %v3826 = vld [vmem:[%s3799 + $0x68] sm:$0xf]
      %v3827 = vld [vmem:[%s3799 + $0x6c] sm:$0xf]
      %v3828 = vld [vmem:[%s3799 + $0x70] sm:$0xf]
      %v3829 = vld [vmem:[%s3799 + $0x74] sm:$0xf]
      %v3830 = vld [vmem:[%s3799 + $0x78] sm:$0xf]
      %v3831 = vld [vmem:[%s3799 + $0x7c] sm:$0xf]
      %v3832 = vld [vmem:[%s3799 + $0x80] sm:$0xf]
      %v3833 = vld [vmem:[%s3799 + $0x84] sm:$0xf]
      %v3834 = vld [vmem:[%s3799 + $0x88] sm:$0xf]
      %v3835 = vld [vmem:[%s3799 + $0x8c] sm:$0xf]
      %v3836 = vld [vmem:[%s3799 + $0x90] sm:$0xf]
      %v3837 = vld [vmem:[%s3799 + $0x94] sm:$0xf]
      %v3838 = vld [vmem:[%s3799 + $0x98] sm:$0xf]
      %v3839 = vld [vmem:[%s3799 + $0x9c] sm:$0xf]
      %v3840 = vld [vmem:[%s3799 + $0xa0] sm:$0xf]
      %v3841 = vld [vmem:[%s3799 + $0xa4] sm:$0xf]
      %v3842 = vld [vmem:[%s3799 + $0xa8] sm:$0xf]
      %v3843 = vld [vmem:[%s3799 + $0xac] sm:$0xf]
      %v3844 = vld [vmem:[%s3799 + $0xb0] sm:$0xf]
      %v3845 = vld [vmem:[%s3799 + $0xb4] sm:$0xf]
      %v3846 = vld [vmem:[%s3799 + $0xb8] sm:$0xf]
      %v3847 = vld [vmem:[%s3799 + $0xbc] sm:$0xf]
      %v3848 = vld [vmem:[%s3799 + $0xc0] sm:$0xf]
      %v3849 = vld [vmem:[%s3799 + $0xc4] sm:$0xf]
      %v3850 = vld [vmem:[%s3799 + $0xc8] sm:$0xf]
      %v3851 = vld [vmem:[%s3799 + $0xcc] sm:$0xf]
      %v3852 = vld [vmem:[%s3799 + $0xd0] sm:$0xf]
      %v3853 = vld [vmem:[%s3799 + $0xd4] sm:$0xf]
      %v3854 = vld [vmem:[%s3799 + $0xd8] sm:$0xf]
      %v3855 = vld [vmem:[%s3799 + $0xdc] sm:$0xf]
      %v3856 = vld [vmem:[%s3799 + $0xe0] sm:$0xf]
      %v3857 = vld [vmem:[%s3799 + $0xe4] sm:$0xf]
      %v3858 = vld [vmem:[%s3799 + $0xe8] sm:$0xf]
      %v3859 = vld [vmem:[%s3799 + $0xec] sm:$0xf]
      %v3860 = vld [vmem:[%s3799 + $0xf0] sm:$0xf]
      %v3861 = vld [vmem:[%s3799 + $0xf4] sm:$0xf]
      %v3862 = vld [vmem:[%s3799 + $0xf8] sm:$0xf]
      %v3863 = vld [vmem:[%s3799 + $0xfc] sm:$0xf]
      %v3912 = vunpack.c.l.b16 %v3800
      %v3913 = vunpack.c.l.b16 %v3801
      %v3914 = vunpack.c.l.b16 %v3802
      %v3915 = vunpack.c.l.b16 %v3804
      %v3916 = vunpack.c.l.b16 %v3805
      %v3917 = vunpack.c.l.b16 %v3806
      %v3918 = vunpack.c.l.b16 %v3808
      %v3919 = vunpack.c.l.b16 %v3809
      %v3920 = vunpack.c.l.b16 %v3810
      %v3921 = vunpack.c.l.b16 %v3812
      %v3922 = vunpack.c.l.b16 %v3813
      %v3923 = vunpack.c.l.b16 %v3814
      %v3924 = vunpack.c.l.b16 %v3816
      %v3925 = vunpack.c.l.b16 %v3817
      %v3926 = vunpack.c.l.b16 %v3818
      %v3927 = vunpack.c.l.b16 %v3820
      %v3928 = vunpack.c.l.b16 %v3821
      %v3929 = vunpack.c.l.b16 %v3822
      %v3930 = vunpack.c.l.b16 %v3824
      %v3931 = vunpack.c.l.b16 %v3825
      %v3932 = vunpack.c.l.b16 %v3826
      %v3933 = vunpack.c.l.b16 %v3828
      %v3934 = vunpack.c.l.b16 %v3829
      %v3935 = vunpack.c.l.b16 %v3830
      %v3936 = vunpack.c.l.b16 %v3832
      %v3937 = vunpack.c.l.b16 %v3833
      %v3938 = vunpack.c.l.b16 %v3834
      %v3939 = vunpack.c.l.b16 %v3836
      %v3940 = vunpack.c.l.b16 %v3837
      %v3941 = vunpack.c.l.b16 %v3838
      %v3942 = vunpack.c.l.b16 %v3840
      %v3943 = vunpack.c.l.b16 %v3841
      %v3944 = vunpack.c.l.b16 %v3842
      %v3945 = vunpack.c.l.b16 %v3844
      %v3946 = vunpack.c.l.b16 %v3845
      %v3947 = vunpack.c.l.b16 %v3846
      %v3948 = vunpack.c.l.b16 %v3848
      %v3949 = vunpack.c.l.b16 %v3849
      %v3950 = vunpack.c.l.b16 %v3850
      %v3951 = vunpack.c.l.b16 %v3852
      %v3952 = vunpack.c.l.b16 %v3853
      %v3953 = vunpack.c.l.b16 %v3854
      %v3954 = vunpack.c.l.b16 %v3856
      %v3955 = vunpack.c.l.b16 %v3857
      %v3956 = vunpack.c.l.b16 %v3858
      %v3957 = vunpack.c.l.b16 %v3860
      %v3958 = vunpack.c.l.b16 %v3861
      %v3959 = vunpack.c.l.b16 %v3862
      %v3960 = vpack.c.b16 %v3913, %v3912
      %v3961 = vpack.c.b16 %v3914, %v3914
      %v3962 = vpack.c.b16 %v3916, %v3915
      %v3963 = vpack.c.b16 %v3917, %v3917
      %v3964 = vpack.c.b16 %v3919, %v3918
      %v3965 = vpack.c.b16 %v3920, %v3920
      %v3966 = vpack.c.b16 %v3922, %v3921
      %v3967 = vpack.c.b16 %v3923, %v3923
      %v3968 = vpack.c.b16 %v3925, %v3924
      %v3969 = vpack.c.b16 %v3926, %v3926
      %v3970 = vpack.c.b16 %v3928, %v3927
      %v3971 = vpack.c.b16 %v3929, %v3929
      %v3972 = vpack.c.b16 %v3931, %v3930
      %v3973 = vpack.c.b16 %v3932, %v3932
      %v3974 = vpack.c.b16 %v3934, %v3933
      %v3975 = vpack.c.b16 %v3935, %v3935
      %v3976 = vpack.c.b16 %v3937, %v3936
      %v3977 = vpack.c.b16 %v3938, %v3938
      %v3978 = vpack.c.b16 %v3940, %v3939
      %v3979 = vpack.c.b16 %v3941, %v3941
      %v3980 = vpack.c.b16 %v3943, %v3942
      %v3981 = vpack.c.b16 %v3944, %v3944
      %v3982 = vpack.c.b16 %v3946, %v3945
      %v3983 = vpack.c.b16 %v3947, %v3947
      %v3984 = vpack.c.b16 %v3949, %v3948
      %v3985 = vpack.c.b16 %v3950, %v3950
      %v3986 = vpack.c.b16 %v3952, %v3951
      %v3987 = vpack.c.b16 %v3953, %v3953
      %v3988 = vpack.c.b16 %v3955, %v3954
      %v3989 = vpack.c.b16 %v3956, %v3956
      %v3990 = vpack.c.b16 %v3958, %v3957
      %v3991 = vpack.c.b16 %v3959, %v3959
      %v3992 = vpack.c.b16 %v3914, %v3913
      %v3993 = vpack.c.b16 %v3917, %v3916
      %v3994 = vpack.c.b16 %v3920, %v3919
      %v3995 = vpack.c.b16 %v3923, %v3922
      %v3996 = vpack.c.b16 %v3926, %v3925
      %v3997 = vpack.c.b16 %v3929, %v3928
      %v3998 = vpack.c.b16 %v3932, %v3931
      %v3999 = vpack.c.b16 %v3935, %v3934
      %v4000 = vpack.c.b16 %v3938, %v3937
      %v4001 = vpack.c.b16 %v3941, %v3940
      %v4002 = vpack.c.b16 %v3944, %v3943
      %v4003 = vpack.c.b16 %v3947, %v3946
      %v4004 = vpack.c.b16 %v3950, %v3949
      %v4005 = vpack.c.b16 %v3953, %v3952
      %v4006 = vpack.c.b16 %v3956, %v3955
      %v4007 = vpack.c.b16 %v3959, %v3958
      %v4009 = vshrl.u32 %v3992, 16
      %v4011 = vrot.slane %v4009, 4
      %v4012 = vshll.u32 %v3992, 16
      %v4014 = vrot.slane %v4012, 5
      %v4015 = vor.u32 %v4011, %v4014
      %v4017 = vshrl.u32 %v3993, 16
      %v4019 = vrot.slane %v4017, 4
      %v4020 = vshll.u32 %v3993, 16
      %v4022 = vrot.slane %v4020, 5
      %v4023 = vor.u32 %v4019, %v4022
      %v4025 = vshrl.u32 %v3994, 16
      %v4027 = vrot.slane %v4025, 4
      %v4028 = vshll.u32 %v3994, 16
      %v4030 = vrot.slane %v4028, 5
      %v4031 = vor.u32 %v4027, %v4030
      %v4033 = vshrl.u32 %v3995, 16
      %v4035 = vrot.slane %v4033, 4
      %v4036 = vshll.u32 %v3995, 16
      %v4038 = vrot.slane %v4036, 5
      %v4039 = vor.u32 %v4035, %v4038
      %v4041 = vshrl.u32 %v3996, 16
      %v4043 = vrot.slane %v4041, 4
      %v4044 = vshll.u32 %v3996, 16
      %v4046 = vrot.slane %v4044, 5
      %v4047 = vor.u32 %v4043, %v4046
      %v4049 = vshrl.u32 %v3997, 16
      %v4051 = vrot.slane %v4049, 4
      %v4052 = vshll.u32 %v3997, 16
      %v4054 = vrot.slane %v4052, 5
      %v4055 = vor.u32 %v4051, %v4054
      %v4057 = vshrl.u32 %v3998, 16
      %v4059 = vrot.slane %v4057, 4
      %v4060 = vshll.u32 %v3998, 16
      %v4062 = vrot.slane %v4060, 5
      %v4063 = vor.u32 %v4059, %v4062
      %v4065 = vshrl.u32 %v3999, 16
      %v4067 = vrot.slane %v4065, 4
      %v4068 = vshll.u32 %v3999, 16
      %v4070 = vrot.slane %v4068, 5
      %v4071 = vor.u32 %v4067, %v4070
      %v4073 = vshrl.u32 %v4000, 16
      %v4075 = vrot.slane %v4073, 4
      %v4076 = vshll.u32 %v4000, 16
      %v4078 = vrot.slane %v4076, 5
      %v4079 = vor.u32 %v4075, %v4078
      %v4081 = vshrl.u32 %v4001, 16
      %v4083 = vrot.slane %v4081, 4
      %v4084 = vshll.u32 %v4001, 16
      %v4086 = vrot.slane %v4084, 5
      %v4087 = vor.u32 %v4083, %v4086
      %v4089 = vshrl.u32 %v4002, 16
      %v4091 = vrot.slane %v4089, 4
      %v4092 = vshll.u32 %v4002, 16
      %v4094 = vrot.slane %v4092, 5
      %v4095 = vor.u32 %v4091, %v4094
      %v4097 = vshrl.u32 %v4003, 16
      %v4099 = vrot.slane %v4097, 4
      %v4100 = vshll.u32 %v4003, 16
      %v4102 = vrot.slane %v4100, 5
      %v4103 = vor.u32 %v4099, %v4102
      %v4105 = vshrl.u32 %v4004, 16
      %v4107 = vrot.slane %v4105, 4
      %v4108 = vshll.u32 %v4004, 16
      %v4110 = vrot.slane %v4108, 5
      %v4111 = vor.u32 %v4107, %v4110
      %v4113 = vshrl.u32 %v4005, 16
      %v4115 = vrot.slane %v4113, 4
      %v4116 = vshll.u32 %v4005, 16
      %v4118 = vrot.slane %v4116, 5
      %v4119 = vor.u32 %v4115, %v4118
      %v4121 = vshrl.u32 %v4006, 16
      %v4123 = vrot.slane %v4121, 4
      %v4124 = vshll.u32 %v4006, 16
      %v4126 = vrot.slane %v4124, 5
      %v4127 = vor.u32 %v4123, %v4126
      %v4129 = vshrl.u32 %v4007, 16
      %v4131 = vrot.slane %v4129, 4
      %v4132 = vshll.u32 %v4007, 16
      %v4134 = vrot.slane %v4132, 5
      %v4135 = vor.u32 %v4131, %v4134
      %v4152 = vunpack.c.l.b16 %v3803
      %v4153 = vunpack.c.l.b16 %v3807
      %v4154 = vunpack.c.l.b16 %v3811
      %v4155 = vunpack.c.l.b16 %v3815
      %v4156 = vunpack.c.l.b16 %v3819
      %v4157 = vunpack.c.l.b16 %v3823
      %v4158 = vunpack.c.l.b16 %v3827
      %v4159 = vunpack.c.l.b16 %v3831
      %v4160 = vunpack.c.l.b16 %v3835
      %v4161 = vunpack.c.l.b16 %v3839
      %v4162 = vunpack.c.l.b16 %v3843
      %v4163 = vunpack.c.l.b16 %v3847
      %v4164 = vunpack.c.l.b16 %v3851
      %v4165 = vunpack.c.l.b16 %v3855
      %v4166 = vunpack.c.l.b16 %v3859
      %v4167 = vunpack.c.l.b16 %v3863
      %v4168 = vpack.c.b16 %v4152, %v4152
      %v4169 = vpack.c.b16 %v4153, %v4153
      %v4170 = vpack.c.b16 %v4154, %v4154
      %v4171 = vpack.c.b16 %v4155, %v4155
      %v4172 = vpack.c.b16 %v4156, %v4156
      %v4173 = vpack.c.b16 %v4157, %v4157
      %v4174 = vpack.c.b16 %v4158, %v4158
      %v4175 = vpack.c.b16 %v4159, %v4159
      %v4176 = vpack.c.b16 %v4160, %v4160
      %v4177 = vpack.c.b16 %v4161, %v4161
      %v4178 = vpack.c.b16 %v4162, %v4162
      %v4179 = vpack.c.b16 %v4163, %v4163
      %v4180 = vpack.c.b16 %v4164, %v4164
      %v4181 = vpack.c.b16 %v4165, %v4165
      %v4182 = vpack.c.b16 %v4166, %v4166
      %v4183 = vpack.c.b16 %v4167, %v4167
      %v4184 = vrot.slane %v3992, 5
      %v4185 = vrot.slane %v4168, 5
      %v4186 = vsel %vm926, %v4184, %v4185
      %v4187 = vrot.slane %v3993, 5
      %v4188 = vrot.slane %v4169, 5
      %v4189 = vsel %vm926, %v4187, %v4188
      %v4190 = vrot.slane %v3994, 5
      %v4191 = vrot.slane %v4170, 5
      %v4192 = vsel %vm926, %v4190, %v4191
      %v4193 = vrot.slane %v3995, 5
      %v4194 = vrot.slane %v4171, 5
      %v4195 = vsel %vm926, %v4193, %v4194
      %v4196 = vrot.slane %v3996, 5
      %v4197 = vrot.slane %v4172, 5
      %v4198 = vsel %vm926, %v4196, %v4197
      %v4199 = vrot.slane %v3997, 5
      %v4200 = vrot.slane %v4173, 5
      %v4201 = vsel %vm926, %v4199, %v4200
      %v4202 = vrot.slane %v3998, 5
      %v4203 = vrot.slane %v4174, 5
      %v4204 = vsel %vm926, %v4202, %v4203
      %v4205 = vrot.slane %v3999, 5
      %v4206 = vrot.slane %v4175, 5
      %v4207 = vsel %vm926, %v4205, %v4206
      %v4208 = vrot.slane %v4000, 5
      %v4209 = vrot.slane %v4176, 5
      %v4210 = vsel %vm926, %v4208, %v4209
      %v4211 = vrot.slane %v4001, 5
      %v4212 = vrot.slane %v4177, 5
      %v4213 = vsel %vm926, %v4211, %v4212
      %v4214 = vrot.slane %v4002, 5
      %v4215 = vrot.slane %v4178, 5
      %v4216 = vsel %vm926, %v4214, %v4215
      %v4217 = vrot.slane %v4003, 5
      %v4218 = vrot.slane %v4179, 5
      %v4219 = vsel %vm926, %v4217, %v4218
      %v4220 = vrot.slane %v4004, 5
      %v4221 = vrot.slane %v4180, 5
      %v4222 = vsel %vm926, %v4220, %v4221
      %v4223 = vrot.slane %v4005, 5
      %v4224 = vrot.slane %v4181, 5
      %v4225 = vsel %vm926, %v4223, %v4224
      %v4226 = vrot.slane %v4006, 5
      %v4227 = vrot.slane %v4182, 5
      %v4228 = vsel %vm926, %v4226, %v4227
      %v4229 = vrot.slane %v4007, 5
      %v4230 = vrot.slane %v4183, 5
      %v4231 = vsel %vm926, %v4229, %v4230
      %v4233 = vshrl.u32 %v3960, 16
      %v4235 = vrot.slane %v4233, 3
      %v4236 = vshll.u32 %v3960, 16
      %v4238 = vrot.slane %v4236, 4
      %v4239 = vor.u32 %v4235, %v4238
      %v4241 = vshrl.u32 %v3961, 16
      %v4243 = vrot.slane %v4241, 3
      %v4244 = vshll.u32 %v3961, 16
      %v4246 = vrot.slane %v4244, 4
      %v4247 = vor.u32 %v4243, %v4246
      %v4248 = vsel %vm975, %v4239, %v4247
      %v4250 = vshrl.u32 %v4015, 16
      %v4252 = vrot.slane %v4250, 3
      %v4253 = vshll.u32 %v4015, 16
      %v4255 = vrot.slane %v4253, 4
      %v4256 = vor.u32 %v4252, %v4255
      %v4257 = vsel %vm975, %v4256, %v4256
      %v4259 = vshrl.u32 %v4184, 16
      %v4261 = vrot.slane %v4259, 3
      %v4262 = vshll.u32 %v4184, 16
      %v4264 = vrot.slane %v4262, 4
      %v4265 = vor.u32 %v4261, %v4264
      %v4267 = vshrl.u32 %v4186, 16
      %v4269 = vrot.slane %v4267, 3
      %v4270 = vshll.u32 %v4186, 16
      %v4272 = vrot.slane %v4270, 4
      %v4273 = vor.u32 %v4269, %v4272
      %v4274 = vsel %vm975, %v4265, %v4273
      %v4276 = vshrl.u32 %v3962, 16
      %v4278 = vrot.slane %v4276, 3
      %v4279 = vshll.u32 %v3962, 16
      %v4281 = vrot.slane %v4279, 4
      %v4282 = vor.u32 %v4278, %v4281
      %v4284 = vshrl.u32 %v3963, 16
      %v4286 = vrot.slane %v4284, 3
      %v4287 = vshll.u32 %v3963, 16
      %v4289 = vrot.slane %v4287, 4
      %v4290 = vor.u32 %v4286, %v4289
      %v4291 = vsel %vm975, %v4282, %v4290
      %v4293 = vshrl.u32 %v4023, 16
      %v4295 = vrot.slane %v4293, 3
      %v4296 = vshll.u32 %v4023, 16
      %v4298 = vrot.slane %v4296, 4
      %v4299 = vor.u32 %v4295, %v4298
      %v4300 = vsel %vm975, %v4299, %v4299
      %v4302 = vshrl.u32 %v4187, 16
      %v4304 = vrot.slane %v4302, 3
      %v4305 = vshll.u32 %v4187, 16
      %v4307 = vrot.slane %v4305, 4
      %v4308 = vor.u32 %v4304, %v4307
      %v4310 = vshrl.u32 %v4189, 16
      %v4312 = vrot.slane %v4310, 3
      %v4313 = vshll.u32 %v4189, 16
      %v4315 = vrot.slane %v4313, 4
      %v4316 = vor.u32 %v4312, %v4315
      %v4317 = vsel %vm975, %v4308, %v4316
      %v4319 = vshrl.u32 %v3964, 16
      %v4321 = vrot.slane %v4319, 3
      %v4322 = vshll.u32 %v3964, 16
      %v4324 = vrot.slane %v4322, 4
      %v4325 = vor.u32 %v4321, %v4324
      %v4327 = vshrl.u32 %v3965, 16
      %v4329 = vrot.slane %v4327, 3
      %v4330 = vshll.u32 %v3965, 16
      %v4332 = vrot.slane %v4330, 4
      %v4333 = vor.u32 %v4329, %v4332
      %v4334 = vsel %vm975, %v4325, %v4333
      %v4336 = vshrl.u32 %v4031, 16
      %v4338 = vrot.slane %v4336, 3
      %v4339 = vshll.u32 %v4031, 16
      %v4341 = vrot.slane %v4339, 4
      %v4342 = vor.u32 %v4338, %v4341
      %v4343 = vsel %vm975, %v4342, %v4342
      %v4345 = vshrl.u32 %v4190, 16
      %v4347 = vrot.slane %v4345, 3
      %v4348 = vshll.u32 %v4190, 16
      %v4350 = vrot.slane %v4348, 4
      %v4351 = vor.u32 %v4347, %v4350
      %v4353 = vshrl.u32 %v4192, 16
      %v4355 = vrot.slane %v4353, 3
      %v4356 = vshll.u32 %v4192, 16
      %v4358 = vrot.slane %v4356, 4
      %v4359 = vor.u32 %v4355, %v4358
      %v4360 = vsel %vm975, %v4351, %v4359
      %v4362 = vshrl.u32 %v3966, 16
      %v4364 = vrot.slane %v4362, 3
      %v4365 = vshll.u32 %v3966, 16
      %v4367 = vrot.slane %v4365, 4
      %v4368 = vor.u32 %v4364, %v4367
      %v4370 = vshrl.u32 %v3967, 16
      %v4372 = vrot.slane %v4370, 3
      %v4373 = vshll.u32 %v3967, 16
      %v4375 = vrot.slane %v4373, 4
      %v4376 = vor.u32 %v4372, %v4375
      %v4377 = vsel %vm975, %v4368, %v4376
      %v4379 = vshrl.u32 %v4039, 16
      %v4381 = vrot.slane %v4379, 3
      %v4382 = vshll.u32 %v4039, 16
      %v4384 = vrot.slane %v4382, 4
      %v4385 = vor.u32 %v4381, %v4384
      %v4386 = vsel %vm975, %v4385, %v4385
      %v4388 = vshrl.u32 %v4193, 16
      %v4390 = vrot.slane %v4388, 3
      %v4391 = vshll.u32 %v4193, 16
      %v4393 = vrot.slane %v4391, 4
      %v4394 = vor.u32 %v4390, %v4393
      %v4396 = vshrl.u32 %v4195, 16
      %v4398 = vrot.slane %v4396, 3
      %v4399 = vshll.u32 %v4195, 16
      %v4401 = vrot.slane %v4399, 4
      %v4402 = vor.u32 %v4398, %v4401
      %v4403 = vsel %vm975, %v4394, %v4402
      %v4405 = vshrl.u32 %v3968, 16
      %v4407 = vrot.slane %v4405, 3
      %v4408 = vshll.u32 %v3968, 16
      %v4410 = vrot.slane %v4408, 4
      %v4411 = vor.u32 %v4407, %v4410
      %v4413 = vshrl.u32 %v3969, 16
      %v4415 = vrot.slane %v4413, 3
      %v4416 = vshll.u32 %v3969, 16
      %v4418 = vrot.slane %v4416, 4
      %v4419 = vor.u32 %v4415, %v4418
      %v4420 = vsel %vm975, %v4411, %v4419
      %v4422 = vshrl.u32 %v4047, 16
      %v4424 = vrot.slane %v4422, 3
      %v4425 = vshll.u32 %v4047, 16
      %v4427 = vrot.slane %v4425, 4
      %v4428 = vor.u32 %v4424, %v4427
      %v4429 = vsel %vm975, %v4428, %v4428
      %v4431 = vshrl.u32 %v4196, 16
      %v4433 = vrot.slane %v4431, 3
      %v4434 = vshll.u32 %v4196, 16
      %v4436 = vrot.slane %v4434, 4
      %v4437 = vor.u32 %v4433, %v4436
      %v4439 = vshrl.u32 %v4198, 16
      %v4441 = vrot.slane %v4439, 3
      %v4442 = vshll.u32 %v4198, 16
      %v4444 = vrot.slane %v4442, 4
      %v4445 = vor.u32 %v4441, %v4444
      %v4446 = vsel %vm975, %v4437, %v4445
      %v4448 = vshrl.u32 %v3970, 16
      %v4450 = vrot.slane %v4448, 3
      %v4451 = vshll.u32 %v3970, 16
      %v4453 = vrot.slane %v4451, 4
      %v4454 = vor.u32 %v4450, %v4453
      %v4456 = vshrl.u32 %v3971, 16
      %v4458 = vrot.slane %v4456, 3
      %v4459 = vshll.u32 %v3971, 16
      %v4461 = vrot.slane %v4459, 4
      %v4462 = vor.u32 %v4458, %v4461
      %v4463 = vsel %vm975, %v4454, %v4462
      %v4465 = vshrl.u32 %v4055, 16
      %v4467 = vrot.slane %v4465, 3
      %v4468 = vshll.u32 %v4055, 16
      %v4470 = vrot.slane %v4468, 4
      %v4471 = vor.u32 %v4467, %v4470
      %v4472 = vsel %vm975, %v4471, %v4471
      %v4474 = vshrl.u32 %v4199, 16
      %v4476 = vrot.slane %v4474, 3
      %v4477 = vshll.u32 %v4199, 16
      %v4479 = vrot.slane %v4477, 4
      %v4480 = vor.u32 %v4476, %v4479
      %v4482 = vshrl.u32 %v4201, 16
      %v4484 = vrot.slane %v4482, 3
      %v4485 = vshll.u32 %v4201, 16
      %v4487 = vrot.slane %v4485, 4
      %v4488 = vor.u32 %v4484, %v4487
      %v4489 = vsel %vm975, %v4480, %v4488
      %v4491 = vshrl.u32 %v3972, 16
      %v4493 = vrot.slane %v4491, 3
      %v4494 = vshll.u32 %v3972, 16
      %v4496 = vrot.slane %v4494, 4
      %v4497 = vor.u32 %v4493, %v4496
      %v4499 = vshrl.u32 %v3973, 16
      %v4501 = vrot.slane %v4499, 3
      %v4502 = vshll.u32 %v3973, 16
      %v4504 = vrot.slane %v4502, 4
      %v4505 = vor.u32 %v4501, %v4504
      %v4506 = vsel %vm975, %v4497, %v4505
      %v4508 = vshrl.u32 %v4063, 16
      %v4510 = vrot.slane %v4508, 3
      %v4511 = vshll.u32 %v4063, 16
      %v4513 = vrot.slane %v4511, 4
      %v4514 = vor.u32 %v4510, %v4513
      %v4515 = vsel %vm975, %v4514, %v4514
      %v4517 = vshrl.u32 %v4202, 16
      %v4519 = vrot.slane %v4517, 3
      %v4520 = vshll.u32 %v4202, 16
      %v4522 = vrot.slane %v4520, 4
      %v4523 = vor.u32 %v4519, %v4522
      %v4525 = vshrl.u32 %v4204, 16
      %v4527 = vrot.slane %v4525, 3
      %v4528 = vshll.u32 %v4204, 16
      %v4530 = vrot.slane %v4528, 4
      %v4531 = vor.u32 %v4527, %v4530
      %v4532 = vsel %vm975, %v4523, %v4531
      %v4534 = vshrl.u32 %v3974, 16
      %v4536 = vrot.slane %v4534, 3
      %v4537 = vshll.u32 %v3974, 16
      %v4539 = vrot.slane %v4537, 4
      %v4540 = vor.u32 %v4536, %v4539
      %v4542 = vshrl.u32 %v3975, 16
      %v4544 = vrot.slane %v4542, 3
      %v4545 = vshll.u32 %v3975, 16
      %v4547 = vrot.slane %v4545, 4
      %v4548 = vor.u32 %v4544, %v4547
      %v4549 = vsel %vm975, %v4540, %v4548
      %v4551 = vshrl.u32 %v4071, 16
      %v4553 = vrot.slane %v4551, 3
      %v4554 = vshll.u32 %v4071, 16
      %v4556 = vrot.slane %v4554, 4
      %v4557 = vor.u32 %v4553, %v4556
      %v4558 = vsel %vm975, %v4557, %v4557
      %v4560 = vshrl.u32 %v4205, 16
      %v4562 = vrot.slane %v4560, 3
      %v4563 = vshll.u32 %v4205, 16
      %v4565 = vrot.slane %v4563, 4
      %v4566 = vor.u32 %v4562, %v4565
      %v4568 = vshrl.u32 %v4207, 16
      %v4570 = vrot.slane %v4568, 3
      %v4571 = vshll.u32 %v4207, 16
      %v4573 = vrot.slane %v4571, 4
      %v4574 = vor.u32 %v4570, %v4573
      %v4575 = vsel %vm975, %v4566, %v4574
      %v4577 = vshrl.u32 %v3976, 16
      %v4579 = vrot.slane %v4577, 3
      %v4580 = vshll.u32 %v3976, 16
      %v4582 = vrot.slane %v4580, 4
      %v4583 = vor.u32 %v4579, %v4582
      %v4585 = vshrl.u32 %v3977, 16
      %v4587 = vrot.slane %v4585, 3
      %v4588 = vshll.u32 %v3977, 16
      %v4590 = vrot.slane %v4588, 4
      %v4591 = vor.u32 %v4587, %v4590
      %v4592 = vsel %vm975, %v4583, %v4591
      %v4594 = vshrl.u32 %v4079, 16
      %v4596 = vrot.slane %v4594, 3
      %v4597 = vshll.u32 %v4079, 16
      %v4599 = vrot.slane %v4597, 4
      %v4600 = vor.u32 %v4596, %v4599
      %v4601 = vsel %vm975, %v4600, %v4600
      %v4603 = vshrl.u32 %v4208, 16
      %v4605 = vrot.slane %v4603, 3
      %v4606 = vshll.u32 %v4208, 16
      %v4608 = vrot.slane %v4606, 4
      %v4609 = vor.u32 %v4605, %v4608
      %v4611 = vshrl.u32 %v4210, 16
      %v4613 = vrot.slane %v4611, 3
      %v4614 = vshll.u32 %v4210, 16
      %v4616 = vrot.slane %v4614, 4
      %v4617 = vor.u32 %v4613, %v4616
      %v4618 = vsel %vm975, %v4609, %v4617
      %v4620 = vshrl.u32 %v3978, 16
      %v4622 = vrot.slane %v4620, 3
      %v4623 = vshll.u32 %v3978, 16
      %v4625 = vrot.slane %v4623, 4
      %v4626 = vor.u32 %v4622, %v4625
      %v4628 = vshrl.u32 %v3979, 16
      %v4630 = vrot.slane %v4628, 3
      %v4631 = vshll.u32 %v3979, 16
      %v4633 = vrot.slane %v4631, 4
      %v4634 = vor.u32 %v4630, %v4633
      %v4635 = vsel %vm975, %v4626, %v4634
      %v4637 = vshrl.u32 %v4087, 16
      %v4639 = vrot.slane %v4637, 3
      %v4640 = vshll.u32 %v4087, 16
      %v4642 = vrot.slane %v4640, 4
      %v4643 = vor.u32 %v4639, %v4642
      %v4644 = vsel %vm975, %v4643, %v4643
      %v4646 = vshrl.u32 %v4211, 16
      %v4648 = vrot.slane %v4646, 3
      %v4649 = vshll.u32 %v4211, 16
      %v4651 = vrot.slane %v4649, 4
      %v4652 = vor.u32 %v4648, %v4651
      %v4654 = vshrl.u32 %v4213, 16
      %v4656 = vrot.slane %v4654, 3
      %v4657 = vshll.u32 %v4213, 16
      %v4659 = vrot.slane %v4657, 4
      %v4660 = vor.u32 %v4656, %v4659
      %v4661 = vsel %vm975, %v4652, %v4660
      %v4663 = vshrl.u32 %v3980, 16
      %v4665 = vrot.slane %v4663, 3
      %v4666 = vshll.u32 %v3980, 16
      %v4668 = vrot.slane %v4666, 4
      %v4669 = vor.u32 %v4665, %v4668
      %v4671 = vshrl.u32 %v3981, 16
      %v4673 = vrot.slane %v4671, 3
      %v4674 = vshll.u32 %v3981, 16
      %v4676 = vrot.slane %v4674, 4
      %v4677 = vor.u32 %v4673, %v4676
      %v4678 = vsel %vm975, %v4669, %v4677
      %v4680 = vshrl.u32 %v4095, 16
      %v4682 = vrot.slane %v4680, 3
      %v4683 = vshll.u32 %v4095, 16
      %v4685 = vrot.slane %v4683, 4
      %v4686 = vor.u32 %v4682, %v4685
      %v4687 = vsel %vm975, %v4686, %v4686
      %v4689 = vshrl.u32 %v4214, 16
      %v4691 = vrot.slane %v4689, 3
      %v4692 = vshll.u32 %v4214, 16
      %v4694 = vrot.slane %v4692, 4
      %v4695 = vor.u32 %v4691, %v4694
      %v4697 = vshrl.u32 %v4216, 16
      %v4699 = vrot.slane %v4697, 3
      %v4700 = vshll.u32 %v4216, 16
      %v4702 = vrot.slane %v4700, 4
      %v4703 = vor.u32 %v4699, %v4702
      %v4704 = vsel %vm975, %v4695, %v4703
      %v4706 = vshrl.u32 %v3982, 16
      %v4708 = vrot.slane %v4706, 3
      %v4709 = vshll.u32 %v3982, 16
      %v4711 = vrot.slane %v4709, 4
      %v4712 = vor.u32 %v4708, %v4711
      %v4714 = vshrl.u32 %v3983, 16
      %v4716 = vrot.slane %v4714, 3
      %v4717 = vshll.u32 %v3983, 16
      %v4719 = vrot.slane %v4717, 4
      %v4720 = vor.u32 %v4716, %v4719
      %v4721 = vsel %vm975, %v4712, %v4720
      %v4723 = vshrl.u32 %v4103, 16
      %v4725 = vrot.slane %v4723, 3
      %v4726 = vshll.u32 %v4103, 16
      %v4728 = vrot.slane %v4726, 4
      %v4729 = vor.u32 %v4725, %v4728
      %v4730 = vsel %vm975, %v4729, %v4729
      %v4732 = vshrl.u32 %v4217, 16
      %v4734 = vrot.slane %v4732, 3
      %v4735 = vshll.u32 %v4217, 16
      %v4737 = vrot.slane %v4735, 4
      %v4738 = vor.u32 %v4734, %v4737
      %v4740 = vshrl.u32 %v4219, 16
      %v4742 = vrot.slane %v4740, 3
      %v4743 = vshll.u32 %v4219, 16
      %v4745 = vrot.slane %v4743, 4
      %v4746 = vor.u32 %v4742, %v4745
      %v4747 = vsel %vm975, %v4738, %v4746
      %v4749 = vshrl.u32 %v3984, 16
      %v4751 = vrot.slane %v4749, 3
      %v4752 = vshll.u32 %v3984, 16
      %v4754 = vrot.slane %v4752, 4
      %v4755 = vor.u32 %v4751, %v4754
      %v4757 = vshrl.u32 %v3985, 16
      %v4759 = vrot.slane %v4757, 3
      %v4760 = vshll.u32 %v3985, 16
      %v4762 = vrot.slane %v4760, 4
      %v4763 = vor.u32 %v4759, %v4762
      %v4764 = vsel %vm975, %v4755, %v4763
      %v4766 = vshrl.u32 %v4111, 16
      %v4768 = vrot.slane %v4766, 3
      %v4769 = vshll.u32 %v4111, 16
      %v4771 = vrot.slane %v4769, 4
      %v4772 = vor.u32 %v4768, %v4771
      %v4773 = vsel %vm975, %v4772, %v4772
      %v4775 = vshrl.u32 %v4220, 16
      %v4777 = vrot.slane %v4775, 3
      %v4778 = vshll.u32 %v4220, 16
      %v4780 = vrot.slane %v4778, 4
      %v4781 = vor.u32 %v4777, %v4780
      %v4783 = vshrl.u32 %v4222, 16
      %v4785 = vrot.slane %v4783, 3
      %v4786 = vshll.u32 %v4222, 16
      %v4788 = vrot.slane %v4786, 4
      %v4789 = vor.u32 %v4785, %v4788
      %v4790 = vsel %vm975, %v4781, %v4789
      %v4792 = vshrl.u32 %v3986, 16
      %v4794 = vrot.slane %v4792, 3
      %v4795 = vshll.u32 %v3986, 16
      %v4797 = vrot.slane %v4795, 4
      %v4798 = vor.u32 %v4794, %v4797
      %v4800 = vshrl.u32 %v3987, 16
      %v4802 = vrot.slane %v4800, 3
      %v4803 = vshll.u32 %v3987, 16
      %v4805 = vrot.slane %v4803, 4
      %v4806 = vor.u32 %v4802, %v4805
      %v4807 = vsel %vm975, %v4798, %v4806
      %v4809 = vshrl.u32 %v4119, 16
      %v4811 = vrot.slane %v4809, 3
      %v4812 = vshll.u32 %v4119, 16
      %v4814 = vrot.slane %v4812, 4
      %v4815 = vor.u32 %v4811, %v4814
      %v4816 = vsel %vm975, %v4815, %v4815
      %v4818 = vshrl.u32 %v4223, 16
      %v4820 = vrot.slane %v4818, 3
      %v4821 = vshll.u32 %v4223, 16
      %v4823 = vrot.slane %v4821, 4
      %v4824 = vor.u32 %v4820, %v4823
      %v4826 = vshrl.u32 %v4225, 16
      %v4828 = vrot.slane %v4826, 3
      %v4829 = vshll.u32 %v4225, 16
      %v4831 = vrot.slane %v4829, 4
      %v4832 = vor.u32 %v4828, %v4831
      %v4833 = vsel %vm975, %v4824, %v4832
      %v4835 = vshrl.u32 %v3988, 16
      %v4837 = vrot.slane %v4835, 3
      %v4838 = vshll.u32 %v3988, 16
      %v4840 = vrot.slane %v4838, 4
      %v4841 = vor.u32 %v4837, %v4840
      %v4843 = vshrl.u32 %v3989, 16
      %v4845 = vrot.slane %v4843, 3
      %v4846 = vshll.u32 %v3989, 16
      %v4848 = vrot.slane %v4846, 4
      %v4849 = vor.u32 %v4845, %v4848
      %v4850 = vsel %vm975, %v4841, %v4849
      %v4852 = vshrl.u32 %v4127, 16
      %v4854 = vrot.slane %v4852, 3
      %v4855 = vshll.u32 %v4127, 16
      %v4857 = vrot.slane %v4855, 4
      %v4858 = vor.u32 %v4854, %v4857
      %v4859 = vsel %vm975, %v4858, %v4858
      %v4861 = vshrl.u32 %v4226, 16
      %v4863 = vrot.slane %v4861, 3
      %v4864 = vshll.u32 %v4226, 16
      %v4866 = vrot.slane %v4864, 4
      %v4867 = vor.u32 %v4863, %v4866
      %v4869 = vshrl.u32 %v4228, 16
      %v4871 = vrot.slane %v4869, 3
      %v4872 = vshll.u32 %v4228, 16
      %v4874 = vrot.slane %v4872, 4
      %v4875 = vor.u32 %v4871, %v4874
      %v4876 = vsel %vm975, %v4867, %v4875
      %v4878 = vshrl.u32 %v3990, 16
      %v4880 = vrot.slane %v4878, 3
      %v4881 = vshll.u32 %v3990, 16
      %v4883 = vrot.slane %v4881, 4
      %v4884 = vor.u32 %v4880, %v4883
      %v4886 = vshrl.u32 %v3991, 16
      %v4888 = vrot.slane %v4886, 3
      %v4889 = vshll.u32 %v3991, 16
      %v4891 = vrot.slane %v4889, 4
      %v4892 = vor.u32 %v4888, %v4891
      %v4893 = vsel %vm975, %v4884, %v4892
      %v4895 = vshrl.u32 %v4135, 16
      %v4897 = vrot.slane %v4895, 3
      %v4898 = vshll.u32 %v4135, 16
      %v4900 = vrot.slane %v4898, 4
      %v4901 = vor.u32 %v4897, %v4900
      %v4902 = vsel %vm975, %v4901, %v4901
      %v4904 = vshrl.u32 %v4229, 16
      %v4906 = vrot.slane %v4904, 3
      %v4907 = vshll.u32 %v4229, 16
      %v4909 = vrot.slane %v4907, 4
      %v4910 = vor.u32 %v4906, %v4909
      %v4912 = vshrl.u32 %v4231, 16
      %v4914 = vrot.slane %v4912, 3
      %v4915 = vshll.u32 %v4231, 16
      %v4917 = vrot.slane %v4915, 4
      %v4918 = vor.u32 %v4914, %v4917
      %v4919 = vsel %vm975, %v4910, %v4918
      %s4968 = scalar_lea.vmem %s3, 384
      %v4969 = vld [vmem:[%s4968] sm:$0xf]
      %v4970 = vld [vmem:[%s4968 + $0x4] sm:$0xf]
      %v4971 = vld [vmem:[%s4968 + $0x8] sm:$0xf]
      %v4972 = vld [vmem:[%s4968 + $0xc] sm:$0xf]
      %v4973 = vld [vmem:[%s4968 + $0x10] sm:$0xf]
      %v4974 = vld [vmem:[%s4968 + $0x14] sm:$0xf]
      %v4975 = vld [vmem:[%s4968 + $0x18] sm:$0xf]
      %v4976 = vld [vmem:[%s4968 + $0x1c] sm:$0xf]
      %v4977 = vld [vmem:[%s4968 + $0x20] sm:$0xf]
      %v4978 = vld [vmem:[%s4968 + $0x24] sm:$0xf]
      %v4979 = vld [vmem:[%s4968 + $0x28] sm:$0xf]
      %v4980 = vld [vmem:[%s4968 + $0x2c] sm:$0xf]
      %v4981 = vld [vmem:[%s4968 + $0x30] sm:$0xf]
      %v4982 = vld [vmem:[%s4968 + $0x34] sm:$0xf]
      %v4983 = vld [vmem:[%s4968 + $0x38] sm:$0xf]
      %v4984 = vld [vmem:[%s4968 + $0x3c] sm:$0xf]
      %v4985 = vld [vmem:[%s4968 + $0x40] sm:$0xf]
      %v4986 = vld [vmem:[%s4968 + $0x44] sm:$0xf]
      %v4987 = vld [vmem:[%s4968 + $0x48] sm:$0xf]
      %v4988 = vld [vmem:[%s4968 + $0x4c] sm:$0xf]
      %v4989 = vld [vmem:[%s4968 + $0x50] sm:$0xf]
      %v4990 = vld [vmem:[%s4968 + $0x54] sm:$0xf]
      %v4991 = vld [vmem:[%s4968 + $0x58] sm:$0xf]
      %v4992 = vld [vmem:[%s4968 + $0x5c] sm:$0xf]
      %v4993 = vld [vmem:[%s4968 + $0x60] sm:$0xf]
      %v4994 = vld [vmem:[%s4968 + $0x64] sm:$0xf]
      %v4995 = vld [vmem:[%s4968 + $0x68] sm:$0xf]
      %v4996 = vld [vmem:[%s4968 + $0x6c] sm:$0xf]
      %v4997 = vld [vmem:[%s4968 + $0x70] sm:$0xf]
      %v4998 = vld [vmem:[%s4968 + $0x74] sm:$0xf]
      %v4999 = vld [vmem:[%s4968 + $0x78] sm:$0xf]
      %v5000 = vld [vmem:[%s4968 + $0x7c] sm:$0xf]
      %v5001 = vld [vmem:[%s4968 + $0x80] sm:$0xf]
      %v5002 = vld [vmem:[%s4968 + $0x84] sm:$0xf]
      %v5003 = vld [vmem:[%s4968 + $0x88] sm:$0xf]
      %v5004 = vld [vmem:[%s4968 + $0x8c] sm:$0xf]
      %v5005 = vld [vmem:[%s4968 + $0x90] sm:$0xf]
      %v5006 = vld [vmem:[%s4968 + $0x94] sm:$0xf]
      %v5007 = vld [vmem:[%s4968 + $0x98] sm:$0xf]
      %v5008 = vld [vmem:[%s4968 + $0x9c] sm:$0xf]
      %v5009 = vld [vmem:[%s4968 + $0xa0] sm:$0xf]
      %v5010 = vld [vmem:[%s4968 + $0xa4] sm:$0xf]
      %v5011 = vld [vmem:[%s4968 + $0xa8] sm:$0xf]
      %v5012 = vld [vmem:[%s4968 + $0xac] sm:$0xf]
      %v5013 = vld [vmem:[%s4968 + $0xb0] sm:$0xf]
      %v5014 = vld [vmem:[%s4968 + $0xb4] sm:$0xf]
      %v5015 = vld [vmem:[%s4968 + $0xb8] sm:$0xf]
      %v5016 = vld [vmem:[%s4968 + $0xbc] sm:$0xf]
      %v5065 = vunpack.c.l.b16 %v4969
      %v5066 = vunpack.c.l.b16 %v4970
      %v5067 = vunpack.c.l.b16 %v4971
      %v5068 = vunpack.c.l.b16 %v4972
      %v5069 = vunpack.c.l.b16 %v4973
      %v5070 = vunpack.c.l.b16 %v4974
      %v5071 = vunpack.c.l.b16 %v4975
      %v5072 = vunpack.c.l.b16 %v4976
      %v5073 = vunpack.c.l.b16 %v4977
      %v5074 = vunpack.c.l.b16 %v4978
      %v5075 = vunpack.c.l.b16 %v4979
      %v5076 = vunpack.c.l.b16 %v4980
      %v5077 = vunpack.c.l.b16 %v4981
      %v5078 = vunpack.c.l.b16 %v4982
      %v5079 = vunpack.c.l.b16 %v4983
      %v5080 = vunpack.c.l.b16 %v4984
      %v5081 = vunpack.c.l.b16 %v4985
      %v5082 = vunpack.c.l.b16 %v4986
      %v5083 = vunpack.c.l.b16 %v4987
      %v5084 = vunpack.c.l.b16 %v4988
      %v5085 = vunpack.c.l.b16 %v4989
      %v5086 = vunpack.c.l.b16 %v4990
      %v5087 = vunpack.c.l.b16 %v4991
      %v5088 = vunpack.c.l.b16 %v4992
      %v5089 = vunpack.c.l.b16 %v4993
      %v5090 = vunpack.c.l.b16 %v4994
      %v5091 = vunpack.c.l.b16 %v4995
      %v5092 = vunpack.c.l.b16 %v4996
      %v5093 = vunpack.c.l.b16 %v4997
      %v5094 = vunpack.c.l.b16 %v4998
      %v5095 = vunpack.c.l.b16 %v4999
      %v5096 = vunpack.c.l.b16 %v5000
      %v5097 = vunpack.c.l.b16 %v5001
      %v5098 = vunpack.c.l.b16 %v5002
      %v5099 = vunpack.c.l.b16 %v5003
      %v5100 = vunpack.c.l.b16 %v5004
      %v5101 = vunpack.c.l.b16 %v5005
      %v5102 = vunpack.c.l.b16 %v5006
      %v5103 = vunpack.c.l.b16 %v5007
      %v5104 = vunpack.c.l.b16 %v5008
      %v5105 = vunpack.c.l.b16 %v5009
      %v5106 = vunpack.c.l.b16 %v5010
      %v5107 = vunpack.c.l.b16 %v5011
      %v5108 = vunpack.c.l.b16 %v5012
      %v5109 = vunpack.c.l.b16 %v5013
      %v5110 = vunpack.c.l.b16 %v5014
      %v5111 = vunpack.c.l.b16 %v5015
      %v5112 = vunpack.c.l.b16 %v5016
      %v5113 = vpack.c.b16 %v5066, %v5065
      %v5114 = vpack.c.b16 %v5068, %v5067
      %v5115 = vpack.c.b16 %v5070, %v5069
      %v5116 = vpack.c.b16 %v5072, %v5071
      %v5117 = vpack.c.b16 %v5074, %v5073
      %v5118 = vpack.c.b16 %v5076, %v5075
      %v5119 = vpack.c.b16 %v5078, %v5077
      %v5120 = vpack.c.b16 %v5080, %v5079
      %v5121 = vpack.c.b16 %v5082, %v5081
      %v5122 = vpack.c.b16 %v5084, %v5083
      %v5123 = vpack.c.b16 %v5086, %v5085
      %v5124 = vpack.c.b16 %v5088, %v5087
      %v5125 = vpack.c.b16 %v5090, %v5089
      %v5126 = vpack.c.b16 %v5092, %v5091
      %v5127 = vpack.c.b16 %v5094, %v5093
      %v5128 = vpack.c.b16 %v5096, %v5095
      %v5129 = vpack.c.b16 %v5098, %v5097
      %v5130 = vpack.c.b16 %v5100, %v5099
      %v5131 = vpack.c.b16 %v5102, %v5101
      %v5132 = vpack.c.b16 %v5104, %v5103
      %v5133 = vpack.c.b16 %v5106, %v5105
      %v5134 = vpack.c.b16 %v5108, %v5107
      %v5135 = vpack.c.b16 %v5110, %v5109
      %v5136 = vpack.c.b16 %v5112, %v5111
      %5161 = vmatpush.bf16.msra.mxu0 %v5120
      %5162 = vmatpush.bf16.msra.mxu0 %v5119
      %5163 = vmatpush.bf16.msra.mxu0 %v5118
      %5164 = vmatpush.bf16.msra.mxu0 %v5117
      %5165 = vmatpush.bf16.msra.mxu0 %v5116
      %5166 = vmatpush.bf16.msra.mxu0 %v5115
      %5167 = vmatpush.bf16.msra.mxu0 %v5114
      %5168 = vmatpush.bf16.msra.mxu0 %v5113
      %5169 = vmatmul.bf16.gmra.mxu0 %v4248
      %v5170 = vpop.f32.mrf.mxu0
      %v5171 = vadd.f32 0.0, %v5170
      %v5172 = vpop.f32.mrf.mxu0
      %v5173 = vadd.f32 0.0, %v5172
      %5174 = vmatmul.bf16.gmra.mxu0 %v4291
      %v5175 = vpop.f32.mrf.mxu0
      %v5176 = vadd.f32 0.0, %v5175
      %v5177 = vpop.f32.mrf.mxu0
      %v5178 = vadd.f32 0.0, %v5177
      %5179 = vmatmul.bf16.gmra.mxu0 %v4334
      %v5180 = vpop.f32.mrf.mxu0
      %v5181 = vadd.f32 0.0, %v5180
      %v5182 = vpop.f32.mrf.mxu0
      %v5183 = vadd.f32 0.0, %v5182
      %5184 = vmatmul.bf16.gmra.mxu0 %v4377
      %v5185 = vpop.f32.mrf.mxu0
      %v5186 = vadd.f32 0.0, %v5185
      %v5187 = vpop.f32.mrf.mxu0
      %v5188 = vadd.f32 0.0, %v5187
      %5189 = vmatmul.bf16.gmra.mxu0 %v4420
      %v5190 = vpop.f32.mrf.mxu0
      %v5191 = vadd.f32 0.0, %v5190
      %v5192 = vpop.f32.mrf.mxu0
      %v5193 = vadd.f32 0.0, %v5192
      %5194 = vmatmul.bf16.gmra.mxu0 %v4463
      %v5195 = vpop.f32.mrf.mxu0
      %v5196 = vadd.f32 0.0, %v5195
      %v5197 = vpop.f32.mrf.mxu0
      %v5198 = vadd.f32 0.0, %v5197
      %5199 = vmatmul.bf16.gmra.mxu0 %v4506
      %v5200 = vpop.f32.mrf.mxu0
      %v5201 = vadd.f32 0.0, %v5200
      %v5202 = vpop.f32.mrf.mxu0
      %v5203 = vadd.f32 0.0, %v5202
      %5204 = vmatmul.bf16.gmra.mxu0 %v4549
      %v5205 = vpop.f32.mrf.mxu0
      %v5206 = vadd.f32 0.0, %v5205
      %v5207 = vpop.f32.mrf.mxu0
      %v5208 = vadd.f32 0.0, %v5207
      %5209 = vmatmul.bf16.gmra.mxu0 %v4592
      %v5210 = vpop.f32.mrf.mxu0
      %v5211 = vadd.f32 0.0, %v5210
      %v5212 = vpop.f32.mrf.mxu0
      %v5213 = vadd.f32 0.0, %v5212
      %5214 = vmatmul.bf16.gmra.mxu0 %v4635
      %v5215 = vpop.f32.mrf.mxu0
      %v5216 = vadd.f32 0.0, %v5215
      %v5217 = vpop.f32.mrf.mxu0
      %v5218 = vadd.f32 0.0, %v5217
      %5219 = vmatmul.bf16.gmra.mxu0 %v4678
      %v5220 = vpop.f32.mrf.mxu0
      %v5221 = vadd.f32 0.0, %v5220
      %v5222 = vpop.f32.mrf.mxu0
      %v5223 = vadd.f32 0.0, %v5222
      %5224 = vmatmul.bf16.gmra.mxu0 %v4721
      %v5225 = vpop.f32.mrf.mxu0
      %v5226 = vadd.f32 0.0, %v5225
      %v5227 = vpop.f32.mrf.mxu0
      %v5228 = vadd.f32 0.0, %v5227
      %5229 = vmatmul.bf16.gmra.mxu0 %v4764
      %v5230 = vpop.f32.mrf.mxu0
      %v5231 = vadd.f32 0.0, %v5230
      %v5232 = vpop.f32.mrf.mxu0
      %v5233 = vadd.f32 0.0, %v5232
      %5234 = vmatmul.bf16.gmra.mxu0 %v4807
      %v5235 = vpop.f32.mrf.mxu0
      %v5236 = vadd.f32 0.0, %v5235
      %v5237 = vpop.f32.mrf.mxu0
      %v5238 = vadd.f32 0.0, %v5237
      %5239 = vmatmul.bf16.gmra.mxu0 %v4850
      %v5240 = vpop.f32.mrf.mxu0
      %v5241 = vadd.f32 0.0, %v5240
      %v5242 = vpop.f32.mrf.mxu0
      %v5243 = vadd.f32 0.0, %v5242
      %5244 = vmatmul.bf16.gmra.mxu0 %v4893
      %v5245 = vpop.f32.mrf.mxu0
      %v5246 = vadd.f32 0.0, %v5245
      %v5247 = vpop.f32.mrf.mxu0
      %v5248 = vadd.f32 0.0, %v5247
      %5249 = vdwg.mxu0
      %5250 = vmatpush.bf16.msra.mxu0 %v5128
      %5251 = vmatpush.bf16.msra.mxu0 %v5127
      %5252 = vmatpush.bf16.msra.mxu0 %v5126
      %5253 = vmatpush.bf16.msra.mxu0 %v5125
      %5254 = vmatpush.bf16.msra.mxu0 %v5124
      %5255 = vmatpush.bf16.msra.mxu0 %v5123
      %5256 = vmatpush.bf16.msra.mxu0 %v5122
      %5257 = vmatpush.bf16.msra.mxu0 %v5121
      %5258 = vmatmul.bf16.gmra.mxu0 %v4257
      %v5259 = vpop.f32.mrf.mxu0
      %v5260 = vadd.f32 %v5171, %v5259
      %v5261 = vpop.f32.mrf.mxu0
      %v5262 = vadd.f32 %v5173, %v5261
      %5263 = vmatmul.bf16.gmra.mxu0 %v4300
      %v5264 = vpop.f32.mrf.mxu0
      %v5265 = vadd.f32 %v5176, %v5264
      %v5266 = vpop.f32.mrf.mxu0
      %v5267 = vadd.f32 %v5178, %v5266
      %5268 = vmatmul.bf16.gmra.mxu0 %v4343
      %v5269 = vpop.f32.mrf.mxu0
      %v5270 = vadd.f32 %v5181, %v5269
      %v5271 = vpop.f32.mrf.mxu0
      %v5272 = vadd.f32 %v5183, %v5271
      %5273 = vmatmul.bf16.gmra.mxu0 %v4386
      %v5274 = vpop.f32.mrf.mxu0
      %v5275 = vadd.f32 %v5186, %v5274
      %v5276 = vpop.f32.mrf.mxu0
      %v5277 = vadd.f32 %v5188, %v5276
      %5278 = vmatmul.bf16.gmra.mxu0 %v4429
      %v5279 = vpop.f32.mrf.mxu0
      %v5280 = vadd.f32 %v5191, %v5279
      %v5281 = vpop.f32.mrf.mxu0
      %v5282 = vadd.f32 %v5193, %v5281
      %5283 = vmatmul.bf16.gmra.mxu0 %v4472
      %v5284 = vpop.f32.mrf.mxu0
      %v5285 = vadd.f32 %v5196, %v5284
      %v5286 = vpop.f32.mrf.mxu0
      %v5287 = vadd.f32 %v5198, %v5286
      %5288 = vmatmul.bf16.gmra.mxu0 %v4515
      %v5289 = vpop.f32.mrf.mxu0
      %v5290 = vadd.f32 %v5201, %v5289
      %v5291 = vpop.f32.mrf.mxu0
      %v5292 = vadd.f32 %v5203, %v5291
      %5293 = vmatmul.bf16.gmra.mxu0 %v4558
      %v5294 = vpop.f32.mrf.mxu0
      %v5295 = vadd.f32 %v5206, %v5294
      %v5296 = vpop.f32.mrf.mxu0
      %v5297 = vadd.f32 %v5208, %v5296
      %5298 = vmatmul.bf16.gmra.mxu0 %v4601
      %v5299 = vpop.f32.mrf.mxu0
      %v5300 = vadd.f32 %v5211, %v5299
      %v5301 = vpop.f32.mrf.mxu0
      %v5302 = vadd.f32 %v5213, %v5301
      %5303 = vmatmul.bf16.gmra.mxu0 %v4644
      %v5304 = vpop.f32.mrf.mxu0
      %v5305 = vadd.f32 %v5216, %v5304
      %v5306 = vpop.f32.mrf.mxu0
      %v5307 = vadd.f32 %v5218, %v5306
      %5308 = vmatmul.bf16.gmra.mxu0 %v4687
      %v5309 = vpop.f32.mrf.mxu0
      %v5310 = vadd.f32 %v5221, %v5309
      %v5311 = vpop.f32.mrf.mxu0
      %v5312 = vadd.f32 %v5223, %v5311
      %5313 = vmatmul.bf16.gmra.mxu0 %v4730
      %v5314 = vpop.f32.mrf.mxu0
      %v5315 = vadd.f32 %v5226, %v5314
      %v5316 = vpop.f32.mrf.mxu0
      %v5317 = vadd.f32 %v5228, %v5316
      %5318 = vmatmul.bf16.gmra.mxu0 %v4773
      %v5319 = vpop.f32.mrf.mxu0
      %v5320 = vadd.f32 %v5231, %v5319
      %v5321 = vpop.f32.mrf.mxu0
      %v5322 = vadd.f32 %v5233, %v5321
      %5323 = vmatmul.bf16.gmra.mxu0 %v4816
      %v5324 = vpop.f32.mrf.mxu0
      %v5325 = vadd.f32 %v5236, %v5324
      %v5326 = vpop.f32.mrf.mxu0
      %v5327 = vadd.f32 %v5238, %v5326
      %5328 = vmatmul.bf16.gmra.mxu0 %v4859
      %v5329 = vpop.f32.mrf.mxu0
      %v5330 = vadd.f32 %v5241, %v5329
      %v5331 = vpop.f32.mrf.mxu0
      %v5332 = vadd.f32 %v5243, %v5331
      %5333 = vmatmul.bf16.gmra.mxu0 %v4902
      %v5334 = vpop.f32.mrf.mxu0
      %v5335 = vadd.f32 %v5246, %v5334
      %v5336 = vpop.f32.mrf.mxu0
      %v5337 = vadd.f32 %v5248, %v5336
      %5338 = vdwg.mxu0
      %5339 = vmatpush.bf16.msra.mxu0 %v5136
      %5340 = vmatpush.bf16.msra.mxu0 %v5135
      %5341 = vmatpush.bf16.msra.mxu0 %v5134
      %5342 = vmatpush.bf16.msra.mxu0 %v5133
      %5343 = vmatpush.bf16.msra.mxu0 %v5132
      %5344 = vmatpush.bf16.msra.mxu0 %v5131
      %5345 = vmatpush.bf16.msra.mxu0 %v5130
      %5346 = vmatpush.bf16.msra.mxu0 %v5129
      %5347 = vmatmul.bf16.gmra.mxu0 %v4274
      %v5348 = vpop.f32.mrf.mxu0
      %v5349 = vadd.f32 %v5260, %v5348
      %v5350 = vpop.f32.mrf.mxu0
      %v5351 = vadd.f32 %v5262, %v5350
      %5352 = vmatmul.bf16.gmra.mxu0 %v4317
      %v5353 = vpop.f32.mrf.mxu0
      %v5354 = vadd.f32 %v5265, %v5353
      %v5355 = vpop.f32.mrf.mxu0
      %v5356 = vadd.f32 %v5267, %v5355
      %5357 = vmatmul.bf16.gmra.mxu0 %v4360
      %v5358 = vpop.f32.mrf.mxu0
      %v5359 = vadd.f32 %v5270, %v5358
      %v5360 = vpop.f32.mrf.mxu0
      %v5361 = vadd.f32 %v5272, %v5360
      %5362 = vmatmul.bf16.gmra.mxu0 %v4403
      %v5363 = vpop.f32.mrf.mxu0
      %v5364 = vadd.f32 %v5275, %v5363
      %v5365 = vpop.f32.mrf.mxu0
      %v5366 = vadd.f32 %v5277, %v5365
      %5367 = vmatmul.bf16.gmra.mxu0 %v4446
      %v5368 = vpop.f32.mrf.mxu0
      %v5369 = vadd.f32 %v5280, %v5368
      %v5370 = vpop.f32.mrf.mxu0
      %v5371 = vadd.f32 %v5282, %v5370
      %5372 = vmatmul.bf16.gmra.mxu0 %v4489
      %v5373 = vpop.f32.mrf.mxu0
      %v5374 = vadd.f32 %v5285, %v5373
      %v5375 = vpop.f32.mrf.mxu0
      %v5376 = vadd.f32 %v5287, %v5375
      %5377 = vmatmul.bf16.gmra.mxu0 %v4532
      %v5378 = vpop.f32.mrf.mxu0
      %v5379 = vadd.f32 %v5290, %v5378
      %v5380 = vpop.f32.mrf.mxu0
      %v5381 = vadd.f32 %v5292, %v5380
      %5382 = vmatmul.bf16.gmra.mxu0 %v4575
      %v5383 = vpop.f32.mrf.mxu0
      %v5384 = vadd.f32 %v5295, %v5383
      %v5385 = vpop.f32.mrf.mxu0
      %v5386 = vadd.f32 %v5297, %v5385
      %5387 = vmatmul.bf16.gmra.mxu0 %v4618
      %v5388 = vpop.f32.mrf.mxu0
      %v5389 = vadd.f32 %v5300, %v5388
      %v5390 = vpop.f32.mrf.mxu0
      %v5391 = vadd.f32 %v5302, %v5390
      %5392 = vmatmul.bf16.gmra.mxu0 %v4661
      %v5393 = vpop.f32.mrf.mxu0
      %v5394 = vadd.f32 %v5305, %v5393
      %v5395 = vpop.f32.mrf.mxu0
      %v5396 = vadd.f32 %v5307, %v5395
      %5397 = vmatmul.bf16.gmra.mxu0 %v4704
      %v5398 = vpop.f32.mrf.mxu0
      %v5399 = vadd.f32 %v5310, %v5398
      %v5400 = vpop.f32.mrf.mxu0
      %v5401 = vadd.f32 %v5312, %v5400
      %5402 = vmatmul.bf16.gmra.mxu0 %v4747
      %v5403 = vpop.f32.mrf.mxu0
      %v5404 = vadd.f32 %v5315, %v5403
      %v5405 = vpop.f32.mrf.mxu0
      %v5406 = vadd.f32 %v5317, %v5405
      %5407 = vmatmul.bf16.gmra.mxu0 %v4790
      %v5408 = vpop.f32.mrf.mxu0
      %v5409 = vadd.f32 %v5320, %v5408
      %v5410 = vpop.f32.mrf.mxu0
      %v5411 = vadd.f32 %v5322, %v5410
      %5412 = vmatmul.bf16.gmra.mxu0 %v4833
      %v5413 = vpop.f32.mrf.mxu0
      %v5414 = vadd.f32 %v5325, %v5413
      %v5415 = vpop.f32.mrf.mxu0
      %v5416 = vadd.f32 %v5327, %v5415
      %5417 = vmatmul.bf16.gmra.mxu0 %v4876
      %v5418 = vpop.f32.mrf.mxu0
      %v5419 = vadd.f32 %v5330, %v5418
      %v5420 = vpop.f32.mrf.mxu0
      %v5421 = vadd.f32 %v5332, %v5420
      %5422 = vmatmul.bf16.gmra.mxu0 %v4919
      %v5423 = vpop.f32.mrf.mxu0
      %v5424 = vadd.f32 %v5335, %v5423
      %v5425 = vpop.f32.mrf.mxu0
      %v5426 = vadd.f32 %v5337, %v5425
      %5427 = vdwg.mxu0
      %v5428 = vadd.f32 %v3720, %v5349
      %v5429 = vadd.f32 %v3722, %v5351
      %v5430 = vadd.f32 %v3725, %v5354
      %v5431 = vadd.f32 %v3727, %v5356
      %v5432 = vadd.f32 %v3730, %v5359
      %v5433 = vadd.f32 %v3732, %v5361
      %v5434 = vadd.f32 %v3735, %v5364
      %v5435 = vadd.f32 %v3737, %v5366
      %v5436 = vadd.f32 %v3740, %v5369
      %v5437 = vadd.f32 %v3742, %v5371
      %v5438 = vadd.f32 %v3745, %v5374
      %v5439 = vadd.f32 %v3747, %v5376
      %v5440 = vadd.f32 %v3750, %v5379
      %v5441 = vadd.f32 %v3752, %v5381
      %v5442 = vadd.f32 %v3755, %v5384
      %v5443 = vadd.f32 %v3757, %v5386
      %v5444 = vadd.f32 %v3760, %v5389
      %v5445 = vadd.f32 %v3762, %v5391
      %v5446 = vadd.f32 %v3765, %v5394
      %v5447 = vadd.f32 %v3767, %v5396
      %v5448 = vadd.f32 %v3770, %v5399
      %v5449 = vadd.f32 %v3772, %v5401
      %v5450 = vadd.f32 %v3775, %v5404
      %v5451 = vadd.f32 %v3777, %v5406
      %v5452 = vadd.f32 %v3780, %v5409
      %v5453 = vadd.f32 %v3782, %v5411
      %v5454 = vadd.f32 %v3785, %v5414
      %v5455 = vadd.f32 %v3787, %v5416
      %v5456 = vadd.f32 %v3790, %v5419
      %v5457 = vadd.f32 %v3792, %v5421
      %v5458 = vadd.f32 %v3795, %v5424
      %v5459 = vadd.f32 %v3797, %v5426
      %5460 = vst [vmem:[%s231] sm:$0xff] %v5428
      %5461 = vst [vmem:[%s231 + $0x8] sm:$0xff] %v5429
      %5462 = vst [vmem:[%s231 + $0x10] sm:$0xff] %v5430
      %5463 = vst [vmem:[%s231 + $0x18] sm:$0xff] %v5431
      %5464 = vst [vmem:[%s231 + $0x20] sm:$0xff] %v5432
      %5465 = vst [vmem:[%s231 + $0x28] sm:$0xff] %v5433
      %5466 = vst [vmem:[%s231 + $0x30] sm:$0xff] %v5434
      %5467 = vst [vmem:[%s231 + $0x38] sm:$0xff] %v5435
      %5468 = vst [vmem:[%s231 + $0x40] sm:$0xff] %v5436
      %5469 = vst [vmem:[%s231 + $0x48] sm:$0xff] %v5437
      %5470 = vst [vmem:[%s231 + $0x50] sm:$0xff] %v5438
      %5471 = vst [vmem:[%s231 + $0x58] sm:$0xff] %v5439
      %5472 = vst [vmem:[%s231 + $0x60] sm:$0xff] %v5440
      %5473 = vst [vmem:[%s231 + $0x68] sm:$0xff] %v5441
      %5474 = vst [vmem:[%s231 + $0x70] sm:$0xff] %v5442
      %5475 = vst [vmem:[%s231 + $0x78] sm:$0xff] %v5443
      %5476 = vst [vmem:[%s231 + $0x80] sm:$0xff] %v5444
      %5477 = vst [vmem:[%s231 + $0x88] sm:$0xff] %v5445
      %5478 = vst [vmem:[%s231 + $0x90] sm:$0xff] %v5446
      %5479 = vst [vmem:[%s231 + $0x98] sm:$0xff] %v5447
      %5480 = vst [vmem:[%s231 + $0xa0] sm:$0xff] %v5448
      %5481 = vst [vmem:[%s231 + $0xa8] sm:$0xff] %v5449
      %5482 = vst [vmem:[%s231 + $0xb0] sm:$0xff] %v5450
      %5483 = vst [vmem:[%s231 + $0xb8] sm:$0xff] %v5451
      %5484 = vst [vmem:[%s231 + $0xc0] sm:$0xff] %v5452
      %5485 = vst [vmem:[%s231 + $0xc8] sm:$0xff] %v5453
      %5486 = vst [vmem:[%s231 + $0xd0] sm:$0xff] %v5454
      %5487 = vst [vmem:[%s231 + $0xd8] sm:$0xff] %v5455
      %5488 = vst [vmem:[%s231 + $0xe0] sm:$0xff] %v5456
      %5489 = vst [vmem:[%s231 + $0xe8] sm:$0xff] %v5457
      %5490 = vst [vmem:[%s231 + $0xf0] sm:$0xff] %v5458
      %5491 = vst [vmem:[%s231 + $0xf8] sm:$0xff] %v5459
      %v5492 = vadd.f32 %v5428, %v5429
      %v5493 = vadd.f32 %v5492, %v5430
      %v5494 = vadd.f32 %v5493, %v5431
      %v5495 = vadd.f32 %v5494, %v5432
      %v5496 = vadd.f32 %v5495, %v5433
      %v5497 = vadd.f32 %v5496, %v5434
      %v5498 = vadd.f32 %v5497, %v5435
      %v5499 = vadd.f32 %v5498, %v5436
      %v5500 = vadd.f32 %v5499, %v5437
      %v5501 = vadd.f32 %v5500, %v5438
      %v5502 = vadd.f32 %v5501, %v5439
      %v5503 = vadd.f32 %v5502, %v5440
      %v5504 = vadd.f32 %v5503, %v5441
      %v5505 = vadd.f32 %v5504, %v5442
      %v5506 = vadd.f32 %v5505, %v5443
      %v5507 = vadd.f32 %v5506, %v5444
      %v5508 = vadd.f32 %v5507, %v5445
      %v5509 = vadd.f32 %v5508, %v5446
      %v5510 = vadd.f32 %v5509, %v5447
      %v5511 = vadd.f32 %v5510, %v5448
      %v5512 = vadd.f32 %v5511, %v5449
      %v5513 = vadd.f32 %v5512, %v5450
      %v5514 = vadd.f32 %v5513, %v5451
      %v5515 = vadd.f32 %v5514, %v5452
      %v5516 = vadd.f32 %v5515, %v5453
      %v5517 = vadd.f32 %v5516, %v5454
      %v5518 = vadd.f32 %v5517, %v5455
      %v5519 = vadd.f32 %v5518, %v5456
      %v5520 = vadd.f32 %v5519, %v5457
      %v5521 = vadd.f32 %v5520, %v5458
      %v5522 = vadd.f32 %v5521, %v5459
      %v5523 = vrot.slane %v5522, 4
      %v5524 = vadd.f32 %v5522, %v5523
      %v5525 = vrot.slane %v5524, 2
      %v5526 = vadd.f32 %v5524, %v5525
      %v5527 = vrot.slane %v5526, 1
      %v5528 = vadd.f32 %v5526, %v5527
      %v5529 = vmul.f32 %v5428, %v5428
      %v5530 = vmul.f32 %v5429, %v5429
      %v5531 = vmul.f32 %v5430, %v5430
      %v5532 = vmul.f32 %v5431, %v5431
      %v5533 = vmul.f32 %v5432, %v5432
      %v5534 = vmul.f32 %v5433, %v5433
      %v5535 = vmul.f32 %v5434, %v5434
      %v5536 = vmul.f32 %v5435, %v5435
      %v5537 = vmul.f32 %v5436, %v5436
      %v5538 = vmul.f32 %v5437, %v5437
      %v5539 = vmul.f32 %v5438, %v5438
      %v5540 = vmul.f32 %v5439, %v5439
      %v5541 = vmul.f32 %v5440, %v5440
      %v5542 = vmul.f32 %v5441, %v5441
      %v5543 = vmul.f32 %v5442, %v5442
      %v5544 = vmul.f32 %v5443, %v5443
      %v5545 = vmul.f32 %v5444, %v5444
      %v5546 = vmul.f32 %v5445, %v5445
      %v5547 = vmul.f32 %v5446, %v5446
      %v5548 = vmul.f32 %v5447, %v5447
      %v5549 = vmul.f32 %v5448, %v5448
      %v5550 = vmul.f32 %v5449, %v5449
      %v5551 = vmul.f32 %v5450, %v5450
      %v5552 = vmul.f32 %v5451, %v5451
      %v5553 = vmul.f32 %v5452, %v5452
      %v5554 = vmul.f32 %v5453, %v5453
      %v5555 = vmul.f32 %v5454, %v5454
      %v5556 = vmul.f32 %v5455, %v5455
      %v5557 = vmul.f32 %v5456, %v5456
      %v5558 = vmul.f32 %v5457, %v5457
      %v5559 = vmul.f32 %v5458, %v5458
      %v5560 = vmul.f32 %v5459, %v5459
      %v5561 = vadd.f32 %v5529, %v5530
      %v5562 = vadd.f32 %v5561, %v5531
      %v5563 = vadd.f32 %v5562, %v5532
      %v5564 = vadd.f32 %v5563, %v5533
      %v5565 = vadd.f32 %v5564, %v5534
      %v5566 = vadd.f32 %v5565, %v5535
      %v5567 = vadd.f32 %v5566, %v5536
      %v5568 = vadd.f32 %v5567, %v5537
      %v5569 = vadd.f32 %v5568, %v5538
      %v5570 = vadd.f32 %v5569, %v5539
      %v5571 = vadd.f32 %v5570, %v5540
      %v5572 = vadd.f32 %v5571, %v5541
      %v5573 = vadd.f32 %v5572, %v5542
      %v5574 = vadd.f32 %v5573, %v5543
      %v5575 = vadd.f32 %v5574, %v5544
      %v5576 = vadd.f32 %v5575, %v5545
      %v5577 = vadd.f32 %v5576, %v5546
      %v5578 = vadd.f32 %v5577, %v5547
      %v5579 = vadd.f32 %v5578, %v5548
      %v5580 = vadd.f32 %v5579, %v5549
      %v5581 = vadd.f32 %v5580, %v5550
      %v5582 = vadd.f32 %v5581, %v5551
      %v5583 = vadd.f32 %v5582, %v5552
      %v5584 = vadd.f32 %v5583, %v5553
      %v5585 = vadd.f32 %v5584, %v5554
      %v5586 = vadd.f32 %v5585, %v5555
      %v5587 = vadd.f32 %v5586, %v5556
      %v5588 = vadd.f32 %v5587, %v5557
      %v5589 = vadd.f32 %v5588, %v5558
      %v5590 = vadd.f32 %v5589, %v5559
      %v5591 = vadd.f32 %v5590, %v5560
      %v5592 = vrot.slane %v5591, 4
      %v5593 = vadd.f32 %v5591, %v5592
      %v5594 = vrot.slane %v5593, 2
      %v5595 = vadd.f32 %v5593, %v5594
      %v5596 = vrot.slane %v5595, 1
      %v5597 = vadd.f32 %v5595, %v5596
      %vm5598 = vcmask 1040384
      %v5599 = vsel %vm5598, %v5528, %v5597
      %5600 = vst [vmem:[%s235] sm:$0x3] %v5599
      %p5601 = scmp.lt.s32.totalorder %s17, 1
      %s5602 = scalar_select %p5601, %s17, 1
      %s5603 = smul.addr %s5602, 32
      %s5604 = smul.addr %s5603, 8
      %s5605 = scalar_lea.vmem %s4, %s5604
      %p5606 = scmp.lt.s32.totalorder %s17, 1
      %s5607 = scalar_select %p5606, %s17, 1
      %s5608 = smul.addr %s5607, 2
      %s5609 = scalar_lea.vmem %s5, %s5608
      // Predicated region
      $region37: #{residual_block_forward.4} parent=35 // pred_check
        %p5610 = pneg %p124
      $region38: #{residual_block_forward.4} parent=35 // pred_check_branch
        %5612 = sbr.rel (%p5610) target = $region40
      $region39: #{residual_block_forward.4} parent=35 // pred_region
        _
      $region40: #{residual_block_forward.4} parent=35 // pred_fallthru
        _
      // Predicated region
      $region41: #{residual_block_forward.4} parent=35 // pred_check
        %p5613 = pneg %p150
      $region42: #{residual_block_forward.4} parent=35 // pred_check_branch
        %5615 = sbr.rel (%p5613) target = $region44
      $region43: #{residual_block_forward.4} parent=35 // pred_region
        _
      $region44: #{residual_block_forward.4} parent=35 // pred_fallthru
        _
    $region36: #{residual_block_forward.4} parent=5 // pred_fallthru
      _
    %p5616 = scmp.le.s32.totalorder 2, %s12
    // Predicated region
    $region45: #{residual_block_forward.4} parent=5 // pred_check
      %p5617 = pneg %p5616
    $region46: #{residual_block_forward.4} parent=5 // pred_check_branch
      %5619 = sbr.rel (%p5617) target = $region48
    $region47: #{residual_block_forward.4} parent=5 // pred_region
      %s5620 = ssub.s32 %s12, 2
      // Predicated region
      $region49: #{residual_block_forward.4} parent=47 // pred_check
        %p5621 = pneg %p130
      $region50: #{residual_block_forward.4} parent=47 // pred_check_branch
        %5623 = sbr.rel (%p5621) target = $region52
      $region51: #{residual_block_forward.4} parent=47 // pred_region
        %p5624 = scmp.lt.s32.totalorder %s18, 1
        %s5625 = scalar_select %p5624, %s18, 1
        %s5626 = smul.addr %s5625, 32
        %s5627 = smul.addr %s5626, 8
        %s5628 = scalar_lea.vmem %s4, %s5627
      $region52: #{residual_block_forward.4} parent=47 // pred_fallthru
        _
      // Predicated region
      $region53: #{residual_block_forward.4} parent=47 // pred_check
        %p5629 = pneg %p156
      $region54: #{residual_block_forward.4} parent=47 // pred_check_branch
        %5631 = sbr.rel (%p5629) target = $region56
      $region55: #{residual_block_forward.4} parent=47 // pred_region
        %p5632 = scmp.lt.s32.totalorder %s18, 1
        %s5633 = scalar_select %p5632, %s18, 1
        %s5634 = smul.addr %s5633, 2
        %s5635 = scalar_lea.vmem %s5, %s5634
      $region56: #{residual_block_forward.4} parent=47 // pred_fallthru
        _
    $region48: #{residual_block_forward.4} parent=5 // pred_fallthru
      _
  $region6: #{residual_block_forward.4} parent=0 // loop_footer
    %s16 = sadd.s32 1, %s12
  $region7: #{residual_block_forward.4} parent=0 // loop_footer_branch
    %11 = sbr.rel target = $region3
  $region8: #{residual_block_forward.4} parent=0 // loop_exit
    _

</llo_original>
